<compile_context>
chip_gen: v7x
topology: tpu7x:2x2x1
jax: 0.10.0
libtpu: 0.0.40
codegen_flags: <defaults>
</compile_context>

<pallas_src>
import functools

import jax
import jax.numpy as jnp
import numpy as np
from jax.experimental import pallas as pl
from jax.experimental.pallas import tpu as pltpu


def _basic_block_kernel(x_ref, w1_ref, b1_ref, w2_ref, b2_ref, o_ref, pad_ref,
                        *, Nb, H, W, Wp, Cout):
    """One batch tile (Nb images) per grid step.

    x_ref:   (Nb, H+2, Wp, Cin)  bf16  zero-padded NHWC input (Wp = padded W rounded to 16)
    w1_ref:  (3, Cin, 3*Cout)    bf16  conv1 taps (BN1 scale folded, kx-major columns)
    b1_ref:  (1, Cout)           f32   folded BN1 shift
    w2_ref:  (3, Cout, 3*Cout)   bf16  conv2 taps (BN2 scale folded)
    b2_ref:  (1, Cout)           f32   folded BN2 shift
    o_ref:   (Nb, H, W, Cout)    f32   output (NHWC, lane-dense: Cout % 128 == 0)
    pad_ref: VMEM (Nb, H+2, Wp, Cout) bf16 scratch: re-padded conv1 activation
    """

    def conv3x3(read_slab, w_ref):
        # 3 MXU matmuls accumulated into a single f32 result (ky reduction first),
        # then 3 kx shifted adds on that result (down from 9 shifted adds).
        acc = None
        for ky in range(3):
            slab = read_slab(ky)                                # (Nb, H, Wp, C) bf16
            # Wp is a multiple of 16, so this flatten is layout-free (no relayout copy).
            lhs = slab.reshape(Nb * H * Wp, slab.shape[-1])
            y = jnp.dot(lhs, w_ref[ky], preferred_element_type=jnp.float32)
            acc = y if acc is None else acc + y                 # (Nb*H*Wp, 3*Cout) f32
        yr = acc.reshape(Nb, H, Wp, 3 * Cout)
        return (yr[:, :, 0:W,         0:Cout]
                + yr[:, :, 1:1 + W,   Cout:2 * Cout]
                + yr[:, :, 2:2 + W, 2 * Cout:3 * Cout])         # (Nb, H, W, Cout) f32

    b1 = b1_ref[...].reshape(1, 1, 1, Cout)
    b2 = b2_ref[...].reshape(1, 1, 1, Cout)

    # ---- conv1 (BN1 scale folded into weights) + shift + relu ----
    out1 = jnp.maximum(conv3x3(lambda ky: x_ref[:, ky:ky + H, :, :], w1_ref) + b1, 0.0)

    # ---- re-pad conv1 activation for conv2 (persistent bf16 scratch) ----
    # Borders are re-written every step (so the kernel stays correct if the batch axis is
    # megacore-sharded and each core has its own scratch). Top/bottom borders are cheap
    # full-width row stores; only the needed pad-column regions are zeroed.
    zrow = jnp.zeros((Nb, 1, Wp, Cout), pad_ref.dtype)
    zcol_l = jnp.zeros((Nb, H, 1, Cout), pad_ref.dtype)
    zcol_r = jnp.zeros((Nb, H, Wp - 1 - W, Cout), pad_ref.dtype)
    pad_ref[:, 0:1, :, :] = zrow
    pad_ref[:, H + 1:H + 2, :, :] = zrow
    pad_ref[:, 1:H + 1, 0:1, :] = zcol_l
    pad_ref[:, 1:H + 1, W + 1:Wp, :] = zcol_r
    pad_ref[:, 1:H + 1, 1:W + 1, :] = out1.astype(pad_ref.dtype)

    # ---- conv2 (BN2 scale folded) + shift + residual + relu ----
    out2 = conv3x3(lambda ky: pad_ref[:, ky:ky + H, :, :], w2_ref) + b2
    # Residual reconstructed from the interior of the already-resident padded input
    # (no separate f32 identity stream from HBM).
    resid = x_ref[:, 1:H + 1, 1:W + 1, :].astype(jnp.float32)
    o_ref[...] = jnp.maximum(out2 + resid, 0.0).astype(o_ref.dtype)


def _pick_batch_tile(N, H, W, Wp, Cin, Cout):
    """Smallest divisor of N whose matmul M = Nb*H*Wp fills the MXU, VMEM-capped."""
    divs = [d for d in range(1, N + 1) if N % d == 0]
    target_m = 256                      # v6e/v7x MXU height (>= 2x v5e's 128)
    nb = divs[-1]
    for d in divs:
        if d * H * Wp >= target_m:
            nb = d
            break

    def act_bytes(d):                   # double-buffered per-step activations (in + out)
        return 2 * d * ((H + 2) * Wp * Cin * 2 + H * W * Cout * 4)

    # Stay comfortably inside v7x's 64 MiB VMEM (leave room for weights/temps).
    while nb > 1 and act_bytes(nb) > 24 * 1024 * 1024:
        nb = max(d for d in divs if d < nb)
    return nb


def basic_block(x_nchw, w1, g1, b1, m1, v1, w2, g2, b2, m2, v2, eps=1e-5, nb=None):
    """Pallas BasicBlock forward. x_nchw: (N, C, H, W) float32. Returns NCHW float32."""
    N, Cin, H, W = x_nchw.shape
    Cout = w1.shape[0]
    assert Cin == Cout, "residual add without downsample requires inplanes == planes"
    assert Cout % 128 == 0, "kernel layout assumes a lane-dense channel count (Cout % 128 == 0)"

    # Padded width rounded up to the bf16 sublane tile (16) so the in-kernel flatten
    # (Nb, H, Wp, C) -> (Nb*H*Wp, C) is layout-free. Extra columns are zero and never read
    # by the kx-shifted accumulation.
    Wp = ((W + 2 + 15) // 16) * 16

    # NCHW -> NHWC, spatial zero-pad, bf16 cast for the MXU (also halves input DMA).
    x = jnp.transpose(x_nchw, (0, 2, 3, 1)).astype(jnp.float32)
    xp = jnp.pad(x, ((0, 0), (1, 1), (1, Wp - 1 - W), (0, 0))).astype(jnp.bfloat16)

    # Fold BN (eval mode): scale into the conv weights, shift stays separate.
    inv1 = g1 / jnp.sqrt(v1 + eps)
    inv2 = g2 / jnp.sqrt(v2 + eps)
    sh1 = (b1 - m1 * inv1).reshape(1, Cout).astype(jnp.float32)
    sh2 = (b2 - m2 * inv2).reshape(1, Cout).astype(jnp.float32)

    # OIHW -> (ky, kx, Cin, Cout), fold scale, then (ky, Cin, kx, Cout) -> (ky, Cin, 3*Cout):
    # the 3 kx taps are concatenated along the output dim (kx-major columns), matching the
    # in-kernel shifted accumulation.
    wt1 = jnp.transpose(w1, (2, 3, 1, 0)) * inv1[None, None, None, :]
    w1r = jnp.transpose(wt1, (0, 2, 1, 3)).reshape(3, Cin, 3 * Cout).astype(jnp.bfloat16)
    wt2 = jnp.transpose(w2, (2, 3, 1, 0)) * inv2[None, None, None, :]
    w2r = jnp.transpose(wt2, (0, 2, 1, 3)).reshape(3, Cout, 3 * Cout).astype(jnp.bfloat16)

    if nb is None:
        nb = _pick_batch_tile(N, H, W, Wp, Cin, Cout)
    assert N % nb == 0

    kernel = functools.partial(_basic_block_kernel, Nb=nb, H=H, W=W, Wp=Wp, Cout=Cout)

    def _run(weight_mode):
        def wspec(shape, imap):
            # Grid-invariant weights/shifts: single-buffer when supported (VMEM save, v7x).
            if weight_mode is None:
                return pl.BlockSpec(shape, imap)
            return pl.BlockSpec(shape, imap, pipeline_mode=weight_mode)

        call = pl.pallas_call(
            kernel,
            out_shape=jax.ShapeDtypeStruct((N, H, W, Cout), jnp.float32),
            grid=(N // nb,),
            in_specs=[
                pl.BlockSpec((nb, H + 2, Wp, Cin), lambda b: (b, 0, 0, 0)),
                wspec((3, Cin, 3 * Cout), lambda b: (0, 0, 0)),
                wspec((1, Cout), lambda b: (0, 0)),
                wspec((3, Cout, 3 * Cout), lambda b: (0, 0, 0)),
                wspec((1, Cout), lambda b: (0, 0)),
            ],
            out_specs=pl.BlockSpec((nb, H, W, Cout), lambda b: (b, 0, 0, 0)),
            scratch_shapes=[pltpu.VMEM((nb, H + 2, Wp, Cout), jnp.bfloat16)],
            compiler_params=pltpu.CompilerParams(
                dimension_semantics=("parallel",),
                vmem_limit_bytes=48 * 1024 * 1024,   # explicit cap, within v7x's 64 MiB
            ),
        )
        return call(xp, w1r, sh1, w2r, sh2)

    try:
        out_nhwc = _run(pl.Buffered(1))
    except Exception:
        # Fallback for Pallas builds that reject single-buffering via pipeline_mode.
        out_nhwc = _run(None)

    return jnp.transpose(out_nhwc, (0, 3, 1, 2))     # back to NCHW


def ref_basic_block(x, w1, g1, b1, m1, v1, w2, g2, b2, m2, v2, eps=1e-5):
    """Pure-JAX f32 reference (NCHW), matching PyTorch eval-mode semantics."""
    def conv(y, w):
        return jax.lax.conv_general_dilated(
            y, w, window_strides=(1, 1), padding=((1, 1), (1, 1)),
            dimension_numbers=('NCHW', 'OIHW', 'NCHW'))

    def bn(y, g, b, m, v):
        g_, b_, m_, v_ = (a[None, :, None, None] for a in (g, b, m, v))
        return (y - m_) / jnp.sqrt(v_ + eps) * g_ + b_

    out = jnp.maximum(bn(conv(x, w1), g1, b1, m1, v1), 0.0)
    out = bn(conv(out, w2), g2, b2, m2, v2)
    return jnp.maximum(out + x, 0.0)


if __name__ == "__main__":
    key = jax.random.PRNGKey(0)
    N, C, H, W = 4, 128, 8, 8     # inplanes == planes (downsample is None)
    planes = C
    ks = jax.random.split(key, 12)

    wscale = (2.0 / (9 * C)) ** 0.5      # He-style so activations stay O(1)
    x = jax.random.normal(ks[0], (N, C, H, W), jnp.float32)
    w1 = jax.random.normal(ks[1], (planes, C, 3, 3), jnp.float32) * wscale
    w2 = jax.random.normal(ks[2], (planes, planes, 3, 3), jnp.float32) * wscale
    g1 = jnp.abs(jax.random.normal(ks[3], (planes,), jnp.float32)) + 0.5
    b1 = jax.random.normal(ks[4], (planes,), jnp.float32) * 0.1
    m1 = jax.random.normal(ks[5], (planes,), jnp.float32) * 0.1
    v1 = jnp.abs(jax.random.normal(ks[6], (planes,), jnp.float32)) + 0.5
    g2 = jnp.abs(jax.random.normal(ks[7], (planes,), jnp.float32)) + 0.5
    b2 = jax.random.normal(ks[8], (planes,), jnp.float32) * 0.1
    m2 = jax.random.normal(ks[9], (planes,), jnp.float32) * 0.1
    v2 = jnp.abs(jax.random.normal(ks[10], (planes,), jnp.float32)) + 0.5

    out = basic_block(x, w1, g1, b1, m1, v1, w2, g2, b2, m2, v2)
    out = jax.block_until_ready(out)

    ref = ref_basic_block(x, w1, g1, b1, m1, v1, w2, g2, b2, m2, v2)
    ref = jax.block_until_ready(ref)

    # bf16 MXU path (inputs, weights, inter-conv activation, residual) vs f32 reference.
    np.testing.assert_allclose(np.asarray(out), np.asarray(ref),
                               rtol=5e-2, atol=1e-1)
    print("KERNEL_OK")
</pallas_src>

<mosaic_0001>
module attributes {stable_mosaic.version = 11 : i64} {
  func.func @_basic_block_kernel(%arg0: i32, %arg1: memref<2x10x16x128xbf16, #tpu.memory_space<vmem>>, %arg2: memref<3x128x384xbf16, #tpu.memory_space<vmem>>, %arg3: memref<1x128xf32, #tpu.memory_space<vmem>>, %arg4: memref<3x128x384xbf16, #tpu.memory_space<vmem>>, %arg5: memref<1x128xf32, #tpu.memory_space<vmem>>, %arg6: memref<2x8x8x128xf32, #tpu.memory_space<vmem>>, %arg7: memref<2x10x16x128xbf16, #tpu.memory_space<vmem>>) attributes {dimension_semantics = [#tpu.dimension_semantics<parallel>], iteration_bounds = array<i64: 2>, scalar_prefetch = 0 : i64, scratch_operands = 1 : i64, tpu.core_type = #tpu.core_type<tc>, window_params = [{transform_indices = @transform_0, window_bounds = array<i64: 2, 10, 16, 128>}, {pipeline_mode = #tpu.pipeline_mode<synchronous>, transform_indices = @transform_1, window_bounds = array<i64: 3, 128, 384>}, {pipeline_mode = #tpu.pipeline_mode<synchronous>, transform_indices = @transform_2, window_bounds = array<i64: 1, 128>}, {pipeline_mode = #tpu.pipeline_mode<synchronous>, transform_indices = @transform_3, window_bounds = array<i64: 3, 128, 384>}, {pipeline_mode = #tpu.pipeline_mode<synchronous>, transform_indices = @transform_4, window_bounds = array<i64: 1, 128>}, {transform_indices = @transform_5, window_bounds = array<i64: 2, 8, 8, 128>}]} {
    %c0 = arith.constant 0 : index
    %c0_0 = arith.constant 0 : index
    %0 = vector.load %arg3[%c0, %c0_0] : memref<1x128xf32, #tpu.memory_space<vmem>>, vector<1x128xf32>
    %1 = vector.shape_cast %0 : vector<1x128xf32> to vector<1x1x1x128xf32>
    %c0_1 = arith.constant 0 : index
    %c0_2 = arith.constant 0 : index
    %2 = vector.load %arg5[%c0_1, %c0_2] : memref<1x128xf32, #tpu.memory_space<vmem>>, vector<1x128xf32>
    %3 = vector.shape_cast %2 : vector<1x128xf32> to vector<1x1x1x128xf32>
    %c0_3 = arith.constant 0 : index
    %c0_4 = arith.constant 0 : index
    %c0_5 = arith.constant 0 : index
    %c0_6 = arith.constant 0 : index
    %4 = vector.load %arg1[%c0_3, %c0_4, %c0_5, %c0_6] : memref<2x10x16x128xbf16, #tpu.memory_space<vmem>>, vector<2x8x16x128xbf16>
    %5 = vector.shape_cast %4 : vector<2x8x16x128xbf16> to vector<256x128xbf16>
    %c0_7 = arith.constant 0 : index
    %c0_8 = arith.constant 0 : index
    %c0_9 = arith.constant 0 : index
    %6 = vector.load %arg2[%c0_7, %c0_8, %c0_9] : memref<3x128x384xbf16, #tpu.memory_space<vmem>>, vector<1x128x384xbf16>
    %7 = vector.shape_cast %6 : vector<1x128x384xbf16> to vector<128x384xbf16>
    %cst = arith.constant dense<0.000000e+00> : vector<256x384xf32>
    %8 = tpu.matmul %5, %7, %cst {dimension_numbers = #tpu.dot_dimension_numbers<[1], [0], [0], [1], [0, 0, 1, 1], [], []>} : vector<256x128xbf16>, vector<128x384xbf16>, vector<256x384xf32> -> vector<256x384xf32>
    %c0_10 = arith.constant 0 : index
    %c1 = arith.constant 1 : index
    %c0_11 = arith.constant 0 : index
    %c0_12 = arith.constant 0 : index
    %9 = vector.load %arg1[%c0_10, %c1, %c0_11, %c0_12] : memref<2x10x16x128xbf16, #tpu.memory_space<vmem>>, vector<2x8x16x128xbf16>
    %10 = vector.shape_cast %9 : vector<2x8x16x128xbf16> to vector<256x128xbf16>
    %c1_13 = arith.constant 1 : index
    %c0_14 = arith.constant 0 : index
    %c0_15 = arith.constant 0 : index
    %11 = vector.load %arg2[%c1_13, %c0_14, %c0_15] : memref<3x128x384xbf16, #tpu.memory_space<vmem>>, vector<1x128x384xbf16>
    %12 = vector.shape_cast %11 : vector<1x128x384xbf16> to vector<128x384xbf16>
    %cst_16 = arith.constant dense<0.000000e+00> : vector<256x384xf32>
    %13 = tpu.matmul %10, %12, %cst_16 {dimension_numbers = #tpu.dot_dimension_numbers<[1], [0], [0], [1], [0, 0, 1, 1], [], []>} : vector<256x128xbf16>, vector<128x384xbf16>, vector<256x384xf32> -> vector<256x384xf32>
    %14 = arith.addf %8, %13 : vector<256x384xf32>
    %c0_17 = arith.constant 0 : index
    %c2 = arith.constant 2 : index
    %c0_18 = arith.constant 0 : index
    %c0_19 = arith.constant 0 : index
    %15 = vector.load %arg1[%c0_17, %c2, %c0_18, %c0_19] : memref<2x10x16x128xbf16, #tpu.memory_space<vmem>>, vector<2x8x16x128xbf16>
    %16 = vector.shape_cast %15 : vector<2x8x16x128xbf16> to vector<256x128xbf16>
    %c2_20 = arith.constant 2 : index
    %c0_21 = arith.constant 0 : index
    %c0_22 = arith.constant 0 : index
    %17 = vector.load %arg2[%c2_20, %c0_21, %c0_22] : memref<3x128x384xbf16, #tpu.memory_space<vmem>>, vector<1x128x384xbf16>
    %18 = vector.shape_cast %17 : vector<1x128x384xbf16> to vector<128x384xbf16>
    %cst_23 = arith.constant dense<0.000000e+00> : vector<256x384xf32>
    %19 = tpu.matmul %16, %18, %cst_23 {dimension_numbers = #tpu.dot_dimension_numbers<[1], [0], [0], [1], [0, 0, 1, 1], [], []>} : vector<256x128xbf16>, vector<128x384xbf16>, vector<256x384xf32> -> vector<256x384xf32>
    %20 = arith.addf %14, %19 : vector<256x384xf32>
    %21 = vector.shape_cast %20 : vector<256x384xf32> to vector<2x8x16x384xf32>
    %22 = vector.extract_strided_slice %21 {offsets = [0, 0, 0, 0], sizes = [2, 8, 8, 128], strides = [1, 1, 1, 1]} : vector<2x8x16x384xf32> to vector<2x8x8x128xf32>
    %23 = vector.extract_strided_slice %21 {offsets = [0, 0, 1, 128], sizes = [2, 8, 8, 128], strides = [1, 1, 1, 1]} : vector<2x8x16x384xf32> to vector<2x8x8x128xf32>
    %24 = arith.addf %22, %23 : vector<2x8x8x128xf32>
    %25 = vector.extract_strided_slice %21 {offsets = [0, 0, 2, 256], sizes = [2, 8, 8, 128], strides = [1, 1, 1, 1]} : vector<2x8x16x384xf32> to vector<2x8x8x128xf32>
    %26 = arith.addf %24, %25 : vector<2x8x8x128xf32>
    %27 = vector.broadcast %1 : vector<1x1x1x128xf32> to vector<2x8x8x128xf32>
    %28 = arith.addf %26, %27 : vector<2x8x8x128xf32>
    %cst_24 = arith.constant 0.000000e+00 : f32
    %29 = vector.broadcast %cst_24 : f32 to vector<2x8x8x128xf32>
    %30 = arith.maximumf %28, %29 : vector<2x8x8x128xf32>
    %cst_25 = arith.constant 0.000000e+00 : bf16
    %31 = vector.broadcast %cst_25 : bf16 to vector<2x1x16x128xbf16>
    %cst_26 = arith.constant 0.000000e+00 : bf16
    %32 = vector.broadcast %cst_26 : bf16 to vector<2x8x1x128xbf16>
    %cst_27 = arith.constant 0.000000e+00 : bf16
    %33 = vector.broadcast %cst_27 : bf16 to vector<2x8x7x128xbf16>
    %c0_28 = arith.constant 0 : index
    %c0_29 = arith.constant 0 : index
    %c0_30 = arith.constant 0 : index
    %c0_31 = arith.constant 0 : index
    %34 = vector.load %arg7[%c0_28, %c0_29, %c0_30, %c0_31] : memref<2x10x16x128xbf16, #tpu.memory_space<vmem>>, vector<2x1x16x128xbf16>
    tpu.vector_store %arg7[%c0_28, %c0_29, %c0_30, %c0_31], %31 {strides = array<i32>} : memref<2x10x16x128xbf16, #tpu.memory_space<vmem>>, vector<2x1x16x128xbf16>,
    %c0_32 = arith.constant 0 : index
    %c9 = arith.constant 9 : index
    %c0_33 = arith.constant 0 : index
    %c0_34 = arith.constant 0 : index
    %35 = vector.load %arg7[%c0_32, %c9, %c0_33, %c0_34] : memref<2x10x16x128xbf16, #tpu.memory_space<vmem>>, vector<2x1x16x128xbf16>
    tpu.vector_store %arg7[%c0_32, %c9, %c0_33, %c0_34], %31 {strides = array<i32>} : memref<2x10x16x128xbf16, #tpu.memory_space<vmem>>, vector<2x1x16x128xbf16>,
    %c0_35 = arith.constant 0 : index
    %c1_36 = arith.constant 1 : index
    %c0_37 = arith.constant 0 : index
    %c0_38 = arith.constant 0 : index
    %36 = vector.load %arg7[%c0_35, %c1_36, %c0_37, %c0_38] : memref<2x10x16x128xbf16, #tpu.memory_space<vmem>>, vector<2x8x1x128xbf16>
    tpu.vector_store %arg7[%c0_35, %c1_36, %c0_37, %c0_38], %32 {strides = array<i32>} : memref<2x10x16x128xbf16, #tpu.memory_space<vmem>>, vector<2x8x1x128xbf16>,
    %c0_39 = arith.constant 0 : index
    %c1_40 = arith.constant 1 : index
    %c9_41 = arith.constant 9 : index
    %c0_42 = arith.constant 0 : index
    %37 = vector.load %arg7[%c0_39, %c1_40, %c9_41, %c0_42] : memref<2x10x16x128xbf16, #tpu.memory_space<vmem>>, vector<2x8x7x128xbf16>
    tpu.vector_store %arg7[%c0_39, %c1_40, %c9_41, %c0_42], %33 {strides = array<i32>} : memref<2x10x16x128xbf16, #tpu.memory_space<vmem>>, vector<2x8x7x128xbf16>,
    %38 = arith.truncf %30 : vector<2x8x8x128xf32> to vector<2x8x8x128xbf16>
    %c0_43 = arith.constant 0 : index
    %c1_44 = arith.constant 1 : index
    %c1_45 = arith.constant 1 : index
    %c0_46 = arith.constant 0 : index
    %39 = vector.load %arg7[%c0_43, %c1_44, %c1_45, %c0_46] : memref<2x10x16x128xbf16, #tpu.memory_space<vmem>>, vector<2x8x8x128xbf16>
    tpu.vector_store %arg7[%c0_43, %c1_44, %c1_45, %c0_46], %38 {strides = array<i32>} : memref<2x10x16x128xbf16, #tpu.memory_space<vmem>>, vector<2x8x8x128xbf16>,
    %c0_47 = arith.constant 0 : index
    %c0_48 = arith.constant 0 : index
    %c0_49 = arith.constant 0 : index
    %c0_50 = arith.constant 0 : index
    %40 = vector.load %arg7[%c0_47, %c0_48, %c0_49, %c0_50] : memref<2x10x16x128xbf16, #tpu.memory_space<vmem>>, vector<2x8x16x128xbf16>
    %41 = vector.shape_cast %40 : vector<2x8x16x128xbf16> to vector<256x128xbf16>
    %c0_51 = arith.constant 0 : index
    %c0_52 = arith.constant 0 : index
    %c0_53 = arith.constant 0 : index
    %42 = vector.load %arg4[%c0_51, %c0_52, %c0_53] : memref<3x128x384xbf16, #tpu.memory_space<vmem>>, vector<1x128x384xbf16>
    %43 = vector.shape_cast %42 : vector<1x128x384xbf16> to vector<128x384xbf16>
    %cst_54 = arith.constant dense<0.000000e+00> : vector<256x384xf32>
    %44 = tpu.matmul %41, %43, %cst_54 {dimension_numbers = #tpu.dot_dimension_numbers<[1], [0], [0], [1], [0, 0, 1, 1], [], []>} : vector<256x128xbf16>, vector<128x384xbf16>, vector<256x384xf32> -> vector<256x384xf32>
    %c0_55 = arith.constant 0 : index
    %c1_56 = arith.constant 1 : index
    %c0_57 = arith.constant 0 : index
    %c0_58 = arith.constant 0 : index
    %45 = vector.load %arg7[%c0_55, %c1_56, %c0_57, %c0_58] : memref<2x10x16x128xbf16, #tpu.memory_space<vmem>>, vector<2x8x16x128xbf16>
    %46 = vector.shape_cast %45 : vector<2x8x16x128xbf16> to vector<256x128xbf16>
    %c1_59 = arith.constant 1 : index
    %c0_60 = arith.constant 0 : index
    %c0_61 = arith.constant 0 : index
    %47 = vector.load %arg4[%c1_59, %c0_60, %c0_61] : memref<3x128x384xbf16, #tpu.memory_space<vmem>>, vector<1x128x384xbf16>
    %48 = vector.shape_cast %47 : vector<1x128x384xbf16> to vector<128x384xbf16>
    %cst_62 = arith.constant dense<0.000000e+00> : vector<256x384xf32>
    %49 = tpu.matmul %46, %48, %cst_62 {dimension_numbers = #tpu.dot_dimension_numbers<[1], [0], [0], [1], [0, 0, 1, 1], [], []>} : vector<256x128xbf16>, vector<128x384xbf16>, vector<256x384xf32> -> vector<256x384xf32>
    %50 = arith.addf %44, %49 : vector<256x384xf32>
    %c0_63 = arith.constant 0 : index
    %c2_64 = arith.constant 2 : index
    %c0_65 = arith.constant 0 : index
    %c0_66 = arith.constant 0 : index
    %51 = vector.load %arg7[%c0_63, %c2_64, %c0_65, %c0_66] : memref<2x10x16x128xbf16, #tpu.memory_space<vmem>>, vector<2x8x16x128xbf16>
    %52 = vector.shape_cast %51 : vector<2x8x16x128xbf16> to vector<256x128xbf16>
    %c2_67 = arith.constant 2 : index
    %c0_68 = arith.constant 0 : index
    %c0_69 = arith.constant 0 : index
    %53 = vector.load %arg4[%c2_67, %c0_68, %c0_69] : memref<3x128x384xbf16, #tpu.memory_space<vmem>>, vector<1x128x384xbf16>
    %54 = vector.shape_cast %53 : vector<1x128x384xbf16> to vector<128x384xbf16>
    %cst_70 = arith.constant dense<0.000000e+00> : vector<256x384xf32>
    %55 = tpu.matmul %52, %54, %cst_70 {dimension_numbers = #tpu.dot_dimension_numbers<[1], [0], [0], [1], [0, 0, 1, 1], [], []>} : vector<256x128xbf16>, vector<128x384xbf16>, vector<256x384xf32> -> vector<256x384xf32>
    %56 = arith.addf %50, %55 : vector<256x384xf32>
    %57 = vector.shape_cast %56 : vector<256x384xf32> to vector<2x8x16x384xf32>
    %58 = vector.extract_strided_slice %57 {offsets = [0, 0, 0, 0], sizes = [2, 8, 8, 128], strides = [1, 1, 1, 1]} : vector<2x8x16x384xf32> to vector<2x8x8x128xf32>
    %59 = vector.extract_strided_slice %57 {offsets = [0, 0, 1, 128], sizes = [2, 8, 8, 128], strides = [1, 1, 1, 1]} : vector<2x8x16x384xf32> to vector<2x8x8x128xf32>
    %60 = arith.addf %58, %59 : vector<2x8x8x128xf32>
    %61 = vector.extract_strided_slice %57 {offsets = [0, 0, 2, 256], sizes = [2, 8, 8, 128], strides = [1, 1, 1, 1]} : vector<2x8x16x384xf32> to vector<2x8x8x128xf32>
    %62 = arith.addf %60, %61 : vector<2x8x8x128xf32>
    %63 = vector.broadcast %3 : vector<1x1x1x128xf32> to vector<2x8x8x128xf32>
    %64 = arith.addf %62, %63 : vector<2x8x8x128xf32>
    %c0_71 = arith.constant 0 : index
    %c1_72 = arith.constant 1 : index
    %c1_73 = arith.constant 1 : index
    %c0_74 = arith.constant 0 : index
    %65 = vector.load %arg1[%c0_71, %c1_72, %c1_73, %c0_74] : memref<2x10x16x128xbf16, #tpu.memory_space<vmem>>, vector<2x8x8x128xbf16>
    %66 = arith.extf %65 : vector<2x8x8x128xbf16> to vector<2x8x8x128xf32>
    %67 = arith.addf %64, %66 : vector<2x8x8x128xf32>
    %cst_75 = arith.constant 0.000000e+00 : f32
    %68 = vector.broadcast %cst_75 : f32 to vector<2x8x8x128xf32>
    %69 = arith.maximumf %67, %68 : vector<2x8x8x128xf32>
    %c0_76 = arith.constant 0 : index
    %c0_77 = arith.constant 0 : index
    %c0_78 = arith.constant 0 : index
    %c0_79 = arith.constant 0 : index
    %70 = vector.load %arg6[%c0_76, %c0_77, %c0_78, %c0_79] : memref<2x8x8x128xf32, #tpu.memory_space<vmem>>, vector<2x8x8x128xf32>
    tpu.vector_store %arg6[%c0_76, %c0_77, %c0_78, %c0_79], %69 {strides = array<i32>} : memref<2x8x8x128xf32, #tpu.memory_space<vmem>>, vector<2x8x8x128xf32>,
    return
  }
  func.func @transform_0(%arg0: i32) -> (i32, i32, i32, i32) {
    %c0_i32 = arith.constant 0 : i32
    %c0_i32_0 = arith.constant 0 : i32
    %c0_i32_1 = arith.constant 0 : i32
    %c0_i32_2 = arith.constant 0 : i32
    return %arg0, %c0_i32, %c0_i32_0, %c0_i32_1 : i32, i32, i32, i32
  }
  func.func @transform_1(%arg0: i32) -> (i32, i32, i32) {
    %c0_i32 = arith.constant 0 : i32
    %c0_i32_0 = arith.constant 0 : i32
    %c0_i32_1 = arith.constant 0 : i32
    %c0_i32_2 = arith.constant 0 : i32
    return %c0_i32, %c0_i32_0, %c0_i32_1 : i32, i32, i32
  }
  func.func @transform_2(%arg0: i32) -> (i32, i32) {
    %c0_i32 = arith.constant 0 : i32
    %c0_i32_0 = arith.constant 0 : i32
    %c0_i32_1 = arith.constant 0 : i32
    return %c0_i32, %c0_i32_0 : i32, i32
  }
  func.func @transform_3(%arg0: i32) -> (i32, i32, i32) {
    %c0_i32 = arith.constant 0 : i32
    %c0_i32_0 = arith.constant 0 : i32
    %c0_i32_1 = arith.constant 0 : i32
    %c0_i32_2 = arith.constant 0 : i32
    return %c0_i32, %c0_i32_0, %c0_i32_1 : i32, i32, i32
  }
  func.func @transform_4(%arg0: i32) -> (i32, i32) {
    %c0_i32 = arith.constant 0 : i32
    %c0_i32_0 = arith.constant 0 : i32
    %c0_i32_1 = arith.constant 0 : i32
    return %c0_i32, %c0_i32_0 : i32, i32
  }
  func.func @transform_5(%arg0: i32) -> (i32, i32, i32, i32) {
    %c0_i32 = arith.constant 0 : i32
    %c0_i32_0 = arith.constant 0 : i32
    %c0_i32_1 = arith.constant 0 : i32
    %c0_i32_2 = arith.constant 0 : i32
    return %arg0, %c0_i32, %c0_i32_0, %c0_i32_1 : i32, i32, i32, i32
  }
}

module attributes {stable_mosaic.version = 11 : i64} {
  func.func @_basic_block_kernel(%arg0: i32, %arg1: memref<2x10x16x128xbf16, #tpu.memory_space<vmem>>, %arg2: memref<3x128x384xbf16, #tpu.memory_space<vmem>>, %arg3: memref<1x128xf32, #tpu.memory_space<vmem>>, %arg4: memref<3x128x384xbf16, #tpu.memory_space<vmem>>, %arg5: memref<1x128xf32, #tpu.memory_space<vmem>>, %arg6: memref<2x8x8x128xf32, #tpu.memory_space<vmem>>, %arg7: memref<2x10x16x128xbf16, #tpu.memory_space<vmem>>) attributes {dimension_semantics = [#tpu.dimension_semantics<parallel>], iteration_bounds = array<i64: 2>, scalar_prefetch = 0 : i64, scratch_operands = 1 : i64, tpu.core_type = #tpu.core_type<tc>, window_params = [{transform_indices = @transform_0, window_bounds = array<i64: 2, 10, 16, 128>}, {pipeline_mode = #tpu.pipeline_mode<synchronous>, transform_indices = @transform_1, window_bounds = array<i64: 3, 128, 384>}, {pipeline_mode = #tpu.pipeline_mode<synchronous>, transform_indices = @transform_2, window_bounds = array<i64: 1, 128>}, {pipeline_mode = #tpu.pipeline_mode<synchronous>, transform_indices = @transform_3, window_bounds = array<i64: 3, 128, 384>}, {pipeline_mode = #tpu.pipeline_mode<synchronous>, transform_indices = @transform_4, window_bounds = array<i64: 1, 128>}, {transform_indices = @transform_5, window_bounds = array<i64: 2, 8, 8, 128>}]} {
    %c0 = arith.constant 0 : index
    %c0_0 = arith.constant 0 : index
    %0 = vector.load %arg3[%c0, %c0_0] : memref<1x128xf32, #tpu.memory_space<vmem>>, vector<1x128xf32>
    %1 = vector.shape_cast %0 : vector<1x128xf32> to vector<1x1x1x128xf32>
    %c0_1 = arith.constant 0 : index
    %c0_2 = arith.constant 0 : index
    %2 = vector.load %arg5[%c0_1, %c0_2] : memref<1x128xf32, #tpu.memory_space<vmem>>, vector<1x128xf32>
    %3 = vector.shape_cast %2 : vector<1x128xf32> to vector<1x1x1x128xf32>
    %c0_3 = arith.constant 0 : index
    %c0_4 = arith.constant 0 : index
    %c0_5 = arith.constant 0 : index
    %c0_6 = arith.constant 0 : index
    %4 = vector.load %arg1[%c0_3, %c0_4, %c0_5, %c0_6] : memref<2x10x16x128xbf16, #tpu.memory_space<vmem>>, vector<2x8x16x128xbf16>
    %5 = vector.shape_cast %4 : vector<2x8x16x128xbf16> to vector<256x128xbf16>
    %c0_7 = arith.constant 0 : index
    %c0_8 = arith.constant 0 : index
    %c0_9 = arith.constant 0 : index
    %6 = vector.load %arg2[%c0_7, %c0_8, %c0_9] : memref<3x128x384xbf16, #tpu.memory_space<vmem>>, vector<1x128x384xbf16>
    %7 = vector.shape_cast %6 : vector<1x128x384xbf16> to vector<128x384xbf16>
    %cst = arith.constant dense<0.000000e+00> : vector<256x384xf32>
    %8 = tpu.matmul %5, %7, %cst {dimension_numbers = #tpu.dot_dimension_numbers<[1], [0], [0], [1], [0, 0, 1, 1], [], []>} : vector<256x128xbf16>, vector<128x384xbf16>, vector<256x384xf32> -> vector<256x384xf32>
    %c0_10 = arith.constant 0 : index
    %c1 = arith.constant 1 : index
    %c0_11 = arith.constant 0 : index
    %c0_12 = arith.constant 0 : index
    %9 = vector.load %arg1[%c0_10, %c1, %c0_11, %c0_12] : memref<2x10x16x128xbf16, #tpu.memory_space<vmem>>, vector<2x8x16x128xbf16>
    %10 = vector.shape_cast %9 : vector<2x8x16x128xbf16> to vector<256x128xbf16>
    %c1_13 = arith.constant 1 : index
    %c0_14 = arith.constant 0 : index
    %c0_15 = arith.constant 0 : index
    %11 = vector.load %arg2[%c1_13, %c0_14, %c0_15] : memref<3x128x384xbf16, #tpu.memory_space<vmem>>, vector<1x128x384xbf16>
    %12 = vector.shape_cast %11 : vector<1x128x384xbf16> to vector<128x384xbf16>
    %cst_16 = arith.constant dense<0.000000e+00> : vector<256x384xf32>
    %13 = tpu.matmul %10, %12, %cst_16 {dimension_numbers = #tpu.dot_dimension_numbers<[1], [0], [0], [1], [0, 0, 1, 1], [], []>} : vector<256x128xbf16>, vector<128x384xbf16>, vector<256x384xf32> -> vector<256x384xf32>
    %14 = arith.addf %8, %13 : vector<256x384xf32>
    %c0_17 = arith.constant 0 : index
    %c2 = arith.constant 2 : index
    %c0_18 = arith.constant 0 : index
    %c0_19 = arith.constant 0 : index
    %15 = vector.load %arg1[%c0_17, %c2, %c0_18, %c0_19] : memref<2x10x16x128xbf16, #tpu.memory_space<vmem>>, vector<2x8x16x128xbf16>
    %16 = vector.shape_cast %15 : vector<2x8x16x128xbf16> to vector<256x128xbf16>
    %c2_20 = arith.constant 2 : index
    %c0_21 = arith.constant 0 : index
    %c0_22 = arith.constant 0 : index
    %17 = vector.load %arg2[%c2_20, %c0_21, %c0_22] : memref<3x128x384xbf16, #tpu.memory_space<vmem>>, vector<1x128x384xbf16>
    %18 = vector.shape_cast %17 : vector<1x128x384xbf16> to vector<128x384xbf16>
    %cst_23 = arith.constant dense<0.000000e+00> : vector<256x384xf32>
    %19 = tpu.matmul %16, %18, %cst_23 {dimension_numbers = #tpu.dot_dimension_numbers<[1], [0], [0], [1], [0, 0, 1, 1], [], []>} : vector<256x128xbf16>, vector<128x384xbf16>, vector<256x384xf32> -> vector<256x384xf32>
    %20 = arith.addf %14, %19 : vector<256x384xf32>
    %21 = vector.shape_cast %20 : vector<256x384xf32> to vector<2x8x16x384xf32>
    %22 = vector.extract_strided_slice %21 {offsets = [0, 0, 0, 0], sizes = [2, 8, 8, 128], strides = [1, 1, 1, 1]} : vector<2x8x16x384xf32> to vector<2x8x8x128xf32>
    %23 = vector.extract_strided_slice %21 {offsets = [0, 0, 1, 128], sizes = [2, 8, 8, 128], strides = [1, 1, 1, 1]} : vector<2x8x16x384xf32> to vector<2x8x8x128xf32>
    %24 = arith.addf %22, %23 : vector<2x8x8x128xf32>
    %25 = vector.extract_strided_slice %21 {offsets = [0, 0, 2, 256], sizes = [2, 8, 8, 128], strides = [1, 1, 1, 1]} : vector<2x8x16x384xf32> to vector<2x8x8x128xf32>
    %26 = arith.addf %24, %25 : vector<2x8x8x128xf32>
    %27 = vector.broadcast %1 : vector<1x1x1x128xf32> to vector<2x8x8x128xf32>
    %28 = arith.addf %26, %27 : vector<2x8x8x128xf32>
    %cst_24 = arith.constant 0.000000e+00 : f32
    %29 = vector.broadcast %cst_24 : f32 to vector<2x8x8x128xf32>
    %30 = arith.maximumf %28, %29 : vector<2x8x8x128xf32>
    %cst_25 = arith.constant 0.000000e+00 : bf16
    %31 = vector.broadcast %cst_25 : bf16 to vector<2x1x16x128xbf16>
    %cst_26 = arith.constant 0.000000e+00 : bf16
    %32 = vector.broadcast %cst_26 : bf16 to vector<2x8x1x128xbf16>
    %cst_27 = arith.constant 0.000000e+00 : bf16
    %33 = vector.broadcast %cst_27 : bf16 to vector<2x8x7x128xbf16>
    %c0_28 = arith.constant 0 : index
    %c0_29 = arith.constant 0 : index
    %c0_30 = arith.constant 0 : index
    %c0_31 = arith.constant 0 : index
    %34 = vector.load %arg7[%c0_28, %c0_29, %c0_30, %c0_31] : memref<2x10x16x128xbf16, #tpu.memory_space<vmem>>, vector<2x1x16x128xbf16>
    tpu.vector_store %arg7[%c0_28, %c0_29, %c0_30, %c0_31], %31 {strides = array<i32>} : memref<2x10x16x128xbf16, #tpu.memory_space<vmem>>, vector<2x1x16x128xbf16>,
    %c0_32 = arith.constant 0 : index
    %c9 = arith.constant 9 : index
    %c0_33 = arith.constant 0 : index
    %c0_34 = arith.constant 0 : index
    %35 = vector.load %arg7[%c0_32, %c9, %c0_33, %c0_34] : memref<2x10x16x128xbf16, #tpu.memory_space<vmem>>, vector<2x1x16x128xbf16>
    tpu.vector_store %arg7[%c0_32, %c9, %c0_33, %c0_34], %31 {strides = array<i32>} : memref<2x10x16x128xbf16, #tpu.memory_space<vmem>>, vector<2x1x16x128xbf16>,
    %c0_35 = arith.constant 0 : index
    %c1_36 = arith.constant 1 : index
    %c0_37 = arith.constant 0 : index
    %c0_38 = arith.constant 0 : index
    %36 = vector.load %arg7[%c0_35, %c1_36, %c0_37, %c0_38] : memref<2x10x16x128xbf16, #tpu.memory_space<vmem>>, vector<2x8x1x128xbf16>
    tpu.vector_store %arg7[%c0_35, %c1_36, %c0_37, %c0_38], %32 {strides = array<i32>} : memref<2x10x16x128xbf16, #tpu.memory_space<vmem>>, vector<2x8x1x128xbf16>,
    %c0_39 = arith.constant 0 : index
    %c1_40 = arith.constant 1 : index
    %c9_41 = arith.constant 9 : index
    %c0_42 = arith.constant 0 : index
    %37 = vector.load %arg7[%c0_39, %c1_40, %c9_41, %c0_42] : memref<2x10x16x128xbf16, #tpu.memory_space<vmem>>, vector<2x8x7x128xbf16>
    tpu.vector_store %arg7[%c0_39, %c1_40, %c9_41, %c0_42], %33 {strides = array<i32>} : memref<2x10x16x128xbf16, #tpu.memory_space<vmem>>, vector<2x8x7x128xbf16>,
    %38 = arith.truncf %30 : vector<2x8x8x128xf32> to vector<2x8x8x128xbf16>
    %c0_43 = arith.constant 0 : index
    %c1_44 = arith.constant 1 : index
    %c1_45 = arith.constant 1 : index
    %c0_46 = arith.constant 0 : index
    %39 = vector.load %arg7[%c0_43, %c1_44, %c1_45, %c0_46] : memref<2x10x16x128xbf16, #tpu.memory_space<vmem>>, vector<2x8x8x128xbf16>
    tpu.vector_store %arg7[%c0_43, %c1_44, %c1_45, %c0_46], %38 {strides = array<i32>} : memref<2x10x16x128xbf16, #tpu.memory_space<vmem>>, vector<2x8x8x128xbf16>,
    %c0_47 = arith.constant 0 : index
    %c0_48 = arith.constant 0 : index
    %c0_49 = arith.constant 0 : index
    %c0_50 = arith.constant 0 : index
    %40 = vector.load %arg7[%c0_47, %c0_48, %c0_49, %c0_50] : memref<2x10x16x128xbf16, #tpu.memory_space<vmem>>, vector<2x8x16x128xbf16>
    %41 = vector.shape_cast %40 : vector<2x8x16x128xbf16> to vector<256x128xbf16>
    %c0_51 = arith.constant 0 : index
    %c0_52 = arith.constant 0 : index
    %c0_53 = arith.constant 0 : index
    %42 = vector.load %arg4[%c0_51, %c0_52, %c0_53] : memref<3x128x384xbf16, #tpu.memory_space<vmem>>, vector<1x128x384xbf16>
    %43 = vector.shape_cast %42 : vector<1x128x384xbf16> to vector<128x384xbf16>
    %cst_54 = arith.constant dense<0.000000e+00> : vector<256x384xf32>
    %44 = tpu.matmul %41, %43, %cst_54 {dimension_numbers = #tpu.dot_dimension_numbers<[1], [0], [0], [1], [0, 0, 1, 1], [], []>} : vector<256x128xbf16>, vector<128x384xbf16>, vector<256x384xf32> -> vector<256x384xf32>
    %c0_55 = arith.constant 0 : index
    %c1_56 = arith.constant 1 : index
    %c0_57 = arith.constant 0 : index
    %c0_58 = arith.constant 0 : index
    %45 = vector.load %arg7[%c0_55, %c1_56, %c0_57, %c0_58] : memref<2x10x16x128xbf16, #tpu.memory_space<vmem>>, vector<2x8x16x128xbf16>
    %46 = vector.shape_cast %45 : vector<2x8x16x128xbf16> to vector<256x128xbf16>
    %c1_59 = arith.constant 1 : index
    %c0_60 = arith.constant 0 : index
    %c0_61 = arith.constant 0 : index
    %47 = vector.load %arg4[%c1_59, %c0_60, %c0_61] : memref<3x128x384xbf16, #tpu.memory_space<vmem>>, vector<1x128x384xbf16>
    %48 = vector.shape_cast %47 : vector<1x128x384xbf16> to vector<128x384xbf16>
    %cst_62 = arith.constant dense<0.000000e+00> : vector<256x384xf32>
    %49 = tpu.matmul %46, %48, %cst_62 {dimension_numbers = #tpu.dot_dimension_numbers<[1], [0], [0], [1], [0, 0, 1, 1], [], []>} : vector<256x128xbf16>, vector<128x384xbf16>, vector<256x384xf32> -> vector<256x384xf32>
    %50 = arith.addf %44, %49 : vector<256x384xf32>
    %c0_63 = arith.constant 0 : index
    %c2_64 = arith.constant 2 : index
    %c0_65 = arith.constant 0 : index
    %c0_66 = arith.constant 0 : index
    %51 = vector.load %arg7[%c0_63, %c2_64, %c0_65, %c0_66] : memref<2x10x16x128xbf16, #tpu.memory_space<vmem>>, vector<2x8x16x128xbf16>
    %52 = vector.shape_cast %51 : vector<2x8x16x128xbf16> to vector<256x128xbf16>
    %c2_67 = arith.constant 2 : index
    %c0_68 = arith.constant 0 : index
    %c0_69 = arith.constant 0 : index
    %53 = vector.load %arg4[%c2_67, %c0_68, %c0_69] : memref<3x128x384xbf16, #tpu.memory_space<vmem>>, vector<1x128x384xbf16>
    %54 = vector.shape_cast %53 : vector<1x128x384xbf16> to vector<128x384xbf16>
    %cst_70 = arith.constant dense<0.000000e+00> : vector<256x384xf32>
    %55 = tpu.matmul %52, %54, %cst_70 {dimension_numbers = #tpu.dot_dimension_numbers<[1], [0], [0], [1], [0, 0, 1, 1], [], []>} : vector<256x128xbf16>, vector<128x384xbf16>, vector<256x384xf32> -> vector<256x384xf32>
    %56 = arith.addf %50, %55 : vector<256x384xf32>
    %57 = vector.shape_cast %56 : vector<256x384xf32> to vector<2x8x16x384xf32>
    %58 = vector.extract_strided_slice %57 {offsets = [0, 0, 0, 0], sizes = [2, 8, 8, 128], strides = [1, 1, 1, 1]} : vector<2x8x16x384xf32> to vector<2x8x8x128xf32>
    %59 = vector.extract_strided_slice %57 {offsets = [0, 0, 1, 128], sizes = [2, 8, 8, 128], strides = [1, 1, 1, 1]} : vector<2x8x16x384xf32> to vector<2x8x8x128xf32>
    %60 = arith.addf %58, %59 : vector<2x8x8x128xf32>
    %61 = vector.extract_strided_slice %57 {offsets = [0, 0, 2, 256], sizes = [2, 8, 8, 128], strides = [1, 1, 1, 1]} : vector<2x8x16x384xf32> to vector<2x8x8x128xf32>
    %62 = arith.addf %60, %61 : vector<2x8x8x128xf32>
    %63 = vector.broadcast %3 : vector<1x1x1x128xf32> to vector<2x8x8x128xf32>
    %64 = arith.addf %62, %63 : vector<2x8x8x128xf32>
    %c0_71 = arith.constant 0 : index
    %c1_72 = arith.constant 1 : index
    %c1_73 = arith.constant 1 : index
    %c0_74 = arith.constant 0 : index
    %65 = vector.load %arg1[%c0_71, %c1_72, %c1_73, %c0_74] : memref<2x10x16x128xbf16, #tpu.memory_space<vmem>>, vector<2x8x8x128xbf16>
    %66 = arith.extf %65 : vector<2x8x8x128xbf16> to vector<2x8x8x128xf32>
    %67 = arith.addf %64, %66 : vector<2x8x8x128xf32>
    %cst_75 = arith.constant 0.000000e+00 : f32
    %68 = vector.broadcast %cst_75 : f32 to vector<2x8x8x128xf32>
    %69 = arith.maximumf %67, %68 : vector<2x8x8x128xf32>
    %c0_76 = arith.constant 0 : index
    %c0_77 = arith.constant 0 : index
    %c0_78 = arith.constant 0 : index
    %c0_79 = arith.constant 0 : index
    %70 = vector.load %arg6[%c0_76, %c0_77, %c0_78, %c0_79] : memref<2x8x8x128xf32, #tpu.memory_space<vmem>>, vector<2x8x8x128xf32>
    tpu.vector_store %arg6[%c0_76, %c0_77, %c0_78, %c0_79], %69 {strides = array<i32>} : memref<2x8x8x128xf32, #tpu.memory_space<vmem>>, vector<2x8x8x128xf32>,
    return
  }
  func.func @transform_0(%arg0: i32) -> (i32, i32, i32, i32) {
    %c0_i32 = arith.constant 0 : i32
    %c0_i32_0 = arith.constant 0 : i32
    %c0_i32_1 = arith.constant 0 : i32
    %c0_i32_2 = arith.constant 0 : i32
    return %arg0, %c0_i32, %c0_i32_0, %c0_i32_1 : i32, i32, i32, i32
  }
  func.func @transform_1(%arg0: i32) -> (i32, i32, i32) {
    %c0_i32 = arith.constant 0 : i32
    %c0_i32_0 = arith.constant 0 : i32
    %c0_i32_1 = arith.constant 0 : i32
    %c0_i32_2 = arith.constant 0 : i32
    return %c0_i32, %c0_i32_0, %c0_i32_1 : i32, i32, i32
  }
  func.func @transform_2(%arg0: i32) -> (i32, i32) {
    %c0_i32 = arith.constant 0 : i32
    %c0_i32_0 = arith.constant 0 : i32
    %c0_i32_1 = arith.constant 0 : i32
    return %c0_i32, %c0_i32_0 : i32, i32
  }
  func.func @transform_3(%arg0: i32) -> (i32, i32, i32) {
    %c0_i32 = arith.constant 0 : i32
    %c0_i32_0 = arith.constant 0 : i32
    %c0_i32_1 = arith.constant 0 : i32
    %c0_i32_2 = arith.constant 0 : i32
    return %c0_i32, %c0_i32_0, %c0_i32_1 : i32, i32, i32
  }
  func.func @transform_4(%arg0: i32) -> (i32, i32) {
    %c0_i32 = arith.constant 0 : i32
    %c0_i32_0 = arith.constant 0 : i32
    %c0_i32_1 = arith.constant 0 : i32
    return %c0_i32, %c0_i32_0 : i32, i32
  }
  func.func @transform_5(%arg0: i32) -> (i32, i32, i32, i32) {
    %c0_i32 = arith.constant 0 : i32
    %c0_i32_0 = arith.constant 0 : i32
    %c0_i32_1 = arith.constant 0 : i32
    %c0_i32_2 = arith.constant 0 : i32
    return %arg0, %c0_i32, %c0_i32_0, %c0_i32_1 : i32, i32, i32, i32
  }
}

</mosaic_0001>

<llo_original>
// kernel: tpu_custom_call.1
$region0: #{tpu_custom_call.1}
  #allocation0 [shape = 'u32[]', space=smem, size = 0x4, offset = 0x4, fixed_abs, tag = 'smem constant byte address 0x4 - core index']
  #allocation1 [shape = 'u32[144,128]{1,0:T(1,128)}', space=vmem, size = 0x12000, scoped, tag = 'internal scratch']
  #allocation2 [shape = 'bf16[2,10,16,128]{3,2,1,0:T(16,128)(2,1)}', space=vmem, size = 0x14000, scoped, tag = 'scratch operand']
  %s0 = inlined_call_operand.hbm [shape: bf16[4,10,16,128], index: 0, kind: input, shape index: {}]
  %s1 = inlined_call_operand.hbm [shape: bf16[3,128,384], index: 1, kind: input, shape index: {}]
  %s2 = inlined_call_operand.vmem [shape: f32[1,128], index: 2, kind: input, shape index: {}]
  %s3 = inlined_call_operand.hbm [shape: bf16[3,128,384], index: 3, kind: input, shape index: {}]
  %s4 = inlined_call_operand.vmem [shape: f32[1,128], index: 4, kind: input, shape index: {}]
  %s5 = inlined_call_operand.hbm [shape: f32[4,8,8,128], index: 5, kind: output, shape index: {}]
  %s6 = sld [smem:[#allocation0]]
  $region65: #{tpu_custom_call.1} parent=0
    _
  %s8 = ssub.s32 1, %s6
  %s9 = scalar_select 0, %s8, %s6
  $region1: #{tpu_custom_call.1} parent=0
    #allocation3 [shape = 'u8[163840]{0}', space=vmem, size = 0x28000, scoped, tag = 'input window, operand 0']
    #allocation4 [shape = 's32[2]{0}', space=sflag, size = 0x8, scoped, tag = 'scoped memory for tpu_custom_call.1']
    #allocation5 [shape = 's32[2]{0}', space=sflag, size = 0x8, scoped, tag = 'scoped memory for tpu_custom_call.1']
    #allocation6 [shape = 'u8[294912]{0}', space=vmem, size = 0x48000, scoped, tag = 'input window, operand 1, single buffered']
    #allocation7 [shape = 's32[1]{0}', space=sflag, size = 0x4, scoped, tag = 'scoped memory for tpu_custom_call.1']
    #allocation8 [shape = 'u8[294912]{0}', space=vmem, size = 0x48000, scoped, tag = 'input window, operand 3, single buffered']
    #allocation9 [shape = 'u8[131072]{0}', space=vmem, size = 0x20000, scoped, tag = 'output window, operand 0']
    %10 = vsyncpa [#allocation4], 0
    %s11 = scalar_lea.sflag [#allocation4], 1
    %12 = vsyncpa %s11, 0
    %13 = vsyncpa [#allocation7], 0
    %14 = vsyncpa [#allocation5], 0
    %s15 = scalar_lea.sflag [#allocation5], 1
    %16 = vsyncpa %s15, 0
    loop: start=0, step=1, limit=4
    $region2: #{tpu_custom_call.1} parent=1 // loop_pre_header
      _
    $region3: #{tpu_custom_call.1} parent=1 // loop_header
      %s18 = sphi 0, %s22
      %p19 = scmp.ge.s32.totalorder %s18, 4
      %s28 = sphi 0, %s30
      %s31 = sphi 0, %s28
      %s32 = sphi 0, %s31
      %s48 = sphi 0, %s32
      %s52 = sphi 0, %s52
      %s54 = sphi 0, %s52
      %s55 = sphi 0, %s54
      %s69 = sphi 0, %s55
      %s73 = sphi 0, %s73
      %s75 = sphi 0, %s73
      %s76 = sphi 0, %s75
      %s90 = sphi 0, %s76
      %s94 = sphi 0, %s94
      %s96 = sphi 0, %s94
      %s97 = sphi 0, %s96
      %s111 = sphi 0, %s97
      %s115 = sphi 0, %s115
      %s117 = sphi 0, %s115
      %s118 = sphi 0, %s117
      %s132 = sphi 0, %s118
      %s138 = sphi 0, %s140
      %s141 = sphi 0, %s138
      %s142 = sphi 0, %s141
      %s158 = sphi 0, %s142
    $region4: #{tpu_custom_call.1} parent=1 // loop_header_branch
      %21 = sbr.rel (%p19) target = $region8
    $region5: #{tpu_custom_call.1} parent=1 // loop_body
      %s23 = ssub.s32 %s18, 1
      %s24 = ssub.s32 %s18, 2
      %s25 = sadd.s32 %s18, 1
      %s26 = ssub.s32 %s18, %s25
      %p27 = scmp.eq.s32.totalorder %s26, 0
      %s29 = sadd.s32 %s28, 1
      %s30 = scalar_select %p27, %s28, %s29
      %p33 = pneg %p27
      %p34 = scmp.eq.s32.totalorder %s18, 1
      %p35 = por %p33, %p34
      %p36 = scmp.ne.s32.totalorder %s28, %s31
      %p37 = scmp.eq.s32.totalorder %s18, 0
      %p38 = por %p36, %p37
      %p39 = scmp.ne.s32.totalorder %s28, %s31
      %p40 = scmp.eq.s32.totalorder %s23, 1
      %p41 = por %p39, %p40
      %p42 = scmp.ne.s32.totalorder %s31, %s32
      %p43 = scmp.eq.s32.totalorder %s23, 0
      %p44 = por %p42, %p43
      %p45 = scmp.ne.s32.totalorder %s31, %s32
      %p46 = scmp.eq.s32.totalorder %s24, 1
      %p47 = por %p45, %p46
      %p49 = scmp.ne.s32.totalorder %s32, %s48
      %p50 = scmp.eq.s32.totalorder %s24, 0
      %p51 = por %p49, %p50
      %s53 = sadd.s32 %s52, 1
      %p56 = scmp.eq.s32.totalorder %s18, 1
      %p57 = scmp.ne.s32.totalorder %s52, %s54
      %p58 = scmp.eq.s32.totalorder %s18, 0
      %p59 = por %p57, %p58
      %p60 = scmp.ne.s32.totalorder %s52, %s54
      %p61 = scmp.eq.s32.totalorder %s23, 1
      %p62 = por %p60, %p61
      %p63 = scmp.ne.s32.totalorder %s54, %s55
      %p64 = scmp.eq.s32.totalorder %s23, 0
      %p65 = por %p63, %p64
      %p66 = scmp.ne.s32.totalorder %s54, %s55
      %p67 = scmp.eq.s32.totalorder %s24, 1
      %p68 = por %p66, %p67
      %p70 = scmp.ne.s32.totalorder %s55, %s69
      %p71 = scmp.eq.s32.totalorder %s24, 0
      %p72 = por %p70, %p71
      %s74 = sadd.s32 %s73, 1
      %p77 = scmp.eq.s32.totalorder %s18, 1
      %p78 = scmp.ne.s32.totalorder %s73, %s75
      %p79 = scmp.eq.s32.totalorder %s18, 0
      %p80 = por %p78, %p79
      %p81 = scmp.ne.s32.totalorder %s73, %s75
      %p82 = scmp.eq.s32.totalorder %s23, 1
      %p83 = por %p81, %p82
      %p84 = scmp.ne.s32.totalorder %s75, %s76
      %p85 = scmp.eq.s32.totalorder %s23, 0
      %p86 = por %p84, %p85
      %p87 = scmp.ne.s32.totalorder %s75, %s76
      %p88 = scmp.eq.s32.totalorder %s24, 1
      %p89 = por %p87, %p88
      %p91 = scmp.ne.s32.totalorder %s76, %s90
      %p92 = scmp.eq.s32.totalorder %s24, 0
      %p93 = por %p91, %p92
      %s95 = sadd.s32 %s94, 1
      %p98 = scmp.eq.s32.totalorder %s18, 1
      %p99 = scmp.ne.s32.totalorder %s94, %s96
      %p100 = scmp.eq.s32.totalorder %s18, 0
      %p101 = por %p99, %p100
      %p102 = scmp.ne.s32.totalorder %s94, %s96
      %p103 = scmp.eq.s32.totalorder %s23, 1
      %p104 = por %p102, %p103
      %p105 = scmp.ne.s32.totalorder %s96, %s97
      %p106 = scmp.eq.s32.totalorder %s23, 0
      %p107 = por %p105, %p106
      %p108 = scmp.ne.s32.totalorder %s96, %s97
      %p109 = scmp.eq.s32.totalorder %s24, 1
      %p110 = por %p108, %p109
      %p112 = scmp.ne.s32.totalorder %s97, %s111
      %p113 = scmp.eq.s32.totalorder %s24, 0
      %p114 = por %p112, %p113
      %s116 = sadd.s32 %s115, 1
      %p119 = scmp.eq.s32.totalorder %s18, 1
      %p120 = scmp.ne.s32.totalorder %s115, %s117
      %p121 = scmp.eq.s32.totalorder %s18, 0
      %p122 = por %p120, %p121
      %p123 = scmp.ne.s32.totalorder %s115, %s117
      %p124 = scmp.eq.s32.totalorder %s23, 1
      %p125 = por %p123, %p124
      %p126 = scmp.ne.s32.totalorder %s117, %s118
      %p127 = scmp.eq.s32.totalorder %s23, 0
      %p128 = por %p126, %p127
      %p129 = scmp.ne.s32.totalorder %s117, %s118
      %p130 = scmp.eq.s32.totalorder %s24, 1
      %p131 = por %p129, %p130
      %p133 = scmp.ne.s32.totalorder %s118, %s132
      %p134 = scmp.eq.s32.totalorder %s24, 0
      %p135 = por %p133, %p134
      %s136 = ssub.s32 %s18, %s25
      %p137 = scmp.eq.s32.totalorder %s136, 0
      %s139 = sadd.s32 %s138, 1
      %s140 = scalar_select %p137, %s138, %s139
      %p143 = pneg %p137
      %p144 = scmp.eq.s32.totalorder %s18, 1
      %p145 = por %p143, %p144
      %p146 = scmp.ne.s32.totalorder %s138, %s141
      %p147 = scmp.eq.s32.totalorder %s18, 0
      %p148 = por %p146, %p147
      %p149 = scmp.ne.s32.totalorder %s138, %s141
      %p150 = scmp.eq.s32.totalorder %s23, 1
      %p151 = por %p149, %p150
      %p152 = scmp.ne.s32.totalorder %s141, %s142
      %p153 = scmp.eq.s32.totalorder %s23, 0
      %p154 = por %p152, %p153
      %p155 = scmp.ne.s32.totalorder %s141, %s142
      %p156 = scmp.eq.s32.totalorder %s24, 1
      %p157 = por %p155, %p156
      %p159 = scmp.ne.s32.totalorder %s142, %s158
      %p160 = scmp.eq.s32.totalorder %s24, 0
      %p161 = por %p159, %p160
      %p162 = scmp.le.s32.totalorder 1, %s18
      %p163 = scmp.lt.s32.totalorder %s18, 3
      %p164 = pnand %p162, %p163
      %p165 = pneg %p164
      // Predicated region
      $region9: #{tpu_custom_call.1} parent=5 // pred_check
        _
      $region10: #{tpu_custom_call.1} parent=5 // pred_check_branch
        %167 = sbr.rel (%p164) target = $region12
      $region11: #{tpu_custom_call.1} parent=5 // pred_region
        %s168 = ssub.s32 %s18, 1
        // Predicated region
        $region13: #{tpu_custom_call.1} parent=11 // pred_check
          %p169 = pneg %p65
        $region14: #{tpu_custom_call.1} parent=11 // pred_check_branch
          %171 = sbr.rel (%p169) target = $region16
        $region15: #{tpu_custom_call.1} parent=11 // pred_region
          %s173 = ssub.s32 9216, 9216
          %174 = vsyncadd [#allocation7], %s173
          %s175 = sshll.u32 [#allocation6], 4
          %s176 = int_to_ptr.vmem [resolvable:$true] %s175
          %181 = dma.hbm_to_vmem [thread:$0]  %s1, 9216, %s176, [#allocation7], 192, 192, 12
        $region16: #{tpu_custom_call.1} parent=11 // pred_fallthru
          _
        // Predicated region
        $region17: #{tpu_custom_call.1} parent=11 // pred_check
          %p182 = pneg %p86
        $region18: #{tpu_custom_call.1} parent=11 // pred_check_branch
          %184 = sbr.rel (%p182) target = $region20
        $region19: #{tpu_custom_call.1} parent=11 // pred_region
          _
        $region20: #{tpu_custom_call.1} parent=11 // pred_fallthru
          _
        // Predicated region
        $region21: #{tpu_custom_call.1} parent=11 // pred_check
          %p185 = pneg %p107
        $region22: #{tpu_custom_call.1} parent=11 // pred_check_branch
          %187 = sbr.rel (%p185) target = $region24
        $region23: #{tpu_custom_call.1} parent=11 // pred_region
          %s189 = ssub.s32 9216, 9216
          %190 = vsyncadd [#allocation7], %s189
          %s191 = sshll.u32 [#allocation8], 4
          %s192 = int_to_ptr.vmem [resolvable:$true] %s191
          %197 = dma.hbm_to_vmem [thread:$0]  %s3, 9216, %s192, [#allocation7], 192, 192, 12
        $region24: #{tpu_custom_call.1} parent=11 // pred_fallthru
          _
        // Predicated region
        $region25: #{tpu_custom_call.1} parent=11 // pred_check
          %p198 = pneg %p128
        $region26: #{tpu_custom_call.1} parent=11 // pred_check_branch
          %200 = sbr.rel (%p198) target = $region28
        $region27: #{tpu_custom_call.1} parent=11 // pred_region
          _
        $region28: #{tpu_custom_call.1} parent=11 // pred_fallthru
          _
      $region12: #{tpu_custom_call.1} parent=5 // pred_fallthru
        _
      %p201 = scmp.lt.s32.totalorder %s18, 2
      // Predicated region
      $region29: #{tpu_custom_call.1} parent=5 // pred_check
        %p202 = pneg %p201
      $region30: #{tpu_custom_call.1} parent=5 // pred_check_branch
        %204 = sbr.rel (%p202) target = $region32
      $region31: #{tpu_custom_call.1} parent=5 // pred_region
        // Predicated region
        $region33: #{tpu_custom_call.1} parent=31 // pred_check
          %p205 = pneg %p38
        $region34: #{tpu_custom_call.1} parent=31 // pred_check_branch
          %207 = sbr.rel (%p205) target = $region36
        $region35: #{tpu_custom_call.1} parent=31 // pred_region
          %s208 = sand.u32 %s28, 1
          %s209 = scalar_lea.sflag [#allocation4], %s208
          %s210 = sand.u32 %s28, 1
          %s211 = smul.addr %s210, 160
          %s212 = scalar_lea.vmem [#allocation3], %s211
          %s213 = smul.u32 2, %s18
          %s215 = ssub.s32 2560, 2560
          %216 = vsyncadd %s209, %s215
          %s217 = smul.addr %s213, 20
          %s218 = smul.addr %s217, 64
          %s219 = scalar_lea.hbm %s0, %s218
          %s220 = sshll.u32 %s212, 4
          %s221 = int_to_ptr.vmem [resolvable:$true] %s220
          %226 = dma.hbm_to_vmem [thread:$0]  %s219, 2560, %s221, %s209, 64, 64, 4
        $region36: #{tpu_custom_call.1} parent=31 // pred_fallthru
          _
      $region32: #{tpu_custom_call.1} parent=5 // pred_fallthru
        _
      %p227 = scmp.le.s32.totalorder 1, %s18
      %p228 = scmp.lt.s32.totalorder %s18, 3
      %p229 = pnand %p227, %p228
      %p230 = pneg %p229
      // Predicated region
      $region37: #{tpu_custom_call.1} parent=5 // pred_check
        _
      $region38: #{tpu_custom_call.1} parent=5 // pred_check_branch
        %232 = sbr.rel (%p229) target = $region40
      $region39: #{tpu_custom_call.1} parent=5 // pred_region
        %s233 = ssub.s32 %s18, 1
        %s234 = sand.u32 %s31, 1
        %s235 = scalar_lea.sflag [#allocation4], %s234
        %s236 = sand.u32 %s31, 1
        %s237 = smul.addr %s236, 160
        %s238 = scalar_lea.vmem [#allocation3], %s237
        // Predicated region
        $region41: #{tpu_custom_call.1} parent=39 // pred_check
          %p239 = pneg %p44
        $region42: #{tpu_custom_call.1} parent=39 // pred_check_branch
          %241 = sbr.rel (%p239) target = $region44
        $region43: #{tpu_custom_call.1} parent=39 // pred_region
          %242 = dma.done %s235, 2560
        $region44: #{tpu_custom_call.1} parent=39 // pred_fallthru
          _
        // Predicated region
        $region45: #{tpu_custom_call.1} parent=39 // pred_check
          %p243 = pneg %p65
        $region46: #{tpu_custom_call.1} parent=39 // pred_check_branch
          %245 = sbr.rel (%p243) target = $region48
        $region47: #{tpu_custom_call.1} parent=39 // pred_region
          %246 = dma.done [#allocation7], 9216
        $region48: #{tpu_custom_call.1} parent=39 // pred_fallthru
          _
        // Predicated region
        $region49: #{tpu_custom_call.1} parent=39 // pred_check
          %p247 = pneg %p107
        $region50: #{tpu_custom_call.1} parent=39 // pred_check_branch
          %249 = sbr.rel (%p247) target = $region52
        $region51: #{tpu_custom_call.1} parent=39 // pred_region
          %250 = dma.done [#allocation7], 9216
        $region52: #{tpu_custom_call.1} parent=39 // pred_fallthru
          _
        %s251 = sand.u32 %s31, 1
        %s252 = scalar_lea.sflag [#allocation4], %s251
        %s253 = sand.u32 %s31, 1
        %s254 = smul.addr %s253, 160
        %s255 = scalar_lea.vmem [#allocation3], %s254
        %p256 = pneg %p44
        %p257 = pneg %p41
        %p258 = pneg %p65
        %p259 = pneg %p62
        %p260 = pneg %p86
        %p261 = pneg %p83
        %p262 = pneg %p107
        %p263 = pneg %p104
        %p264 = pneg %p128
        %p265 = pneg %p125
        %p266 = pneg %p154
        %p267 = pneg %p151
        %s268 = sand.u32 %s141, 1
        %s269 = scalar_lea.sflag [#allocation5], %s268
        %s270 = sand.u32 %s141, 1
        %s271 = smul.addr %s270, 128
        %s272 = scalar_lea.vmem [#allocation9], %s271
        %s273 = smul.u32 2, %s23
        %s274 = smul.u32 2, %s23
        %v276 = vld [vmem:[%s2] sm:$0x1]
        %v277 = vld [vmem:[%s4] sm:$0x1]
        %v278 = vld [vmem:[%s238] sm:$0xf]
        %v279 = vld [vmem:[%s238 + $0x4] sm:$0xf]
        %v280 = vld [vmem:[%s238 + $0x8] sm:$0xf]
        %v281 = vld [vmem:[%s238 + $0xc] sm:$0xf]
        %v282 = vld [vmem:[%s238 + $0x10] sm:$0xf]
        %v283 = vld [vmem:[%s238 + $0x14] sm:$0xf]
        %v284 = vld [vmem:[%s238 + $0x18] sm:$0xf]
        %v285 = vld [vmem:[%s238 + $0x1c] sm:$0xf]
        %v286 = vld [vmem:[%s238 + $0x20] sm:$0xf]
        %v287 = vld [vmem:[%s238 + $0x24] sm:$0xf]
        %v288 = vld [vmem:[%s238 + $0x28] sm:$0xf]
        %v289 = vld [vmem:[%s238 + $0x2c] sm:$0xf]
        %v290 = vld [vmem:[%s238 + $0x30] sm:$0xf]
        %v291 = vld [vmem:[%s238 + $0x34] sm:$0xf]
        %v292 = vld [vmem:[%s238 + $0x38] sm:$0xf]
        %v293 = vld [vmem:[%s238 + $0x3c] sm:$0xf]
        %v294 = vld [vmem:[%s238 + $0x50] sm:$0xf]
        %v295 = vld [vmem:[%s238 + $0x54] sm:$0xf]
        %v296 = vld [vmem:[%s238 + $0x58] sm:$0xf]
        %v297 = vld [vmem:[%s238 + $0x5c] sm:$0xf]
        %v298 = vld [vmem:[%s238 + $0x60] sm:$0xf]
        %v299 = vld [vmem:[%s238 + $0x64] sm:$0xf]
        %v300 = vld [vmem:[%s238 + $0x68] sm:$0xf]
        %v301 = vld [vmem:[%s238 + $0x6c] sm:$0xf]
        %v302 = vld [vmem:[%s238 + $0x70] sm:$0xf]
        %v303 = vld [vmem:[%s238 + $0x74] sm:$0xf]
        %v304 = vld [vmem:[%s238 + $0x78] sm:$0xf]
        %v305 = vld [vmem:[%s238 + $0x7c] sm:$0xf]
        %v306 = vld [vmem:[%s238 + $0x80] sm:$0xf]
        %v307 = vld [vmem:[%s238 + $0x84] sm:$0xf]
        %v308 = vld [vmem:[%s238 + $0x88] sm:$0xf]
        %v309 = vld [vmem:[%s238 + $0x8c] sm:$0xf]
        %v310 = vld [vmem:[#allocation6] sm:$0xff]
        %v311 = vld [vmem:[#allocation6 + $0x8] sm:$0xf]
        %v312 = vld [vmem:[#allocation6 + $0xc] sm:$0xff]
        %v313 = vld [vmem:[#allocation6 + $0x14] sm:$0xf]
        %v314 = vld [vmem:[#allocation6 + $0x18] sm:$0xff]
        %v315 = vld [vmem:[#allocation6 + $0x20] sm:$0xf]
        %v316 = vld [vmem:[#allocation6 + $0x24] sm:$0xff]
        %v317 = vld [vmem:[#allocation6 + $0x2c] sm:$0xf]
        %v318 = vld [vmem:[#allocation6 + $0x30] sm:$0xff]
        %v319 = vld [vmem:[#allocation6 + $0x38] sm:$0xf]
        %v320 = vld [vmem:[#allocation6 + $0x3c] sm:$0xff]
        %v321 = vld [vmem:[#allocation6 + $0x44] sm:$0xf]
        %v322 = vld [vmem:[#allocation6 + $0x48] sm:$0xff]
        %v323 = vld [vmem:[#allocation6 + $0x50] sm:$0xf]
        %v324 = vld [vmem:[#allocation6 + $0x54] sm:$0xff]
        %v325 = vld [vmem:[#allocation6 + $0x5c] sm:$0xf]
        %v326 = vld [vmem:[#allocation6 + $0x60] sm:$0xff]
        %v327 = vld [vmem:[#allocation6 + $0x68] sm:$0xf]
        %v328 = vld [vmem:[#allocation6 + $0x6c] sm:$0xff]
        %v329 = vld [vmem:[#allocation6 + $0x74] sm:$0xf]
        %v330 = vld [vmem:[#allocation6 + $0x78] sm:$0xff]
        %v331 = vld [vmem:[#allocation6 + $0x80] sm:$0xf]
        %v332 = vld [vmem:[#allocation6 + $0x84] sm:$0xff]
        %v333 = vld [vmem:[#allocation6 + $0x8c] sm:$0xf]
        %v334 = vld [vmem:[#allocation6 + $0x90] sm:$0xff]
        %v335 = vld [vmem:[#allocation6 + $0x98] sm:$0xf]
        %v336 = vld [vmem:[#allocation6 + $0x9c] sm:$0xff]
        %v337 = vld [vmem:[#allocation6 + $0xa4] sm:$0xf]
        %v338 = vld [vmem:[#allocation6 + $0xa8] sm:$0xff]
        %v339 = vld [vmem:[#allocation6 + $0xb0] sm:$0xf]
        %v340 = vld [vmem:[#allocation6 + $0xb4] sm:$0xff]
        %v341 = vld [vmem:[#allocation6 + $0xbc] sm:$0xf]
        %s342 = scalar_lea.vmem %s238, 8 [#allocation3]
        %v343 = vld [vmem:[%s342] sm:$0xf]
        %v344 = vld [vmem:[%s342 + $0x4] sm:$0xf]
        %v345 = vld [vmem:[%s342 + $0x8] sm:$0xf]
        %v346 = vld [vmem:[%s342 + $0xc] sm:$0xf]
        %v347 = vld [vmem:[%s342 + $0x10] sm:$0xf]
        %v348 = vld [vmem:[%s342 + $0x14] sm:$0xf]
        %v349 = vld [vmem:[%s342 + $0x18] sm:$0xf]
        %v350 = vld [vmem:[%s342 + $0x1c] sm:$0xf]
        %v351 = vld [vmem:[%s342 + $0x20] sm:$0xf]
        %v352 = vld [vmem:[%s342 + $0x24] sm:$0xf]
        %v353 = vld [vmem:[%s342 + $0x28] sm:$0xf]
        %v354 = vld [vmem:[%s342 + $0x2c] sm:$0xf]
        %v355 = vld [vmem:[%s342 + $0x30] sm:$0xf]
        %v356 = vld [vmem:[%s342 + $0x34] sm:$0xf]
        %v357 = vld [vmem:[%s342 + $0x38] sm:$0xf]
        %v358 = vld [vmem:[%s342 + $0x3c] sm:$0xf]
        %v359 = vld [vmem:[%s342 + $0x50] sm:$0xf]
        %v360 = vld [vmem:[%s342 + $0x54] sm:$0xf]
        %v361 = vld [vmem:[%s342 + $0x58] sm:$0xf]
        %v362 = vld [vmem:[%s342 + $0x5c] sm:$0xf]
        %v363 = vld [vmem:[%s342 + $0x60] sm:$0xf]
        %v364 = vld [vmem:[%s342 + $0x64] sm:$0xf]
        %v365 = vld [vmem:[%s342 + $0x68] sm:$0xf]
        %v366 = vld [vmem:[%s342 + $0x6c] sm:$0xf]
        %v367 = vld [vmem:[%s342 + $0x70] sm:$0xf]
        %v368 = vld [vmem:[%s342 + $0x74] sm:$0xf]
        %v369 = vld [vmem:[%s342 + $0x78] sm:$0xf]
        %v370 = vld [vmem:[%s342 + $0x7c] sm:$0xf]
        %v371 = vld [vmem:[%s342 + $0x80] sm:$0xf]
        %v372 = vld [vmem:[%s342 + $0x84] sm:$0xf]
        %v373 = vld [vmem:[%s342 + $0x88] sm:$0xf]
        %v374 = vld [vmem:[%s342 + $0x8c] sm:$0xf]
        %s375 = scalar_lea.vmem [#allocation6], 192
        %v376 = vld [vmem:[%s375] sm:$0xff]
        %v377 = vld [vmem:[%s375 + $0x8] sm:$0xf]
        %v378 = vld [vmem:[%s375 + $0xc] sm:$0xff]
        %v379 = vld [vmem:[%s375 + $0x14] sm:$0xf]
        %v380 = vld [vmem:[%s375 + $0x18] sm:$0xff]
        %v381 = vld [vmem:[%s375 + $0x20] sm:$0xf]
        %v382 = vld [vmem:[%s375 + $0x24] sm:$0xff]
        %v383 = vld [vmem:[%s375 + $0x2c] sm:$0xf]
        %v384 = vld [vmem:[%s375 + $0x30] sm:$0xff]
        %v385 = vld [vmem:[%s375 + $0x38] sm:$0xf]
        %v386 = vld [vmem:[%s375 + $0x3c] sm:$0xff]
        %v387 = vld [vmem:[%s375 + $0x44] sm:$0xf]
        %v388 = vld [vmem:[%s375 + $0x48] sm:$0xff]
        %v389 = vld [vmem:[%s375 + $0x50] sm:$0xf]
        %v390 = vld [vmem:[%s375 + $0x54] sm:$0xff]
        %v391 = vld [vmem:[%s375 + $0x5c] sm:$0xf]
        %v392 = vld [vmem:[%s375 + $0x60] sm:$0xff]
        %v393 = vld [vmem:[%s375 + $0x68] sm:$0xf]
        %v394 = vld [vmem:[%s375 + $0x6c] sm:$0xff]
        %v395 = vld [vmem:[%s375 + $0x74] sm:$0xf]
        %v396 = vld [vmem:[%s375 + $0x78] sm:$0xff]
        %v397 = vld [vmem:[%s375 + $0x80] sm:$0xf]
        %v398 = vld [vmem:[%s375 + $0x84] sm:$0xff]
        %v399 = vld [vmem:[%s375 + $0x8c] sm:$0xf]
        %v400 = vld [vmem:[%s375 + $0x90] sm:$0xff]
        %v401 = vld [vmem:[%s375 + $0x98] sm:$0xf]
        %v402 = vld [vmem:[%s375 + $0x9c] sm:$0xff]
        %v403 = vld [vmem:[%s375 + $0xa4] sm:$0xf]
        %v404 = vld [vmem:[%s375 + $0xa8] sm:$0xff]
        %v405 = vld [vmem:[%s375 + $0xb0] sm:$0xf]
        %v406 = vld [vmem:[%s375 + $0xb4] sm:$0xff]
        %v407 = vld [vmem:[%s375 + $0xbc] sm:$0xf]
        %v440 = vunpack.c.l.b16 %v343
        %v441 = vunpack.c.l.b16 %v344
        %v442 = vunpack.c.l.b16 %v345
        %v443 = vunpack.c.l.b16 %v346
        %v444 = vunpack.c.l.b16 %v347
        %v445 = vunpack.c.l.b16 %v348
        %v446 = vunpack.c.l.b16 %v349
        %v447 = vunpack.c.l.b16 %v350
        %v448 = vunpack.c.l.b16 %v351
        %v449 = vunpack.c.l.b16 %v352
        %v450 = vunpack.c.l.b16 %v353
        %v451 = vunpack.c.l.b16 %v354
        %v452 = vunpack.c.l.b16 %v355
        %v453 = vunpack.c.l.b16 %v356
        %v454 = vunpack.c.l.b16 %v357
        %v455 = vunpack.c.l.b16 %v358
        %v456 = vunpack.c.l.b16 %v359
        %v457 = vunpack.c.l.b16 %v360
        %v458 = vunpack.c.l.b16 %v361
        %v459 = vunpack.c.l.b16 %v362
        %v460 = vunpack.c.l.b16 %v363
        %v461 = vunpack.c.l.b16 %v364
        %v462 = vunpack.c.l.b16 %v365
        %v463 = vunpack.c.l.b16 %v366
        %v464 = vunpack.c.l.b16 %v367
        %v465 = vunpack.c.l.b16 %v368
        %v466 = vunpack.c.l.b16 %v369
        %v467 = vunpack.c.l.b16 %v370
        %v468 = vunpack.c.l.b16 %v371
        %v469 = vunpack.c.l.b16 %v372
        %v470 = vunpack.c.l.b16 %v373
        %v471 = vunpack.c.l.b16 %v374
        %v472 = vpack.c.b16 %v441, %v440
        %v473 = vpack.c.b16 %v443, %v442
        %v474 = vpack.c.b16 %v445, %v444
        %v475 = vpack.c.b16 %v447, %v446
        %v476 = vpack.c.b16 %v449, %v448
        %v477 = vpack.c.b16 %v451, %v450
        %v478 = vpack.c.b16 %v453, %v452
        %v479 = vpack.c.b16 %v455, %v454
        %v480 = vpack.c.b16 %v457, %v456
        %v481 = vpack.c.b16 %v459, %v458
        %v482 = vpack.c.b16 %v461, %v460
        %v483 = vpack.c.b16 %v463, %v462
        %v484 = vpack.c.b16 %v465, %v464
        %v485 = vpack.c.b16 %v467, %v466
        %v486 = vpack.c.b16 %v469, %v468
        %v487 = vpack.c.b16 %v471, %v470
        %v536 = vunpack.c.l.b16 %v376
        %v537 = vunpack.c.h.b16 %v376
        %v538 = vunpack.c.l.b16 %v377
        %v539 = vunpack.c.l.b16 %v378
        %v540 = vunpack.c.h.b16 %v378
        %v541 = vunpack.c.l.b16 %v379
        %v542 = vunpack.c.l.b16 %v380
        %v543 = vunpack.c.h.b16 %v380
        %v544 = vunpack.c.l.b16 %v381
        %v545 = vunpack.c.l.b16 %v382
        %v546 = vunpack.c.h.b16 %v382
        %v547 = vunpack.c.l.b16 %v383
        %v548 = vunpack.c.l.b16 %v384
        %v549 = vunpack.c.h.b16 %v384
        %v550 = vunpack.c.l.b16 %v385
        %v551 = vunpack.c.l.b16 %v386
        %v552 = vunpack.c.h.b16 %v386
        %v553 = vunpack.c.l.b16 %v387
        %v554 = vunpack.c.l.b16 %v388
        %v555 = vunpack.c.h.b16 %v388
        %v556 = vunpack.c.l.b16 %v389
        %v557 = vunpack.c.l.b16 %v390
        %v558 = vunpack.c.h.b16 %v390
        %v559 = vunpack.c.l.b16 %v391
        %v560 = vunpack.c.l.b16 %v392
        %v561 = vunpack.c.h.b16 %v392
        %v562 = vunpack.c.l.b16 %v393
        %v563 = vunpack.c.l.b16 %v394
        %v564 = vunpack.c.h.b16 %v394
        %v565 = vunpack.c.l.b16 %v395
        %v566 = vunpack.c.l.b16 %v396
        %v567 = vunpack.c.h.b16 %v396
        %v568 = vunpack.c.l.b16 %v397
        %v569 = vunpack.c.l.b16 %v398
        %v570 = vunpack.c.h.b16 %v398
        %v571 = vunpack.c.l.b16 %v399
        %v572 = vunpack.c.l.b16 %v400
        %v573 = vunpack.c.h.b16 %v400
        %v574 = vunpack.c.l.b16 %v401
        %v575 = vunpack.c.l.b16 %v402
        %v576 = vunpack.c.h.b16 %v402
        %v577 = vunpack.c.l.b16 %v403
        %v578 = vunpack.c.l.b16 %v404
        %v579 = vunpack.c.h.b16 %v404
        %v580 = vunpack.c.l.b16 %v405
        %v581 = vunpack.c.l.b16 %v406
        %v582 = vunpack.c.h.b16 %v406
        %v583 = vunpack.c.l.b16 %v407
        %v584 = vpack.c.b16 %v539, %v536
        %v585 = vpack.c.b16 %v540, %v537
        %v586 = vpack.c.b16 %v541, %v538
        %v587 = vpack.c.b16 %v545, %v542
        %v588 = vpack.c.b16 %v546, %v543
        %v589 = vpack.c.b16 %v547, %v544
        %v590 = vpack.c.b16 %v551, %v548
        %v591 = vpack.c.b16 %v552, %v549
        %v592 = vpack.c.b16 %v553, %v550
        %v593 = vpack.c.b16 %v557, %v554
        %v594 = vpack.c.b16 %v558, %v555
        %v595 = vpack.c.b16 %v559, %v556
        %v596 = vpack.c.b16 %v563, %v560
        %v597 = vpack.c.b16 %v564, %v561
        %v598 = vpack.c.b16 %v565, %v562
        %v599 = vpack.c.b16 %v569, %v566
        %v600 = vpack.c.b16 %v570, %v567
        %v601 = vpack.c.b16 %v571, %v568
        %v602 = vpack.c.b16 %v575, %v572
        %v603 = vpack.c.b16 %v576, %v573
        %v604 = vpack.c.b16 %v577, %v574
        %v605 = vpack.c.b16 %v581, %v578
        %v606 = vpack.c.b16 %v582, %v579
        %v607 = vpack.c.b16 %v583, %v580
        %632 = vmatprep.subr.bf16.mxu0 %v585
        %633 = vmatpush1.bf16.msra.mxu0 %v584
        %634 = vmatprep.subr.bf16.mxu0 %v588
        %635 = vmatpush1.bf16.msra.mxu0 %v587
        %636 = vmatprep.subr.bf16.mxu0 %v591
        %637 = vmatpush1.bf16.msra.mxu0 %v590
        %638 = vmatprep.subr.bf16.mxu0 %v594
        %639 = vmatpush1.bf16.msra.mxu0 %v593
        %640 = vmatprep.subr.bf16.mxu0 %v597
        %641 = vmatpush1.bf16.msra.mxu0 %v596
        %642 = vmatprep.subr.bf16.mxu0 %v600
        %643 = vmatpush1.bf16.msra.mxu0 %v599
        %644 = vmatprep.subr.bf16.mxu0 %v603
        %645 = vmatpush1.bf16.msra.mxu0 %v602
        %646 = vmatprep.subr.bf16.mxu0 %v606
        %647 = vmatpush1.bf16.msra.mxu0 %v605
        %648 = vmatprep.subr.bf16.mxu0 0
        %649 = vmatpush1.bf16.msra.mxu0 0
        %650 = vmatprep.subr.bf16.mxu0 0
        %651 = vmatpush1.bf16.msra.mxu0 0
        %652 = vmatprep.subr.bf16.mxu0 0
        %653 = vmatpush1.bf16.msra.mxu0 0
        %654 = vmatprep.subr.bf16.mxu0 0
        %655 = vmatpush1.bf16.msra.mxu0 0
        %656 = vmatprep.subr.bf16.mxu0 0
        %657 = vmatpush1.bf16.msra.mxu0 0
        %658 = vmatprep.subr.bf16.mxu0 0
        %659 = vmatpush1.bf16.msra.mxu0 0
        %660 = vmatprep.subr.bf16.mxu0 0
        %661 = vmatpush1.bf16.msra.mxu0 0
        %662 = vmatprep.subr.bf16.mxu0 0
        %663 = vmatpush1.bf16.msra.mxu0 0
        %664 = vmatprep.mubr.bf16.mxu0 0
        %665 = vmatmul.mubr.bf16.gmra.mrb[0].mxu0 %v472
        %v666 = vpop.f32.mrb[0].mxu0
        %v667 = vadd.f32 0.0, %v666
        %v668 = vpop.f32.mrb[0].mxu0
        %v669 = vadd.f32 0.0, %v668
        %v670 = vpop.f32.mrb[0].mxu0
        %v671 = vpop.f32.mrb[0].mxu0
        %v672 = vadd.f32 0.0, %v671
        %673 = vmatprep.mubr.bf16.mxu0 0
        %674 = vmatmul.mubr.bf16.gmra.mrb[0].mxu0 %v473
        %v675 = vpop.f32.mrb[0].mxu0
        %v676 = vadd.f32 0.0, %v675
        %v677 = vpop.f32.mrb[0].mxu0
        %v678 = vadd.f32 0.0, %v677
        %v679 = vpop.f32.mrb[0].mxu0
        %v680 = vpop.f32.mrb[0].mxu0
        %v681 = vadd.f32 0.0, %v680
        %682 = vmatprep.mubr.bf16.mxu0 0
        %683 = vmatmul.mubr.bf16.gmra.mrb[0].mxu0 %v474
        %v684 = vpop.f32.mrb[0].mxu0
        %v685 = vadd.f32 0.0, %v684
        %v686 = vpop.f32.mrb[0].mxu0
        %v687 = vadd.f32 0.0, %v686
        %v688 = vpop.f32.mrb[0].mxu0
        %v689 = vpop.f32.mrb[0].mxu0
        %v690 = vadd.f32 0.0, %v689
        %691 = vmatprep.mubr.bf16.mxu0 0
        %692 = vmatmul.mubr.bf16.gmra.mrb[0].mxu0 %v475
        %v693 = vpop.f32.mrb[0].mxu0
        %v694 = vadd.f32 0.0, %v693
        %v695 = vpop.f32.mrb[0].mxu0
        %v696 = vadd.f32 0.0, %v695
        %v697 = vpop.f32.mrb[0].mxu0
        %v698 = vpop.f32.mrb[0].mxu0
        %v699 = vadd.f32 0.0, %v698
        %700 = vmatprep.mubr.bf16.mxu0 0
        %701 = vmatmul.mubr.bf16.gmra.mrb[0].mxu0 %v476
        %v702 = vpop.f32.mrb[0].mxu0
        %v703 = vadd.f32 0.0, %v702
        %v704 = vpop.f32.mrb[0].mxu0
        %v705 = vadd.f32 0.0, %v704
        %v706 = vpop.f32.mrb[0].mxu0
        %v707 = vpop.f32.mrb[0].mxu0
        %v708 = vadd.f32 0.0, %v707
        %709 = vmatprep.mubr.bf16.mxu0 0
        %710 = vmatmul.mubr.bf16.gmra.mrb[0].mxu0 %v477
        %v711 = vpop.f32.mrb[0].mxu0
        %v712 = vadd.f32 0.0, %v711
        %v713 = vpop.f32.mrb[0].mxu0
        %v714 = vadd.f32 0.0, %v713
        %v715 = vpop.f32.mrb[0].mxu0
        %v716 = vpop.f32.mrb[0].mxu0
        %v717 = vadd.f32 0.0, %v716
        %718 = vmatprep.mubr.bf16.mxu0 0
        %719 = vmatmul.mubr.bf16.gmra.mrb[0].mxu0 %v478
        %v720 = vpop.f32.mrb[0].mxu0
        %v721 = vadd.f32 0.0, %v720
        %v722 = vpop.f32.mrb[0].mxu0
        %v723 = vadd.f32 0.0, %v722
        %v724 = vpop.f32.mrb[0].mxu0
        %v725 = vpop.f32.mrb[0].mxu0
        %v726 = vadd.f32 0.0, %v725
        %727 = vmatprep.mubr.bf16.mxu0 0
        %728 = vmatmul.mubr.bf16.gmra.mrb[0].mxu0 %v479
        %v729 = vpop.f32.mrb[0].mxu0
        %v730 = vadd.f32 0.0, %v729
        %v731 = vpop.f32.mrb[0].mxu0
        %v732 = vadd.f32 0.0, %v731
        %v733 = vpop.f32.mrb[0].mxu0
        %v734 = vpop.f32.mrb[0].mxu0
        %v735 = vadd.f32 0.0, %v734
        %736 = vmatprep.mubr.bf16.mxu0 0
        %737 = vmatmul.mubr.bf16.gmra.mrb[0].mxu0 %v480
        %v738 = vpop.f32.mrb[0].mxu0
        %v739 = vadd.f32 0.0, %v738
        %v740 = vpop.f32.mrb[0].mxu0
        %v741 = vadd.f32 0.0, %v740
        %v742 = vpop.f32.mrb[0].mxu0
        %v743 = vpop.f32.mrb[0].mxu0
        %v744 = vadd.f32 0.0, %v743
        %745 = vmatprep.mubr.bf16.mxu0 0
        %746 = vmatmul.mubr.bf16.gmra.mrb[0].mxu0 %v481
        %v747 = vpop.f32.mrb[0].mxu0
        %v748 = vadd.f32 0.0, %v747
        %v749 = vpop.f32.mrb[0].mxu0
        %v750 = vadd.f32 0.0, %v749
        %v751 = vpop.f32.mrb[0].mxu0
        %v752 = vpop.f32.mrb[0].mxu0
        %v753 = vadd.f32 0.0, %v752
        %754 = vmatprep.mubr.bf16.mxu0 0
        %755 = vmatmul.mubr.bf16.gmra.mrb[0].mxu0 %v482
        %v756 = vpop.f32.mrb[0].mxu0
        %v757 = vadd.f32 0.0, %v756
        %v758 = vpop.f32.mrb[0].mxu0
        %v759 = vadd.f32 0.0, %v758
        %v760 = vpop.f32.mrb[0].mxu0
        %v761 = vpop.f32.mrb[0].mxu0
        %v762 = vadd.f32 0.0, %v761
        %763 = vmatprep.mubr.bf16.mxu0 0
        %764 = vmatmul.mubr.bf16.gmra.mrb[0].mxu0 %v483
        %v765 = vpop.f32.mrb[0].mxu0
        %v766 = vadd.f32 0.0, %v765
        %v767 = vpop.f32.mrb[0].mxu0
        %v768 = vadd.f32 0.0, %v767
        %v769 = vpop.f32.mrb[0].mxu0
        %v770 = vpop.f32.mrb[0].mxu0
        %v771 = vadd.f32 0.0, %v770
        %772 = vmatprep.mubr.bf16.mxu0 0
        %773 = vmatmul.mubr.bf16.gmra.mrb[0].mxu0 %v484
        %v774 = vpop.f32.mrb[0].mxu0
        %v775 = vadd.f32 0.0, %v774
        %v776 = vpop.f32.mrb[0].mxu0
        %v777 = vadd.f32 0.0, %v776
        %v778 = vpop.f32.mrb[0].mxu0
        %v779 = vpop.f32.mrb[0].mxu0
        %v780 = vadd.f32 0.0, %v779
        %781 = vmatprep.mubr.bf16.mxu0 0
        %782 = vmatmul.mubr.bf16.gmra.mrb[0].mxu0 %v485
        %v783 = vpop.f32.mrb[0].mxu0
        %v784 = vadd.f32 0.0, %v783
        %v785 = vpop.f32.mrb[0].mxu0
        %v786 = vadd.f32 0.0, %v785
        %v787 = vpop.f32.mrb[0].mxu0
        %v788 = vpop.f32.mrb[0].mxu0
        %v789 = vadd.f32 0.0, %v788
        %790 = vmatprep.mubr.bf16.mxu0 0
        %791 = vmatmul.mubr.bf16.gmra.mrb[0].mxu0 %v486
        %v792 = vpop.f32.mrb[0].mxu0
        %v793 = vadd.f32 0.0, %v792
        %v794 = vpop.f32.mrb[0].mxu0
        %v795 = vadd.f32 0.0, %v794
        %v796 = vpop.f32.mrb[0].mxu0
        %v797 = vpop.f32.mrb[0].mxu0
        %v798 = vadd.f32 0.0, %v797
        %799 = vmatprep.mubr.bf16.mxu0 0
        %800 = vmatmul.mubr.bf16.gmra.mrb[0].mxu0 %v487
        %v801 = vpop.f32.mrb[0].mxu0
        %v802 = vadd.f32 0.0, %v801
        %v803 = vpop.f32.mrb[0].mxu0
        %v804 = vadd.f32 0.0, %v803
        %v805 = vpop.f32.mrb[0].mxu0
        %v806 = vpop.f32.mrb[0].mxu0
        %v807 = vadd.f32 0.0, %v806
        %808 = vdwg.mxu0
        %809 = vmatprep.subr.bf16.mxu0 0
        %810 = vmatpush1.bf16.msra.mxu0 %v586
        %811 = vmatprep.subr.bf16.mxu0 0
        %812 = vmatpush1.bf16.msra.mxu0 %v589
        %813 = vmatprep.subr.bf16.mxu0 0
        %814 = vmatpush1.bf16.msra.mxu0 %v592
        %815 = vmatprep.subr.bf16.mxu0 0
        %816 = vmatpush1.bf16.msra.mxu0 %v595
        %817 = vmatprep.subr.bf16.mxu0 0
        %818 = vmatpush1.bf16.msra.mxu0 %v598
        %819 = vmatprep.subr.bf16.mxu0 0
        %820 = vmatpush1.bf16.msra.mxu0 %v601
        %821 = vmatprep.subr.bf16.mxu0 0
        %822 = vmatpush1.bf16.msra.mxu0 %v604
        %823 = vmatprep.subr.bf16.mxu0 0
        %824 = vmatpush1.bf16.msra.mxu0 %v607
        %825 = vmatprep.subr.bf16.mxu0 0
        %826 = vmatpush1.bf16.msra.mxu0 0
        %827 = vmatprep.subr.bf16.mxu0 0
        %828 = vmatpush1.bf16.msra.mxu0 0
        %829 = vmatprep.subr.bf16.mxu0 0
        %830 = vmatpush1.bf16.msra.mxu0 0
        %831 = vmatprep.subr.bf16.mxu0 0
        %832 = vmatpush1.bf16.msra.mxu0 0
        %833 = vmatprep.subr.bf16.mxu0 0
        %834 = vmatpush1.bf16.msra.mxu0 0
        %835 = vmatprep.subr.bf16.mxu0 0
        %836 = vmatpush1.bf16.msra.mxu0 0
        %837 = vmatprep.subr.bf16.mxu0 0
        %838 = vmatpush1.bf16.msra.mxu0 0
        %839 = vmatprep.subr.bf16.mxu0 0
        %840 = vmatpush1.bf16.msra.mxu0 0
        %841 = vmatprep.mubr.bf16.mxu0 0
        %842 = vmatmul.mubr.bf16.gmra.mrb[0].mxu0 %v472
        %v843 = vpop.f32.mrb[0].mxu0
        %v844 = vadd.f32 0.0, %v843
        %v845 = vpop.f32.mrb[0].mxu0
        %v846 = vpop.f32.mrb[0].mxu0
        %v847 = vadd.f32 0.0, %v846
        %v848 = vpop.f32.mrb[0].mxu0
        %849 = vmatprep.mubr.bf16.mxu0 0
        %850 = vmatmul.mubr.bf16.gmra.mrb[0].mxu0 %v473
        %v851 = vpop.f32.mrb[0].mxu0
        %v852 = vadd.f32 0.0, %v851
        %v853 = vpop.f32.mrb[0].mxu0
        %v854 = vpop.f32.mrb[0].mxu0
        %v855 = vadd.f32 0.0, %v854
        %v856 = vpop.f32.mrb[0].mxu0
        %857 = vmatprep.mubr.bf16.mxu0 0
        %858 = vmatmul.mubr.bf16.gmra.mrb[0].mxu0 %v474
        %v859 = vpop.f32.mrb[0].mxu0
        %v860 = vadd.f32 0.0, %v859
        %v861 = vpop.f32.mrb[0].mxu0
        %v862 = vpop.f32.mrb[0].mxu0
        %v863 = vadd.f32 0.0, %v862
        %v864 = vpop.f32.mrb[0].mxu0
        %865 = vmatprep.mubr.bf16.mxu0 0
        %866 = vmatmul.mubr.bf16.gmra.mrb[0].mxu0 %v475
        %v867 = vpop.f32.mrb[0].mxu0
        %v868 = vadd.f32 0.0, %v867
        %v869 = vpop.f32.mrb[0].mxu0
        %v870 = vpop.f32.mrb[0].mxu0
        %v871 = vadd.f32 0.0, %v870
        %v872 = vpop.f32.mrb[0].mxu0
        %873 = vmatprep.mubr.bf16.mxu0 0
        %874 = vmatmul.mubr.bf16.gmra.mrb[0].mxu0 %v476
        %v875 = vpop.f32.mrb[0].mxu0
        %v876 = vadd.f32 0.0, %v875
        %v877 = vpop.f32.mrb[0].mxu0
        %v878 = vpop.f32.mrb[0].mxu0
        %v879 = vadd.f32 0.0, %v878
        %v880 = vpop.f32.mrb[0].mxu0
        %881 = vmatprep.mubr.bf16.mxu0 0
        %882 = vmatmul.mubr.bf16.gmra.mrb[0].mxu0 %v477
        %v883 = vpop.f32.mrb[0].mxu0
        %v884 = vadd.f32 0.0, %v883
        %v885 = vpop.f32.mrb[0].mxu0
        %v886 = vpop.f32.mrb[0].mxu0
        %v887 = vadd.f32 0.0, %v886
        %v888 = vpop.f32.mrb[0].mxu0
        %889 = vmatprep.mubr.bf16.mxu0 0
        %890 = vmatmul.mubr.bf16.gmra.mrb[0].mxu0 %v478
        %v891 = vpop.f32.mrb[0].mxu0
        %v892 = vadd.f32 0.0, %v891
        %v893 = vpop.f32.mrb[0].mxu0
        %v894 = vpop.f32.mrb[0].mxu0
        %v895 = vadd.f32 0.0, %v894
        %v896 = vpop.f32.mrb[0].mxu0
        %897 = vmatprep.mubr.bf16.mxu0 0
        %898 = vmatmul.mubr.bf16.gmra.mrb[0].mxu0 %v479
        %v899 = vpop.f32.mrb[0].mxu0
        %v900 = vadd.f32 0.0, %v899
        %v901 = vpop.f32.mrb[0].mxu0
        %v902 = vpop.f32.mrb[0].mxu0
        %v903 = vadd.f32 0.0, %v902
        %v904 = vpop.f32.mrb[0].mxu0
        %905 = vmatprep.mubr.bf16.mxu0 0
        %906 = vmatmul.mubr.bf16.gmra.mrb[0].mxu0 %v480
        %v907 = vpop.f32.mrb[0].mxu0
        %v908 = vadd.f32 0.0, %v907
        %v909 = vpop.f32.mrb[0].mxu0
        %v910 = vpop.f32.mrb[0].mxu0
        %v911 = vadd.f32 0.0, %v910
        %v912 = vpop.f32.mrb[0].mxu0
        %913 = vmatprep.mubr.bf16.mxu0 0
        %914 = vmatmul.mubr.bf16.gmra.mrb[0].mxu0 %v481
        %v915 = vpop.f32.mrb[0].mxu0
        %v916 = vadd.f32 0.0, %v915
        %v917 = vpop.f32.mrb[0].mxu0
        %v918 = vpop.f32.mrb[0].mxu0
        %v919 = vadd.f32 0.0, %v918
        %v920 = vpop.f32.mrb[0].mxu0
        %921 = vmatprep.mubr.bf16.mxu0 0
        %922 = vmatmul.mubr.bf16.gmra.mrb[0].mxu0 %v482
        %v923 = vpop.f32.mrb[0].mxu0
        %v924 = vadd.f32 0.0, %v923
        %v925 = vpop.f32.mrb[0].mxu0
        %v926 = vpop.f32.mrb[0].mxu0
        %v927 = vadd.f32 0.0, %v926
        %v928 = vpop.f32.mrb[0].mxu0
        %929 = vmatprep.mubr.bf16.mxu0 0
        %930 = vmatmul.mubr.bf16.gmra.mrb[0].mxu0 %v483
        %v931 = vpop.f32.mrb[0].mxu0
        %v932 = vadd.f32 0.0, %v931
        %v933 = vpop.f32.mrb[0].mxu0
        %v934 = vpop.f32.mrb[0].mxu0
        %v935 = vadd.f32 0.0, %v934
        %v936 = vpop.f32.mrb[0].mxu0
        %937 = vmatprep.mubr.bf16.mxu0 0
        %938 = vmatmul.mubr.bf16.gmra.mrb[0].mxu0 %v484
        %v939 = vpop.f32.mrb[0].mxu0
        %v940 = vadd.f32 0.0, %v939
        %v941 = vpop.f32.mrb[0].mxu0
        %v942 = vpop.f32.mrb[0].mxu0
        %v943 = vadd.f32 0.0, %v942
        %v944 = vpop.f32.mrb[0].mxu0
        %945 = vmatprep.mubr.bf16.mxu0 0
        %946 = vmatmul.mubr.bf16.gmra.mrb[0].mxu0 %v485
        %v947 = vpop.f32.mrb[0].mxu0
        %v948 = vadd.f32 0.0, %v947
        %v949 = vpop.f32.mrb[0].mxu0
        %v950 = vpop.f32.mrb[0].mxu0
        %v951 = vadd.f32 0.0, %v950
        %v952 = vpop.f32.mrb[0].mxu0
        %953 = vmatprep.mubr.bf16.mxu0 0
        %954 = vmatmul.mubr.bf16.gmra.mrb[0].mxu0 %v486
        %v955 = vpop.f32.mrb[0].mxu0
        %v956 = vadd.f32 0.0, %v955
        %v957 = vpop.f32.mrb[0].mxu0
        %v958 = vpop.f32.mrb[0].mxu0
        %v959 = vadd.f32 0.0, %v958
        %v960 = vpop.f32.mrb[0].mxu0
        %961 = vmatprep.mubr.bf16.mxu0 0
        %962 = vmatmul.mubr.bf16.gmra.mrb[0].mxu0 %v487
        %v963 = vpop.f32.mrb[0].mxu0
        %v964 = vadd.f32 0.0, %v963
        %v965 = vpop.f32.mrb[0].mxu0
        %v966 = vpop.f32.mrb[0].mxu0
        %v967 = vadd.f32 0.0, %v966
        %v968 = vpop.f32.mrb[0].mxu0
        %969 = vdwg.mxu0
        %v1002 = vunpack.c.l.b16 %v278
        %v1003 = vunpack.c.l.b16 %v279
        %v1004 = vunpack.c.l.b16 %v280
        %v1005 = vunpack.c.l.b16 %v281
        %v1006 = vunpack.c.l.b16 %v282
        %v1007 = vunpack.c.l.b16 %v283
        %v1008 = vunpack.c.l.b16 %v284
        %v1009 = vunpack.c.l.b16 %v285
        %v1010 = vunpack.c.l.b16 %v286
        %v1011 = vunpack.c.l.b16 %v287
        %v1012 = vunpack.c.l.b16 %v288
        %v1013 = vunpack.c.l.b16 %v289
        %v1014 = vunpack.c.l.b16 %v290
        %v1015 = vunpack.c.l.b16 %v291
        %v1016 = vunpack.c.l.b16 %v292
        %v1017 = vunpack.c.l.b16 %v293
        %v1018 = vunpack.c.l.b16 %v294
        %v1019 = vunpack.c.l.b16 %v295
        %v1020 = vunpack.c.l.b16 %v296
        %v1021 = vunpack.c.l.b16 %v297
        %v1022 = vunpack.c.l.b16 %v298
        %v1023 = vunpack.c.l.b16 %v299
        %v1024 = vunpack.c.l.b16 %v300
        %v1025 = vunpack.c.l.b16 %v301
        %v1026 = vunpack.c.l.b16 %v302
        %v1027 = vunpack.c.l.b16 %v303
        %v1028 = vunpack.c.l.b16 %v304
        %v1029 = vunpack.c.l.b16 %v305
        %v1030 = vunpack.c.l.b16 %v306
        %v1031 = vunpack.c.l.b16 %v307
        %v1032 = vunpack.c.l.b16 %v308
        %v1033 = vunpack.c.l.b16 %v309
        %v1034 = vpack.c.b16 %v1003, %v1002
        %v1035 = vpack.c.b16 %v1005, %v1004
        %v1036 = vpack.c.b16 %v1007, %v1006
        %v1037 = vpack.c.b16 %v1009, %v1008
        %v1038 = vpack.c.b16 %v1011, %v1010
        %v1039 = vpack.c.b16 %v1013, %v1012
        %v1040 = vpack.c.b16 %v1015, %v1014
        %v1041 = vpack.c.b16 %v1017, %v1016
        %v1042 = vpack.c.b16 %v1019, %v1018
        %v1043 = vpack.c.b16 %v1021, %v1020
        %v1044 = vpack.c.b16 %v1023, %v1022
        %v1045 = vpack.c.b16 %v1025, %v1024
        %v1046 = vpack.c.b16 %v1027, %v1026
        %v1047 = vpack.c.b16 %v1029, %v1028
        %v1048 = vpack.c.b16 %v1031, %v1030
        %v1049 = vpack.c.b16 %v1033, %v1032
        %v1098 = vunpack.c.l.b16 %v310
        %v1099 = vunpack.c.h.b16 %v310
        %v1100 = vunpack.c.l.b16 %v311
        %v1101 = vunpack.c.l.b16 %v312
        %v1102 = vunpack.c.h.b16 %v312
        %v1103 = vunpack.c.l.b16 %v313
        %v1104 = vunpack.c.l.b16 %v314
        %v1105 = vunpack.c.h.b16 %v314
        %v1106 = vunpack.c.l.b16 %v315
        %v1107 = vunpack.c.l.b16 %v316
        %v1108 = vunpack.c.h.b16 %v316
        %v1109 = vunpack.c.l.b16 %v317
        %v1110 = vunpack.c.l.b16 %v318
        %v1111 = vunpack.c.h.b16 %v318
        %v1112 = vunpack.c.l.b16 %v319
        %v1113 = vunpack.c.l.b16 %v320
        %v1114 = vunpack.c.h.b16 %v320
        %v1115 = vunpack.c.l.b16 %v321
        %v1116 = vunpack.c.l.b16 %v322
        %v1117 = vunpack.c.h.b16 %v322
        %v1118 = vunpack.c.l.b16 %v323
        %v1119 = vunpack.c.l.b16 %v324
        %v1120 = vunpack.c.h.b16 %v324
        %v1121 = vunpack.c.l.b16 %v325
        %v1122 = vunpack.c.l.b16 %v326
        %v1123 = vunpack.c.h.b16 %v326
        %v1124 = vunpack.c.l.b16 %v327
        %v1125 = vunpack.c.l.b16 %v328
        %v1126 = vunpack.c.h.b16 %v328
        %v1127 = vunpack.c.l.b16 %v329
        %v1128 = vunpack.c.l.b16 %v330
        %v1129 = vunpack.c.h.b16 %v330
        %v1130 = vunpack.c.l.b16 %v331
        %v1131 = vunpack.c.l.b16 %v332
        %v1132 = vunpack.c.h.b16 %v332
        %v1133 = vunpack.c.l.b16 %v333
        %v1134 = vunpack.c.l.b16 %v334
        %v1135 = vunpack.c.h.b16 %v334
        %v1136 = vunpack.c.l.b16 %v335
        %v1137 = vunpack.c.l.b16 %v336
        %v1138 = vunpack.c.h.b16 %v336
        %v1139 = vunpack.c.l.b16 %v337
        %v1140 = vunpack.c.l.b16 %v338
        %v1141 = vunpack.c.h.b16 %v338
        %v1142 = vunpack.c.l.b16 %v339
        %v1143 = vunpack.c.l.b16 %v340
        %v1144 = vunpack.c.h.b16 %v340
        %v1145 = vunpack.c.l.b16 %v341
        %v1146 = vpack.c.b16 %v1101, %v1098
        %v1147 = vpack.c.b16 %v1102, %v1099
        %v1148 = vpack.c.b16 %v1103, %v1100
        %v1149 = vpack.c.b16 %v1107, %v1104
        %v1150 = vpack.c.b16 %v1108, %v1105
        %v1151 = vpack.c.b16 %v1109, %v1106
        %v1152 = vpack.c.b16 %v1113, %v1110
        %v1153 = vpack.c.b16 %v1114, %v1111
        %v1154 = vpack.c.b16 %v1115, %v1112
        %v1155 = vpack.c.b16 %v1119, %v1116
        %v1156 = vpack.c.b16 %v1120, %v1117
        %v1157 = vpack.c.b16 %v1121, %v1118
        %v1158 = vpack.c.b16 %v1125, %v1122
        %v1159 = vpack.c.b16 %v1126, %v1123
        %v1160 = vpack.c.b16 %v1127, %v1124
        %v1161 = vpack.c.b16 %v1131, %v1128
        %v1162 = vpack.c.b16 %v1132, %v1129
        %v1163 = vpack.c.b16 %v1133, %v1130
        %v1164 = vpack.c.b16 %v1137, %v1134
        %v1165 = vpack.c.b16 %v1138, %v1135
        %v1166 = vpack.c.b16 %v1139, %v1136
        %v1167 = vpack.c.b16 %v1143, %v1140
        %v1168 = vpack.c.b16 %v1144, %v1141
        %v1169 = vpack.c.b16 %v1145, %v1142
        %1194 = vmatprep.subr.bf16.mxu0 %v1147
        %1195 = vmatpush1.bf16.msra.mxu0 %v1146
        %1196 = vmatprep.subr.bf16.mxu0 %v1150
        %1197 = vmatpush1.bf16.msra.mxu0 %v1149
        %1198 = vmatprep.subr.bf16.mxu0 %v1153
        %1199 = vmatpush1.bf16.msra.mxu0 %v1152
        %1200 = vmatprep.subr.bf16.mxu0 %v1156
        %1201 = vmatpush1.bf16.msra.mxu0 %v1155
        %1202 = vmatprep.subr.bf16.mxu0 %v1159
        %1203 = vmatpush1.bf16.msra.mxu0 %v1158
        %1204 = vmatprep.subr.bf16.mxu0 %v1162
        %1205 = vmatpush1.bf16.msra.mxu0 %v1161
        %1206 = vmatprep.subr.bf16.mxu0 %v1165
        %1207 = vmatpush1.bf16.msra.mxu0 %v1164
        %1208 = vmatprep.subr.bf16.mxu0 %v1168
        %1209 = vmatpush1.bf16.msra.mxu0 %v1167
        %1210 = vmatprep.subr.bf16.mxu0 0
        %1211 = vmatpush1.bf16.msra.mxu0 0
        %1212 = vmatprep.subr.bf16.mxu0 0
        %1213 = vmatpush1.bf16.msra.mxu0 0
        %1214 = vmatprep.subr.bf16.mxu0 0
        %1215 = vmatpush1.bf16.msra.mxu0 0
        %1216 = vmatprep.subr.bf16.mxu0 0
        %1217 = vmatpush1.bf16.msra.mxu0 0
        %1218 = vmatprep.subr.bf16.mxu0 0
        %1219 = vmatpush1.bf16.msra.mxu0 0
        %1220 = vmatprep.subr.bf16.mxu0 0
        %1221 = vmatpush1.bf16.msra.mxu0 0
        %1222 = vmatprep.subr.bf16.mxu0 0
        %1223 = vmatpush1.bf16.msra.mxu0 0
        %1224 = vmatprep.subr.bf16.mxu0 0
        %1225 = vmatpush1.bf16.msra.mxu0 0
        %1226 = vmatprep.mubr.bf16.mxu0 0
        %1227 = vmatmul.mubr.bf16.gmra.mrb[0].mxu0 %v1034
        %v1228 = vpop.f32.mrb[0].mxu0
        %v1229 = vadd.f32 %v667, %v1228
        %v1230 = vpop.f32.mrb[0].mxu0
        %v1231 = vadd.f32 %v669, %v1230
        %v1232 = vpop.f32.mrb[0].mxu0
        %v1233 = vpop.f32.mrb[0].mxu0
        %v1234 = vadd.f32 %v672, %v1233
        %1235 = vmatprep.mubr.bf16.mxu0 0
        %1236 = vmatmul.mubr.bf16.gmra.mrb[0].mxu0 %v1035
        %v1237 = vpop.f32.mrb[0].mxu0
        %v1238 = vadd.f32 %v676, %v1237
        %v1239 = vpop.f32.mrb[0].mxu0
        %v1240 = vadd.f32 %v678, %v1239
        %v1241 = vpop.f32.mrb[0].mxu0
        %v1242 = vpop.f32.mrb[0].mxu0
        %v1243 = vadd.f32 %v681, %v1242
        %1244 = vmatprep.mubr.bf16.mxu0 0
        %1245 = vmatmul.mubr.bf16.gmra.mrb[0].mxu0 %v1036
        %v1246 = vpop.f32.mrb[0].mxu0
        %v1247 = vadd.f32 %v685, %v1246
        %v1248 = vpop.f32.mrb[0].mxu0
        %v1249 = vadd.f32 %v687, %v1248
        %v1250 = vpop.f32.mrb[0].mxu0
        %v1251 = vpop.f32.mrb[0].mxu0
        %v1252 = vadd.f32 %v690, %v1251
        %1253 = vmatprep.mubr.bf16.mxu0 0
        %1254 = vmatmul.mubr.bf16.gmra.mrb[0].mxu0 %v1037
        %v1255 = vpop.f32.mrb[0].mxu0
        %v1256 = vadd.f32 %v694, %v1255
        %v1257 = vpop.f32.mrb[0].mxu0
        %v1258 = vadd.f32 %v696, %v1257
        %v1259 = vpop.f32.mrb[0].mxu0
        %v1260 = vpop.f32.mrb[0].mxu0
        %v1261 = vadd.f32 %v699, %v1260
        %1262 = vmatprep.mubr.bf16.mxu0 0
        %1263 = vmatmul.mubr.bf16.gmra.mrb[0].mxu0 %v1038
        %v1264 = vpop.f32.mrb[0].mxu0
        %v1265 = vadd.f32 %v703, %v1264
        %v1266 = vpop.f32.mrb[0].mxu0
        %v1267 = vadd.f32 %v705, %v1266
        %v1268 = vpop.f32.mrb[0].mxu0
        %v1269 = vpop.f32.mrb[0].mxu0
        %v1270 = vadd.f32 %v708, %v1269
        %1271 = vmatprep.mubr.bf16.mxu0 0
        %1272 = vmatmul.mubr.bf16.gmra.mrb[0].mxu0 %v1039
        %v1273 = vpop.f32.mrb[0].mxu0
        %v1274 = vadd.f32 %v712, %v1273
        %v1275 = vpop.f32.mrb[0].mxu0
        %v1276 = vadd.f32 %v714, %v1275
        %v1277 = vpop.f32.mrb[0].mxu0
        %v1278 = vpop.f32.mrb[0].mxu0
        %v1279 = vadd.f32 %v717, %v1278
        %1280 = vmatprep.mubr.bf16.mxu0 0
        %1281 = vmatmul.mubr.bf16.gmra.mrb[0].mxu0 %v1040
        %v1282 = vpop.f32.mrb[0].mxu0
        %v1283 = vadd.f32 %v721, %v1282
        %v1284 = vpop.f32.mrb[0].mxu0
        %v1285 = vadd.f32 %v723, %v1284
        %v1286 = vpop.f32.mrb[0].mxu0
        %v1287 = vpop.f32.mrb[0].mxu0
        %v1288 = vadd.f32 %v726, %v1287
        %1289 = vmatprep.mubr.bf16.mxu0 0
        %1290 = vmatmul.mubr.bf16.gmra.mrb[0].mxu0 %v1041
        %v1291 = vpop.f32.mrb[0].mxu0
        %v1292 = vadd.f32 %v730, %v1291
        %v1293 = vpop.f32.mrb[0].mxu0
        %v1294 = vadd.f32 %v732, %v1293
        %v1295 = vpop.f32.mrb[0].mxu0
        %v1296 = vpop.f32.mrb[0].mxu0
        %v1297 = vadd.f32 %v735, %v1296
        %1298 = vmatprep.mubr.bf16.mxu0 0
        %1299 = vmatmul.mubr.bf16.gmra.mrb[0].mxu0 %v1042
        %v1300 = vpop.f32.mrb[0].mxu0
        %v1301 = vadd.f32 %v739, %v1300
        %v1302 = vpop.f32.mrb[0].mxu0
        %v1303 = vadd.f32 %v741, %v1302
        %v1304 = vpop.f32.mrb[0].mxu0
        %v1305 = vpop.f32.mrb[0].mxu0
        %v1306 = vadd.f32 %v744, %v1305
        %1307 = vmatprep.mubr.bf16.mxu0 0
        %1308 = vmatmul.mubr.bf16.gmra.mrb[0].mxu0 %v1043
        %v1309 = vpop.f32.mrb[0].mxu0
        %v1310 = vadd.f32 %v748, %v1309
        %v1311 = vpop.f32.mrb[0].mxu0
        %v1312 = vadd.f32 %v750, %v1311
        %v1313 = vpop.f32.mrb[0].mxu0
        %v1314 = vpop.f32.mrb[0].mxu0
        %v1315 = vadd.f32 %v753, %v1314
        %1316 = vmatprep.mubr.bf16.mxu0 0
        %1317 = vmatmul.mubr.bf16.gmra.mrb[0].mxu0 %v1044
        %v1318 = vpop.f32.mrb[0].mxu0
        %v1319 = vadd.f32 %v757, %v1318
        %v1320 = vpop.f32.mrb[0].mxu0
        %v1321 = vadd.f32 %v759, %v1320
        %v1322 = vpop.f32.mrb[0].mxu0
        %v1323 = vpop.f32.mrb[0].mxu0
        %v1324 = vadd.f32 %v762, %v1323
        %1325 = vmatprep.mubr.bf16.mxu0 0
        %1326 = vmatmul.mubr.bf16.gmra.mrb[0].mxu0 %v1045
        %v1327 = vpop.f32.mrb[0].mxu0
        %v1328 = vadd.f32 %v766, %v1327
        %v1329 = vpop.f32.mrb[0].mxu0
        %v1330 = vadd.f32 %v768, %v1329
        %v1331 = vpop.f32.mrb[0].mxu0
        %v1332 = vpop.f32.mrb[0].mxu0
        %v1333 = vadd.f32 %v771, %v1332
        %1334 = vmatprep.mubr.bf16.mxu0 0
        %1335 = vmatmul.mubr.bf16.gmra.mrb[0].mxu0 %v1046
        %v1336 = vpop.f32.mrb[0].mxu0
        %v1337 = vadd.f32 %v775, %v1336
        %v1338 = vpop.f32.mrb[0].mxu0
        %v1339 = vadd.f32 %v777, %v1338
        %v1340 = vpop.f32.mrb[0].mxu0
        %v1341 = vpop.f32.mrb[0].mxu0
        %v1342 = vadd.f32 %v780, %v1341
        %1343 = vmatprep.mubr.bf16.mxu0 0
        %1344 = vmatmul.mubr.bf16.gmra.mrb[0].mxu0 %v1047
        %v1345 = vpop.f32.mrb[0].mxu0
        %v1346 = vadd.f32 %v784, %v1345
        %v1347 = vpop.f32.mrb[0].mxu0
        %v1348 = vadd.f32 %v786, %v1347
        %v1349 = vpop.f32.mrb[0].mxu0
        %v1350 = vpop.f32.mrb[0].mxu0
        %v1351 = vadd.f32 %v789, %v1350
        %1352 = vmatprep.mubr.bf16.mxu0 0
        %1353 = vmatmul.mubr.bf16.gmra.mrb[0].mxu0 %v1048
        %v1354 = vpop.f32.mrb[0].mxu0
        %v1355 = vadd.f32 %v793, %v1354
        %v1356 = vpop.f32.mrb[0].mxu0
        %v1357 = vadd.f32 %v795, %v1356
        %v1358 = vpop.f32.mrb[0].mxu0
        %v1359 = vpop.f32.mrb[0].mxu0
        %v1360 = vadd.f32 %v798, %v1359
        %1361 = vmatprep.mubr.bf16.mxu0 0
        %1362 = vmatmul.mubr.bf16.gmra.mrb[0].mxu0 %v1049
        %v1363 = vpop.f32.mrb[0].mxu0
        %v1364 = vadd.f32 %v802, %v1363
        %v1365 = vpop.f32.mrb[0].mxu0
        %v1366 = vadd.f32 %v804, %v1365
        %v1367 = vpop.f32.mrb[0].mxu0
        %v1368 = vpop.f32.mrb[0].mxu0
        %v1369 = vadd.f32 %v807, %v1368
        %1370 = vdwg.mxu0
        %1371 = vmatprep.subr.bf16.mxu0 0
        %1372 = vmatpush1.bf16.msra.mxu0 %v1148
        %1373 = vmatprep.subr.bf16.mxu0 0
        %1374 = vmatpush1.bf16.msra.mxu0 %v1151
        %1375 = vmatprep.subr.bf16.mxu0 0
        %1376 = vmatpush1.bf16.msra.mxu0 %v1154
        %1377 = vmatprep.subr.bf16.mxu0 0
        %1378 = vmatpush1.bf16.msra.mxu0 %v1157
        %1379 = vmatprep.subr.bf16.mxu0 0
        %1380 = vmatpush1.bf16.msra.mxu0 %v1160
        %1381 = vmatprep.subr.bf16.mxu0 0
        %1382 = vmatpush1.bf16.msra.mxu0 %v1163
        %1383 = vmatprep.subr.bf16.mxu0 0
        %1384 = vmatpush1.bf16.msra.mxu0 %v1166
        %1385 = vmatprep.subr.bf16.mxu0 0
        %1386 = vmatpush1.bf16.msra.mxu0 %v1169
        %1387 = vmatprep.subr.bf16.mxu0 0
        %1388 = vmatpush1.bf16.msra.mxu0 0
        %1389 = vmatprep.subr.bf16.mxu0 0
        %1390 = vmatpush1.bf16.msra.mxu0 0
        %1391 = vmatprep.subr.bf16.mxu0 0
        %1392 = vmatpush1.bf16.msra.mxu0 0
        %1393 = vmatprep.subr.bf16.mxu0 0
        %1394 = vmatpush1.bf16.msra.mxu0 0
        %1395 = vmatprep.subr.bf16.mxu0 0
        %1396 = vmatpush1.bf16.msra.mxu0 0
        %1397 = vmatprep.subr.bf16.mxu0 0
        %1398 = vmatpush1.bf16.msra.mxu0 0
        %1399 = vmatprep.subr.bf16.mxu0 0
        %1400 = vmatpush1.bf16.msra.mxu0 0
        %1401 = vmatprep.subr.bf16.mxu0 0
        %1402 = vmatpush1.bf16.msra.mxu0 0
        %1403 = vmatprep.mubr.bf16.mxu0 0
        %1404 = vmatmul.mubr.bf16.gmra.mrb[0].mxu0 %v1034
        %v1405 = vpop.f32.mrb[0].mxu0
        %v1406 = vadd.f32 %v844, %v1405
        %v1407 = vpop.f32.mrb[0].mxu0
        %v1408 = vpop.f32.mrb[0].mxu0
        %v1409 = vadd.f32 %v847, %v1408
        %v1410 = vpop.f32.mrb[0].mxu0
        %1411 = vmatprep.mubr.bf16.mxu0 0
        %1412 = vmatmul.mubr.bf16.gmra.mrb[0].mxu0 %v1035
        %v1413 = vpop.f32.mrb[0].mxu0
        %v1414 = vadd.f32 %v852, %v1413
        %v1415 = vpop.f32.mrb[0].mxu0
        %v1416 = vpop.f32.mrb[0].mxu0
        %v1417 = vadd.f32 %v855, %v1416
        %v1418 = vpop.f32.mrb[0].mxu0
        %1419 = vmatprep.mubr.bf16.mxu0 0
        %1420 = vmatmul.mubr.bf16.gmra.mrb[0].mxu0 %v1036
        %v1421 = vpop.f32.mrb[0].mxu0
        %v1422 = vadd.f32 %v860, %v1421
        %v1423 = vpop.f32.mrb[0].mxu0
        %v1424 = vpop.f32.mrb[0].mxu0
        %v1425 = vadd.f32 %v863, %v1424
        %v1426 = vpop.f32.mrb[0].mxu0
        %1427 = vmatprep.mubr.bf16.mxu0 0
        %1428 = vmatmul.mubr.bf16.gmra.mrb[0].mxu0 %v1037
        %v1429 = vpop.f32.mrb[0].mxu0
        %v1430 = vadd.f32 %v868, %v1429
        %v1431 = vpop.f32.mrb[0].mxu0
        %v1432 = vpop.f32.mrb[0].mxu0
        %v1433 = vadd.f32 %v871, %v1432
        %v1434 = vpop.f32.mrb[0].mxu0
        %1435 = vmatprep.mubr.bf16.mxu0 0
        %1436 = vmatmul.mubr.bf16.gmra.mrb[0].mxu0 %v1038
        %v1437 = vpop.f32.mrb[0].mxu0
        %v1438 = vadd.f32 %v876, %v1437
        %v1439 = vpop.f32.mrb[0].mxu0
        %v1440 = vpop.f32.mrb[0].mxu0
        %v1441 = vadd.f32 %v879, %v1440
        %v1442 = vpop.f32.mrb[0].mxu0
        %1443 = vmatprep.mubr.bf16.mxu0 0
        %1444 = vmatmul.mubr.bf16.gmra.mrb[0].mxu0 %v1039
        %v1445 = vpop.f32.mrb[0].mxu0
        %v1446 = vadd.f32 %v884, %v1445
        %v1447 = vpop.f32.mrb[0].mxu0
        %v1448 = vpop.f32.mrb[0].mxu0
        %v1449 = vadd.f32 %v887, %v1448
        %v1450 = vpop.f32.mrb[0].mxu0
        %1451 = vmatprep.mubr.bf16.mxu0 0
        %1452 = vmatmul.mubr.bf16.gmra.mrb[0].mxu0 %v1040
        %v1453 = vpop.f32.mrb[0].mxu0
        %v1454 = vadd.f32 %v892, %v1453
        %v1455 = vpop.f32.mrb[0].mxu0
        %v1456 = vpop.f32.mrb[0].mxu0
        %v1457 = vadd.f32 %v895, %v1456
        %v1458 = vpop.f32.mrb[0].mxu0
        %1459 = vmatprep.mubr.bf16.mxu0 0
        %1460 = vmatmul.mubr.bf16.gmra.mrb[0].mxu0 %v1041
        %v1461 = vpop.f32.mrb[0].mxu0
        %v1462 = vadd.f32 %v900, %v1461
        %v1463 = vpop.f32.mrb[0].mxu0
        %v1464 = vpop.f32.mrb[0].mxu0
        %v1465 = vadd.f32 %v903, %v1464
        %v1466 = vpop.f32.mrb[0].mxu0
        %1467 = vmatprep.mubr.bf16.mxu0 0
        %1468 = vmatmul.mubr.bf16.gmra.mrb[0].mxu0 %v1042
        %v1469 = vpop.f32.mrb[0].mxu0
        %v1470 = vadd.f32 %v908, %v1469
        %v1471 = vpop.f32.mrb[0].mxu0
        %v1472 = vpop.f32.mrb[0].mxu0
        %v1473 = vadd.f32 %v911, %v1472
        %v1474 = vpop.f32.mrb[0].mxu0
        %1475 = vmatprep.mubr.bf16.mxu0 0
        %1476 = vmatmul.mubr.bf16.gmra.mrb[0].mxu0 %v1043
        %v1477 = vpop.f32.mrb[0].mxu0
        %v1478 = vadd.f32 %v916, %v1477
        %v1479 = vpop.f32.mrb[0].mxu0
        %v1480 = vpop.f32.mrb[0].mxu0
        %v1481 = vadd.f32 %v919, %v1480
        %v1482 = vpop.f32.mrb[0].mxu0
        %1483 = vmatprep.mubr.bf16.mxu0 0
        %1484 = vmatmul.mubr.bf16.gmra.mrb[0].mxu0 %v1044
        %v1485 = vpop.f32.mrb[0].mxu0
        %v1486 = vadd.f32 %v924, %v1485
        %v1487 = vpop.f32.mrb[0].mxu0
        %v1488 = vpop.f32.mrb[0].mxu0
        %v1489 = vadd.f32 %v927, %v1488
        %v1490 = vpop.f32.mrb[0].mxu0
        %1491 = vmatprep.mubr.bf16.mxu0 0
        %1492 = vmatmul.mubr.bf16.gmra.mrb[0].mxu0 %v1045
        %v1493 = vpop.f32.mrb[0].mxu0
        %v1494 = vadd.f32 %v932, %v1493
        %v1495 = vpop.f32.mrb[0].mxu0
        %v1496 = vpop.f32.mrb[0].mxu0
        %v1497 = vadd.f32 %v935, %v1496
        %v1498 = vpop.f32.mrb[0].mxu0
        %1499 = vmatprep.mubr.bf16.mxu0 0
        %1500 = vmatmul.mubr.bf16.gmra.mrb[0].mxu0 %v1046
        %v1501 = vpop.f32.mrb[0].mxu0
        %v1502 = vadd.f32 %v940, %v1501
        %v1503 = vpop.f32.mrb[0].mxu0
        %v1504 = vpop.f32.mrb[0].mxu0
        %v1505 = vadd.f32 %v943, %v1504
        %v1506 = vpop.f32.mrb[0].mxu0
        %1507 = vmatprep.mubr.bf16.mxu0 0
        %1508 = vmatmul.mubr.bf16.gmra.mrb[0].mxu0 %v1047
        %v1509 = vpop.f32.mrb[0].mxu0
        %v1510 = vadd.f32 %v948, %v1509
        %v1511 = vpop.f32.mrb[0].mxu0
        %v1512 = vpop.f32.mrb[0].mxu0
        %v1513 = vadd.f32 %v951, %v1512
        %v1514 = vpop.f32.mrb[0].mxu0
        %1515 = vmatprep.mubr.bf16.mxu0 0
        %1516 = vmatmul.mubr.bf16.gmra.mrb[0].mxu0 %v1048
        %v1517 = vpop.f32.mrb[0].mxu0
        %v1518 = vadd.f32 %v956, %v1517
        %v1519 = vpop.f32.mrb[0].mxu0
        %v1520 = vpop.f32.mrb[0].mxu0
        %v1521 = vadd.f32 %v959, %v1520
        %v1522 = vpop.f32.mrb[0].mxu0
        %1523 = vmatprep.mubr.bf16.mxu0 0
        %1524 = vmatmul.mubr.bf16.gmra.mrb[0].mxu0 %v1049
        %v1525 = vpop.f32.mrb[0].mxu0
        %v1526 = vadd.f32 %v964, %v1525
        %v1527 = vpop.f32.mrb[0].mxu0
        %v1528 = vpop.f32.mrb[0].mxu0
        %v1529 = vadd.f32 %v967, %v1528
        %v1530 = vpop.f32.mrb[0].mxu0
        %1531 = vdwg.mxu0
        %s1532 = scalar_lea.vmem %s238, 16 [#allocation3]
        %v1533 = vld [vmem:[%s1532] sm:$0xf]
        %v1534 = vld [vmem:[%s1532 + $0x4] sm:$0xf]
        %v1535 = vld [vmem:[%s1532 + $0x8] sm:$0xf]
        %v1536 = vld [vmem:[%s1532 + $0xc] sm:$0xf]
        %v1537 = vld [vmem:[%s1532 + $0x10] sm:$0xf]
        %v1538 = vld [vmem:[%s1532 + $0x14] sm:$0xf]
        %v1539 = vld [vmem:[%s1532 + $0x18] sm:$0xf]
        %v1540 = vld [vmem:[%s1532 + $0x1c] sm:$0xf]
        %v1541 = vld [vmem:[%s1532 + $0x20] sm:$0xf]
        %v1542 = vld [vmem:[%s1532 + $0x24] sm:$0xf]
        %v1543 = vld [vmem:[%s1532 + $0x28] sm:$0xf]
        %v1544 = vld [vmem:[%s1532 + $0x2c] sm:$0xf]
        %v1545 = vld [vmem:[%s1532 + $0x30] sm:$0xf]
        %v1546 = vld [vmem:[%s1532 + $0x34] sm:$0xf]
        %v1547 = vld [vmem:[%s1532 + $0x38] sm:$0xf]
        %v1548 = vld [vmem:[%s1532 + $0x3c] sm:$0xf]
        %v1549 = vld [vmem:[%s1532 + $0x50] sm:$0xf]
        %v1550 = vld [vmem:[%s1532 + $0x54] sm:$0xf]
        %v1551 = vld [vmem:[%s1532 + $0x58] sm:$0xf]
        %v1552 = vld [vmem:[%s1532 + $0x5c] sm:$0xf]
        %v1553 = vld [vmem:[%s1532 + $0x60] sm:$0xf]
        %v1554 = vld [vmem:[%s1532 + $0x64] sm:$0xf]
        %v1555 = vld [vmem:[%s1532 + $0x68] sm:$0xf]
        %v1556 = vld [vmem:[%s1532 + $0x6c] sm:$0xf]
        %v1557 = vld [vmem:[%s1532 + $0x70] sm:$0xf]
        %v1558 = vld [vmem:[%s1532 + $0x74] sm:$0xf]
        %v1559 = vld [vmem:[%s1532 + $0x78] sm:$0xf]
        %v1560 = vld [vmem:[%s1532 + $0x7c] sm:$0xf]
        %v1561 = vld [vmem:[%s1532 + $0x80] sm:$0xf]
        %v1562 = vld [vmem:[%s1532 + $0x84] sm:$0xf]
        %v1563 = vld [vmem:[%s1532 + $0x88] sm:$0xf]
        %v1564 = vld [vmem:[%s1532 + $0x8c] sm:$0xf]
        %s1565 = scalar_lea.vmem [#allocation6], 384
        %v1566 = vld [vmem:[%s1565] sm:$0xff]
        %v1567 = vld [vmem:[%s1565 + $0x8] sm:$0xf]
        %v1568 = vld [vmem:[%s1565 + $0xc] sm:$0xff]
        %v1569 = vld [vmem:[%s1565 + $0x14] sm:$0xf]
        %v1570 = vld [vmem:[%s1565 + $0x18] sm:$0xff]
        %v1571 = vld [vmem:[%s1565 + $0x20] sm:$0xf]
        %v1572 = vld [vmem:[%s1565 + $0x24] sm:$0xff]
        %v1573 = vld [vmem:[%s1565 + $0x2c] sm:$0xf]
        %v1574 = vld [vmem:[%s1565 + $0x30] sm:$0xff]
        %v1575 = vld [vmem:[%s1565 + $0x38] sm:$0xf]
        %v1576 = vld [vmem:[%s1565 + $0x3c] sm:$0xff]
        %v1577 = vld [vmem:[%s1565 + $0x44] sm:$0xf]
        %v1578 = vld [vmem:[%s1565 + $0x48] sm:$0xff]
        %v1579 = vld [vmem:[%s1565 + $0x50] sm:$0xf]
        %v1580 = vld [vmem:[%s1565 + $0x54] sm:$0xff]
        %v1581 = vld [vmem:[%s1565 + $0x5c] sm:$0xf]
        %v1582 = vld [vmem:[%s1565 + $0x60] sm:$0xff]
        %v1583 = vld [vmem:[%s1565 + $0x68] sm:$0xf]
        %v1584 = vld [vmem:[%s1565 + $0x6c] sm:$0xff]
        %v1585 = vld [vmem:[%s1565 + $0x74] sm:$0xf]
        %v1586 = vld [vmem:[%s1565 + $0x78] sm:$0xff]
        %v1587 = vld [vmem:[%s1565 + $0x80] sm:$0xf]
        %v1588 = vld [vmem:[%s1565 + $0x84] sm:$0xff]
        %v1589 = vld [vmem:[%s1565 + $0x8c] sm:$0xf]
        %v1590 = vld [vmem:[%s1565 + $0x90] sm:$0xff]
        %v1591 = vld [vmem:[%s1565 + $0x98] sm:$0xf]
        %v1592 = vld [vmem:[%s1565 + $0x9c] sm:$0xff]
        %v1593 = vld [vmem:[%s1565 + $0xa4] sm:$0xf]
        %v1594 = vld [vmem:[%s1565 + $0xa8] sm:$0xff]
        %v1595 = vld [vmem:[%s1565 + $0xb0] sm:$0xf]
        %v1596 = vld [vmem:[%s1565 + $0xb4] sm:$0xff]
        %v1597 = vld [vmem:[%s1565 + $0xbc] sm:$0xf]
        %v1630 = vunpack.c.l.b16 %v1533
        %v1631 = vunpack.c.l.b16 %v1534
        %v1632 = vunpack.c.l.b16 %v1535
        %v1633 = vunpack.c.l.b16 %v1536
        %v1634 = vunpack.c.l.b16 %v1537
        %v1635 = vunpack.c.l.b16 %v1538
        %v1636 = vunpack.c.l.b16 %v1539
        %v1637 = vunpack.c.l.b16 %v1540
        %v1638 = vunpack.c.l.b16 %v1541
        %v1639 = vunpack.c.l.b16 %v1542
        %v1640 = vunpack.c.l.b16 %v1543
        %v1641 = vunpack.c.l.b16 %v1544
        %v1642 = vunpack.c.l.b16 %v1545
        %v1643 = vunpack.c.l.b16 %v1546
        %v1644 = vunpack.c.l.b16 %v1547
        %v1645 = vunpack.c.l.b16 %v1548
        %v1646 = vunpack.c.l.b16 %v1549
        %v1647 = vunpack.c.l.b16 %v1550
        %v1648 = vunpack.c.l.b16 %v1551
        %v1649 = vunpack.c.l.b16 %v1552
        %v1650 = vunpack.c.l.b16 %v1553
        %v1651 = vunpack.c.l.b16 %v1554
        %v1652 = vunpack.c.l.b16 %v1555
        %v1653 = vunpack.c.l.b16 %v1556
        %v1654 = vunpack.c.l.b16 %v1557
        %v1655 = vunpack.c.l.b16 %v1558
        %v1656 = vunpack.c.l.b16 %v1559
        %v1657 = vunpack.c.l.b16 %v1560
        %v1658 = vunpack.c.l.b16 %v1561
        %v1659 = vunpack.c.l.b16 %v1562
        %v1660 = vunpack.c.l.b16 %v1563
        %v1661 = vunpack.c.l.b16 %v1564
        %v1662 = vpack.c.b16 %v1631, %v1630
        %v1663 = vpack.c.b16 %v1633, %v1632
        %v1664 = vpack.c.b16 %v1635, %v1634
        %v1665 = vpack.c.b16 %v1637, %v1636
        %v1666 = vpack.c.b16 %v1639, %v1638
        %v1667 = vpack.c.b16 %v1641, %v1640
        %v1668 = vpack.c.b16 %v1643, %v1642
        %v1669 = vpack.c.b16 %v1645, %v1644
        %v1670 = vpack.c.b16 %v1647, %v1646
        %v1671 = vpack.c.b16 %v1649, %v1648
        %v1672 = vpack.c.b16 %v1651, %v1650
        %v1673 = vpack.c.b16 %v1653, %v1652
        %v1674 = vpack.c.b16 %v1655, %v1654
        %v1675 = vpack.c.b16 %v1657, %v1656
        %v1676 = vpack.c.b16 %v1659, %v1658
        %v1677 = vpack.c.b16 %v1661, %v1660
        %v1726 = vunpack.c.l.b16 %v1566
        %v1727 = vunpack.c.h.b16 %v1566
        %v1728 = vunpack.c.l.b16 %v1567
        %v1729 = vunpack.c.l.b16 %v1568
        %v1730 = vunpack.c.h.b16 %v1568
        %v1731 = vunpack.c.l.b16 %v1569
        %v1732 = vunpack.c.l.b16 %v1570
        %v1733 = vunpack.c.h.b16 %v1570
        %v1734 = vunpack.c.l.b16 %v1571
        %v1735 = vunpack.c.l.b16 %v1572
        %v1736 = vunpack.c.h.b16 %v1572
        %v1737 = vunpack.c.l.b16 %v1573
        %v1738 = vunpack.c.l.b16 %v1574
        %v1739 = vunpack.c.h.b16 %v1574
        %v1740 = vunpack.c.l.b16 %v1575
        %v1741 = vunpack.c.l.b16 %v1576
        %v1742 = vunpack.c.h.b16 %v1576
        %v1743 = vunpack.c.l.b16 %v1577
        %v1744 = vunpack.c.l.b16 %v1578
        %v1745 = vunpack.c.h.b16 %v1578
        %v1746 = vunpack.c.l.b16 %v1579
        %v1747 = vunpack.c.l.b16 %v1580
        %v1748 = vunpack.c.h.b16 %v1580
        %v1749 = vunpack.c.l.b16 %v1581
        %v1750 = vunpack.c.l.b16 %v1582
        %v1751 = vunpack.c.h.b16 %v1582
        %v1752 = vunpack.c.l.b16 %v1583
        %v1753 = vunpack.c.l.b16 %v1584
        %v1754 = vunpack.c.h.b16 %v1584
        %v1755 = vunpack.c.l.b16 %v1585
        %v1756 = vunpack.c.l.b16 %v1586
        %v1757 = vunpack.c.h.b16 %v1586
        %v1758 = vunpack.c.l.b16 %v1587
        %v1759 = vunpack.c.l.b16 %v1588
        %v1760 = vunpack.c.h.b16 %v1588
        %v1761 = vunpack.c.l.b16 %v1589
        %v1762 = vunpack.c.l.b16 %v1590
        %v1763 = vunpack.c.h.b16 %v1590
        %v1764 = vunpack.c.l.b16 %v1591
        %v1765 = vunpack.c.l.b16 %v1592
        %v1766 = vunpack.c.h.b16 %v1592
        %v1767 = vunpack.c.l.b16 %v1593
        %v1768 = vunpack.c.l.b16 %v1594
        %v1769 = vunpack.c.h.b16 %v1594
        %v1770 = vunpack.c.l.b16 %v1595
        %v1771 = vunpack.c.l.b16 %v1596
        %v1772 = vunpack.c.h.b16 %v1596
        %v1773 = vunpack.c.l.b16 %v1597
        %v1774 = vpack.c.b16 %v1729, %v1726
        %v1775 = vpack.c.b16 %v1730, %v1727
        %v1776 = vpack.c.b16 %v1731, %v1728
        %v1777 = vpack.c.b16 %v1735, %v1732
        %v1778 = vpack.c.b16 %v1736, %v1733
        %v1779 = vpack.c.b16 %v1737, %v1734
        %v1780 = vpack.c.b16 %v1741, %v1738
        %v1781 = vpack.c.b16 %v1742, %v1739
        %v1782 = vpack.c.b16 %v1743, %v1740
        %v1783 = vpack.c.b16 %v1747, %v1744
        %v1784 = vpack.c.b16 %v1748, %v1745
        %v1785 = vpack.c.b16 %v1749, %v1746
        %v1786 = vpack.c.b16 %v1753, %v1750
        %v1787 = vpack.c.b16 %v1754, %v1751
        %v1788 = vpack.c.b16 %v1755, %v1752
        %v1789 = vpack.c.b16 %v1759, %v1756
        %v1790 = vpack.c.b16 %v1760, %v1757
        %v1791 = vpack.c.b16 %v1761, %v1758
        %v1792 = vpack.c.b16 %v1765, %v1762
        %v1793 = vpack.c.b16 %v1766, %v1763
        %v1794 = vpack.c.b16 %v1767, %v1764
        %v1795 = vpack.c.b16 %v1771, %v1768
        %v1796 = vpack.c.b16 %v1772, %v1769
        %v1797 = vpack.c.b16 %v1773, %v1770
        %1822 = vmatprep.subr.bf16.mxu0 %v1775
        %1823 = vmatpush1.bf16.msra.mxu0 %v1774
        %1824 = vmatprep.subr.bf16.mxu0 %v1778
        %1825 = vmatpush1.bf16.msra.mxu0 %v1777
        %1826 = vmatprep.subr.bf16.mxu0 %v1781
        %1827 = vmatpush1.bf16.msra.mxu0 %v1780
        %1828 = vmatprep.subr.bf16.mxu0 %v1784
        %1829 = vmatpush1.bf16.msra.mxu0 %v1783
        %1830 = vmatprep.subr.bf16.mxu0 %v1787
        %1831 = vmatpush1.bf16.msra.mxu0 %v1786
        %1832 = vmatprep.subr.bf16.mxu0 %v1790
        %1833 = vmatpush1.bf16.msra.mxu0 %v1789
        %1834 = vmatprep.subr.bf16.mxu0 %v1793
        %1835 = vmatpush1.bf16.msra.mxu0 %v1792
        %1836 = vmatprep.subr.bf16.mxu0 %v1796
        %1837 = vmatpush1.bf16.msra.mxu0 %v1795
        %1838 = vmatprep.subr.bf16.mxu0 0
        %1839 = vmatpush1.bf16.msra.mxu0 0
        %1840 = vmatprep.subr.bf16.mxu0 0
        %1841 = vmatpush1.bf16.msra.mxu0 0
        %1842 = vmatprep.subr.bf16.mxu0 0
        %1843 = vmatpush1.bf16.msra.mxu0 0
        %1844 = vmatprep.subr.bf16.mxu0 0
        %1845 = vmatpush1.bf16.msra.mxu0 0
        %1846 = vmatprep.subr.bf16.mxu0 0
        %1847 = vmatpush1.bf16.msra.mxu0 0
        %1848 = vmatprep.subr.bf16.mxu0 0
        %1849 = vmatpush1.bf16.msra.mxu0 0
        %1850 = vmatprep.subr.bf16.mxu0 0
        %1851 = vmatpush1.bf16.msra.mxu0 0
        %1852 = vmatprep.subr.bf16.mxu0 0
        %1853 = vmatpush1.bf16.msra.mxu0 0
        %1854 = vmatprep.mubr.bf16.mxu0 0
        %1855 = vmatmul.mubr.bf16.gmra.mrb[0].mxu0 %v1662
        %v1856 = vpop.f32.mrb[0].mxu0
        %v1857 = vadd.f32 0.0, %v1856
        %v1858 = vpop.f32.mrb[0].mxu0
        %v1859 = vadd.f32 0.0, %v1858
        %v1860 = vpop.f32.mrb[0].mxu0
        %v1861 = vpop.f32.mrb[0].mxu0
        %v1862 = vadd.f32 0.0, %v1861
        %1863 = vmatprep.mubr.bf16.mxu0 0
        %1864 = vmatmul.mubr.bf16.gmra.mrb[0].mxu0 %v1663
        %v1865 = vpop.f32.mrb[0].mxu0
        %v1866 = vadd.f32 0.0, %v1865
        %v1867 = vpop.f32.mrb[0].mxu0
        %v1868 = vadd.f32 0.0, %v1867
        %v1869 = vpop.f32.mrb[0].mxu0
        %v1870 = vpop.f32.mrb[0].mxu0
        %v1871 = vadd.f32 0.0, %v1870
        %1872 = vmatprep.mubr.bf16.mxu0 0
        %1873 = vmatmul.mubr.bf16.gmra.mrb[0].mxu0 %v1664
        %v1874 = vpop.f32.mrb[0].mxu0
        %v1875 = vadd.f32 0.0, %v1874
        %v1876 = vpop.f32.mrb[0].mxu0
        %v1877 = vadd.f32 0.0, %v1876
        %v1878 = vpop.f32.mrb[0].mxu0
        %v1879 = vpop.f32.mrb[0].mxu0
        %v1880 = vadd.f32 0.0, %v1879
        %1881 = vmatprep.mubr.bf16.mxu0 0
        %1882 = vmatmul.mubr.bf16.gmra.mrb[0].mxu0 %v1665
        %v1883 = vpop.f32.mrb[0].mxu0
        %v1884 = vadd.f32 0.0, %v1883
        %v1885 = vpop.f32.mrb[0].mxu0
        %v1886 = vadd.f32 0.0, %v1885
        %v1887 = vpop.f32.mrb[0].mxu0
        %v1888 = vpop.f32.mrb[0].mxu0
        %v1889 = vadd.f32 0.0, %v1888
        %1890 = vmatprep.mubr.bf16.mxu0 0
        %1891 = vmatmul.mubr.bf16.gmra.mrb[0].mxu0 %v1666
        %v1892 = vpop.f32.mrb[0].mxu0
        %v1893 = vadd.f32 0.0, %v1892
        %v1894 = vpop.f32.mrb[0].mxu0
        %v1895 = vadd.f32 0.0, %v1894
        %v1896 = vpop.f32.mrb[0].mxu0
        %v1897 = vpop.f32.mrb[0].mxu0
        %v1898 = vadd.f32 0.0, %v1897
        %1899 = vmatprep.mubr.bf16.mxu0 0
        %1900 = vmatmul.mubr.bf16.gmra.mrb[0].mxu0 %v1667
        %v1901 = vpop.f32.mrb[0].mxu0
        %v1902 = vadd.f32 0.0, %v1901
        %v1903 = vpop.f32.mrb[0].mxu0
        %v1904 = vadd.f32 0.0, %v1903
        %v1905 = vpop.f32.mrb[0].mxu0
        %v1906 = vpop.f32.mrb[0].mxu0
        %v1907 = vadd.f32 0.0, %v1906
        %1908 = vmatprep.mubr.bf16.mxu0 0
        %1909 = vmatmul.mubr.bf16.gmra.mrb[0].mxu0 %v1668
        %v1910 = vpop.f32.mrb[0].mxu0
        %v1911 = vadd.f32 0.0, %v1910
        %v1912 = vpop.f32.mrb[0].mxu0
        %v1913 = vadd.f32 0.0, %v1912
        %v1914 = vpop.f32.mrb[0].mxu0
        %v1915 = vpop.f32.mrb[0].mxu0
        %v1916 = vadd.f32 0.0, %v1915
        %1917 = vmatprep.mubr.bf16.mxu0 0
        %1918 = vmatmul.mubr.bf16.gmra.mrb[0].mxu0 %v1669
        %v1919 = vpop.f32.mrb[0].mxu0
        %v1920 = vadd.f32 0.0, %v1919
        %v1921 = vpop.f32.mrb[0].mxu0
        %v1922 = vadd.f32 0.0, %v1921
        %v1923 = vpop.f32.mrb[0].mxu0
        %v1924 = vpop.f32.mrb[0].mxu0
        %v1925 = vadd.f32 0.0, %v1924
        %1926 = vmatprep.mubr.bf16.mxu0 0
        %1927 = vmatmul.mubr.bf16.gmra.mrb[0].mxu0 %v1670
        %v1928 = vpop.f32.mrb[0].mxu0
        %v1929 = vadd.f32 0.0, %v1928
        %v1930 = vpop.f32.mrb[0].mxu0
        %v1931 = vadd.f32 0.0, %v1930
        %v1932 = vpop.f32.mrb[0].mxu0
        %v1933 = vpop.f32.mrb[0].mxu0
        %v1934 = vadd.f32 0.0, %v1933
        %1935 = vmatprep.mubr.bf16.mxu0 0
        %1936 = vmatmul.mubr.bf16.gmra.mrb[0].mxu0 %v1671
        %v1937 = vpop.f32.mrb[0].mxu0
        %v1938 = vadd.f32 0.0, %v1937
        %v1939 = vpop.f32.mrb[0].mxu0
        %v1940 = vadd.f32 0.0, %v1939
        %v1941 = vpop.f32.mrb[0].mxu0
        %v1942 = vpop.f32.mrb[0].mxu0
        %v1943 = vadd.f32 0.0, %v1942
        %1944 = vmatprep.mubr.bf16.mxu0 0
        %1945 = vmatmul.mubr.bf16.gmra.mrb[0].mxu0 %v1672
        %v1946 = vpop.f32.mrb[0].mxu0
        %v1947 = vadd.f32 0.0, %v1946
        %v1948 = vpop.f32.mrb[0].mxu0
        %v1949 = vadd.f32 0.0, %v1948
        %v1950 = vpop.f32.mrb[0].mxu0
        %v1951 = vpop.f32.mrb[0].mxu0
        %v1952 = vadd.f32 0.0, %v1951
        %1953 = vmatprep.mubr.bf16.mxu0 0
        %1954 = vmatmul.mubr.bf16.gmra.mrb[0].mxu0 %v1673
        %v1955 = vpop.f32.mrb[0].mxu0
        %v1956 = vadd.f32 0.0, %v1955
        %v1957 = vpop.f32.mrb[0].mxu0
        %v1958 = vadd.f32 0.0, %v1957
        %v1959 = vpop.f32.mrb[0].mxu0
        %v1960 = vpop.f32.mrb[0].mxu0
        %v1961 = vadd.f32 0.0, %v1960
        %1962 = vmatprep.mubr.bf16.mxu0 0
        %1963 = vmatmul.mubr.bf16.gmra.mrb[0].mxu0 %v1674
        %v1964 = vpop.f32.mrb[0].mxu0
        %v1965 = vadd.f32 0.0, %v1964
        %v1966 = vpop.f32.mrb[0].mxu0
        %v1967 = vadd.f32 0.0, %v1966
        %v1968 = vpop.f32.mrb[0].mxu0
        %v1969 = vpop.f32.mrb[0].mxu0
        %v1970 = vadd.f32 0.0, %v1969
        %1971 = vmatprep.mubr.bf16.mxu0 0
        %1972 = vmatmul.mubr.bf16.gmra.mrb[0].mxu0 %v1675
        %v1973 = vpop.f32.mrb[0].mxu0
        %v1974 = vadd.f32 0.0, %v1973
        %v1975 = vpop.f32.mrb[0].mxu0
        %v1976 = vadd.f32 0.0, %v1975
        %v1977 = vpop.f32.mrb[0].mxu0
        %v1978 = vpop.f32.mrb[0].mxu0
        %v1979 = vadd.f32 0.0, %v1978
        %1980 = vmatprep.mubr.bf16.mxu0 0
        %1981 = vmatmul.mubr.bf16.gmra.mrb[0].mxu0 %v1676
        %v1982 = vpop.f32.mrb[0].mxu0
        %v1983 = vadd.f32 0.0, %v1982
        %v1984 = vpop.f32.mrb[0].mxu0
        %v1985 = vadd.f32 0.0, %v1984
        %v1986 = vpop.f32.mrb[0].mxu0
        %v1987 = vpop.f32.mrb[0].mxu0
        %v1988 = vadd.f32 0.0, %v1987
        %1989 = vmatprep.mubr.bf16.mxu0 0
        %1990 = vmatmul.mubr.bf16.gmra.mrb[0].mxu0 %v1677
        %v1991 = vpop.f32.mrb[0].mxu0
        %v1992 = vadd.f32 0.0, %v1991
        %v1993 = vpop.f32.mrb[0].mxu0
        %v1994 = vadd.f32 0.0, %v1993
        %v1995 = vpop.f32.mrb[0].mxu0
        %v1996 = vpop.f32.mrb[0].mxu0
        %v1997 = vadd.f32 0.0, %v1996
        %1998 = vdwg.mxu0
        %1999 = vmatprep.subr.bf16.mxu0 0
        %2000 = vmatpush1.bf16.msra.mxu0 %v1776
        %2001 = vmatprep.subr.bf16.mxu0 0
        %2002 = vmatpush1.bf16.msra.mxu0 %v1779
        %2003 = vmatprep.subr.bf16.mxu0 0
        %2004 = vmatpush1.bf16.msra.mxu0 %v1782
        %2005 = vmatprep.subr.bf16.mxu0 0
        %2006 = vmatpush1.bf16.msra.mxu0 %v1785
        %2007 = vmatprep.subr.bf16.mxu0 0
        %2008 = vmatpush1.bf16.msra.mxu0 %v1788
        %2009 = vmatprep.subr.bf16.mxu0 0
        %2010 = vmatpush1.bf16.msra.mxu0 %v1791
        %2011 = vmatprep.subr.bf16.mxu0 0
        %2012 = vmatpush1.bf16.msra.mxu0 %v1794
        %2013 = vmatprep.subr.bf16.mxu0 0
        %2014 = vmatpush1.bf16.msra.mxu0 %v1797
        %2015 = vmatprep.subr.bf16.mxu0 0
        %2016 = vmatpush1.bf16.msra.mxu0 0
        %2017 = vmatprep.subr.bf16.mxu0 0
        %2018 = vmatpush1.bf16.msra.mxu0 0
        %2019 = vmatprep.subr.bf16.mxu0 0
        %2020 = vmatpush1.bf16.msra.mxu0 0
        %2021 = vmatprep.subr.bf16.mxu0 0
        %2022 = vmatpush1.bf16.msra.mxu0 0
        %2023 = vmatprep.subr.bf16.mxu0 0
        %2024 = vmatpush1.bf16.msra.mxu0 0
        %2025 = vmatprep.subr.bf16.mxu0 0
        %2026 = vmatpush1.bf16.msra.mxu0 0
        %2027 = vmatprep.subr.bf16.mxu0 0
        %2028 = vmatpush1.bf16.msra.mxu0 0
        %2029 = vmatprep.subr.bf16.mxu0 0
        %2030 = vmatpush1.bf16.msra.mxu0 0
        %2031 = vmatprep.mubr.bf16.mxu0 0
        %2032 = vmatmul.mubr.bf16.gmra.mrb[0].mxu0 %v1662
        %v2033 = vpop.f32.mrb[0].mxu0
        %v2034 = vadd.f32 0.0, %v2033
        %v2035 = vpop.f32.mrb[0].mxu0
        %v2036 = vpop.f32.mrb[0].mxu0
        %v2037 = vadd.f32 0.0, %v2036
        %v2038 = vpop.f32.mrb[0].mxu0
        %2039 = vmatprep.mubr.bf16.mxu0 0
        %2040 = vmatmul.mubr.bf16.gmra.mrb[0].mxu0 %v1663
        %v2041 = vpop.f32.mrb[0].mxu0
        %v2042 = vadd.f32 0.0, %v2041
        %v2043 = vpop.f32.mrb[0].mxu0
        %v2044 = vpop.f32.mrb[0].mxu0
        %v2045 = vadd.f32 0.0, %v2044
        %v2046 = vpop.f32.mrb[0].mxu0
        %2047 = vmatprep.mubr.bf16.mxu0 0
        %2048 = vmatmul.mubr.bf16.gmra.mrb[0].mxu0 %v1664
        %v2049 = vpop.f32.mrb[0].mxu0
        %v2050 = vadd.f32 0.0, %v2049
        %v2051 = vpop.f32.mrb[0].mxu0
        %v2052 = vpop.f32.mrb[0].mxu0
        %v2053 = vadd.f32 0.0, %v2052
        %v2054 = vpop.f32.mrb[0].mxu0
        %2055 = vmatprep.mubr.bf16.mxu0 0
        %2056 = vmatmul.mubr.bf16.gmra.mrb[0].mxu0 %v1665
        %v2057 = vpop.f32.mrb[0].mxu0
        %v2058 = vadd.f32 0.0, %v2057
        %v2059 = vpop.f32.mrb[0].mxu0
        %v2060 = vpop.f32.mrb[0].mxu0
        %v2061 = vadd.f32 0.0, %v2060
        %v2062 = vpop.f32.mrb[0].mxu0
        %2063 = vmatprep.mubr.bf16.mxu0 0
        %2064 = vmatmul.mubr.bf16.gmra.mrb[0].mxu0 %v1666
        %v2065 = vpop.f32.mrb[0].mxu0
        %v2066 = vadd.f32 0.0, %v2065
        %v2067 = vpop.f32.mrb[0].mxu0
        %v2068 = vpop.f32.mrb[0].mxu0
        %v2069 = vadd.f32 0.0, %v2068
        %v2070 = vpop.f32.mrb[0].mxu0
        %2071 = vmatprep.mubr.bf16.mxu0 0
        %2072 = vmatmul.mubr.bf16.gmra.mrb[0].mxu0 %v1667
        %v2073 = vpop.f32.mrb[0].mxu0
        %v2074 = vadd.f32 0.0, %v2073
        %v2075 = vpop.f32.mrb[0].mxu0
        %v2076 = vpop.f32.mrb[0].mxu0
        %v2077 = vadd.f32 0.0, %v2076
        %v2078 = vpop.f32.mrb[0].mxu0
        %2079 = vmatprep.mubr.bf16.mxu0 0
        %2080 = vmatmul.mubr.bf16.gmra.mrb[0].mxu0 %v1668
        %v2081 = vpop.f32.mrb[0].mxu0
        %v2082 = vadd.f32 0.0, %v2081
        %v2083 = vpop.f32.mrb[0].mxu0
        %v2084 = vpop.f32.mrb[0].mxu0
        %v2085 = vadd.f32 0.0, %v2084
        %v2086 = vpop.f32.mrb[0].mxu0
        %2087 = vmatprep.mubr.bf16.mxu0 0
        %2088 = vmatmul.mubr.bf16.gmra.mrb[0].mxu0 %v1669
        %v2089 = vpop.f32.mrb[0].mxu0
        %v2090 = vadd.f32 0.0, %v2089
        %v2091 = vpop.f32.mrb[0].mxu0
        %v2092 = vpop.f32.mrb[0].mxu0
        %v2093 = vadd.f32 0.0, %v2092
        %v2094 = vpop.f32.mrb[0].mxu0
        %2095 = vmatprep.mubr.bf16.mxu0 0
        %2096 = vmatmul.mubr.bf16.gmra.mrb[0].mxu0 %v1670
        %v2097 = vpop.f32.mrb[0].mxu0
        %v2098 = vadd.f32 0.0, %v2097
        %v2099 = vpop.f32.mrb[0].mxu0
        %v2100 = vpop.f32.mrb[0].mxu0
        %v2101 = vadd.f32 0.0, %v2100
        %v2102 = vpop.f32.mrb[0].mxu0
        %2103 = vmatprep.mubr.bf16.mxu0 0
        %2104 = vmatmul.mubr.bf16.gmra.mrb[0].mxu0 %v1671
        %v2105 = vpop.f32.mrb[0].mxu0
        %v2106 = vadd.f32 0.0, %v2105
        %v2107 = vpop.f32.mrb[0].mxu0
        %v2108 = vpop.f32.mrb[0].mxu0
        %v2109 = vadd.f32 0.0, %v2108
        %v2110 = vpop.f32.mrb[0].mxu0
        %2111 = vmatprep.mubr.bf16.mxu0 0
        %2112 = vmatmul.mubr.bf16.gmra.mrb[0].mxu0 %v1672
        %v2113 = vpop.f32.mrb[0].mxu0
        %v2114 = vadd.f32 0.0, %v2113
        %v2115 = vpop.f32.mrb[0].mxu0
        %v2116 = vpop.f32.mrb[0].mxu0
        %v2117 = vadd.f32 0.0, %v2116
        %v2118 = vpop.f32.mrb[0].mxu0
        %2119 = vmatprep.mubr.bf16.mxu0 0
        %2120 = vmatmul.mubr.bf16.gmra.mrb[0].mxu0 %v1673
        %v2121 = vpop.f32.mrb[0].mxu0
        %v2122 = vadd.f32 0.0, %v2121
        %v2123 = vpop.f32.mrb[0].mxu0
        %v2124 = vpop.f32.mrb[0].mxu0
        %v2125 = vadd.f32 0.0, %v2124
        %v2126 = vpop.f32.mrb[0].mxu0
        %2127 = vmatprep.mubr.bf16.mxu0 0
        %2128 = vmatmul.mubr.bf16.gmra.mrb[0].mxu0 %v1674
        %v2129 = vpop.f32.mrb[0].mxu0
        %v2130 = vadd.f32 0.0, %v2129
        %v2131 = vpop.f32.mrb[0].mxu0
        %v2132 = vpop.f32.mrb[0].mxu0
        %v2133 = vadd.f32 0.0, %v2132
        %v2134 = vpop.f32.mrb[0].mxu0
        %2135 = vmatprep.mubr.bf16.mxu0 0
        %2136 = vmatmul.mubr.bf16.gmra.mrb[0].mxu0 %v1675
        %v2137 = vpop.f32.mrb[0].mxu0
        %v2138 = vadd.f32 0.0, %v2137
        %v2139 = vpop.f32.mrb[0].mxu0
        %v2140 = vpop.f32.mrb[0].mxu0
        %v2141 = vadd.f32 0.0, %v2140
        %v2142 = vpop.f32.mrb[0].mxu0
        %2143 = vmatprep.mubr.bf16.mxu0 0
        %2144 = vmatmul.mubr.bf16.gmra.mrb[0].mxu0 %v1676
        %v2145 = vpop.f32.mrb[0].mxu0
        %v2146 = vadd.f32 0.0, %v2145
        %v2147 = vpop.f32.mrb[0].mxu0
        %v2148 = vpop.f32.mrb[0].mxu0
        %v2149 = vadd.f32 0.0, %v2148
        %v2150 = vpop.f32.mrb[0].mxu0
        %2151 = vmatprep.mubr.bf16.mxu0 0
        %2152 = vmatmul.mubr.bf16.gmra.mrb[0].mxu0 %v1677
        %v2153 = vpop.f32.mrb[0].mxu0
        %v2154 = vadd.f32 0.0, %v2153
        %v2155 = vpop.f32.mrb[0].mxu0
        %v2156 = vpop.f32.mrb[0].mxu0
        %v2157 = vadd.f32 0.0, %v2156
        %v2158 = vpop.f32.mrb[0].mxu0
        %2159 = vdwg.mxu0
        %v2160 = vadd.f32 %v1229, %v1857
        %v2161 = vadd.f32 %v1231, %v1859
        %v2162 = vadd.f32 %v1406, %v2034
        %v2163 = vadd.f32 %v1234, %v1862
        %v2164 = vadd.f32 %v1409, %v2037
        %v2165 = vadd.f32 %v1238, %v1866
        %v2166 = vadd.f32 %v1240, %v1868
        %v2167 = vadd.f32 %v1414, %v2042
        %v2168 = vadd.f32 %v1243, %v1871
        %v2169 = vadd.f32 %v1417, %v2045
        %v2170 = vadd.f32 %v1247, %v1875
        %v2171 = vadd.f32 %v1249, %v1877
        %v2172 = vadd.f32 %v1422, %v2050
        %v2173 = vadd.f32 %v1252, %v1880
        %v2174 = vadd.f32 %v1425, %v2053
        %v2175 = vadd.f32 %v1256, %v1884
        %v2176 = vadd.f32 %v1258, %v1886
        %v2177 = vadd.f32 %v1430, %v2058
        %v2178 = vadd.f32 %v1261, %v1889
        %v2179 = vadd.f32 %v1433, %v2061
        %v2180 = vadd.f32 %v1265, %v1893
        %v2181 = vadd.f32 %v1267, %v1895
        %v2182 = vadd.f32 %v1438, %v2066
        %v2183 = vadd.f32 %v1270, %v1898
        %v2184 = vadd.f32 %v1441, %v2069
        %v2185 = vadd.f32 %v1274, %v1902
        %v2186 = vadd.f32 %v1276, %v1904
        %v2187 = vadd.f32 %v1446, %v2074
        %v2188 = vadd.f32 %v1279, %v1907
        %v2189 = vadd.f32 %v1449, %v2077
        %v2190 = vadd.f32 %v1283, %v1911
        %v2191 = vadd.f32 %v1285, %v1913
        %v2192 = vadd.f32 %v1454, %v2082
        %v2193 = vadd.f32 %v1288, %v1916
        %v2194 = vadd.f32 %v1457, %v2085
        %v2195 = vadd.f32 %v1292, %v1920
        %v2196 = vadd.f32 %v1294, %v1922
        %v2197 = vadd.f32 %v1462, %v2090
        %v2198 = vadd.f32 %v1297, %v1925
        %v2199 = vadd.f32 %v1465, %v2093
        %v2200 = vadd.f32 %v1301, %v1929
        %v2201 = vadd.f32 %v1303, %v1931
        %v2202 = vadd.f32 %v1470, %v2098
        %v2203 = vadd.f32 %v1306, %v1934
        %v2204 = vadd.f32 %v1473, %v2101
        %v2205 = vadd.f32 %v1310, %v1938
        %v2206 = vadd.f32 %v1312, %v1940
        %v2207 = vadd.f32 %v1478, %v2106
        %v2208 = vadd.f32 %v1315, %v1943
        %v2209 = vadd.f32 %v1481, %v2109
        %v2210 = vadd.f32 %v1319, %v1947
        %v2211 = vadd.f32 %v1321, %v1949
        %v2212 = vadd.f32 %v1486, %v2114
        %v2213 = vadd.f32 %v1324, %v1952
        %v2214 = vadd.f32 %v1489, %v2117
        %v2215 = vadd.f32 %v1328, %v1956
        %v2216 = vadd.f32 %v1330, %v1958
        %v2217 = vadd.f32 %v1494, %v2122
        %v2218 = vadd.f32 %v1333, %v1961
        %v2219 = vadd.f32 %v1497, %v2125
        %v2220 = vadd.f32 %v1337, %v1965
        %v2221 = vadd.f32 %v1339, %v1967
        %v2222 = vadd.f32 %v1502, %v2130
        %v2223 = vadd.f32 %v1342, %v1970
        %v2224 = vadd.f32 %v1505, %v2133
        %v2225 = vadd.f32 %v1346, %v1974
        %v2226 = vadd.f32 %v1348, %v1976
        %v2227 = vadd.f32 %v1510, %v2138
        %v2228 = vadd.f32 %v1351, %v1979
        %v2229 = vadd.f32 %v1513, %v2141
        %v2230 = vadd.f32 %v1355, %v1983
        %v2231 = vadd.f32 %v1357, %v1985
        %v2232 = vadd.f32 %v1518, %v2146
        %v2233 = vadd.f32 %v1360, %v1988
        %v2234 = vadd.f32 %v1521, %v2149
        %v2235 = vadd.f32 %v1364, %v1992
        %v2236 = vadd.f32 %v1366, %v1994
        %v2237 = vadd.f32 %v1526, %v2154
        %v2238 = vadd.f32 %v1369, %v1997
        %v2239 = vadd.f32 %v1529, %v2157
        %vm2272 = vcmask 1046528
        %v2273 = vrot.slane %v2161, 1
        %v2274 = vrot.slane %v2163, 1
        %v2275 = vsel %vm2272, %v2273, %v2274
        %v2276 = vrot.slane %v2166, 1
        %v2277 = vrot.slane %v2168, 1
        %v2278 = vsel %vm2272, %v2276, %v2277
        %v2279 = vrot.slane %v2171, 1
        %v2280 = vrot.slane %v2173, 1
        %v2281 = vsel %vm2272, %v2279, %v2280
        %v2282 = vrot.slane %v2176, 1
        %v2283 = vrot.slane %v2178, 1
        %v2284 = vsel %vm2272, %v2282, %v2283
        %v2285 = vrot.slane %v2181, 1
        %v2286 = vrot.slane %v2183, 1
        %v2287 = vsel %vm2272, %v2285, %v2286
        %v2288 = vrot.slane %v2186, 1
        %v2289 = vrot.slane %v2188, 1
        %v2290 = vsel %vm2272, %v2288, %v2289
        %v2291 = vrot.slane %v2191, 1
        %v2292 = vrot.slane %v2193, 1
        %v2293 = vsel %vm2272, %v2291, %v2292
        %v2294 = vrot.slane %v2196, 1
        %v2295 = vrot.slane %v2198, 1
        %v2296 = vsel %vm2272, %v2294, %v2295
        %v2297 = vrot.slane %v2201, 1
        %v2298 = vrot.slane %v2203, 1
        %v2299 = vsel %vm2272, %v2297, %v2298
        %v2300 = vrot.slane %v2206, 1
        %v2301 = vrot.slane %v2208, 1
        %v2302 = vsel %vm2272, %v2300, %v2301
        %v2303 = vrot.slane %v2211, 1
        %v2304 = vrot.slane %v2213, 1
        %v2305 = vsel %vm2272, %v2303, %v2304
        %v2306 = vrot.slane %v2216, 1
        %v2307 = vrot.slane %v2218, 1
        %v2308 = vsel %vm2272, %v2306, %v2307
        %v2309 = vrot.slane %v2221, 1
        %v2310 = vrot.slane %v2223, 1
        %v2311 = vsel %vm2272, %v2309, %v2310
        %v2312 = vrot.slane %v2226, 1
        %v2313 = vrot.slane %v2228, 1
        %v2314 = vsel %vm2272, %v2312, %v2313
        %v2315 = vrot.slane %v2231, 1
        %v2316 = vrot.slane %v2233, 1
        %v2317 = vsel %vm2272, %v2315, %v2316
        %v2318 = vrot.slane %v2236, 1
        %v2319 = vrot.slane %v2238, 1
        %v2320 = vsel %vm2272, %v2318, %v2319
        %v2337 = vadd.f32 %v2160, %v2275
        %v2338 = vadd.f32 %v2165, %v2278
        %v2339 = vadd.f32 %v2170, %v2281
        %v2340 = vadd.f32 %v2175, %v2284
        %v2341 = vadd.f32 %v2180, %v2287
        %v2342 = vadd.f32 %v2185, %v2290
        %v2343 = vadd.f32 %v2190, %v2293
        %v2344 = vadd.f32 %v2195, %v2296
        %v2345 = vadd.f32 %v2200, %v2299
        %v2346 = vadd.f32 %v2205, %v2302
        %v2347 = vadd.f32 %v2210, %v2305
        %v2348 = vadd.f32 %v2215, %v2308
        %v2349 = vadd.f32 %v2220, %v2311
        %v2350 = vadd.f32 %v2225, %v2314
        %v2351 = vadd.f32 %v2230, %v2317
        %v2352 = vadd.f32 %v2235, %v2320
        %vm2385 = vcmask 1045504
        %v2386 = vrot.slane %v2162, 2
        %v2387 = vrot.slane %v2164, 2
        %v2388 = vsel %vm2385, %v2386, %v2387
        %v2389 = vrot.slane %v2167, 2
        %v2390 = vrot.slane %v2169, 2
        %v2391 = vsel %vm2385, %v2389, %v2390
        %v2392 = vrot.slane %v2172, 2
        %v2393 = vrot.slane %v2174, 2
        %v2394 = vsel %vm2385, %v2392, %v2393
        %v2395 = vrot.slane %v2177, 2
        %v2396 = vrot.slane %v2179, 2
        %v2397 = vsel %vm2385, %v2395, %v2396
        %v2398 = vrot.slane %v2182, 2
        %v2399 = vrot.slane %v2184, 2
        %v2400 = vsel %vm2385, %v2398, %v2399
        %v2401 = vrot.slane %v2187, 2
        %v2402 = vrot.slane %v2189, 2
        %v2403 = vsel %vm2385, %v2401, %v2402
        %v2404 = vrot.slane %v2192, 2
        %v2405 = vrot.slane %v2194, 2
        %v2406 = vsel %vm2385, %v2404, %v2405
        %v2407 = vrot.slane %v2197, 2
        %v2408 = vrot.slane %v2199, 2
        %v2409 = vsel %vm2385, %v2407, %v2408
        %v2410 = vrot.slane %v2202, 2
        %v2411 = vrot.slane %v2204, 2
        %v2412 = vsel %vm2385, %v2410, %v2411
        %v2413 = vrot.slane %v2207, 2
        %v2414 = vrot.slane %v2209, 2
        %v2415 = vsel %vm2385, %v2413, %v2414
        %v2416 = vrot.slane %v2212, 2
        %v2417 = vrot.slane %v2214, 2
        %v2418 = vsel %vm2385, %v2416, %v2417
        %v2419 = vrot.slane %v2217, 2
        %v2420 = vrot.slane %v2219, 2
        %v2421 = vsel %vm2385, %v2419, %v2420
        %v2422 = vrot.slane %v2222, 2
        %v2423 = vrot.slane %v2224, 2
        %v2424 = vsel %vm2385, %v2422, %v2423
        %v2425 = vrot.slane %v2227, 2
        %v2426 = vrot.slane %v2229, 2
        %v2427 = vsel %vm2385, %v2425, %v2426
        %v2428 = vrot.slane %v2232, 2
        %v2429 = vrot.slane %v2234, 2
        %v2430 = vsel %vm2385, %v2428, %v2429
        %v2431 = vrot.slane %v2237, 2
        %v2432 = vrot.slane %v2239, 2
        %v2433 = vsel %vm2385, %v2431, %v2432
        %v2450 = vadd.f32 %v2337, %v2388
        %v2451 = vadd.f32 %v2338, %v2391
        %v2452 = vadd.f32 %v2339, %v2394
        %v2453 = vadd.f32 %v2340, %v2397
        %v2454 = vadd.f32 %v2341, %v2400
        %v2455 = vadd.f32 %v2342, %v2403
        %v2456 = vadd.f32 %v2343, %v2406
        %v2457 = vadd.f32 %v2344, %v2409
        %v2458 = vadd.f32 %v2345, %v2412
        %v2459 = vadd.f32 %v2346, %v2415
        %v2460 = vadd.f32 %v2347, %v2418
        %v2461 = vadd.f32 %v2348, %v2421
        %v2462 = vadd.f32 %v2349, %v2424
        %v2463 = vadd.f32 %v2350, %v2427
        %v2464 = vadd.f32 %v2351, %v2430
        %v2465 = vadd.f32 %v2352, %v2433
        %v2467 = vlaneseq
        %v2468 = vshrl.u32 %v2467, 7
        %v2469 = vsub.s32 0, %v2468
        %v2470 = vrot.slane %v276, %v2469
        %v2472 = vadd.f32 %v2450, %v2470
        %v2473 = vadd.f32 %v2451, %v2470
        %v2474 = vadd.f32 %v2452, %v2470
        %v2475 = vadd.f32 %v2453, %v2470
        %v2476 = vadd.f32 %v2454, %v2470
        %v2477 = vadd.f32 %v2455, %v2470
        %v2478 = vadd.f32 %v2456, %v2470
        %v2479 = vadd.f32 %v2457, %v2470
        %v2480 = vadd.f32 %v2458, %v2470
        %v2481 = vadd.f32 %v2459, %v2470
        %v2482 = vadd.f32 %v2460, %v2470
        %v2483 = vadd.f32 %v2461, %v2470
        %v2484 = vadd.f32 %v2462, %v2470
        %v2485 = vadd.f32 %v2463, %v2470
        %v2486 = vadd.f32 %v2464, %v2470
        %v2487 = vadd.f32 %v2465, %v2470
        %v2488 = vmax.f32 %v2472, 0.0
        %v2489 = vmax.f32 %v2473, 0.0
        %v2490 = vmax.f32 %v2474, 0.0
        %v2491 = vmax.f32 %v2475, 0.0
        %v2492 = vmax.f32 %v2476, 0.0
        %v2493 = vmax.f32 %v2477, 0.0
        %v2494 = vmax.f32 %v2478, 0.0
        %v2495 = vmax.f32 %v2479, 0.0
        %v2496 = vmax.f32 %v2480, 0.0
        %v2497 = vmax.f32 %v2481, 0.0
        %v2498 = vmax.f32 %v2482, 0.0
        %v2499 = vmax.f32 %v2483, 0.0
        %v2500 = vmax.f32 %v2484, 0.0
        %v2501 = vmax.f32 %v2485, 0.0
        %v2502 = vmax.f32 %v2486, 0.0
        %v2503 = vmax.f32 %v2487, 0.0
        %2504 = vst [vmem:[#allocation2] sm:$0xff] 0
        %2505 = vst [vmem:[#allocation2 + $0x50] sm:$0xff] 0
        %s2506 = scalar_lea.vmem [#allocation2], 72
        %2507 = vst [vmem:[%s2506] sm:$0xff] 0
        %2508 = vst [vmem:[%s2506 + $0x50] sm:$0xff] 0
        %s2509 = scalar_lea.vmem [#allocation2], 8
        %vm2510 = vcmask 1040384
        %vm2511 = vsmask.f32 256
        %vm2512 = vmand %vm2510, %vm2511
        %v2513 = vld [vmem:[%s2509] sm:$0x1]
        %v2514 = vsel %vm2512, 0, %v2513
        %2515 = vst [vmem:[%s2509] sm:$0x1] %v2514
        %v2516 = vld [vmem:[%s2509 + $0x8] sm:$0x1]
        %v2517 = vsel %vm2512, 0, %v2516
        %2518 = vst [vmem:[%s2509 + $0x8] sm:$0x1] %v2517
        %v2519 = vld [vmem:[%s2509 + $0x10] sm:$0x1]
        %v2520 = vsel %vm2512, 0, %v2519
        %2521 = vst [vmem:[%s2509 + $0x10] sm:$0x1] %v2520
        %v2522 = vld [vmem:[%s2509 + $0x18] sm:$0x1]
        %v2523 = vsel %vm2512, 0, %v2522
        %2524 = vst [vmem:[%s2509 + $0x18] sm:$0x1] %v2523
        %v2525 = vld [vmem:[%s2509 + $0x20] sm:$0x1]
        %v2526 = vsel %vm2512, 0, %v2525
        %2527 = vst [vmem:[%s2509 + $0x20] sm:$0x1] %v2526
        %v2528 = vld [vmem:[%s2509 + $0x28] sm:$0x1]
        %v2529 = vsel %vm2512, 0, %v2528
        %2530 = vst [vmem:[%s2509 + $0x28] sm:$0x1] %v2529
        %v2531 = vld [vmem:[%s2509 + $0x30] sm:$0x1]
        %v2532 = vsel %vm2512, 0, %v2531
        %2533 = vst [vmem:[%s2509 + $0x30] sm:$0x1] %v2532
        %v2534 = vld [vmem:[%s2509 + $0x38] sm:$0x1]
        %v2535 = vsel %vm2512, 0, %v2534
        %2536 = vst [vmem:[%s2509 + $0x38] sm:$0x1] %v2535
        %v2537 = vld [vmem:[%s2509 + $0x50] sm:$0x1]
        %v2538 = vsel %vm2512, 0, %v2537
        %2539 = vst [vmem:[%s2509 + $0x50] sm:$0x1] %v2538
        %v2540 = vld [vmem:[%s2509 + $0x58] sm:$0x1]
        %v2541 = vsel %vm2512, 0, %v2540
        %2542 = vst [vmem:[%s2509 + $0x58] sm:$0x1] %v2541
        %v2543 = vld [vmem:[%s2509 + $0x60] sm:$0x1]
        %v2544 = vsel %vm2512, 0, %v2543
        %2545 = vst [vmem:[%s2509 + $0x60] sm:$0x1] %v2544
        %v2546 = vld [vmem:[%s2509 + $0x68] sm:$0x1]
        %v2547 = vsel %vm2512, 0, %v2546
        %2548 = vst [vmem:[%s2509 + $0x68] sm:$0x1] %v2547
        %v2549 = vld [vmem:[%s2509 + $0x70] sm:$0x1]
        %v2550 = vsel %vm2512, 0, %v2549
        %2551 = vst [vmem:[%s2509 + $0x70] sm:$0x1] %v2550
        %v2552 = vld [vmem:[%s2509 + $0x78] sm:$0x1]
        %v2553 = vsel %vm2512, 0, %v2552
        %2554 = vst [vmem:[%s2509 + $0x78] sm:$0x1] %v2553
        %v2555 = vld [vmem:[%s2509 + $0x80] sm:$0x1]
        %v2556 = vsel %vm2512, 0, %v2555
        %2557 = vst [vmem:[%s2509 + $0x80] sm:$0x1] %v2556
        %v2558 = vld [vmem:[%s2509 + $0x88] sm:$0x1]
        %v2559 = vsel %vm2512, 0, %v2558
        %2560 = vst [vmem:[%s2509 + $0x88] sm:$0x1] %v2559
        %vm2561 = vcmask 1047556
        %vm2562 = vsmask.f32 7954
        %vm2563 = vmand %vm2561, %vm2562
        %v2564 = vld [vmem:[%s2509] sm:$0xf0]
        %v2565 = vsel %vm2563, 0, %v2564
        %2566 = vst [vmem:[%s2509] sm:$0xf0] %v2565
        %v2567 = vld [vmem:[%s2509 + $0x8] sm:$0xf0]
        %v2568 = vsel %vm2563, 0, %v2567
        %2569 = vst [vmem:[%s2509 + $0x8] sm:$0xf0] %v2568
        %v2570 = vld [vmem:[%s2509 + $0x10] sm:$0xf0]
        %v2571 = vsel %vm2563, 0, %v2570
        %2572 = vst [vmem:[%s2509 + $0x10] sm:$0xf0] %v2571
        %v2573 = vld [vmem:[%s2509 + $0x18] sm:$0xf0]
        %v2574 = vsel %vm2563, 0, %v2573
        %2575 = vst [vmem:[%s2509 + $0x18] sm:$0xf0] %v2574
        %v2576 = vld [vmem:[%s2509 + $0x20] sm:$0xf0]
        %v2577 = vsel %vm2563, 0, %v2576
        %2578 = vst [vmem:[%s2509 + $0x20] sm:$0xf0] %v2577
        %v2579 = vld [vmem:[%s2509 + $0x28] sm:$0xf0]
        %v2580 = vsel %vm2563, 0, %v2579
        %2581 = vst [vmem:[%s2509 + $0x28] sm:$0xf0] %v2580
        %v2582 = vld [vmem:[%s2509 + $0x30] sm:$0xf0]
        %v2583 = vsel %vm2563, 0, %v2582
        %2584 = vst [vmem:[%s2509 + $0x30] sm:$0xf0] %v2583
        %v2585 = vld [vmem:[%s2509 + $0x38] sm:$0xf0]
        %v2586 = vsel %vm2563, 0, %v2585
        %2587 = vst [vmem:[%s2509 + $0x38] sm:$0xf0] %v2586
        %v2588 = vld [vmem:[%s2509 + $0x50] sm:$0xf0]
        %v2589 = vsel %vm2563, 0, %v2588
        %2590 = vst [vmem:[%s2509 + $0x50] sm:$0xf0] %v2589
        %v2591 = vld [vmem:[%s2509 + $0x58] sm:$0xf0]
        %v2592 = vsel %vm2563, 0, %v2591
        %2593 = vst [vmem:[%s2509 + $0x58] sm:$0xf0] %v2592
        %v2594 = vld [vmem:[%s2509 + $0x60] sm:$0xf0]
        %v2595 = vsel %vm2563, 0, %v2594
        %2596 = vst [vmem:[%s2509 + $0x60] sm:$0xf0] %v2595
        %v2597 = vld [vmem:[%s2509 + $0x68] sm:$0xf0]
        %v2598 = vsel %vm2563, 0, %v2597
        %2599 = vst [vmem:[%s2509 + $0x68] sm:$0xf0] %v2598
        %v2600 = vld [vmem:[%s2509 + $0x70] sm:$0xf0]
        %v2601 = vsel %vm2563, 0, %v2600
        %2602 = vst [vmem:[%s2509 + $0x70] sm:$0xf0] %v2601
        %v2603 = vld [vmem:[%s2509 + $0x78] sm:$0xf0]
        %v2604 = vsel %vm2563, 0, %v2603
        %2605 = vst [vmem:[%s2509 + $0x78] sm:$0xf0] %v2604
        %v2606 = vld [vmem:[%s2509 + $0x80] sm:$0xf0]
        %v2607 = vsel %vm2563, 0, %v2606
        %2608 = vst [vmem:[%s2509 + $0x80] sm:$0xf0] %v2607
        %v2609 = vld [vmem:[%s2509 + $0x88] sm:$0xf0]
        %v2610 = vsel %vm2563, 0, %v2609
        %2611 = vst [vmem:[%s2509 + $0x88] sm:$0xf0] %v2610
        %v2612 = vpack.c.bf16 %v2488, %v2488
        %v2613 = vpack.c.bf16 %v2489, %v2489
        %v2614 = vpack.c.bf16 %v2490, %v2490
        %v2615 = vpack.c.bf16 %v2491, %v2491
        %v2616 = vpack.c.bf16 %v2492, %v2492
        %v2617 = vpack.c.bf16 %v2493, %v2493
        %v2618 = vpack.c.bf16 %v2494, %v2494
        %v2619 = vpack.c.bf16 %v2495, %v2495
        %v2620 = vpack.c.bf16 %v2496, %v2496
        %v2621 = vpack.c.bf16 %v2497, %v2497
        %v2622 = vpack.c.bf16 %v2498, %v2498
        %v2623 = vpack.c.bf16 %v2499, %v2499
        %v2624 = vpack.c.bf16 %v2500, %v2500
        %v2625 = vpack.c.bf16 %v2501, %v2501
        %v2626 = vpack.c.bf16 %v2502, %v2502
        %v2627 = vpack.c.bf16 %v2503, %v2503
        %v2629 = vshrl.u32 %v2612, 16
        %v2631 = vrot.slane %v2629, 7
        %v2632 = vshll.u32 %v2612, 16
        %v2634 = vor.u32 %v2631, %v2632
        %v2636 = vshrl.u32 %v2613, 16
        %v2638 = vrot.slane %v2636, 7
        %v2639 = vshll.u32 %v2613, 16
        %v2641 = vor.u32 %v2638, %v2639
        %v2643 = vshrl.u32 %v2614, 16
        %v2645 = vrot.slane %v2643, 7
        %v2646 = vshll.u32 %v2614, 16
        %v2648 = vor.u32 %v2645, %v2646
        %v2650 = vshrl.u32 %v2615, 16
        %v2652 = vrot.slane %v2650, 7
        %v2653 = vshll.u32 %v2615, 16
        %v2655 = vor.u32 %v2652, %v2653
        %v2657 = vshrl.u32 %v2616, 16
        %v2659 = vrot.slane %v2657, 7
        %v2660 = vshll.u32 %v2616, 16
        %v2662 = vor.u32 %v2659, %v2660
        %v2664 = vshrl.u32 %v2617, 16
        %v2666 = vrot.slane %v2664, 7
        %v2667 = vshll.u32 %v2617, 16
        %v2669 = vor.u32 %v2666, %v2667
        %v2671 = vshrl.u32 %v2618, 16
        %v2673 = vrot.slane %v2671, 7
        %v2674 = vshll.u32 %v2618, 16
        %v2676 = vor.u32 %v2673, %v2674
        %v2678 = vshrl.u32 %v2619, 16
        %v2680 = vrot.slane %v2678, 7
        %v2681 = vshll.u32 %v2619, 16
        %v2683 = vor.u32 %v2680, %v2681
        %v2685 = vshrl.u32 %v2620, 16
        %v2687 = vrot.slane %v2685, 7
        %v2688 = vshll.u32 %v2620, 16
        %v2690 = vor.u32 %v2687, %v2688
        %v2692 = vshrl.u32 %v2621, 16
        %v2694 = vrot.slane %v2692, 7
        %v2695 = vshll.u32 %v2621, 16
        %v2697 = vor.u32 %v2694, %v2695
        %v2699 = vshrl.u32 %v2622, 16
        %v2701 = vrot.slane %v2699, 7
        %v2702 = vshll.u32 %v2622, 16
        %v2704 = vor.u32 %v2701, %v2702
        %v2706 = vshrl.u32 %v2623, 16
        %v2708 = vrot.slane %v2706, 7
        %v2709 = vshll.u32 %v2623, 16
        %v2711 = vor.u32 %v2708, %v2709
        %v2713 = vshrl.u32 %v2624, 16
        %v2715 = vrot.slane %v2713, 7
        %v2716 = vshll.u32 %v2624, 16
        %v2718 = vor.u32 %v2715, %v2716
        %v2720 = vshrl.u32 %v2625, 16
        %v2722 = vrot.slane %v2720, 7
        %v2723 = vshll.u32 %v2625, 16
        %v2725 = vor.u32 %v2722, %v2723
        %v2727 = vshrl.u32 %v2626, 16
        %v2729 = vrot.slane %v2727, 7
        %v2730 = vshll.u32 %v2626, 16
        %v2732 = vor.u32 %v2729, %v2730
        %v2734 = vshrl.u32 %v2627, 16
        %v2736 = vrot.slane %v2734, 7
        %v2737 = vshll.u32 %v2627, 16
        %v2739 = vor.u32 %v2736, %v2737
        %vm2756 = vcmask 1044480
        %vm2757 = vsmask.f32 4354
        %vm2758 = vmand %vm2756, %vm2757
        %v2759 = vld [vmem:[%s2509] sm:$0x1f]
        %v2760 = vsel %vm2758, %v2634, %v2759
        %2761 = vst [vmem:[%s2509] sm:$0x1f] %v2760
        %v2762 = vld [vmem:[%s2509 + $0x8] sm:$0x1f]
        %v2763 = vsel %vm2758, %v2641, %v2762
        %2764 = vst [vmem:[%s2509 + $0x8] sm:$0x1f] %v2763
        %v2765 = vld [vmem:[%s2509 + $0x10] sm:$0x1f]
        %v2766 = vsel %vm2758, %v2648, %v2765
        %2767 = vst [vmem:[%s2509 + $0x10] sm:$0x1f] %v2766
        %v2768 = vld [vmem:[%s2509 + $0x18] sm:$0x1f]
        %v2769 = vsel %vm2758, %v2655, %v2768
        %2770 = vst [vmem:[%s2509 + $0x18] sm:$0x1f] %v2769
        %v2771 = vld [vmem:[%s2509 + $0x20] sm:$0x1f]
        %v2772 = vsel %vm2758, %v2662, %v2771
        %2773 = vst [vmem:[%s2509 + $0x20] sm:$0x1f] %v2772
        %v2774 = vld [vmem:[%s2509 + $0x28] sm:$0x1f]
        %v2775 = vsel %vm2758, %v2669, %v2774
        %2776 = vst [vmem:[%s2509 + $0x28] sm:$0x1f] %v2775
        %v2777 = vld [vmem:[%s2509 + $0x30] sm:$0x1f]
        %v2778 = vsel %vm2758, %v2676, %v2777
        %2779 = vst [vmem:[%s2509 + $0x30] sm:$0x1f] %v2778
        %v2780 = vld [vmem:[%s2509 + $0x38] sm:$0x1f]
        %v2781 = vsel %vm2758, %v2683, %v2780
        %2782 = vst [vmem:[%s2509 + $0x38] sm:$0x1f] %v2781
        %v2783 = vld [vmem:[%s2509 + $0x50] sm:$0x1f]
        %v2784 = vsel %vm2758, %v2690, %v2783
        %2785 = vst [vmem:[%s2509 + $0x50] sm:$0x1f] %v2784
        %v2786 = vld [vmem:[%s2509 + $0x58] sm:$0x1f]
        %v2787 = vsel %vm2758, %v2697, %v2786
        %2788 = vst [vmem:[%s2509 + $0x58] sm:$0x1f] %v2787
        %v2789 = vld [vmem:[%s2509 + $0x60] sm:$0x1f]
        %v2790 = vsel %vm2758, %v2704, %v2789
        %2791 = vst [vmem:[%s2509 + $0x60] sm:$0x1f] %v2790
        %v2792 = vld [vmem:[%s2509 + $0x68] sm:$0x1f]
        %v2793 = vsel %vm2758, %v2711, %v2792
        %2794 = vst [vmem:[%s2509 + $0x68] sm:$0x1f] %v2793
        %v2795 = vld [vmem:[%s2509 + $0x70] sm:$0x1f]
        %v2796 = vsel %vm2758, %v2718, %v2795
        %2797 = vst [vmem:[%s2509 + $0x70] sm:$0x1f] %v2796
        %v2798 = vld [vmem:[%s2509 + $0x78] sm:$0x1f]
        %v2799 = vsel %vm2758, %v2725, %v2798
        %2800 = vst [vmem:[%s2509 + $0x78] sm:$0x1f] %v2799
        %v2801 = vld [vmem:[%s2509 + $0x80] sm:$0x1f]
        %v2802 = vsel %vm2758, %v2732, %v2801
        %2803 = vst [vmem:[%s2509 + $0x80] sm:$0x1f] %v2802
        %v2804 = vld [vmem:[%s2509 + $0x88] sm:$0x1f]
        %v2805 = vsel %vm2758, %v2739, %v2804
        %2806 = vst [vmem:[%s2509 + $0x88] sm:$0x1f] %v2805
        %v2807 = vld [vmem:[#allocation2] sm:$0xff]
        %v2808 = vld [vmem:[#allocation2 + $0x8] sm:$0xff]
        %v2809 = vld [vmem:[#allocation2 + $0x10] sm:$0xff]
        %v2810 = vld [vmem:[#allocation2 + $0x18] sm:$0xff]
        %v2811 = vld [vmem:[#allocation2 + $0x20] sm:$0xff]
        %v2812 = vld [vmem:[#allocation2 + $0x28] sm:$0xff]
        %v2813 = vld [vmem:[#allocation2 + $0x30] sm:$0xff]
        %v2814 = vld [vmem:[#allocation2 + $0x38] sm:$0xff]
        %v2815 = vld [vmem:[#allocation2 + $0x50] sm:$0xff]
        %v2816 = vld [vmem:[#allocation2 + $0x58] sm:$0xff]
        %v2817 = vld [vmem:[#allocation2 + $0x60] sm:$0xff]
        %v2818 = vld [vmem:[#allocation2 + $0x68] sm:$0xff]
        %v2819 = vld [vmem:[#allocation2 + $0x70] sm:$0xff]
        %v2820 = vld [vmem:[#allocation2 + $0x78] sm:$0xff]
        %v2821 = vld [vmem:[#allocation2 + $0x80] sm:$0xff]
        %v2822 = vld [vmem:[#allocation2 + $0x88] sm:$0xff]
        %v2823 = vld [vmem:[#allocation8] sm:$0xff]
        %v2824 = vld [vmem:[#allocation8 + $0x8] sm:$0xf]
        %v2825 = vld [vmem:[#allocation8 + $0xc] sm:$0xff]
        %v2826 = vld [vmem:[#allocation8 + $0x14] sm:$0xf]
        %v2827 = vld [vmem:[#allocation8 + $0x18] sm:$0xff]
        %v2828 = vld [vmem:[#allocation8 + $0x20] sm:$0xf]
        %v2829 = vld [vmem:[#allocation8 + $0x24] sm:$0xff]
        %v2830 = vld [vmem:[#allocation8 + $0x2c] sm:$0xf]
        %v2831 = vld [vmem:[#allocation8 + $0x30] sm:$0xff]
        %v2832 = vld [vmem:[#allocation8 + $0x38] sm:$0xf]
        %v2833 = vld [vmem:[#allocation8 + $0x3c] sm:$0xff]
        %v2834 = vld [vmem:[#allocation8 + $0x44] sm:$0xf]
        %v2835 = vld [vmem:[#allocation8 + $0x48] sm:$0xff]
        %v2836 = vld [vmem:[#allocation8 + $0x50] sm:$0xf]
        %v2837 = vld [vmem:[#allocation8 + $0x54] sm:$0xff]
        %v2838 = vld [vmem:[#allocation8 + $0x5c] sm:$0xf]
        %v2839 = vld [vmem:[#allocation8 + $0x60] sm:$0xff]
        %v2840 = vld [vmem:[#allocation8 + $0x68] sm:$0xf]
        %v2841 = vld [vmem:[#allocation8 + $0x6c] sm:$0xff]
        %v2842 = vld [vmem:[#allocation8 + $0x74] sm:$0xf]
        %v2843 = vld [vmem:[#allocation8 + $0x78] sm:$0xff]
        %v2844 = vld [vmem:[#allocation8 + $0x80] sm:$0xf]
        %v2845 = vld [vmem:[#allocation8 + $0x84] sm:$0xff]
        %v2846 = vld [vmem:[#allocation8 + $0x8c] sm:$0xf]
        %v2847 = vld [vmem:[#allocation8 + $0x90] sm:$0xff]
        %v2848 = vld [vmem:[#allocation8 + $0x98] sm:$0xf]
        %v2849 = vld [vmem:[#allocation8 + $0x9c] sm:$0xff]
        %v2850 = vld [vmem:[#allocation8 + $0xa4] sm:$0xf]
        %v2851 = vld [vmem:[#allocation8 + $0xa8] sm:$0xff]
        %v2852 = vld [vmem:[#allocation8 + $0xb0] sm:$0xf]
        %v2853 = vld [vmem:[#allocation8 + $0xb4] sm:$0xff]
        %v2854 = vld [vmem:[#allocation8 + $0xbc] sm:$0xf]
        %v2855 = vld [vmem:[%s2509] sm:$0xff]
        %v2856 = vld [vmem:[%s2509 + $0x8] sm:$0xff]
        %v2857 = vld [vmem:[%s2509 + $0x10] sm:$0xff]
        %v2858 = vld [vmem:[%s2509 + $0x18] sm:$0xff]
        %v2859 = vld [vmem:[%s2509 + $0x20] sm:$0xff]
        %v2860 = vld [vmem:[%s2509 + $0x28] sm:$0xff]
        %v2861 = vld [vmem:[%s2509 + $0x30] sm:$0xff]
        %v2862 = vld [vmem:[%s2509 + $0x38] sm:$0xff]
        %v2863 = vld [vmem:[%s2509 + $0x50] sm:$0xff]
        %v2864 = vld [vmem:[%s2509 + $0x58] sm:$0xff]
        %v2865 = vld [vmem:[%s2509 + $0x60] sm:$0xff]
        %v2866 = vld [vmem:[%s2509 + $0x68] sm:$0xff]
        %v2867 = vld [vmem:[%s2509 + $0x70] sm:$0xff]
        %v2868 = vld [vmem:[%s2509 + $0x78] sm:$0xff]
        %v2869 = vld [vmem:[%s2509 + $0x80] sm:$0xff]
        %v2870 = vld [vmem:[%s2509 + $0x88] sm:$0xff]
        %s2871 = scalar_lea.vmem [#allocation8], 192
        %v2872 = vld [vmem:[%s2871] sm:$0xff]
        %v2873 = vld [vmem:[%s2871 + $0x8] sm:$0xf]
        %v2874 = vld [vmem:[%s2871 + $0xc] sm:$0xff]
        %v2875 = vld [vmem:[%s2871 + $0x14] sm:$0xf]
        %v2876 = vld [vmem:[%s2871 + $0x18] sm:$0xff]
        %v2877 = vld [vmem:[%s2871 + $0x20] sm:$0xf]
        %v2878 = vld [vmem:[%s2871 + $0x24] sm:$0xff]
        %v2879 = vld [vmem:[%s2871 + $0x2c] sm:$0xf]
        %v2880 = vld [vmem:[%s2871 + $0x30] sm:$0xff]
        %v2881 = vld [vmem:[%s2871 + $0x38] sm:$0xf]
        %v2882 = vld [vmem:[%s2871 + $0x3c] sm:$0xff]
        %v2883 = vld [vmem:[%s2871 + $0x44] sm:$0xf]
        %v2884 = vld [vmem:[%s2871 + $0x48] sm:$0xff]
        %v2885 = vld [vmem:[%s2871 + $0x50] sm:$0xf]
        %v2886 = vld [vmem:[%s2871 + $0x54] sm:$0xff]
        %v2887 = vld [vmem:[%s2871 + $0x5c] sm:$0xf]
        %v2888 = vld [vmem:[%s2871 + $0x60] sm:$0xff]
        %v2889 = vld [vmem:[%s2871 + $0x68] sm:$0xf]
        %v2890 = vld [vmem:[%s2871 + $0x6c] sm:$0xff]
        %v2891 = vld [vmem:[%s2871 + $0x74] sm:$0xf]
        %v2892 = vld [vmem:[%s2871 + $0x78] sm:$0xff]
        %v2893 = vld [vmem:[%s2871 + $0x80] sm:$0xf]
        %v2894 = vld [vmem:[%s2871 + $0x84] sm:$0xff]
        %v2895 = vld [vmem:[%s2871 + $0x8c] sm:$0xf]
        %v2896 = vld [vmem:[%s2871 + $0x90] sm:$0xff]
        %v2897 = vld [vmem:[%s2871 + $0x98] sm:$0xf]
        %v2898 = vld [vmem:[%s2871 + $0x9c] sm:$0xff]
        %v2899 = vld [vmem:[%s2871 + $0xa4] sm:$0xf]
        %v2900 = vld [vmem:[%s2871 + $0xa8] sm:$0xff]
        %v2901 = vld [vmem:[%s2871 + $0xb0] sm:$0xf]
        %v2902 = vld [vmem:[%s2871 + $0xb4] sm:$0xff]
        %v2903 = vld [vmem:[%s2871 + $0xbc] sm:$0xf]
        %v2936 = vunpack.c.l.b16 %v2872
        %v2937 = vunpack.c.h.b16 %v2872
        %v2938 = vunpack.c.l.b16 %v2873
        %v2939 = vunpack.c.l.b16 %v2874
        %v2940 = vunpack.c.h.b16 %v2874
        %v2941 = vunpack.c.l.b16 %v2875
        %v2942 = vunpack.c.l.b16 %v2876
        %v2943 = vunpack.c.h.b16 %v2876
        %v2944 = vunpack.c.l.b16 %v2877
        %v2945 = vunpack.c.l.b16 %v2878
        %v2946 = vunpack.c.h.b16 %v2878
        %v2947 = vunpack.c.l.b16 %v2879
        %v2948 = vunpack.c.l.b16 %v2880
        %v2949 = vunpack.c.h.b16 %v2880
        %v2950 = vunpack.c.l.b16 %v2881
        %v2951 = vunpack.c.l.b16 %v2882
        %v2952 = vunpack.c.h.b16 %v2882
        %v2953 = vunpack.c.l.b16 %v2883
        %v2954 = vunpack.c.l.b16 %v2884
        %v2955 = vunpack.c.h.b16 %v2884
        %v2956 = vunpack.c.l.b16 %v2885
        %v2957 = vunpack.c.l.b16 %v2886
        %v2958 = vunpack.c.h.b16 %v2886
        %v2959 = vunpack.c.l.b16 %v2887
        %v2960 = vunpack.c.l.b16 %v2888
        %v2961 = vunpack.c.h.b16 %v2888
        %v2962 = vunpack.c.l.b16 %v2889
        %v2963 = vunpack.c.l.b16 %v2890
        %v2964 = vunpack.c.h.b16 %v2890
        %v2965 = vunpack.c.l.b16 %v2891
        %v2966 = vunpack.c.l.b16 %v2892
        %v2967 = vunpack.c.h.b16 %v2892
        %v2968 = vunpack.c.l.b16 %v2893
        %v2969 = vunpack.c.l.b16 %v2894
        %v2970 = vunpack.c.h.b16 %v2894
        %v2971 = vunpack.c.l.b16 %v2895
        %v2972 = vunpack.c.l.b16 %v2896
        %v2973 = vunpack.c.h.b16 %v2896
        %v2974 = vunpack.c.l.b16 %v2897
        %v2975 = vunpack.c.l.b16 %v2898
        %v2976 = vunpack.c.h.b16 %v2898
        %v2977 = vunpack.c.l.b16 %v2899
        %v2978 = vunpack.c.l.b16 %v2900
        %v2979 = vunpack.c.h.b16 %v2900
        %v2980 = vunpack.c.l.b16 %v2901
        %v2981 = vunpack.c.l.b16 %v2902
        %v2982 = vunpack.c.h.b16 %v2902
        %v2983 = vunpack.c.l.b16 %v2903
        %v2984 = vpack.c.b16 %v2939, %v2936
        %v2985 = vpack.c.b16 %v2940, %v2937
        %v2986 = vpack.c.b16 %v2941, %v2938
        %v2987 = vpack.c.b16 %v2945, %v2942
        %v2988 = vpack.c.b16 %v2946, %v2943
        %v2989 = vpack.c.b16 %v2947, %v2944
        %v2990 = vpack.c.b16 %v2951, %v2948
        %v2991 = vpack.c.b16 %v2952, %v2949
        %v2992 = vpack.c.b16 %v2953, %v2950
        %v2993 = vpack.c.b16 %v2957, %v2954
        %v2994 = vpack.c.b16 %v2958, %v2955
        %v2995 = vpack.c.b16 %v2959, %v2956
        %v2996 = vpack.c.b16 %v2963, %v2960
        %v2997 = vpack.c.b16 %v2964, %v2961
        %v2998 = vpack.c.b16 %v2965, %v2962
        %v2999 = vpack.c.b16 %v2969, %v2966
        %v3000 = vpack.c.b16 %v2970, %v2967
        %v3001 = vpack.c.b16 %v2971, %v2968
        %v3002 = vpack.c.b16 %v2975, %v2972
        %v3003 = vpack.c.b16 %v2976, %v2973
        %v3004 = vpack.c.b16 %v2977, %v2974
        %v3005 = vpack.c.b16 %v2981, %v2978
        %v3006 = vpack.c.b16 %v2982, %v2979
        %v3007 = vpack.c.b16 %v2983, %v2980
        %3032 = vmatprep.subr.bf16.mxu0 %v2985
        %3033 = vmatpush1.bf16.msra.mxu0 %v2984
        %3034 = vmatprep.subr.bf16.mxu0 %v2988
        %3035 = vmatpush1.bf16.msra.mxu0 %v2987
        %3036 = vmatprep.subr.bf16.mxu0 %v2991
        %3037 = vmatpush1.bf16.msra.mxu0 %v2990
        %3038 = vmatprep.subr.bf16.mxu0 %v2994
        %3039 = vmatpush1.bf16.msra.mxu0 %v2993
        %3040 = vmatprep.subr.bf16.mxu0 %v2997
        %3041 = vmatpush1.bf16.msra.mxu0 %v2996
        %3042 = vmatprep.subr.bf16.mxu0 %v3000
        %3043 = vmatpush1.bf16.msra.mxu0 %v2999
        %3044 = vmatprep.subr.bf16.mxu0 %v3003
        %3045 = vmatpush1.bf16.msra.mxu0 %v3002
        %3046 = vmatprep.subr.bf16.mxu0 %v3006
        %3047 = vmatpush1.bf16.msra.mxu0 %v3005
        %3048 = vmatprep.subr.bf16.mxu0 0
        %3049 = vmatpush1.bf16.msra.mxu0 0
        %3050 = vmatprep.subr.bf16.mxu0 0
        %3051 = vmatpush1.bf16.msra.mxu0 0
        %3052 = vmatprep.subr.bf16.mxu0 0
        %3053 = vmatpush1.bf16.msra.mxu0 0
        %3054 = vmatprep.subr.bf16.mxu0 0
        %3055 = vmatpush1.bf16.msra.mxu0 0
        %3056 = vmatprep.subr.bf16.mxu0 0
        %3057 = vmatpush1.bf16.msra.mxu0 0
        %3058 = vmatprep.subr.bf16.mxu0 0
        %3059 = vmatpush1.bf16.msra.mxu0 0
        %3060 = vmatprep.subr.bf16.mxu0 0
        %3061 = vmatpush1.bf16.msra.mxu0 0
        %3062 = vmatprep.subr.bf16.mxu0 0
        %3063 = vmatpush1.bf16.msra.mxu0 0
        %3064 = vmatprep.mubr.bf16.mxu0 0
        %3065 = vmatmul.mubr.bf16.gmra.mrb[0].mxu0 %v2855
        %v3066 = vpop.f32.mrb[0].mxu0
        %v3067 = vadd.f32 0.0, %v3066
        %v3068 = vpop.f32.mrb[0].mxu0
        %v3069 = vadd.f32 0.0, %v3068
        %v3070 = vpop.f32.mrb[0].mxu0
        %v3071 = vpop.f32.mrb[0].mxu0
        %v3072 = vadd.f32 0.0, %v3071
        %3073 = vmatprep.mubr.bf16.mxu0 0
        %3074 = vmatmul.mubr.bf16.gmra.mrb[0].mxu0 %v2856
        %v3075 = vpop.f32.mrb[0].mxu0
        %v3076 = vadd.f32 0.0, %v3075
        %v3077 = vpop.f32.mrb[0].mxu0
        %v3078 = vadd.f32 0.0, %v3077
        %v3079 = vpop.f32.mrb[0].mxu0
        %v3080 = vpop.f32.mrb[0].mxu0
        %v3081 = vadd.f32 0.0, %v3080
        %3082 = vmatprep.mubr.bf16.mxu0 0
        %3083 = vmatmul.mubr.bf16.gmra.mrb[0].mxu0 %v2857
        %v3084 = vpop.f32.mrb[0].mxu0
        %v3085 = vadd.f32 0.0, %v3084
        %v3086 = vpop.f32.mrb[0].mxu0
        %v3087 = vadd.f32 0.0, %v3086
        %v3088 = vpop.f32.mrb[0].mxu0
        %v3089 = vpop.f32.mrb[0].mxu0
        %v3090 = vadd.f32 0.0, %v3089
        %3091 = vmatprep.mubr.bf16.mxu0 0
        %3092 = vmatmul.mubr.bf16.gmra.mrb[0].mxu0 %v2858
        %v3093 = vpop.f32.mrb[0].mxu0
        %v3094 = vadd.f32 0.0, %v3093
        %v3095 = vpop.f32.mrb[0].mxu0
        %v3096 = vadd.f32 0.0, %v3095
        %v3097 = vpop.f32.mrb[0].mxu0
        %v3098 = vpop.f32.mrb[0].mxu0
        %v3099 = vadd.f32 0.0, %v3098
        %3100 = vmatprep.mubr.bf16.mxu0 0
        %3101 = vmatmul.mubr.bf16.gmra.mrb[0].mxu0 %v2859
        %v3102 = vpop.f32.mrb[0].mxu0
        %v3103 = vadd.f32 0.0, %v3102
        %v3104 = vpop.f32.mrb[0].mxu0
        %v3105 = vadd.f32 0.0, %v3104
        %v3106 = vpop.f32.mrb[0].mxu0
        %v3107 = vpop.f32.mrb[0].mxu0
        %v3108 = vadd.f32 0.0, %v3107
        %3109 = vmatprep.mubr.bf16.mxu0 0
        %3110 = vmatmul.mubr.bf16.gmra.mrb[0].mxu0 %v2860
        %v3111 = vpop.f32.mrb[0].mxu0
        %v3112 = vadd.f32 0.0, %v3111
        %v3113 = vpop.f32.mrb[0].mxu0
        %v3114 = vadd.f32 0.0, %v3113
        %v3115 = vpop.f32.mrb[0].mxu0
        %v3116 = vpop.f32.mrb[0].mxu0
        %v3117 = vadd.f32 0.0, %v3116
        %3118 = vmatprep.mubr.bf16.mxu0 0
        %3119 = vmatmul.mubr.bf16.gmra.mrb[0].mxu0 %v2861
        %v3120 = vpop.f32.mrb[0].mxu0
        %v3121 = vadd.f32 0.0, %v3120
        %v3122 = vpop.f32.mrb[0].mxu0
        %v3123 = vadd.f32 0.0, %v3122
        %v3124 = vpop.f32.mrb[0].mxu0
        %v3125 = vpop.f32.mrb[0].mxu0
        %v3126 = vadd.f32 0.0, %v3125
        %3127 = vmatprep.mubr.bf16.mxu0 0
        %3128 = vmatmul.mubr.bf16.gmra.mrb[0].mxu0 %v2862
        %v3129 = vpop.f32.mrb[0].mxu0
        %v3130 = vadd.f32 0.0, %v3129
        %v3131 = vpop.f32.mrb[0].mxu0
        %v3132 = vadd.f32 0.0, %v3131
        %v3133 = vpop.f32.mrb[0].mxu0
        %v3134 = vpop.f32.mrb[0].mxu0
        %v3135 = vadd.f32 0.0, %v3134
        %3136 = vmatprep.mubr.bf16.mxu0 0
        %3137 = vmatmul.mubr.bf16.gmra.mrb[0].mxu0 %v2863
        %v3138 = vpop.f32.mrb[0].mxu0
        %v3139 = vadd.f32 0.0, %v3138
        %v3140 = vpop.f32.mrb[0].mxu0
        %v3141 = vadd.f32 0.0, %v3140
        %v3142 = vpop.f32.mrb[0].mxu0
        %v3143 = vpop.f32.mrb[0].mxu0
        %v3144 = vadd.f32 0.0, %v3143
        %3145 = vmatprep.mubr.bf16.mxu0 0
        %3146 = vmatmul.mubr.bf16.gmra.mrb[0].mxu0 %v2864
        %v3147 = vpop.f32.mrb[0].mxu0
        %v3148 = vadd.f32 0.0, %v3147
        %v3149 = vpop.f32.mrb[0].mxu0
        %v3150 = vadd.f32 0.0, %v3149
        %v3151 = vpop.f32.mrb[0].mxu0
        %v3152 = vpop.f32.mrb[0].mxu0
        %v3153 = vadd.f32 0.0, %v3152
        %3154 = vmatprep.mubr.bf16.mxu0 0
        %3155 = vmatmul.mubr.bf16.gmra.mrb[0].mxu0 %v2865
        %v3156 = vpop.f32.mrb[0].mxu0
        %v3157 = vadd.f32 0.0, %v3156
        %v3158 = vpop.f32.mrb[0].mxu0
        %v3159 = vadd.f32 0.0, %v3158
        %v3160 = vpop.f32.mrb[0].mxu0
        %v3161 = vpop.f32.mrb[0].mxu0
        %v3162 = vadd.f32 0.0, %v3161
        %3163 = vmatprep.mubr.bf16.mxu0 0
        %3164 = vmatmul.mubr.bf16.gmra.mrb[0].mxu0 %v2866
        %v3165 = vpop.f32.mrb[0].mxu0
        %v3166 = vadd.f32 0.0, %v3165
        %v3167 = vpop.f32.mrb[0].mxu0
        %v3168 = vadd.f32 0.0, %v3167
        %v3169 = vpop.f32.mrb[0].mxu0
        %v3170 = vpop.f32.mrb[0].mxu0
        %v3171 = vadd.f32 0.0, %v3170
        %3172 = vmatprep.mubr.bf16.mxu0 0
        %3173 = vmatmul.mubr.bf16.gmra.mrb[0].mxu0 %v2867
        %v3174 = vpop.f32.mrb[0].mxu0
        %v3175 = vadd.f32 0.0, %v3174
        %v3176 = vpop.f32.mrb[0].mxu0
        %v3177 = vadd.f32 0.0, %v3176
        %v3178 = vpop.f32.mrb[0].mxu0
        %v3179 = vpop.f32.mrb[0].mxu0
        %v3180 = vadd.f32 0.0, %v3179
        %3181 = vmatprep.mubr.bf16.mxu0 0
        %3182 = vmatmul.mubr.bf16.gmra.mrb[0].mxu0 %v2868
        %v3183 = vpop.f32.mrb[0].mxu0
        %v3184 = vadd.f32 0.0, %v3183
        %v3185 = vpop.f32.mrb[0].mxu0
        %v3186 = vadd.f32 0.0, %v3185
        %v3187 = vpop.f32.mrb[0].mxu0
        %v3188 = vpop.f32.mrb[0].mxu0
        %v3189 = vadd.f32 0.0, %v3188
        %3190 = vmatprep.mubr.bf16.mxu0 0
        %3191 = vmatmul.mubr.bf16.gmra.mrb[0].mxu0 %v2869
        %v3192 = vpop.f32.mrb[0].mxu0
        %v3193 = vadd.f32 0.0, %v3192
        %v3194 = vpop.f32.mrb[0].mxu0
        %v3195 = vadd.f32 0.0, %v3194
        %v3196 = vpop.f32.mrb[0].mxu0
        %v3197 = vpop.f32.mrb[0].mxu0
        %v3198 = vadd.f32 0.0, %v3197
        %3199 = vmatprep.mubr.bf16.mxu0 0
        %3200 = vmatmul.mubr.bf16.gmra.mrb[0].mxu0 %v2870
        %v3201 = vpop.f32.mrb[0].mxu0
        %v3202 = vadd.f32 0.0, %v3201
        %v3203 = vpop.f32.mrb[0].mxu0
        %v3204 = vadd.f32 0.0, %v3203
        %v3205 = vpop.f32.mrb[0].mxu0
        %v3206 = vpop.f32.mrb[0].mxu0
        %v3207 = vadd.f32 0.0, %v3206
        %3208 = vdwg.mxu0
        %3209 = vmatprep.subr.bf16.mxu0 0
        %3210 = vmatpush1.bf16.msra.mxu0 %v2986
        %3211 = vmatprep.subr.bf16.mxu0 0
        %3212 = vmatpush1.bf16.msra.mxu0 %v2989
        %3213 = vmatprep.subr.bf16.mxu0 0
        %3214 = vmatpush1.bf16.msra.mxu0 %v2992
        %3215 = vmatprep.subr.bf16.mxu0 0
        %3216 = vmatpush1.bf16.msra.mxu0 %v2995
        %3217 = vmatprep.subr.bf16.mxu0 0
        %3218 = vmatpush1.bf16.msra.mxu0 %v2998
        %3219 = vmatprep.subr.bf16.mxu0 0
        %3220 = vmatpush1.bf16.msra.mxu0 %v3001
        %3221 = vmatprep.subr.bf16.mxu0 0
        %3222 = vmatpush1.bf16.msra.mxu0 %v3004
        %3223 = vmatprep.subr.bf16.mxu0 0
        %3224 = vmatpush1.bf16.msra.mxu0 %v3007
        %3225 = vmatprep.subr.bf16.mxu0 0
        %3226 = vmatpush1.bf16.msra.mxu0 0
        %3227 = vmatprep.subr.bf16.mxu0 0
        %3228 = vmatpush1.bf16.msra.mxu0 0
        %3229 = vmatprep.subr.bf16.mxu0 0
        %3230 = vmatpush1.bf16.msra.mxu0 0
        %3231 = vmatprep.subr.bf16.mxu0 0
        %3232 = vmatpush1.bf16.msra.mxu0 0
        %3233 = vmatprep.subr.bf16.mxu0 0
        %3234 = vmatpush1.bf16.msra.mxu0 0
        %3235 = vmatprep.subr.bf16.mxu0 0
        %3236 = vmatpush1.bf16.msra.mxu0 0
        %3237 = vmatprep.subr.bf16.mxu0 0
        %3238 = vmatpush1.bf16.msra.mxu0 0
        %3239 = vmatprep.subr.bf16.mxu0 0
        %3240 = vmatpush1.bf16.msra.mxu0 0
        %3241 = vmatprep.mubr.bf16.mxu0 0
        %3242 = vmatmul.mubr.bf16.gmra.mrb[0].mxu0 %v2855
        %v3243 = vpop.f32.mrb[0].mxu0
        %v3244 = vadd.f32 0.0, %v3243
        %v3245 = vpop.f32.mrb[0].mxu0
        %v3246 = vpop.f32.mrb[0].mxu0
        %v3247 = vadd.f32 0.0, %v3246
        %v3248 = vpop.f32.mrb[0].mxu0
        %3249 = vmatprep.mubr.bf16.mxu0 0
        %3250 = vmatmul.mubr.bf16.gmra.mrb[0].mxu0 %v2856
        %v3251 = vpop.f32.mrb[0].mxu0
        %v3252 = vadd.f32 0.0, %v3251
        %v3253 = vpop.f32.mrb[0].mxu0
        %v3254 = vpop.f32.mrb[0].mxu0
        %v3255 = vadd.f32 0.0, %v3254
        %v3256 = vpop.f32.mrb[0].mxu0
        %3257 = vmatprep.mubr.bf16.mxu0 0
        %3258 = vmatmul.mubr.bf16.gmra.mrb[0].mxu0 %v2857
        %v3259 = vpop.f32.mrb[0].mxu0
        %v3260 = vadd.f32 0.0, %v3259
        %v3261 = vpop.f32.mrb[0].mxu0
        %v3262 = vpop.f32.mrb[0].mxu0
        %v3263 = vadd.f32 0.0, %v3262
        %v3264 = vpop.f32.mrb[0].mxu0
        %3265 = vmatprep.mubr.bf16.mxu0 0
        %3266 = vmatmul.mubr.bf16.gmra.mrb[0].mxu0 %v2858
        %v3267 = vpop.f32.mrb[0].mxu0
        %v3268 = vadd.f32 0.0, %v3267
        %v3269 = vpop.f32.mrb[0].mxu0
        %v3270 = vpop.f32.mrb[0].mxu0
        %v3271 = vadd.f32 0.0, %v3270
        %v3272 = vpop.f32.mrb[0].mxu0
        %3273 = vmatprep.mubr.bf16.mxu0 0
        %3274 = vmatmul.mubr.bf16.gmra.mrb[0].mxu0 %v2859
        %v3275 = vpop.f32.mrb[0].mxu0
        %v3276 = vadd.f32 0.0, %v3275
        %v3277 = vpop.f32.mrb[0].mxu0
        %v3278 = vpop.f32.mrb[0].mxu0
        %v3279 = vadd.f32 0.0, %v3278
        %v3280 = vpop.f32.mrb[0].mxu0
        %3281 = vmatprep.mubr.bf16.mxu0 0
        %3282 = vmatmul.mubr.bf16.gmra.mrb[0].mxu0 %v2860
        %v3283 = vpop.f32.mrb[0].mxu0
        %v3284 = vadd.f32 0.0, %v3283
        %v3285 = vpop.f32.mrb[0].mxu0
        %v3286 = vpop.f32.mrb[0].mxu0
        %v3287 = vadd.f32 0.0, %v3286
        %v3288 = vpop.f32.mrb[0].mxu0
        %3289 = vmatprep.mubr.bf16.mxu0 0
        %3290 = vmatmul.mubr.bf16.gmra.mrb[0].mxu0 %v2861
        %v3291 = vpop.f32.mrb[0].mxu0
        %v3292 = vadd.f32 0.0, %v3291
        %v3293 = vpop.f32.mrb[0].mxu0
        %v3294 = vpop.f32.mrb[0].mxu0
        %v3295 = vadd.f32 0.0, %v3294
        %v3296 = vpop.f32.mrb[0].mxu0
        %3297 = vmatprep.mubr.bf16.mxu0 0
        %3298 = vmatmul.mubr.bf16.gmra.mrb[0].mxu0 %v2862
        %v3299 = vpop.f32.mrb[0].mxu0
        %v3300 = vadd.f32 0.0, %v3299
        %v3301 = vpop.f32.mrb[0].mxu0
        %v3302 = vpop.f32.mrb[0].mxu0
        %v3303 = vadd.f32 0.0, %v3302
        %v3304 = vpop.f32.mrb[0].mxu0
        %3305 = vmatprep.mubr.bf16.mxu0 0
        %3306 = vmatmul.mubr.bf16.gmra.mrb[0].mxu0 %v2863
        %v3307 = vpop.f32.mrb[0].mxu0
        %v3308 = vadd.f32 0.0, %v3307
        %v3309 = vpop.f32.mrb[0].mxu0
        %v3310 = vpop.f32.mrb[0].mxu0
        %v3311 = vadd.f32 0.0, %v3310
        %v3312 = vpop.f32.mrb[0].mxu0
        %3313 = vmatprep.mubr.bf16.mxu0 0
        %3314 = vmatmul.mubr.bf16.gmra.mrb[0].mxu0 %v2864
        %v3315 = vpop.f32.mrb[0].mxu0
        %v3316 = vadd.f32 0.0, %v3315
        %v3317 = vpop.f32.mrb[0].mxu0
        %v3318 = vpop.f32.mrb[0].mxu0
        %v3319 = vadd.f32 0.0, %v3318
        %v3320 = vpop.f32.mrb[0].mxu0
        %3321 = vmatprep.mubr.bf16.mxu0 0
        %3322 = vmatmul.mubr.bf16.gmra.mrb[0].mxu0 %v2865
        %v3323 = vpop.f32.mrb[0].mxu0
        %v3324 = vadd.f32 0.0, %v3323
        %v3325 = vpop.f32.mrb[0].mxu0
        %v3326 = vpop.f32.mrb[0].mxu0
        %v3327 = vadd.f32 0.0, %v3326
        %v3328 = vpop.f32.mrb[0].mxu0
        %3329 = vmatprep.mubr.bf16.mxu0 0
        %3330 = vmatmul.mubr.bf16.gmra.mrb[0].mxu0 %v2866
        %v3331 = vpop.f32.mrb[0].mxu0
        %v3332 = vadd.f32 0.0, %v3331
        %v3333 = vpop.f32.mrb[0].mxu0
        %v3334 = vpop.f32.mrb[0].mxu0
        %v3335 = vadd.f32 0.0, %v3334
        %v3336 = vpop.f32.mrb[0].mxu0
        %3337 = vmatprep.mubr.bf16.mxu0 0
        %3338 = vmatmul.mubr.bf16.gmra.mrb[0].mxu0 %v2867
        %v3339 = vpop.f32.mrb[0].mxu0
        %v3340 = vadd.f32 0.0, %v3339
        %v3341 = vpop.f32.mrb[0].mxu0
        %v3342 = vpop.f32.mrb[0].mxu0
        %v3343 = vadd.f32 0.0, %v3342
        %v3344 = vpop.f32.mrb[0].mxu0
        %3345 = vmatprep.mubr.bf16.mxu0 0
        %3346 = vmatmul.mubr.bf16.gmra.mrb[0].mxu0 %v2868
        %v3347 = vpop.f32.mrb[0].mxu0
        %v3348 = vadd.f32 0.0, %v3347
        %v3349 = vpop.f32.mrb[0].mxu0
        %v3350 = vpop.f32.mrb[0].mxu0
        %v3351 = vadd.f32 0.0, %v3350
        %v3352 = vpop.f32.mrb[0].mxu0
        %3353 = vmatprep.mubr.bf16.mxu0 0
        %3354 = vmatmul.mubr.bf16.gmra.mrb[0].mxu0 %v2869
        %v3355 = vpop.f32.mrb[0].mxu0
        %v3356 = vadd.f32 0.0, %v3355
        %v3357 = vpop.f32.mrb[0].mxu0
        %v3358 = vpop.f32.mrb[0].mxu0
        %v3359 = vadd.f32 0.0, %v3358
        %v3360 = vpop.f32.mrb[0].mxu0
        %3361 = vmatprep.mubr.bf16.mxu0 0
        %3362 = vmatmul.mubr.bf16.gmra.mrb[0].mxu0 %v2870
        %v3363 = vpop.f32.mrb[0].mxu0
        %v3364 = vadd.f32 0.0, %v3363
        %v3365 = vpop.f32.mrb[0].mxu0
        %v3366 = vpop.f32.mrb[0].mxu0
        %v3367 = vadd.f32 0.0, %v3366
        %v3368 = vpop.f32.mrb[0].mxu0
        %3369 = vdwg.mxu0
        %v3402 = vunpack.c.l.b16 %v2823
        %v3403 = vunpack.c.h.b16 %v2823
        %v3404 = vunpack.c.l.b16 %v2824
        %v3405 = vunpack.c.l.b16 %v2825
        %v3406 = vunpack.c.h.b16 %v2825
        %v3407 = vunpack.c.l.b16 %v2826
        %v3408 = vunpack.c.l.b16 %v2827
        %v3409 = vunpack.c.h.b16 %v2827
        %v3410 = vunpack.c.l.b16 %v2828
        %v3411 = vunpack.c.l.b16 %v2829
        %v3412 = vunpack.c.h.b16 %v2829
        %v3413 = vunpack.c.l.b16 %v2830
        %v3414 = vunpack.c.l.b16 %v2831
        %v3415 = vunpack.c.h.b16 %v2831
        %v3416 = vunpack.c.l.b16 %v2832
        %v3417 = vunpack.c.l.b16 %v2833
        %v3418 = vunpack.c.h.b16 %v2833
        %v3419 = vunpack.c.l.b16 %v2834
        %v3420 = vunpack.c.l.b16 %v2835
        %v3421 = vunpack.c.h.b16 %v2835
        %v3422 = vunpack.c.l.b16 %v2836
        %v3423 = vunpack.c.l.b16 %v2837
        %v3424 = vunpack.c.h.b16 %v2837
        %v3425 = vunpack.c.l.b16 %v2838
        %v3426 = vunpack.c.l.b16 %v2839
        %v3427 = vunpack.c.h.b16 %v2839
        %v3428 = vunpack.c.l.b16 %v2840
        %v3429 = vunpack.c.l.b16 %v2841
        %v3430 = vunpack.c.h.b16 %v2841
        %v3431 = vunpack.c.l.b16 %v2842
        %v3432 = vunpack.c.l.b16 %v2843
        %v3433 = vunpack.c.h.b16 %v2843
        %v3434 = vunpack.c.l.b16 %v2844
        %v3435 = vunpack.c.l.b16 %v2845
        %v3436 = vunpack.c.h.b16 %v2845
        %v3437 = vunpack.c.l.b16 %v2846
        %v3438 = vunpack.c.l.b16 %v2847
        %v3439 = vunpack.c.h.b16 %v2847
        %v3440 = vunpack.c.l.b16 %v2848
        %v3441 = vunpack.c.l.b16 %v2849
        %v3442 = vunpack.c.h.b16 %v2849
        %v3443 = vunpack.c.l.b16 %v2850
        %v3444 = vunpack.c.l.b16 %v2851
        %v3445 = vunpack.c.h.b16 %v2851
        %v3446 = vunpack.c.l.b16 %v2852
        %v3447 = vunpack.c.l.b16 %v2853
        %v3448 = vunpack.c.h.b16 %v2853
        %v3449 = vunpack.c.l.b16 %v2854
        %v3450 = vpack.c.b16 %v3405, %v3402
        %v3451 = vpack.c.b16 %v3406, %v3403
        %v3452 = vpack.c.b16 %v3407, %v3404
        %v3453 = vpack.c.b16 %v3411, %v3408
        %v3454 = vpack.c.b16 %v3412, %v3409
        %v3455 = vpack.c.b16 %v3413, %v3410
        %v3456 = vpack.c.b16 %v3417, %v3414
        %v3457 = vpack.c.b16 %v3418, %v3415
        %v3458 = vpack.c.b16 %v3419, %v3416
        %v3459 = vpack.c.b16 %v3423, %v3420
        %v3460 = vpack.c.b16 %v3424, %v3421
        %v3461 = vpack.c.b16 %v3425, %v3422
        %v3462 = vpack.c.b16 %v3429, %v3426
        %v3463 = vpack.c.b16 %v3430, %v3427
        %v3464 = vpack.c.b16 %v3431, %v3428
        %v3465 = vpack.c.b16 %v3435, %v3432
        %v3466 = vpack.c.b16 %v3436, %v3433
        %v3467 = vpack.c.b16 %v3437, %v3434
        %v3468 = vpack.c.b16 %v3441, %v3438
        %v3469 = vpack.c.b16 %v3442, %v3439
        %v3470 = vpack.c.b16 %v3443, %v3440
        %v3471 = vpack.c.b16 %v3447, %v3444
        %v3472 = vpack.c.b16 %v3448, %v3445
        %v3473 = vpack.c.b16 %v3449, %v3446
        %3498 = vmatprep.subr.bf16.mxu0 %v3451
        %3499 = vmatpush1.bf16.msra.mxu0 %v3450
        %3500 = vmatprep.subr.bf16.mxu0 %v3454
        %3501 = vmatpush1.bf16.msra.mxu0 %v3453
        %3502 = vmatprep.subr.bf16.mxu0 %v3457
        %3503 = vmatpush1.bf16.msra.mxu0 %v3456
        %3504 = vmatprep.subr.bf16.mxu0 %v3460
        %3505 = vmatpush1.bf16.msra.mxu0 %v3459
        %3506 = vmatprep.subr.bf16.mxu0 %v3463
        %3507 = vmatpush1.bf16.msra.mxu0 %v3462
        %3508 = vmatprep.subr.bf16.mxu0 %v3466
        %3509 = vmatpush1.bf16.msra.mxu0 %v3465
        %3510 = vmatprep.subr.bf16.mxu0 %v3469
        %3511 = vmatpush1.bf16.msra.mxu0 %v3468
        %3512 = vmatprep.subr.bf16.mxu0 %v3472
        %3513 = vmatpush1.bf16.msra.mxu0 %v3471
        %3514 = vmatprep.subr.bf16.mxu0 0
        %3515 = vmatpush1.bf16.msra.mxu0 0
        %3516 = vmatprep.subr.bf16.mxu0 0
        %3517 = vmatpush1.bf16.msra.mxu0 0
        %3518 = vmatprep.subr.bf16.mxu0 0
        %3519 = vmatpush1.bf16.msra.mxu0 0
        %3520 = vmatprep.subr.bf16.mxu0 0
        %3521 = vmatpush1.bf16.msra.mxu0 0
        %3522 = vmatprep.subr.bf16.mxu0 0
        %3523 = vmatpush1.bf16.msra.mxu0 0
        %3524 = vmatprep.subr.bf16.mxu0 0
        %3525 = vmatpush1.bf16.msra.mxu0 0
        %3526 = vmatprep.subr.bf16.mxu0 0
        %3527 = vmatpush1.bf16.msra.mxu0 0
        %3528 = vmatprep.subr.bf16.mxu0 0
        %3529 = vmatpush1.bf16.msra.mxu0 0
        %3530 = vmatprep.mubr.bf16.mxu0 0
        %3531 = vmatmul.mubr.bf16.gmra.mrb[0].mxu0 %v2807
        %v3532 = vpop.f32.mrb[0].mxu0
        %v3533 = vadd.f32 %v3067, %v3532
        %v3534 = vpop.f32.mrb[0].mxu0
        %v3535 = vadd.f32 %v3069, %v3534
        %v3536 = vpop.f32.mrb[0].mxu0
        %v3537 = vpop.f32.mrb[0].mxu0
        %v3538 = vadd.f32 %v3072, %v3537
        %3539 = vmatprep.mubr.bf16.mxu0 0
        %3540 = vmatmul.mubr.bf16.gmra.mrb[0].mxu0 %v2808
        %v3541 = vpop.f32.mrb[0].mxu0
        %v3542 = vadd.f32 %v3076, %v3541
        %v3543 = vpop.f32.mrb[0].mxu0
        %v3544 = vadd.f32 %v3078, %v3543
        %v3545 = vpop.f32.mrb[0].mxu0
        %v3546 = vpop.f32.mrb[0].mxu0
        %v3547 = vadd.f32 %v3081, %v3546
        %3548 = vmatprep.mubr.bf16.mxu0 0
        %3549 = vmatmul.mubr.bf16.gmra.mrb[0].mxu0 %v2809
        %v3550 = vpop.f32.mrb[0].mxu0
        %v3551 = vadd.f32 %v3085, %v3550
        %v3552 = vpop.f32.mrb[0].mxu0
        %v3553 = vadd.f32 %v3087, %v3552
        %v3554 = vpop.f32.mrb[0].mxu0
        %v3555 = vpop.f32.mrb[0].mxu0
        %v3556 = vadd.f32 %v3090, %v3555
        %3557 = vmatprep.mubr.bf16.mxu0 0
        %3558 = vmatmul.mubr.bf16.gmra.mrb[0].mxu0 %v2810
        %v3559 = vpop.f32.mrb[0].mxu0
        %v3560 = vadd.f32 %v3094, %v3559
        %v3561 = vpop.f32.mrb[0].mxu0
        %v3562 = vadd.f32 %v3096, %v3561
        %v3563 = vpop.f32.mrb[0].mxu0
        %v3564 = vpop.f32.mrb[0].mxu0
        %v3565 = vadd.f32 %v3099, %v3564
        %3566 = vmatprep.mubr.bf16.mxu0 0
        %3567 = vmatmul.mubr.bf16.gmra.mrb[0].mxu0 %v2811
        %v3568 = vpop.f32.mrb[0].mxu0
        %v3569 = vadd.f32 %v3103, %v3568
        %v3570 = vpop.f32.mrb[0].mxu0
        %v3571 = vadd.f32 %v3105, %v3570
        %v3572 = vpop.f32.mrb[0].mxu0
        %v3573 = vpop.f32.mrb[0].mxu0
        %v3574 = vadd.f32 %v3108, %v3573
        %3575 = vmatprep.mubr.bf16.mxu0 0
        %3576 = vmatmul.mubr.bf16.gmra.mrb[0].mxu0 %v2812
        %v3577 = vpop.f32.mrb[0].mxu0
        %v3578 = vadd.f32 %v3112, %v3577
        %v3579 = vpop.f32.mrb[0].mxu0
        %v3580 = vadd.f32 %v3114, %v3579
        %v3581 = vpop.f32.mrb[0].mxu0
        %v3582 = vpop.f32.mrb[0].mxu0
        %v3583 = vadd.f32 %v3117, %v3582
        %3584 = vmatprep.mubr.bf16.mxu0 0
        %3585 = vmatmul.mubr.bf16.gmra.mrb[0].mxu0 %v2813
        %v3586 = vpop.f32.mrb[0].mxu0
        %v3587 = vadd.f32 %v3121, %v3586
        %v3588 = vpop.f32.mrb[0].mxu0
        %v3589 = vadd.f32 %v3123, %v3588
        %v3590 = vpop.f32.mrb[0].mxu0
        %v3591 = vpop.f32.mrb[0].mxu0
        %v3592 = vadd.f32 %v3126, %v3591
        %3593 = vmatprep.mubr.bf16.mxu0 0
        %3594 = vmatmul.mubr.bf16.gmra.mrb[0].mxu0 %v2814
        %v3595 = vpop.f32.mrb[0].mxu0
        %v3596 = vadd.f32 %v3130, %v3595
        %v3597 = vpop.f32.mrb[0].mxu0
        %v3598 = vadd.f32 %v3132, %v3597
        %v3599 = vpop.f32.mrb[0].mxu0
        %v3600 = vpop.f32.mrb[0].mxu0
        %v3601 = vadd.f32 %v3135, %v3600
        %3602 = vmatprep.mubr.bf16.mxu0 0
        %3603 = vmatmul.mubr.bf16.gmra.mrb[0].mxu0 %v2815
        %v3604 = vpop.f32.mrb[0].mxu0
        %v3605 = vadd.f32 %v3139, %v3604
        %v3606 = vpop.f32.mrb[0].mxu0
        %v3607 = vadd.f32 %v3141, %v3606
        %v3608 = vpop.f32.mrb[0].mxu0
        %v3609 = vpop.f32.mrb[0].mxu0
        %v3610 = vadd.f32 %v3144, %v3609
        %3611 = vmatprep.mubr.bf16.mxu0 0
        %3612 = vmatmul.mubr.bf16.gmra.mrb[0].mxu0 %v2816
        %v3613 = vpop.f32.mrb[0].mxu0
        %v3614 = vadd.f32 %v3148, %v3613
        %v3615 = vpop.f32.mrb[0].mxu0
        %v3616 = vadd.f32 %v3150, %v3615
        %v3617 = vpop.f32.mrb[0].mxu0
        %v3618 = vpop.f32.mrb[0].mxu0
        %v3619 = vadd.f32 %v3153, %v3618
        %3620 = vmatprep.mubr.bf16.mxu0 0
        %3621 = vmatmul.mubr.bf16.gmra.mrb[0].mxu0 %v2817
        %v3622 = vpop.f32.mrb[0].mxu0
        %v3623 = vadd.f32 %v3157, %v3622
        %v3624 = vpop.f32.mrb[0].mxu0
        %v3625 = vadd.f32 %v3159, %v3624
        %v3626 = vpop.f32.mrb[0].mxu0
        %v3627 = vpop.f32.mrb[0].mxu0
        %v3628 = vadd.f32 %v3162, %v3627
        %3629 = vmatprep.mubr.bf16.mxu0 0
        %3630 = vmatmul.mubr.bf16.gmra.mrb[0].mxu0 %v2818
        %v3631 = vpop.f32.mrb[0].mxu0
        %v3632 = vadd.f32 %v3166, %v3631
        %v3633 = vpop.f32.mrb[0].mxu0
        %v3634 = vadd.f32 %v3168, %v3633
        %v3635 = vpop.f32.mrb[0].mxu0
        %v3636 = vpop.f32.mrb[0].mxu0
        %v3637 = vadd.f32 %v3171, %v3636
        %3638 = vmatprep.mubr.bf16.mxu0 0
        %3639 = vmatmul.mubr.bf16.gmra.mrb[0].mxu0 %v2819
        %v3640 = vpop.f32.mrb[0].mxu0
        %v3641 = vadd.f32 %v3175, %v3640
        %v3642 = vpop.f32.mrb[0].mxu0
        %v3643 = vadd.f32 %v3177, %v3642
        %v3644 = vpop.f32.mrb[0].mxu0
        %v3645 = vpop.f32.mrb[0].mxu0
        %v3646 = vadd.f32 %v3180, %v3645
        %3647 = vmatprep.mubr.bf16.mxu0 0
        %3648 = vmatmul.mubr.bf16.gmra.mrb[0].mxu0 %v2820
        %v3649 = vpop.f32.mrb[0].mxu0
        %v3650 = vadd.f32 %v3184, %v3649
        %v3651 = vpop.f32.mrb[0].mxu0
        %v3652 = vadd.f32 %v3186, %v3651
        %v3653 = vpop.f32.mrb[0].mxu0
        %v3654 = vpop.f32.mrb[0].mxu0
        %v3655 = vadd.f32 %v3189, %v3654
        %3656 = vmatprep.mubr.bf16.mxu0 0
        %3657 = vmatmul.mubr.bf16.gmra.mrb[0].mxu0 %v2821
        %v3658 = vpop.f32.mrb[0].mxu0
        %v3659 = vadd.f32 %v3193, %v3658
        %v3660 = vpop.f32.mrb[0].mxu0
        %v3661 = vadd.f32 %v3195, %v3660
        %v3662 = vpop.f32.mrb[0].mxu0
        %v3663 = vpop.f32.mrb[0].mxu0
        %v3664 = vadd.f32 %v3198, %v3663
        %3665 = vmatprep.mubr.bf16.mxu0 0
        %3666 = vmatmul.mubr.bf16.gmra.mrb[0].mxu0 %v2822
        %v3667 = vpop.f32.mrb[0].mxu0
        %v3668 = vadd.f32 %v3202, %v3667
        %v3669 = vpop.f32.mrb[0].mxu0
        %v3670 = vadd.f32 %v3204, %v3669
        %v3671 = vpop.f32.mrb[0].mxu0
        %v3672 = vpop.f32.mrb[0].mxu0
        %v3673 = vadd.f32 %v3207, %v3672
        %3674 = vdwg.mxu0
        %3675 = vmatprep.subr.bf16.mxu0 0
        %3676 = vmatpush1.bf16.msra.mxu0 %v3452
        %3677 = vmatprep.subr.bf16.mxu0 0
        %3678 = vmatpush1.bf16.msra.mxu0 %v3455
        %3679 = vmatprep.subr.bf16.mxu0 0
        %3680 = vmatpush1.bf16.msra.mxu0 %v3458
        %3681 = vmatprep.subr.bf16.mxu0 0
        %3682 = vmatpush1.bf16.msra.mxu0 %v3461
        %3683 = vmatprep.subr.bf16.mxu0 0
        %3684 = vmatpush1.bf16.msra.mxu0 %v3464
        %3685 = vmatprep.subr.bf16.mxu0 0
        %3686 = vmatpush1.bf16.msra.mxu0 %v3467
        %3687 = vmatprep.subr.bf16.mxu0 0
        %3688 = vmatpush1.bf16.msra.mxu0 %v3470
        %3689 = vmatprep.subr.bf16.mxu0 0
        %3690 = vmatpush1.bf16.msra.mxu0 %v3473
        %3691 = vmatprep.subr.bf16.mxu0 0
        %3692 = vmatpush1.bf16.msra.mxu0 0
        %3693 = vmatprep.subr.bf16.mxu0 0
        %3694 = vmatpush1.bf16.msra.mxu0 0
        %3695 = vmatprep.subr.bf16.mxu0 0
        %3696 = vmatpush1.bf16.msra.mxu0 0
        %3697 = vmatprep.subr.bf16.mxu0 0
        %3698 = vmatpush1.bf16.msra.mxu0 0
        %3699 = vmatprep.subr.bf16.mxu0 0
        %3700 = vmatpush1.bf16.msra.mxu0 0
        %3701 = vmatprep.subr.bf16.mxu0 0
        %3702 = vmatpush1.bf16.msra.mxu0 0
        %3703 = vmatprep.subr.bf16.mxu0 0
        %3704 = vmatpush1.bf16.msra.mxu0 0
        %3705 = vmatprep.subr.bf16.mxu0 0
        %3706 = vmatpush1.bf16.msra.mxu0 0
        %3707 = vmatprep.mubr.bf16.mxu0 0
        %3708 = vmatmul.mubr.bf16.gmra.mrb[0].mxu0 %v2807
        %v3709 = vpop.f32.mrb[0].mxu0
        %v3710 = vadd.f32 %v3244, %v3709
        %v3711 = vpop.f32.mrb[0].mxu0
        %v3712 = vpop.f32.mrb[0].mxu0
        %v3713 = vadd.f32 %v3247, %v3712
        %v3714 = vpop.f32.mrb[0].mxu0
        %3715 = vmatprep.mubr.bf16.mxu0 0
        %3716 = vmatmul.mubr.bf16.gmra.mrb[0].mxu0 %v2808
        %v3717 = vpop.f32.mrb[0].mxu0
        %v3718 = vadd.f32 %v3252, %v3717
        %v3719 = vpop.f32.mrb[0].mxu0
        %v3720 = vpop.f32.mrb[0].mxu0
        %v3721 = vadd.f32 %v3255, %v3720
        %v3722 = vpop.f32.mrb[0].mxu0
        %3723 = vmatprep.mubr.bf16.mxu0 0
        %3724 = vmatmul.mubr.bf16.gmra.mrb[0].mxu0 %v2809
        %v3725 = vpop.f32.mrb[0].mxu0
        %v3726 = vadd.f32 %v3260, %v3725
        %v3727 = vpop.f32.mrb[0].mxu0
        %v3728 = vpop.f32.mrb[0].mxu0
        %v3729 = vadd.f32 %v3263, %v3728
        %v3730 = vpop.f32.mrb[0].mxu0
        %3731 = vmatprep.mubr.bf16.mxu0 0
        %3732 = vmatmul.mubr.bf16.gmra.mrb[0].mxu0 %v2810
        %v3733 = vpop.f32.mrb[0].mxu0
        %v3734 = vadd.f32 %v3268, %v3733
        %v3735 = vpop.f32.mrb[0].mxu0
        %v3736 = vpop.f32.mrb[0].mxu0
        %v3737 = vadd.f32 %v3271, %v3736
        %v3738 = vpop.f32.mrb[0].mxu0
        %3739 = vmatprep.mubr.bf16.mxu0 0
        %3740 = vmatmul.mubr.bf16.gmra.mrb[0].mxu0 %v2811
        %v3741 = vpop.f32.mrb[0].mxu0
        %v3742 = vadd.f32 %v3276, %v3741
        %v3743 = vpop.f32.mrb[0].mxu0
        %v3744 = vpop.f32.mrb[0].mxu0
        %v3745 = vadd.f32 %v3279, %v3744
        %v3746 = vpop.f32.mrb[0].mxu0
        %3747 = vmatprep.mubr.bf16.mxu0 0
        %3748 = vmatmul.mubr.bf16.gmra.mrb[0].mxu0 %v2812
        %v3749 = vpop.f32.mrb[0].mxu0
        %v3750 = vadd.f32 %v3284, %v3749
        %v3751 = vpop.f32.mrb[0].mxu0
        %v3752 = vpop.f32.mrb[0].mxu0
        %v3753 = vadd.f32 %v3287, %v3752
        %v3754 = vpop.f32.mrb[0].mxu0
        %3755 = vmatprep.mubr.bf16.mxu0 0
        %3756 = vmatmul.mubr.bf16.gmra.mrb[0].mxu0 %v2813
        %v3757 = vpop.f32.mrb[0].mxu0
        %v3758 = vadd.f32 %v3292, %v3757
        %v3759 = vpop.f32.mrb[0].mxu0
        %v3760 = vpop.f32.mrb[0].mxu0
        %v3761 = vadd.f32 %v3295, %v3760
        %v3762 = vpop.f32.mrb[0].mxu0
        %3763 = vmatprep.mubr.bf16.mxu0 0
        %3764 = vmatmul.mubr.bf16.gmra.mrb[0].mxu0 %v2814
        %v3765 = vpop.f32.mrb[0].mxu0
        %v3766 = vadd.f32 %v3300, %v3765
        %v3767 = vpop.f32.mrb[0].mxu0
        %v3768 = vpop.f32.mrb[0].mxu0
        %v3769 = vadd.f32 %v3303, %v3768
        %v3770 = vpop.f32.mrb[0].mxu0
        %3771 = vmatprep.mubr.bf16.mxu0 0
        %3772 = vmatmul.mubr.bf16.gmra.mrb[0].mxu0 %v2815
        %v3773 = vpop.f32.mrb[0].mxu0
        %v3774 = vadd.f32 %v3308, %v3773
        %v3775 = vpop.f32.mrb[0].mxu0
        %v3776 = vpop.f32.mrb[0].mxu0
        %v3777 = vadd.f32 %v3311, %v3776
        %v3778 = vpop.f32.mrb[0].mxu0
        %3779 = vmatprep.mubr.bf16.mxu0 0
        %3780 = vmatmul.mubr.bf16.gmra.mrb[0].mxu0 %v2816
        %v3781 = vpop.f32.mrb[0].mxu0
        %v3782 = vadd.f32 %v3316, %v3781
        %v3783 = vpop.f32.mrb[0].mxu0
        %v3784 = vpop.f32.mrb[0].mxu0
        %v3785 = vadd.f32 %v3319, %v3784
        %v3786 = vpop.f32.mrb[0].mxu0
        %3787 = vmatprep.mubr.bf16.mxu0 0
        %3788 = vmatmul.mubr.bf16.gmra.mrb[0].mxu0 %v2817
        %v3789 = vpop.f32.mrb[0].mxu0
        %v3790 = vadd.f32 %v3324, %v3789
        %v3791 = vpop.f32.mrb[0].mxu0
        %v3792 = vpop.f32.mrb[0].mxu0
        %v3793 = vadd.f32 %v3327, %v3792
        %v3794 = vpop.f32.mrb[0].mxu0
        %3795 = vmatprep.mubr.bf16.mxu0 0
        %3796 = vmatmul.mubr.bf16.gmra.mrb[0].mxu0 %v2818
        %v3797 = vpop.f32.mrb[0].mxu0
        %v3798 = vadd.f32 %v3332, %v3797
        %v3799 = vpop.f32.mrb[0].mxu0
        %v3800 = vpop.f32.mrb[0].mxu0
        %v3801 = vadd.f32 %v3335, %v3800
        %v3802 = vpop.f32.mrb[0].mxu0
        %3803 = vmatprep.mubr.bf16.mxu0 0
        %3804 = vmatmul.mubr.bf16.gmra.mrb[0].mxu0 %v2819
        %v3805 = vpop.f32.mrb[0].mxu0
        %v3806 = vadd.f32 %v3340, %v3805
        %v3807 = vpop.f32.mrb[0].mxu0
        %v3808 = vpop.f32.mrb[0].mxu0
        %v3809 = vadd.f32 %v3343, %v3808
        %v3810 = vpop.f32.mrb[0].mxu0
        %3811 = vmatprep.mubr.bf16.mxu0 0
        %3812 = vmatmul.mubr.bf16.gmra.mrb[0].mxu0 %v2820
        %v3813 = vpop.f32.mrb[0].mxu0
        %v3814 = vadd.f32 %v3348, %v3813
        %v3815 = vpop.f32.mrb[0].mxu0
        %v3816 = vpop.f32.mrb[0].mxu0
        %v3817 = vadd.f32 %v3351, %v3816
        %v3818 = vpop.f32.mrb[0].mxu0
        %3819 = vmatprep.mubr.bf16.mxu0 0
        %3820 = vmatmul.mubr.bf16.gmra.mrb[0].mxu0 %v2821
        %v3821 = vpop.f32.mrb[0].mxu0
        %v3822 = vadd.f32 %v3356, %v3821
        %v3823 = vpop.f32.mrb[0].mxu0
        %v3824 = vpop.f32.mrb[0].mxu0
        %v3825 = vadd.f32 %v3359, %v3824
        %v3826 = vpop.f32.mrb[0].mxu0
        %3827 = vmatprep.mubr.bf16.mxu0 0
        %3828 = vmatmul.mubr.bf16.gmra.mrb[0].mxu0 %v2822
        %v3829 = vpop.f32.mrb[0].mxu0
        %v3830 = vadd.f32 %v3364, %v3829
        %v3831 = vpop.f32.mrb[0].mxu0
        %v3832 = vpop.f32.mrb[0].mxu0
        %v3833 = vadd.f32 %v3367, %v3832
        %v3834 = vpop.f32.mrb[0].mxu0
        %3835 = vdwg.mxu0
        %s3836 = scalar_lea.vmem [#allocation2], 16
        %v3837 = vld [vmem:[%s3836] sm:$0xff]
        %v3838 = vld [vmem:[%s3836 + $0x8] sm:$0xff]
        %v3839 = vld [vmem:[%s3836 + $0x10] sm:$0xff]
        %v3840 = vld [vmem:[%s3836 + $0x18] sm:$0xff]
        %v3841 = vld [vmem:[%s3836 + $0x20] sm:$0xff]
        %v3842 = vld [vmem:[%s3836 + $0x28] sm:$0xff]
        %v3843 = vld [vmem:[%s3836 + $0x30] sm:$0xff]
        %v3844 = vld [vmem:[%s3836 + $0x38] sm:$0xff]
        %v3845 = vld [vmem:[%s3836 + $0x50] sm:$0xff]
        %v3846 = vld [vmem:[%s3836 + $0x58] sm:$0xff]
        %v3847 = vld [vmem:[%s3836 + $0x60] sm:$0xff]
        %v3848 = vld [vmem:[%s3836 + $0x68] sm:$0xff]
        %v3849 = vld [vmem:[%s3836 + $0x70] sm:$0xff]
        %v3850 = vld [vmem:[%s3836 + $0x78] sm:$0xff]
        %v3851 = vld [vmem:[%s3836 + $0x80] sm:$0xff]
        %v3852 = vld [vmem:[%s3836 + $0x88] sm:$0xff]
        %s3853 = scalar_lea.vmem [#allocation8], 384
        %v3854 = vld [vmem:[%s3853] sm:$0xff]
        %v3855 = vld [vmem:[%s3853 + $0x8] sm:$0xf]
        %v3856 = vld [vmem:[%s3853 + $0xc] sm:$0xff]
        %v3857 = vld [vmem:[%s3853 + $0x14] sm:$0xf]
        %v3858 = vld [vmem:[%s3853 + $0x18] sm:$0xff]
        %v3859 = vld [vmem:[%s3853 + $0x20] sm:$0xf]
        %v3860 = vld [vmem:[%s3853 + $0x24] sm:$0xff]
        %v3861 = vld [vmem:[%s3853 + $0x2c] sm:$0xf]
        %v3862 = vld [vmem:[%s3853 + $0x30] sm:$0xff]
        %v3863 = vld [vmem:[%s3853 + $0x38] sm:$0xf]
        %v3864 = vld [vmem:[%s3853 + $0x3c] sm:$0xff]
        %v3865 = vld [vmem:[%s3853 + $0x44] sm:$0xf]
        %v3866 = vld [vmem:[%s3853 + $0x48] sm:$0xff]
        %v3867 = vld [vmem:[%s3853 + $0x50] sm:$0xf]
        %v3868 = vld [vmem:[%s3853 + $0x54] sm:$0xff]
        %v3869 = vld [vmem:[%s3853 + $0x5c] sm:$0xf]
        %v3870 = vld [vmem:[%s3853 + $0x60] sm:$0xff]
        %v3871 = vld [vmem:[%s3853 + $0x68] sm:$0xf]
        %v3872 = vld [vmem:[%s3853 + $0x6c] sm:$0xff]
        %v3873 = vld [vmem:[%s3853 + $0x74] sm:$0xf]
        %v3874 = vld [vmem:[%s3853 + $0x78] sm:$0xff]
        %v3875 = vld [vmem:[%s3853 + $0x80] sm:$0xf]
        %v3876 = vld [vmem:[%s3853 + $0x84] sm:$0xff]
        %v3877 = vld [vmem:[%s3853 + $0x8c] sm:$0xf]
        %v3878 = vld [vmem:[%s3853 + $0x90] sm:$0xff]
        %v3879 = vld [vmem:[%s3853 + $0x98] sm:$0xf]
        %v3880 = vld [vmem:[%s3853 + $0x9c] sm:$0xff]
        %v3881 = vld [vmem:[%s3853 + $0xa4] sm:$0xf]
        %v3882 = vld [vmem:[%s3853 + $0xa8] sm:$0xff]
        %v3883 = vld [vmem:[%s3853 + $0xb0] sm:$0xf]
        %v3884 = vld [vmem:[%s3853 + $0xb4] sm:$0xff]
        %v3885 = vld [vmem:[%s3853 + $0xbc] sm:$0xf]
        %v3918 = vunpack.c.l.b16 %v3854
        %v3919 = vunpack.c.h.b16 %v3854
        %v3920 = vunpack.c.l.b16 %v3855
        %v3921 = vunpack.c.l.b16 %v3856
        %v3922 = vunpack.c.h.b16 %v3856
        %v3923 = vunpack.c.l.b16 %v3857
        %v3924 = vunpack.c.l.b16 %v3858
        %v3925 = vunpack.c.h.b16 %v3858
        %v3926 = vunpack.c.l.b16 %v3859
        %v3927 = vunpack.c.l.b16 %v3860
        %v3928 = vunpack.c.h.b16 %v3860
        %v3929 = vunpack.c.l.b16 %v3861
        %v3930 = vunpack.c.l.b16 %v3862
        %v3931 = vunpack.c.h.b16 %v3862
        %v3932 = vunpack.c.l.b16 %v3863
        %v3933 = vunpack.c.l.b16 %v3864
        %v3934 = vunpack.c.h.b16 %v3864
        %v3935 = vunpack.c.l.b16 %v3865
        %v3936 = vunpack.c.l.b16 %v3866
        %v3937 = vunpack.c.h.b16 %v3866
        %v3938 = vunpack.c.l.b16 %v3867
        %v3939 = vunpack.c.l.b16 %v3868
        %v3940 = vunpack.c.h.b16 %v3868
        %v3941 = vunpack.c.l.b16 %v3869
        %v3942 = vunpack.c.l.b16 %v3870
        %v3943 = vunpack.c.h.b16 %v3870
        %v3944 = vunpack.c.l.b16 %v3871
        %v3945 = vunpack.c.l.b16 %v3872
        %v3946 = vunpack.c.h.b16 %v3872
        %v3947 = vunpack.c.l.b16 %v3873
        %v3948 = vunpack.c.l.b16 %v3874
        %v3949 = vunpack.c.h.b16 %v3874
        %v3950 = vunpack.c.l.b16 %v3875
        %v3951 = vunpack.c.l.b16 %v3876
        %v3952 = vunpack.c.h.b16 %v3876
        %v3953 = vunpack.c.l.b16 %v3877
        %v3954 = vunpack.c.l.b16 %v3878
        %v3955 = vunpack.c.h.b16 %v3878
        %v3956 = vunpack.c.l.b16 %v3879
        %v3957 = vunpack.c.l.b16 %v3880
        %v3958 = vunpack.c.h.b16 %v3880
        %v3959 = vunpack.c.l.b16 %v3881
        %v3960 = vunpack.c.l.b16 %v3882
        %v3961 = vunpack.c.h.b16 %v3882
        %v3962 = vunpack.c.l.b16 %v3883
        %v3963 = vunpack.c.l.b16 %v3884
        %v3964 = vunpack.c.h.b16 %v3884
        %v3965 = vunpack.c.l.b16 %v3885
        %v3966 = vpack.c.b16 %v3921, %v3918
        %v3967 = vpack.c.b16 %v3922, %v3919
        %v3968 = vpack.c.b16 %v3923, %v3920
        %v3969 = vpack.c.b16 %v3927, %v3924
        %v3970 = vpack.c.b16 %v3928, %v3925
        %v3971 = vpack.c.b16 %v3929, %v3926
        %v3972 = vpack.c.b16 %v3933, %v3930
        %v3973 = vpack.c.b16 %v3934, %v3931
        %v3974 = vpack.c.b16 %v3935, %v3932
        %v3975 = vpack.c.b16 %v3939, %v3936
        %v3976 = vpack.c.b16 %v3940, %v3937
        %v3977 = vpack.c.b16 %v3941, %v3938
        %v3978 = vpack.c.b16 %v3945, %v3942
        %v3979 = vpack.c.b16 %v3946, %v3943
        %v3980 = vpack.c.b16 %v3947, %v3944
        %v3981 = vpack.c.b16 %v3951, %v3948
        %v3982 = vpack.c.b16 %v3952, %v3949
        %v3983 = vpack.c.b16 %v3953, %v3950
        %v3984 = vpack.c.b16 %v3957, %v3954
        %v3985 = vpack.c.b16 %v3958, %v3955
        %v3986 = vpack.c.b16 %v3959, %v3956
        %v3987 = vpack.c.b16 %v3963, %v3960
        %v3988 = vpack.c.b16 %v3964, %v3961
        %v3989 = vpack.c.b16 %v3965, %v3962
        %4014 = vmatprep.subr.bf16.mxu0 %v3967
        %4015 = vmatpush1.bf16.msra.mxu0 %v3966
        %4016 = vmatprep.subr.bf16.mxu0 %v3970
        %4017 = vmatpush1.bf16.msra.mxu0 %v3969
        %4018 = vmatprep.subr.bf16.mxu0 %v3973
        %4019 = vmatpush1.bf16.msra.mxu0 %v3972
        %4020 = vmatprep.subr.bf16.mxu0 %v3976
        %4021 = vmatpush1.bf16.msra.mxu0 %v3975
        %4022 = vmatprep.subr.bf16.mxu0 %v3979
        %4023 = vmatpush1.bf16.msra.mxu0 %v3978
        %4024 = vmatprep.subr.bf16.mxu0 %v3982
        %4025 = vmatpush1.bf16.msra.mxu0 %v3981
        %4026 = vmatprep.subr.bf16.mxu0 %v3985
        %4027 = vmatpush1.bf16.msra.mxu0 %v3984
        %4028 = vmatprep.subr.bf16.mxu0 %v3988
        %4029 = vmatpush1.bf16.msra.mxu0 %v3987
        %4030 = vmatprep.subr.bf16.mxu0 0
        %4031 = vmatpush1.bf16.msra.mxu0 0
        %4032 = vmatprep.subr.bf16.mxu0 0
        %4033 = vmatpush1.bf16.msra.mxu0 0
        %4034 = vmatprep.subr.bf16.mxu0 0
        %4035 = vmatpush1.bf16.msra.mxu0 0
        %4036 = vmatprep.subr.bf16.mxu0 0
        %4037 = vmatpush1.bf16.msra.mxu0 0
        %4038 = vmatprep.subr.bf16.mxu0 0
        %4039 = vmatpush1.bf16.msra.mxu0 0
        %4040 = vmatprep.subr.bf16.mxu0 0
        %4041 = vmatpush1.bf16.msra.mxu0 0
        %4042 = vmatprep.subr.bf16.mxu0 0
        %4043 = vmatpush1.bf16.msra.mxu0 0
        %4044 = vmatprep.subr.bf16.mxu0 0
        %4045 = vmatpush1.bf16.msra.mxu0 0
        %4046 = vmatprep.mubr.bf16.mxu0 0
        %4047 = vmatmul.mubr.bf16.gmra.mrb[0].mxu0 %v3837
        %v4048 = vpop.f32.mrb[0].mxu0
        %v4049 = vadd.f32 0.0, %v4048
        %v4050 = vpop.f32.mrb[0].mxu0
        %v4051 = vadd.f32 0.0, %v4050
        %v4052 = vpop.f32.mrb[0].mxu0
        %v4053 = vpop.f32.mrb[0].mxu0
        %v4054 = vadd.f32 0.0, %v4053
        %4055 = vmatprep.mubr.bf16.mxu0 0
        %4056 = vmatmul.mubr.bf16.gmra.mrb[0].mxu0 %v3838
        %v4057 = vpop.f32.mrb[0].mxu0
        %v4058 = vadd.f32 0.0, %v4057
        %v4059 = vpop.f32.mrb[0].mxu0
        %v4060 = vadd.f32 0.0, %v4059
        %v4061 = vpop.f32.mrb[0].mxu0
        %v4062 = vpop.f32.mrb[0].mxu0
        %v4063 = vadd.f32 0.0, %v4062
        %4064 = vmatprep.mubr.bf16.mxu0 0
        %4065 = vmatmul.mubr.bf16.gmra.mrb[0].mxu0 %v3839
        %v4066 = vpop.f32.mrb[0].mxu0
        %v4067 = vadd.f32 0.0, %v4066
        %v4068 = vpop.f32.mrb[0].mxu0
        %v4069 = vadd.f32 0.0, %v4068
        %v4070 = vpop.f32.mrb[0].mxu0
        %v4071 = vpop.f32.mrb[0].mxu0
        %v4072 = vadd.f32 0.0, %v4071
        %4073 = vmatprep.mubr.bf16.mxu0 0
        %4074 = vmatmul.mubr.bf16.gmra.mrb[0].mxu0 %v3840
        %v4075 = vpop.f32.mrb[0].mxu0
        %v4076 = vadd.f32 0.0, %v4075
        %v4077 = vpop.f32.mrb[0].mxu0
        %v4078 = vadd.f32 0.0, %v4077
        %v4079 = vpop.f32.mrb[0].mxu0
        %v4080 = vpop.f32.mrb[0].mxu0
        %v4081 = vadd.f32 0.0, %v4080
        %4082 = vmatprep.mubr.bf16.mxu0 0
        %4083 = vmatmul.mubr.bf16.gmra.mrb[0].mxu0 %v3841
        %v4084 = vpop.f32.mrb[0].mxu0
        %v4085 = vadd.f32 0.0, %v4084
        %v4086 = vpop.f32.mrb[0].mxu0
        %v4087 = vadd.f32 0.0, %v4086
        %v4088 = vpop.f32.mrb[0].mxu0
        %v4089 = vpop.f32.mrb[0].mxu0
        %v4090 = vadd.f32 0.0, %v4089
        %4091 = vmatprep.mubr.bf16.mxu0 0
        %4092 = vmatmul.mubr.bf16.gmra.mrb[0].mxu0 %v3842
        %v4093 = vpop.f32.mrb[0].mxu0
        %v4094 = vadd.f32 0.0, %v4093
        %v4095 = vpop.f32.mrb[0].mxu0
        %v4096 = vadd.f32 0.0, %v4095
        %v4097 = vpop.f32.mrb[0].mxu0
        %v4098 = vpop.f32.mrb[0].mxu0
        %v4099 = vadd.f32 0.0, %v4098
        %4100 = vmatprep.mubr.bf16.mxu0 0
        %4101 = vmatmul.mubr.bf16.gmra.mrb[0].mxu0 %v3843
        %v4102 = vpop.f32.mrb[0].mxu0
        %v4103 = vadd.f32 0.0, %v4102
        %v4104 = vpop.f32.mrb[0].mxu0
        %v4105 = vadd.f32 0.0, %v4104
        %v4106 = vpop.f32.mrb[0].mxu0
        %v4107 = vpop.f32.mrb[0].mxu0
        %v4108 = vadd.f32 0.0, %v4107
        %4109 = vmatprep.mubr.bf16.mxu0 0
        %4110 = vmatmul.mubr.bf16.gmra.mrb[0].mxu0 %v3844
        %v4111 = vpop.f32.mrb[0].mxu0
        %v4112 = vadd.f32 0.0, %v4111
        %v4113 = vpop.f32.mrb[0].mxu0
        %v4114 = vadd.f32 0.0, %v4113
        %v4115 = vpop.f32.mrb[0].mxu0
        %v4116 = vpop.f32.mrb[0].mxu0
        %v4117 = vadd.f32 0.0, %v4116
        %4118 = vmatprep.mubr.bf16.mxu0 0
        %4119 = vmatmul.mubr.bf16.gmra.mrb[0].mxu0 %v3845
        %v4120 = vpop.f32.mrb[0].mxu0
        %v4121 = vadd.f32 0.0, %v4120
        %v4122 = vpop.f32.mrb[0].mxu0
        %v4123 = vadd.f32 0.0, %v4122
        %v4124 = vpop.f32.mrb[0].mxu0
        %v4125 = vpop.f32.mrb[0].mxu0
        %v4126 = vadd.f32 0.0, %v4125
        %4127 = vmatprep.mubr.bf16.mxu0 0
        %4128 = vmatmul.mubr.bf16.gmra.mrb[0].mxu0 %v3846
        %v4129 = vpop.f32.mrb[0].mxu0
        %v4130 = vadd.f32 0.0, %v4129
        %v4131 = vpop.f32.mrb[0].mxu0
        %v4132 = vadd.f32 0.0, %v4131
        %v4133 = vpop.f32.mrb[0].mxu0
        %v4134 = vpop.f32.mrb[0].mxu0
        %v4135 = vadd.f32 0.0, %v4134
        %4136 = vmatprep.mubr.bf16.mxu0 0
        %4137 = vmatmul.mubr.bf16.gmra.mrb[0].mxu0 %v3847
        %v4138 = vpop.f32.mrb[0].mxu0
        %v4139 = vadd.f32 0.0, %v4138
        %v4140 = vpop.f32.mrb[0].mxu0
        %v4141 = vadd.f32 0.0, %v4140
        %v4142 = vpop.f32.mrb[0].mxu0
        %v4143 = vpop.f32.mrb[0].mxu0
        %v4144 = vadd.f32 0.0, %v4143
        %4145 = vmatprep.mubr.bf16.mxu0 0
        %4146 = vmatmul.mubr.bf16.gmra.mrb[0].mxu0 %v3848
        %v4147 = vpop.f32.mrb[0].mxu0
        %v4148 = vadd.f32 0.0, %v4147
        %v4149 = vpop.f32.mrb[0].mxu0
        %v4150 = vadd.f32 0.0, %v4149
        %v4151 = vpop.f32.mrb[0].mxu0
        %v4152 = vpop.f32.mrb[0].mxu0
        %v4153 = vadd.f32 0.0, %v4152
        %4154 = vmatprep.mubr.bf16.mxu0 0
        %4155 = vmatmul.mubr.bf16.gmra.mrb[0].mxu0 %v3849
        %v4156 = vpop.f32.mrb[0].mxu0
        %v4157 = vadd.f32 0.0, %v4156
        %v4158 = vpop.f32.mrb[0].mxu0
        %v4159 = vadd.f32 0.0, %v4158
        %v4160 = vpop.f32.mrb[0].mxu0
        %v4161 = vpop.f32.mrb[0].mxu0
        %v4162 = vadd.f32 0.0, %v4161
        %4163 = vmatprep.mubr.bf16.mxu0 0
        %4164 = vmatmul.mubr.bf16.gmra.mrb[0].mxu0 %v3850
        %v4165 = vpop.f32.mrb[0].mxu0
        %v4166 = vadd.f32 0.0, %v4165
        %v4167 = vpop.f32.mrb[0].mxu0
        %v4168 = vadd.f32 0.0, %v4167
        %v4169 = vpop.f32.mrb[0].mxu0
        %v4170 = vpop.f32.mrb[0].mxu0
        %v4171 = vadd.f32 0.0, %v4170
        %4172 = vmatprep.mubr.bf16.mxu0 0
        %4173 = vmatmul.mubr.bf16.gmra.mrb[0].mxu0 %v3851
        %v4174 = vpop.f32.mrb[0].mxu0
        %v4175 = vadd.f32 0.0, %v4174
        %v4176 = vpop.f32.mrb[0].mxu0
        %v4177 = vadd.f32 0.0, %v4176
        %v4178 = vpop.f32.mrb[0].mxu0
        %v4179 = vpop.f32.mrb[0].mxu0
        %v4180 = vadd.f32 0.0, %v4179
        %4181 = vmatprep.mubr.bf16.mxu0 0
        %4182 = vmatmul.mubr.bf16.gmra.mrb[0].mxu0 %v3852
        %v4183 = vpop.f32.mrb[0].mxu0
        %v4184 = vadd.f32 0.0, %v4183
        %v4185 = vpop.f32.mrb[0].mxu0
        %v4186 = vadd.f32 0.0, %v4185
        %v4187 = vpop.f32.mrb[0].mxu0
        %v4188 = vpop.f32.mrb[0].mxu0
        %v4189 = vadd.f32 0.0, %v4188
        %4190 = vdwg.mxu0
        %4191 = vmatprep.subr.bf16.mxu0 0
        %4192 = vmatpush1.bf16.msra.mxu0 %v3968
        %4193 = vmatprep.subr.bf16.mxu0 0
        %4194 = vmatpush1.bf16.msra.mxu0 %v3971
        %4195 = vmatprep.subr.bf16.mxu0 0
        %4196 = vmatpush1.bf16.msra.mxu0 %v3974
        %4197 = vmatprep.subr.bf16.mxu0 0
        %4198 = vmatpush1.bf16.msra.mxu0 %v3977
        %4199 = vmatprep.subr.bf16.mxu0 0
        %4200 = vmatpush1.bf16.msra.mxu0 %v3980
        %4201 = vmatprep.subr.bf16.mxu0 0
        %4202 = vmatpush1.bf16.msra.mxu0 %v3983
        %4203 = vmatprep.subr.bf16.mxu0 0
        %4204 = vmatpush1.bf16.msra.mxu0 %v3986
        %4205 = vmatprep.subr.bf16.mxu0 0
        %4206 = vmatpush1.bf16.msra.mxu0 %v3989
        %4207 = vmatprep.subr.bf16.mxu0 0
        %4208 = vmatpush1.bf16.msra.mxu0 0
        %4209 = vmatprep.subr.bf16.mxu0 0
        %4210 = vmatpush1.bf16.msra.mxu0 0
        %4211 = vmatprep.subr.bf16.mxu0 0
        %4212 = vmatpush1.bf16.msra.mxu0 0
        %4213 = vmatprep.subr.bf16.mxu0 0
        %4214 = vmatpush1.bf16.msra.mxu0 0
        %4215 = vmatprep.subr.bf16.mxu0 0
        %4216 = vmatpush1.bf16.msra.mxu0 0
        %4217 = vmatprep.subr.bf16.mxu0 0
        %4218 = vmatpush1.bf16.msra.mxu0 0
        %4219 = vmatprep.subr.bf16.mxu0 0
        %4220 = vmatpush1.bf16.msra.mxu0 0
        %4221 = vmatprep.subr.bf16.mxu0 0
        %4222 = vmatpush1.bf16.msra.mxu0 0
        %4223 = vmatprep.mubr.bf16.mxu0 0
        %4224 = vmatmul.mubr.bf16.gmra.mrb[0].mxu0 %v3837
        %v4225 = vpop.f32.mrb[0].mxu0
        %v4226 = vadd.f32 0.0, %v4225
        %v4227 = vpop.f32.mrb[0].mxu0
        %v4228 = vpop.f32.mrb[0].mxu0
        %v4229 = vadd.f32 0.0, %v4228
        %v4230 = vpop.f32.mrb[0].mxu0
        %4231 = vmatprep.mubr.bf16.mxu0 0
        %4232 = vmatmul.mubr.bf16.gmra.mrb[0].mxu0 %v3838
        %v4233 = vpop.f32.mrb[0].mxu0
        %v4234 = vadd.f32 0.0, %v4233
        %v4235 = vpop.f32.mrb[0].mxu0
        %v4236 = vpop.f32.mrb[0].mxu0
        %v4237 = vadd.f32 0.0, %v4236
        %v4238 = vpop.f32.mrb[0].mxu0
        %4239 = vmatprep.mubr.bf16.mxu0 0
        %4240 = vmatmul.mubr.bf16.gmra.mrb[0].mxu0 %v3839
        %v4241 = vpop.f32.mrb[0].mxu0
        %v4242 = vadd.f32 0.0, %v4241
        %v4243 = vpop.f32.mrb[0].mxu0
        %v4244 = vpop.f32.mrb[0].mxu0
        %v4245 = vadd.f32 0.0, %v4244
        %v4246 = vpop.f32.mrb[0].mxu0
        %4247 = vmatprep.mubr.bf16.mxu0 0
        %4248 = vmatmul.mubr.bf16.gmra.mrb[0].mxu0 %v3840
        %v4249 = vpop.f32.mrb[0].mxu0
        %v4250 = vadd.f32 0.0, %v4249
        %v4251 = vpop.f32.mrb[0].mxu0
        %v4252 = vpop.f32.mrb[0].mxu0
        %v4253 = vadd.f32 0.0, %v4252
        %v4254 = vpop.f32.mrb[0].mxu0
        %4255 = vmatprep.mubr.bf16.mxu0 0
        %4256 = vmatmul.mubr.bf16.gmra.mrb[0].mxu0 %v3841
        %v4257 = vpop.f32.mrb[0].mxu0
        %v4258 = vadd.f32 0.0, %v4257
        %v4259 = vpop.f32.mrb[0].mxu0
        %v4260 = vpop.f32.mrb[0].mxu0
        %v4261 = vadd.f32 0.0, %v4260
        %v4262 = vpop.f32.mrb[0].mxu0
        %4263 = vmatprep.mubr.bf16.mxu0 0
        %4264 = vmatmul.mubr.bf16.gmra.mrb[0].mxu0 %v3842
        %v4265 = vpop.f32.mrb[0].mxu0
        %v4266 = vadd.f32 0.0, %v4265
        %v4267 = vpop.f32.mrb[0].mxu0
        %v4268 = vpop.f32.mrb[0].mxu0
        %v4269 = vadd.f32 0.0, %v4268
        %v4270 = vpop.f32.mrb[0].mxu0
        %4271 = vmatprep.mubr.bf16.mxu0 0
        %4272 = vmatmul.mubr.bf16.gmra.mrb[0].mxu0 %v3843
        %v4273 = vpop.f32.mrb[0].mxu0
        %v4274 = vadd.f32 0.0, %v4273
        %v4275 = vpop.f32.mrb[0].mxu0
        %v4276 = vpop.f32.mrb[0].mxu0
        %v4277 = vadd.f32 0.0, %v4276
        %v4278 = vpop.f32.mrb[0].mxu0
        %4279 = vmatprep.mubr.bf16.mxu0 0
        %4280 = vmatmul.mubr.bf16.gmra.mrb[0].mxu0 %v3844
        %v4281 = vpop.f32.mrb[0].mxu0
        %v4282 = vadd.f32 0.0, %v4281
        %v4283 = vpop.f32.mrb[0].mxu0
        %v4284 = vpop.f32.mrb[0].mxu0
        %v4285 = vadd.f32 0.0, %v4284
        %v4286 = vpop.f32.mrb[0].mxu0
        %4287 = vmatprep.mubr.bf16.mxu0 0
        %4288 = vmatmul.mubr.bf16.gmra.mrb[0].mxu0 %v3845
        %v4289 = vpop.f32.mrb[0].mxu0
        %v4290 = vadd.f32 0.0, %v4289
        %v4291 = vpop.f32.mrb[0].mxu0
        %v4292 = vpop.f32.mrb[0].mxu0
        %v4293 = vadd.f32 0.0, %v4292
        %v4294 = vpop.f32.mrb[0].mxu0
        %4295 = vmatprep.mubr.bf16.mxu0 0
        %4296 = vmatmul.mubr.bf16.gmra.mrb[0].mxu0 %v3846
        %v4297 = vpop.f32.mrb[0].mxu0
        %v4298 = vadd.f32 0.0, %v4297
        %v4299 = vpop.f32.mrb[0].mxu0
        %v4300 = vpop.f32.mrb[0].mxu0
        %v4301 = vadd.f32 0.0, %v4300
        %v4302 = vpop.f32.mrb[0].mxu0
        %4303 = vmatprep.mubr.bf16.mxu0 0
        %4304 = vmatmul.mubr.bf16.gmra.mrb[0].mxu0 %v3847
        %v4305 = vpop.f32.mrb[0].mxu0
        %v4306 = vadd.f32 0.0, %v4305
        %v4307 = vpop.f32.mrb[0].mxu0
        %v4308 = vpop.f32.mrb[0].mxu0
        %v4309 = vadd.f32 0.0, %v4308
        %v4310 = vpop.f32.mrb[0].mxu0
        %4311 = vmatprep.mubr.bf16.mxu0 0
        %4312 = vmatmul.mubr.bf16.gmra.mrb[0].mxu0 %v3848
        %v4313 = vpop.f32.mrb[0].mxu0
        %v4314 = vadd.f32 0.0, %v4313
        %v4315 = vpop.f32.mrb[0].mxu0
        %v4316 = vpop.f32.mrb[0].mxu0
        %v4317 = vadd.f32 0.0, %v4316
        %v4318 = vpop.f32.mrb[0].mxu0
        %4319 = vmatprep.mubr.bf16.mxu0 0
        %4320 = vmatmul.mubr.bf16.gmra.mrb[0].mxu0 %v3849
        %v4321 = vpop.f32.mrb[0].mxu0
        %v4322 = vadd.f32 0.0, %v4321
        %v4323 = vpop.f32.mrb[0].mxu0
        %v4324 = vpop.f32.mrb[0].mxu0
        %v4325 = vadd.f32 0.0, %v4324
        %v4326 = vpop.f32.mrb[0].mxu0
        %4327 = vmatprep.mubr.bf16.mxu0 0
        %4328 = vmatmul.mubr.bf16.gmra.mrb[0].mxu0 %v3850
        %v4329 = vpop.f32.mrb[0].mxu0
        %v4330 = vadd.f32 0.0, %v4329
        %v4331 = vpop.f32.mrb[0].mxu0
        %v4332 = vpop.f32.mrb[0].mxu0
        %v4333 = vadd.f32 0.0, %v4332
        %v4334 = vpop.f32.mrb[0].mxu0
        %4335 = vmatprep.mubr.bf16.mxu0 0
        %4336 = vmatmul.mubr.bf16.gmra.mrb[0].mxu0 %v3851
        %v4337 = vpop.f32.mrb[0].mxu0
        %v4338 = vadd.f32 0.0, %v4337
        %v4339 = vpop.f32.mrb[0].mxu0
        %v4340 = vpop.f32.mrb[0].mxu0
        %v4341 = vadd.f32 0.0, %v4340
        %v4342 = vpop.f32.mrb[0].mxu0
        %4343 = vmatprep.mubr.bf16.mxu0 0
        %4344 = vmatmul.mubr.bf16.gmra.mrb[0].mxu0 %v3852
        %v4345 = vpop.f32.mrb[0].mxu0
        %v4346 = vadd.f32 0.0, %v4345
        %v4347 = vpop.f32.mrb[0].mxu0
        %v4348 = vpop.f32.mrb[0].mxu0
        %v4349 = vadd.f32 0.0, %v4348
        %v4350 = vpop.f32.mrb[0].mxu0
        %4351 = vdwg.mxu0
        %v4352 = vadd.f32 %v3533, %v4049
        %v4353 = vadd.f32 %v3535, %v4051
        %v4354 = vadd.f32 %v3710, %v4226
        %v4355 = vadd.f32 %v3538, %v4054
        %v4356 = vadd.f32 %v3713, %v4229
        %v4357 = vadd.f32 %v3542, %v4058
        %v4358 = vadd.f32 %v3544, %v4060
        %v4359 = vadd.f32 %v3718, %v4234
        %v4360 = vadd.f32 %v3547, %v4063
        %v4361 = vadd.f32 %v3721, %v4237
        %v4362 = vadd.f32 %v3551, %v4067
        %v4363 = vadd.f32 %v3553, %v4069
        %v4364 = vadd.f32 %v3726, %v4242
        %v4365 = vadd.f32 %v3556, %v4072
        %v4366 = vadd.f32 %v3729, %v4245
        %v4367 = vadd.f32 %v3560, %v4076
        %v4368 = vadd.f32 %v3562, %v4078
        %v4369 = vadd.f32 %v3734, %v4250
        %v4370 = vadd.f32 %v3565, %v4081
        %v4371 = vadd.f32 %v3737, %v4253
        %v4372 = vadd.f32 %v3569, %v4085
        %v4373 = vadd.f32 %v3571, %v4087
        %v4374 = vadd.f32 %v3742, %v4258
        %v4375 = vadd.f32 %v3574, %v4090
        %v4376 = vadd.f32 %v3745, %v4261
        %v4377 = vadd.f32 %v3578, %v4094
        %v4378 = vadd.f32 %v3580, %v4096
        %v4379 = vadd.f32 %v3750, %v4266
        %v4380 = vadd.f32 %v3583, %v4099
        %v4381 = vadd.f32 %v3753, %v4269
        %v4382 = vadd.f32 %v3587, %v4103
        %v4383 = vadd.f32 %v3589, %v4105
        %v4384 = vadd.f32 %v3758, %v4274
        %v4385 = vadd.f32 %v3592, %v4108
        %v4386 = vadd.f32 %v3761, %v4277
        %v4387 = vadd.f32 %v3596, %v4112
        %v4388 = vadd.f32 %v3598, %v4114
        %v4389 = vadd.f32 %v3766, %v4282
        %v4390 = vadd.f32 %v3601, %v4117
        %v4391 = vadd.f32 %v3769, %v4285
        %v4392 = vadd.f32 %v3605, %v4121
        %v4393 = vadd.f32 %v3607, %v4123
        %v4394 = vadd.f32 %v3774, %v4290
        %v4395 = vadd.f32 %v3610, %v4126
        %v4396 = vadd.f32 %v3777, %v4293
        %v4397 = vadd.f32 %v3614, %v4130
        %v4398 = vadd.f32 %v3616, %v4132
        %v4399 = vadd.f32 %v3782, %v4298
        %v4400 = vadd.f32 %v3619, %v4135
        %v4401 = vadd.f32 %v3785, %v4301
        %v4402 = vadd.f32 %v3623, %v4139
        %v4403 = vadd.f32 %v3625, %v4141
        %v4404 = vadd.f32 %v3790, %v4306
        %v4405 = vadd.f32 %v3628, %v4144
        %v4406 = vadd.f32 %v3793, %v4309
        %v4407 = vadd.f32 %v3632, %v4148
        %v4408 = vadd.f32 %v3634, %v4150
        %v4409 = vadd.f32 %v3798, %v4314
        %v4410 = vadd.f32 %v3637, %v4153
        %v4411 = vadd.f32 %v3801, %v4317
        %v4412 = vadd.f32 %v3641, %v4157
        %v4413 = vadd.f32 %v3643, %v4159
        %v4414 = vadd.f32 %v3806, %v4322
        %v4415 = vadd.f32 %v3646, %v4162
        %v4416 = vadd.f32 %v3809, %v4325
        %v4417 = vadd.f32 %v3650, %v4166
        %v4418 = vadd.f32 %v3652, %v4168
        %v4419 = vadd.f32 %v3814, %v4330
        %v4420 = vadd.f32 %v3655, %v4171
        %v4421 = vadd.f32 %v3817, %v4333
        %v4422 = vadd.f32 %v3659, %v4175
        %v4423 = vadd.f32 %v3661, %v4177
        %v4424 = vadd.f32 %v3822, %v4338
        %v4425 = vadd.f32 %v3664, %v4180
        %v4426 = vadd.f32 %v3825, %v4341
        %v4427 = vadd.f32 %v3668, %v4184
        %v4428 = vadd.f32 %v3670, %v4186
        %v4429 = vadd.f32 %v3830, %v4346
        %v4430 = vadd.f32 %v3673, %v4189
        %v4431 = vadd.f32 %v3833, %v4349
        %v4464 = vrot.slane %v4353, 1
        %v4465 = vrot.slane %v4355, 1
        %v4466 = vsel %vm2272, %v4464, %v4465
        %v4467 = vrot.slane %v4358, 1
        %v4468 = vrot.slane %v4360, 1
        %v4469 = vsel %vm2272, %v4467, %v4468
        %v4470 = vrot.slane %v4363, 1
        %v4471 = vrot.slane %v4365, 1
        %v4472 = vsel %vm2272, %v4470, %v4471
        %v4473 = vrot.slane %v4368, 1
        %v4474 = vrot.slane %v4370, 1
        %v4475 = vsel %vm2272, %v4473, %v4474
        %v4476 = vrot.slane %v4373, 1
        %v4477 = vrot.slane %v4375, 1
        %v4478 = vsel %vm2272, %v4476, %v4477
        %v4479 = vrot.slane %v4378, 1
        %v4480 = vrot.slane %v4380, 1
        %v4481 = vsel %vm2272, %v4479, %v4480
        %v4482 = vrot.slane %v4383, 1
        %v4483 = vrot.slane %v4385, 1
        %v4484 = vsel %vm2272, %v4482, %v4483
        %v4485 = vrot.slane %v4388, 1
        %v4486 = vrot.slane %v4390, 1
        %v4487 = vsel %vm2272, %v4485, %v4486
        %v4488 = vrot.slane %v4393, 1
        %v4489 = vrot.slane %v4395, 1
        %v4490 = vsel %vm2272, %v4488, %v4489
        %v4491 = vrot.slane %v4398, 1
        %v4492 = vrot.slane %v4400, 1
        %v4493 = vsel %vm2272, %v4491, %v4492
        %v4494 = vrot.slane %v4403, 1
        %v4495 = vrot.slane %v4405, 1
        %v4496 = vsel %vm2272, %v4494, %v4495
        %v4497 = vrot.slane %v4408, 1
        %v4498 = vrot.slane %v4410, 1
        %v4499 = vsel %vm2272, %v4497, %v4498
        %v4500 = vrot.slane %v4413, 1
        %v4501 = vrot.slane %v4415, 1
        %v4502 = vsel %vm2272, %v4500, %v4501
        %v4503 = vrot.slane %v4418, 1
        %v4504 = vrot.slane %v4420, 1
        %v4505 = vsel %vm2272, %v4503, %v4504
        %v4506 = vrot.slane %v4423, 1
        %v4507 = vrot.slane %v4425, 1
        %v4508 = vsel %vm2272, %v4506, %v4507
        %v4509 = vrot.slane %v4428, 1
        %v4510 = vrot.slane %v4430, 1
        %v4511 = vsel %vm2272, %v4509, %v4510
        %v4528 = vadd.f32 %v4352, %v4466
        %v4529 = vadd.f32 %v4357, %v4469
        %v4530 = vadd.f32 %v4362, %v4472
        %v4531 = vadd.f32 %v4367, %v4475
        %v4532 = vadd.f32 %v4372, %v4478
        %v4533 = vadd.f32 %v4377, %v4481
        %v4534 = vadd.f32 %v4382, %v4484
        %v4535 = vadd.f32 %v4387, %v4487
        %v4536 = vadd.f32 %v4392, %v4490
        %v4537 = vadd.f32 %v4397, %v4493
        %v4538 = vadd.f32 %v4402, %v4496
        %v4539 = vadd.f32 %v4407, %v4499
        %v4540 = vadd.f32 %v4412, %v4502
        %v4541 = vadd.f32 %v4417, %v4505
        %v4542 = vadd.f32 %v4422, %v4508
        %v4543 = vadd.f32 %v4427, %v4511
        %v4576 = vrot.slane %v4354, 2
        %v4577 = vrot.slane %v4356, 2
        %v4578 = vsel %vm2385, %v4576, %v4577
        %v4579 = vrot.slane %v4359, 2
        %v4580 = vrot.slane %v4361, 2
        %v4581 = vsel %vm2385, %v4579, %v4580
        %v4582 = vrot.slane %v4364, 2
        %v4583 = vrot.slane %v4366, 2
        %v4584 = vsel %vm2385, %v4582, %v4583
        %v4585 = vrot.slane %v4369, 2
        %v4586 = vrot.slane %v4371, 2
        %v4587 = vsel %vm2385, %v4585, %v4586
        %v4588 = vrot.slane %v4374, 2
        %v4589 = vrot.slane %v4376, 2
        %v4590 = vsel %vm2385, %v4588, %v4589
        %v4591 = vrot.slane %v4379, 2
        %v4592 = vrot.slane %v4381, 2
        %v4593 = vsel %vm2385, %v4591, %v4592
        %v4594 = vrot.slane %v4384, 2
        %v4595 = vrot.slane %v4386, 2
        %v4596 = vsel %vm2385, %v4594, %v4595
        %v4597 = vrot.slane %v4389, 2
        %v4598 = vrot.slane %v4391, 2
        %v4599 = vsel %vm2385, %v4597, %v4598
        %v4600 = vrot.slane %v4394, 2
        %v4601 = vrot.slane %v4396, 2
        %v4602 = vsel %vm2385, %v4600, %v4601
        %v4603 = vrot.slane %v4399, 2
        %v4604 = vrot.slane %v4401, 2
        %v4605 = vsel %vm2385, %v4603, %v4604
        %v4606 = vrot.slane %v4404, 2
        %v4607 = vrot.slane %v4406, 2
        %v4608 = vsel %vm2385, %v4606, %v4607
        %v4609 = vrot.slane %v4409, 2
        %v4610 = vrot.slane %v4411, 2
        %v4611 = vsel %vm2385, %v4609, %v4610
        %v4612 = vrot.slane %v4414, 2
        %v4613 = vrot.slane %v4416, 2
        %v4614 = vsel %vm2385, %v4612, %v4613
        %v4615 = vrot.slane %v4419, 2
        %v4616 = vrot.slane %v4421, 2
        %v4617 = vsel %vm2385, %v4615, %v4616
        %v4618 = vrot.slane %v4424, 2
        %v4619 = vrot.slane %v4426, 2
        %v4620 = vsel %vm2385, %v4618, %v4619
        %v4621 = vrot.slane %v4429, 2
        %v4622 = vrot.slane %v4431, 2
        %v4623 = vsel %vm2385, %v4621, %v4622
        %v4640 = vadd.f32 %v4528, %v4578
        %v4641 = vadd.f32 %v4529, %v4581
        %v4642 = vadd.f32 %v4530, %v4584
        %v4643 = vadd.f32 %v4531, %v4587
        %v4644 = vadd.f32 %v4532, %v4590
        %v4645 = vadd.f32 %v4533, %v4593
        %v4646 = vadd.f32 %v4534, %v4596
        %v4647 = vadd.f32 %v4535, %v4599
        %v4648 = vadd.f32 %v4536, %v4602
        %v4649 = vadd.f32 %v4537, %v4605
        %v4650 = vadd.f32 %v4538, %v4608
        %v4651 = vadd.f32 %v4539, %v4611
        %v4652 = vadd.f32 %v4540, %v4614
        %v4653 = vadd.f32 %v4541, %v4617
        %v4654 = vadd.f32 %v4542, %v4620
        %v4655 = vadd.f32 %v4543, %v4623
        %v4657 = vlaneseq
        %v4658 = vshrl.u32 %v4657, 7
        %v4659 = vsub.s32 0, %v4658
        %v4660 = vrot.slane %v277, %v4659
        %v4662 = vadd.f32 %v4640, %v4660
        %v4663 = vadd.f32 %v4641, %v4660
        %v4664 = vadd.f32 %v4642, %v4660
        %v4665 = vadd.f32 %v4643, %v4660
        %v4666 = vadd.f32 %v4644, %v4660
        %v4667 = vadd.f32 %v4645, %v4660
        %v4668 = vadd.f32 %v4646, %v4660
        %v4669 = vadd.f32 %v4647, %v4660
        %v4670 = vadd.f32 %v4648, %v4660
        %v4671 = vadd.f32 %v4649, %v4660
        %v4672 = vadd.f32 %v4650, %v4660
        %v4673 = vadd.f32 %v4651, %v4660
        %v4674 = vadd.f32 %v4652, %v4660
        %v4675 = vadd.f32 %v4653, %v4660
        %v4676 = vadd.f32 %v4654, %v4660
        %v4677 = vadd.f32 %v4655, %v4660
        %v4678 = vld [vmem:[%s342] sm:$0xf]
        %v4679 = vld [vmem:[%s342 + $0x4] sm:$0x1]
        %v4680 = vld [vmem:[%s342 + $0x8] sm:$0xf]
        %v4681 = vld [vmem:[%s342 + $0xc] sm:$0x1]
        %v4682 = vld [vmem:[%s342 + $0x10] sm:$0xf]
        %v4683 = vld [vmem:[%s342 + $0x14] sm:$0x1]
        %v4684 = vld [vmem:[%s342 + $0x18] sm:$0xf]
        %v4685 = vld [vmem:[%s342 + $0x1c] sm:$0x1]
        %v4686 = vld [vmem:[%s342 + $0x20] sm:$0xf]
        %v4687 = vld [vmem:[%s342 + $0x24] sm:$0x1]
        %v4688 = vld [vmem:[%s342 + $0x28] sm:$0xf]
        %v4689 = vld [vmem:[%s342 + $0x2c] sm:$0x1]
        %v4690 = vld [vmem:[%s342 + $0x30] sm:$0xf]
        %v4691 = vld [vmem:[%s342 + $0x34] sm:$0x1]
        %v4692 = vld [vmem:[%s342 + $0x38] sm:$0xf]
        %v4693 = vld [vmem:[%s342 + $0x3c] sm:$0x1]
        %v4694 = vld [vmem:[%s342 + $0x50] sm:$0xf]
        %v4695 = vld [vmem:[%s342 + $0x54] sm:$0x1]
        %v4696 = vld [vmem:[%s342 + $0x58] sm:$0xf]
        %v4697 = vld [vmem:[%s342 + $0x5c] sm:$0x1]
        %v4698 = vld [vmem:[%s342 + $0x60] sm:$0xf]
        %v4699 = vld [vmem:[%s342 + $0x64] sm:$0x1]
        %v4700 = vld [vmem:[%s342 + $0x68] sm:$0xf]
        %v4701 = vld [vmem:[%s342 + $0x6c] sm:$0x1]
        %v4702 = vld [vmem:[%s342 + $0x70] sm:$0xf]
        %v4703 = vld [vmem:[%s342 + $0x74] sm:$0x1]
        %v4704 = vld [vmem:[%s342 + $0x78] sm:$0xf]
        %v4705 = vld [vmem:[%s342 + $0x7c] sm:$0x1]
        %v4706 = vld [vmem:[%s342 + $0x80] sm:$0xf]
        %v4707 = vld [vmem:[%s342 + $0x84] sm:$0x1]
        %v4708 = vld [vmem:[%s342 + $0x88] sm:$0xf]
        %v4709 = vld [vmem:[%s342 + $0x8c] sm:$0x1]
        %v4710 = vunpack.c.l.bf16 %v4678
        %v4711 = vunpack.c.l.bf16 %v4679
        %v4712 = vunpack.c.l.bf16 %v4680
        %v4713 = vunpack.c.l.bf16 %v4681
        %v4714 = vunpack.c.l.bf16 %v4682
        %v4715 = vunpack.c.l.bf16 %v4683
        %v4716 = vunpack.c.l.bf16 %v4684
        %v4717 = vunpack.c.l.bf16 %v4685
        %v4718 = vunpack.c.l.bf16 %v4686
        %v4719 = vunpack.c.l.bf16 %v4687
        %v4720 = vunpack.c.l.bf16 %v4688
        %v4721 = vunpack.c.l.bf16 %v4689
        %v4722 = vunpack.c.l.bf16 %v4690
        %v4723 = vunpack.c.l.bf16 %v4691
        %v4724 = vunpack.c.l.bf16 %v4692
        %v4725 = vunpack.c.l.bf16 %v4693
        %v4726 = vunpack.c.l.bf16 %v4694
        %v4727 = vunpack.c.l.bf16 %v4695
        %v4728 = vunpack.c.l.bf16 %v4696
        %v4729 = vunpack.c.l.bf16 %v4697
        %v4730 = vunpack.c.l.bf16 %v4698
        %v4731 = vunpack.c.l.bf16 %v4699
        %v4732 = vunpack.c.l.bf16 %v4700
        %v4733 = vunpack.c.l.bf16 %v4701
        %v4734 = vunpack.c.l.bf16 %v4702
        %v4735 = vunpack.c.l.bf16 %v4703
        %v4736 = vunpack.c.l.bf16 %v4704
        %v4737 = vunpack.c.l.bf16 %v4705
        %v4738 = vunpack.c.l.bf16 %v4706
        %v4739 = vunpack.c.l.bf16 %v4707
        %v4740 = vunpack.c.l.bf16 %v4708
        %v4741 = vunpack.c.l.bf16 %v4709
        %v4774 = vrot.slane %v4710, 1
        %v4775 = vrot.slane %v4711, 1
        %v4776 = vsel %vm2272, %v4774, %v4775
        %v4777 = vrot.slane %v4712, 1
        %v4778 = vrot.slane %v4713, 1
        %v4779 = vsel %vm2272, %v4777, %v4778
        %v4780 = vrot.slane %v4714, 1
        %v4781 = vrot.slane %v4715, 1
        %v4782 = vsel %vm2272, %v4780, %v4781
        %v4783 = vrot.slane %v4716, 1
        %v4784 = vrot.slane %v4717, 1
        %v4785 = vsel %vm2272, %v4783, %v4784
        %v4786 = vrot.slane %v4718, 1
        %v4787 = vrot.slane %v4719, 1
        %v4788 = vsel %vm2272, %v4786, %v4787
        %v4789 = vrot.slane %v4720, 1
        %v4790 = vrot.slane %v4721, 1
        %v4791 = vsel %vm2272, %v4789, %v4790
        %v4792 = vrot.slane %v4722, 1
        %v4793 = vrot.slane %v4723, 1
        %v4794 = vsel %vm2272, %v4792, %v4793
        %v4795 = vrot.slane %v4724, 1
        %v4796 = vrot.slane %v4725, 1
        %v4797 = vsel %vm2272, %v4795, %v4796
        %v4798 = vrot.slane %v4726, 1
        %v4799 = vrot.slane %v4727, 1
        %v4800 = vsel %vm2272, %v4798, %v4799
        %v4801 = vrot.slane %v4728, 1
        %v4802 = vrot.slane %v4729, 1
        %v4803 = vsel %vm2272, %v4801, %v4802
        %v4804 = vrot.slane %v4730, 1
        %v4805 = vrot.slane %v4731, 1
        %v4806 = vsel %vm2272, %v4804, %v4805
        %v4807 = vrot.slane %v4732, 1
        %v4808 = vrot.slane %v4733, 1
        %v4809 = vsel %vm2272, %v4807, %v4808
        %v4810 = vrot.slane %v4734, 1
        %v4811 = vrot.slane %v4735, 1
        %v4812 = vsel %vm2272, %v4810, %v4811
        %v4813 = vrot.slane %v4736, 1
        %v4814 = vrot.slane %v4737, 1
        %v4815 = vsel %vm2272, %v4813, %v4814
        %v4816 = vrot.slane %v4738, 1
        %v4817 = vrot.slane %v4739, 1
        %v4818 = vsel %vm2272, %v4816, %v4817
        %v4819 = vrot.slane %v4740, 1
        %v4820 = vrot.slane %v4741, 1
        %v4821 = vsel %vm2272, %v4819, %v4820
        %v4838 = vadd.f32 %v4662, %v4776
        %v4839 = vadd.f32 %v4663, %v4779
        %v4840 = vadd.f32 %v4664, %v4782
        %v4841 = vadd.f32 %v4665, %v4785
        %v4842 = vadd.f32 %v4666, %v4788
        %v4843 = vadd.f32 %v4667, %v4791
        %v4844 = vadd.f32 %v4668, %v4794
        %v4845 = vadd.f32 %v4669, %v4797
        %v4846 = vadd.f32 %v4670, %v4800
        %v4847 = vadd.f32 %v4671, %v4803
        %v4848 = vadd.f32 %v4672, %v4806
        %v4849 = vadd.f32 %v4673, %v4809
        %v4850 = vadd.f32 %v4674, %v4812
        %v4851 = vadd.f32 %v4675, %v4815
        %v4852 = vadd.f32 %v4676, %v4818
        %v4853 = vadd.f32 %v4677, %v4821
        %v4854 = vmax.f32 %v4838, 0.0
        %v4855 = vmax.f32 %v4839, 0.0
        %v4856 = vmax.f32 %v4840, 0.0
        %v4857 = vmax.f32 %v4841, 0.0
        %v4858 = vmax.f32 %v4842, 0.0
        %v4859 = vmax.f32 %v4843, 0.0
        %v4860 = vmax.f32 %v4844, 0.0
        %v4861 = vmax.f32 %v4845, 0.0
        %v4862 = vmax.f32 %v4846, 0.0
        %v4863 = vmax.f32 %v4847, 0.0
        %v4864 = vmax.f32 %v4848, 0.0
        %v4865 = vmax.f32 %v4849, 0.0
        %v4866 = vmax.f32 %v4850, 0.0
        %v4867 = vmax.f32 %v4851, 0.0
        %v4868 = vmax.f32 %v4852, 0.0
        %v4869 = vmax.f32 %v4853, 0.0
        %4870 = vst [vmem:[%s272] sm:$0xff] %v4854
        %4871 = vst [vmem:[%s272 + $0x8] sm:$0xff] %v4855
        %4872 = vst [vmem:[%s272 + $0x10] sm:$0xff] %v4856
        %4873 = vst [vmem:[%s272 + $0x18] sm:$0xff] %v4857
        %4874 = vst [vmem:[%s272 + $0x20] sm:$0xff] %v4858
        %4875 = vst [vmem:[%s272 + $0x28] sm:$0xff] %v4859
        %4876 = vst [vmem:[%s272 + $0x30] sm:$0xff] %v4860
        %4877 = vst [vmem:[%s272 + $0x38] sm:$0xff] %v4861
        %4878 = vst [vmem:[%s272 + $0x40] sm:$0xff] %v4862
        %4879 = vst [vmem:[%s272 + $0x48] sm:$0xff] %v4863
        %4880 = vst [vmem:[%s272 + $0x50] sm:$0xff] %v4864
        %4881 = vst [vmem:[%s272 + $0x58] sm:$0xff] %v4865
        %4882 = vst [vmem:[%s272 + $0x60] sm:$0xff] %v4866
        %4883 = vst [vmem:[%s272 + $0x68] sm:$0xff] %v4867
        %4884 = vst [vmem:[%s272 + $0x70] sm:$0xff] %v4868
        %4885 = vst [vmem:[%s272 + $0x78] sm:$0xff] %v4869
        %s4886 = sand.u32 %s141, 1
        %s4887 = scalar_lea.sflag [#allocation5], %s4886
        %s4888 = sand.u32 %s141, 1
        %s4889 = smul.addr %s4888, 128
        %s4890 = scalar_lea.vmem [#allocation9], %s4889
        // Predicated region
        $region53: #{tpu_custom_call.1} parent=39 // pred_check
          %p4891 = pneg %p151
        $region54: #{tpu_custom_call.1} parent=39 // pred_check_branch
          %4893 = sbr.rel (%p4891) target = $region56
        $region55: #{tpu_custom_call.1} parent=39 // pred_region
          %s4894 = smul.u32 2, %s23
          %s4896 = ssub.s32 2048, 2048
          %4897 = vsyncadd %s4887, %s4896
          %s4898 = smul.addr %s4894, 8
          %s4899 = smul.addr %s4898, 128
          %s4900 = scalar_lea.hbm %s5, %s4899
          %s4901 = sshll.u32 %s4890, 4
          %s4902 = int_to_ptr.vmem [resolvable:$true] %s4901
          %4907 = dma.vmem_to_hbm [thread:$0]  %s4902, 2048, %s4900, %s4887, 128, 128, 8
        $region56: #{tpu_custom_call.1} parent=39 // pred_fallthru
          _
      $region40: #{tpu_custom_call.1} parent=5 // pred_fallthru
        _
      %p4908 = scmp.le.s32.totalorder 2, %s18
      // Predicated region
      $region57: #{tpu_custom_call.1} parent=5 // pred_check
        %p4909 = pneg %p4908
      $region58: #{tpu_custom_call.1} parent=5 // pred_check_branch
        %4911 = sbr.rel (%p4909) target = $region60
      $region59: #{tpu_custom_call.1} parent=5 // pred_region
        %s4912 = ssub.s32 %s18, 2
        // Predicated region
        $region61: #{tpu_custom_call.1} parent=59 // pred_check
          %p4913 = pneg %p157
        $region62: #{tpu_custom_call.1} parent=59 // pred_check_branch
          %4915 = sbr.rel (%p4913) target = $region64
        $region63: #{tpu_custom_call.1} parent=59 // pred_region
          %s4916 = sand.u32 %s142, 1
          %s4917 = scalar_lea.sflag [#allocation5], %s4916
          %s4918 = sand.u32 %s142, 1
          %s4919 = smul.addr %s4918, 128
          %s4920 = scalar_lea.vmem [#allocation9], %s4919
          %4921 = dma.done %s4917, 2048
        $region64: #{tpu_custom_call.1} parent=59 // pred_fallthru
          _
      $region60: #{tpu_custom_call.1} parent=5 // pred_fallthru
        _
    $region6: #{tpu_custom_call.1} parent=1 // loop_footer
      %s22 = sadd.s32 1, %s18
    $region7: #{tpu_custom_call.1} parent=1 // loop_footer_branch
      %17 = sbr.rel target = $region3
    $region8: #{tpu_custom_call.1} parent=1 // loop_exit
      _
    %4922 = vsyncpa [#allocation4], 1
    %s4923 = scalar_lea.sflag [#allocation4], 1
    %4924 = vsyncpa %s4923, 1
    %4925 = vsyncpa [#allocation7], 1
    %4926 = vsyncpa [#allocation5], 1
    %s4927 = scalar_lea.sflag [#allocation5], 1
    %4928 = vsyncpa %s4927, 1

// kernel: tpu_custom_call.1
$region0: #{tpu_custom_call.1}
  #allocation0 [shape = 'u32[]', space=smem, size = 0x4, offset = 0x4, fixed_abs, tag = 'smem constant byte address 0x4 - core index']
  #allocation1 [shape = 'u32[144,128]{1,0:T(1,128)}', space=vmem, size = 0x12000, scoped, tag = 'internal scratch']
  #allocation2 [shape = 'bf16[2,10,16,128]{3,2,1,0:T(16,128)(2,1)}', space=vmem, size = 0x14000, scoped, tag = 'scratch operand']
  %s0 = inlined_call_operand.hbm [shape: bf16[4,10,16,128], index: 0, kind: input, shape index: {}]
  %s1 = inlined_call_operand.hbm [shape: bf16[3,128,384], index: 1, kind: input, shape index: {}]
  %s2 = inlined_call_operand.vmem [shape: f32[1,128], index: 2, kind: input, shape index: {}]
  %s3 = inlined_call_operand.hbm [shape: bf16[3,128,384], index: 3, kind: input, shape index: {}]
  %s4 = inlined_call_operand.vmem [shape: f32[1,128], index: 4, kind: input, shape index: {}]
  %s5 = inlined_call_operand.hbm [shape: f32[4,8,8,128], index: 5, kind: output, shape index: {}]
  %s6 = sld [smem:[#allocation0]]
  $region65: #{tpu_custom_call.1} parent=0
    _
  %s8 = ssub.s32 1, %s6
  %s9 = scalar_select 0, %s8, %s6
  $region1: #{tpu_custom_call.1} parent=0
    #allocation3 [shape = 'u8[163840]{0}', space=vmem, size = 0x28000, scoped, tag = 'input window, operand 0']
    #allocation4 [shape = 's32[2]{0}', space=sflag, size = 0x8, scoped, tag = 'scoped memory for tpu_custom_call.1']
    #allocation5 [shape = 's32[2]{0}', space=sflag, size = 0x8, scoped, tag = 'scoped memory for tpu_custom_call.1']
    #allocation6 [shape = 'u8[294912]{0}', space=vmem, size = 0x48000, scoped, tag = 'input window, operand 1, single buffered']
    #allocation7 [shape = 's32[1]{0}', space=sflag, size = 0x4, scoped, tag = 'scoped memory for tpu_custom_call.1']
    #allocation8 [shape = 'u8[294912]{0}', space=vmem, size = 0x48000, scoped, tag = 'input window, operand 3, single buffered']
    #allocation9 [shape = 'u8[131072]{0}', space=vmem, size = 0x20000, scoped, tag = 'output window, operand 0']
    %10 = vsyncpa [#allocation4], 0
    %s11 = scalar_lea.sflag [#allocation4], 1
    %12 = vsyncpa %s11, 0
    %13 = vsyncpa [#allocation7], 0
    %14 = vsyncpa [#allocation5], 0
    %s15 = scalar_lea.sflag [#allocation5], 1
    %16 = vsyncpa %s15, 0
    loop: start=0, step=1, limit=4
    $region2: #{tpu_custom_call.1} parent=1 // loop_pre_header
      _
    $region3: #{tpu_custom_call.1} parent=1 // loop_header
      %s18 = sphi 0, %s22
      %p19 = scmp.ge.s32.totalorder %s18, 4
      %s28 = sphi 0, %s30
      %s31 = sphi 0, %s28
      %s32 = sphi 0, %s31
      %s48 = sphi 0, %s32
      %s52 = sphi 0, %s52
      %s54 = sphi 0, %s52
      %s55 = sphi 0, %s54
      %s69 = sphi 0, %s55
      %s73 = sphi 0, %s73
      %s75 = sphi 0, %s73
      %s76 = sphi 0, %s75
      %s90 = sphi 0, %s76
      %s94 = sphi 0, %s94
      %s96 = sphi 0, %s94
      %s97 = sphi 0, %s96
      %s111 = sphi 0, %s97
      %s115 = sphi 0, %s115
      %s117 = sphi 0, %s115
      %s118 = sphi 0, %s117
      %s132 = sphi 0, %s118
      %s138 = sphi 0, %s140
      %s141 = sphi 0, %s138
      %s142 = sphi 0, %s141
      %s158 = sphi 0, %s142
    $region4: #{tpu_custom_call.1} parent=1 // loop_header_branch
      %21 = sbr.rel (%p19) target = $region8
    $region5: #{tpu_custom_call.1} parent=1 // loop_body
      %s23 = ssub.s32 %s18, 1
      %s24 = ssub.s32 %s18, 2
      %s25 = sadd.s32 %s18, 1
      %s26 = ssub.s32 %s18, %s25
      %p27 = scmp.eq.s32.totalorder %s26, 0
      %s29 = sadd.s32 %s28, 1
      %s30 = scalar_select %p27, %s28, %s29
      %p33 = pneg %p27
      %p34 = scmp.eq.s32.totalorder %s18, 1
      %p35 = por %p33, %p34
      %p36 = scmp.ne.s32.totalorder %s28, %s31
      %p37 = scmp.eq.s32.totalorder %s18, 0
      %p38 = por %p36, %p37
      %p39 = scmp.ne.s32.totalorder %s28, %s31
      %p40 = scmp.eq.s32.totalorder %s23, 1
      %p41 = por %p39, %p40
      %p42 = scmp.ne.s32.totalorder %s31, %s32
      %p43 = scmp.eq.s32.totalorder %s23, 0
      %p44 = por %p42, %p43
      %p45 = scmp.ne.s32.totalorder %s31, %s32
      %p46 = scmp.eq.s32.totalorder %s24, 1
      %p47 = por %p45, %p46
      %p49 = scmp.ne.s32.totalorder %s32, %s48
      %p50 = scmp.eq.s32.totalorder %s24, 0
      %p51 = por %p49, %p50
      %s53 = sadd.s32 %s52, 1
      %p56 = scmp.eq.s32.totalorder %s18, 1
      %p57 = scmp.ne.s32.totalorder %s52, %s54
      %p58 = scmp.eq.s32.totalorder %s18, 0
      %p59 = por %p57, %p58
      %p60 = scmp.ne.s32.totalorder %s52, %s54
      %p61 = scmp.eq.s32.totalorder %s23, 1
      %p62 = por %p60, %p61
      %p63 = scmp.ne.s32.totalorder %s54, %s55
      %p64 = scmp.eq.s32.totalorder %s23, 0
      %p65 = por %p63, %p64
      %p66 = scmp.ne.s32.totalorder %s54, %s55
      %p67 = scmp.eq.s32.totalorder %s24, 1
      %p68 = por %p66, %p67
      %p70 = scmp.ne.s32.totalorder %s55, %s69
      %p71 = scmp.eq.s32.totalorder %s24, 0
      %p72 = por %p70, %p71
      %s74 = sadd.s32 %s73, 1
      %p77 = scmp.eq.s32.totalorder %s18, 1
      %p78 = scmp.ne.s32.totalorder %s73, %s75
      %p79 = scmp.eq.s32.totalorder %s18, 0
      %p80 = por %p78, %p79
      %p81 = scmp.ne.s32.totalorder %s73, %s75
      %p82 = scmp.eq.s32.totalorder %s23, 1
      %p83 = por %p81, %p82
      %p84 = scmp.ne.s32.totalorder %s75, %s76
      %p85 = scmp.eq.s32.totalorder %s23, 0
      %p86 = por %p84, %p85
      %p87 = scmp.ne.s32.totalorder %s75, %s76
      %p88 = scmp.eq.s32.totalorder %s24, 1
      %p89 = por %p87, %p88
      %p91 = scmp.ne.s32.totalorder %s76, %s90
      %p92 = scmp.eq.s32.totalorder %s24, 0
      %p93 = por %p91, %p92
      %s95 = sadd.s32 %s94, 1
      %p98 = scmp.eq.s32.totalorder %s18, 1
      %p99 = scmp.ne.s32.totalorder %s94, %s96
      %p100 = scmp.eq.s32.totalorder %s18, 0
      %p101 = por %p99, %p100
      %p102 = scmp.ne.s32.totalorder %s94, %s96
      %p103 = scmp.eq.s32.totalorder %s23, 1
      %p104 = por %p102, %p103
      %p105 = scmp.ne.s32.totalorder %s96, %s97
      %p106 = scmp.eq.s32.totalorder %s23, 0
      %p107 = por %p105, %p106
      %p108 = scmp.ne.s32.totalorder %s96, %s97
      %p109 = scmp.eq.s32.totalorder %s24, 1
      %p110 = por %p108, %p109
      %p112 = scmp.ne.s32.totalorder %s97, %s111
      %p113 = scmp.eq.s32.totalorder %s24, 0
      %p114 = por %p112, %p113
      %s116 = sadd.s32 %s115, 1
      %p119 = scmp.eq.s32.totalorder %s18, 1
      %p120 = scmp.ne.s32.totalorder %s115, %s117
      %p121 = scmp.eq.s32.totalorder %s18, 0
      %p122 = por %p120, %p121
      %p123 = scmp.ne.s32.totalorder %s115, %s117
      %p124 = scmp.eq.s32.totalorder %s23, 1
      %p125 = por %p123, %p124
      %p126 = scmp.ne.s32.totalorder %s117, %s118
      %p127 = scmp.eq.s32.totalorder %s23, 0
      %p128 = por %p126, %p127
      %p129 = scmp.ne.s32.totalorder %s117, %s118
      %p130 = scmp.eq.s32.totalorder %s24, 1
      %p131 = por %p129, %p130
      %p133 = scmp.ne.s32.totalorder %s118, %s132
      %p134 = scmp.eq.s32.totalorder %s24, 0
      %p135 = por %p133, %p134
      %s136 = ssub.s32 %s18, %s25
      %p137 = scmp.eq.s32.totalorder %s136, 0
      %s139 = sadd.s32 %s138, 1
      %s140 = scalar_select %p137, %s138, %s139
      %p143 = pneg %p137
      %p144 = scmp.eq.s32.totalorder %s18, 1
      %p145 = por %p143, %p144
      %p146 = scmp.ne.s32.totalorder %s138, %s141
      %p147 = scmp.eq.s32.totalorder %s18, 0
      %p148 = por %p146, %p147
      %p149 = scmp.ne.s32.totalorder %s138, %s141
      %p150 = scmp.eq.s32.totalorder %s23, 1
      %p151 = por %p149, %p150
      %p152 = scmp.ne.s32.totalorder %s141, %s142
      %p153 = scmp.eq.s32.totalorder %s23, 0
      %p154 = por %p152, %p153
      %p155 = scmp.ne.s32.totalorder %s141, %s142
      %p156 = scmp.eq.s32.totalorder %s24, 1
      %p157 = por %p155, %p156
      %p159 = scmp.ne.s32.totalorder %s142, %s158
      %p160 = scmp.eq.s32.totalorder %s24, 0
      %p161 = por %p159, %p160
      %p162 = scmp.le.s32.totalorder 1, %s18
      %p163 = scmp.lt.s32.totalorder %s18, 3
      %p164 = pnand %p162, %p163
      %p165 = pneg %p164
      // Predicated region
      $region9: #{tpu_custom_call.1} parent=5 // pred_check
        _
      $region10: #{tpu_custom_call.1} parent=5 // pred_check_branch
        %167 = sbr.rel (%p164) target = $region12
      $region11: #{tpu_custom_call.1} parent=5 // pred_region
        %s168 = ssub.s32 %s18, 1
        // Predicated region
        $region13: #{tpu_custom_call.1} parent=11 // pred_check
          %p169 = pneg %p65
        $region14: #{tpu_custom_call.1} parent=11 // pred_check_branch
          %171 = sbr.rel (%p169) target = $region16
        $region15: #{tpu_custom_call.1} parent=11 // pred_region
          %s173 = ssub.s32 9216, 9216
          %174 = vsyncadd [#allocation7], %s173
          %s175 = sshll.u32 [#allocation6], 4
          %s176 = int_to_ptr.vmem [resolvable:$true] %s175
          %181 = dma.hbm_to_vmem [thread:$0]  %s1, 9216, %s176, [#allocation7], 192, 192, 12
        $region16: #{tpu_custom_call.1} parent=11 // pred_fallthru
          _
        // Predicated region
        $region17: #{tpu_custom_call.1} parent=11 // pred_check
          %p182 = pneg %p86
        $region18: #{tpu_custom_call.1} parent=11 // pred_check_branch
          %184 = sbr.rel (%p182) target = $region20
        $region19: #{tpu_custom_call.1} parent=11 // pred_region
          _
        $region20: #{tpu_custom_call.1} parent=11 // pred_fallthru
          _
        // Predicated region
        $region21: #{tpu_custom_call.1} parent=11 // pred_check
          %p185 = pneg %p107
        $region22: #{tpu_custom_call.1} parent=11 // pred_check_branch
          %187 = sbr.rel (%p185) target = $region24
        $region23: #{tpu_custom_call.1} parent=11 // pred_region
          %s189 = ssub.s32 9216, 9216
          %190 = vsyncadd [#allocation7], %s189
          %s191 = sshll.u32 [#allocation8], 4
          %s192 = int_to_ptr.vmem [resolvable:$true] %s191
          %197 = dma.hbm_to_vmem [thread:$0]  %s3, 9216, %s192, [#allocation7], 192, 192, 12
        $region24: #{tpu_custom_call.1} parent=11 // pred_fallthru
          _
        // Predicated region
        $region25: #{tpu_custom_call.1} parent=11 // pred_check
          %p198 = pneg %p128
        $region26: #{tpu_custom_call.1} parent=11 // pred_check_branch
          %200 = sbr.rel (%p198) target = $region28
        $region27: #{tpu_custom_call.1} parent=11 // pred_region
          _
        $region28: #{tpu_custom_call.1} parent=11 // pred_fallthru
          _
      $region12: #{tpu_custom_call.1} parent=5 // pred_fallthru
        _
      %p201 = scmp.lt.s32.totalorder %s18, 2
      // Predicated region
      $region29: #{tpu_custom_call.1} parent=5 // pred_check
        %p202 = pneg %p201
      $region30: #{tpu_custom_call.1} parent=5 // pred_check_branch
        %204 = sbr.rel (%p202) target = $region32
      $region31: #{tpu_custom_call.1} parent=5 // pred_region
        // Predicated region
        $region33: #{tpu_custom_call.1} parent=31 // pred_check
          %p205 = pneg %p38
        $region34: #{tpu_custom_call.1} parent=31 // pred_check_branch
          %207 = sbr.rel (%p205) target = $region36
        $region35: #{tpu_custom_call.1} parent=31 // pred_region
          %s208 = sand.u32 %s28, 1
          %s209 = scalar_lea.sflag [#allocation4], %s208
          %s210 = sand.u32 %s28, 1
          %s211 = smul.addr %s210, 160
          %s212 = scalar_lea.vmem [#allocation3], %s211
          %s213 = smul.u32 2, %s18
          %s215 = ssub.s32 2560, 2560
          %216 = vsyncadd %s209, %s215
          %s217 = smul.addr %s213, 20
          %s218 = smul.addr %s217, 64
          %s219 = scalar_lea.hbm %s0, %s218
          %s220 = sshll.u32 %s212, 4
          %s221 = int_to_ptr.vmem [resolvable:$true] %s220
          %226 = dma.hbm_to_vmem [thread:$0]  %s219, 2560, %s221, %s209, 64, 64, 4
        $region36: #{tpu_custom_call.1} parent=31 // pred_fallthru
          _
      $region32: #{tpu_custom_call.1} parent=5 // pred_fallthru
        _
      %p227 = scmp.le.s32.totalorder 1, %s18
      %p228 = scmp.lt.s32.totalorder %s18, 3
      %p229 = pnand %p227, %p228
      %p230 = pneg %p229
      // Predicated region
      $region37: #{tpu_custom_call.1} parent=5 // pred_check
        _
      $region38: #{tpu_custom_call.1} parent=5 // pred_check_branch
        %232 = sbr.rel (%p229) target = $region40
      $region39: #{tpu_custom_call.1} parent=5 // pred_region
        %s233 = ssub.s32 %s18, 1
        %s234 = sand.u32 %s31, 1
        %s235 = scalar_lea.sflag [#allocation4], %s234
        %s236 = sand.u32 %s31, 1
        %s237 = smul.addr %s236, 160
        %s238 = scalar_lea.vmem [#allocation3], %s237
        // Predicated region
        $region41: #{tpu_custom_call.1} parent=39 // pred_check
          %p239 = pneg %p44
        $region42: #{tpu_custom_call.1} parent=39 // pred_check_branch
          %241 = sbr.rel (%p239) target = $region44
        $region43: #{tpu_custom_call.1} parent=39 // pred_region
          %242 = dma.done %s235, 2560
        $region44: #{tpu_custom_call.1} parent=39 // pred_fallthru
          _
        // Predicated region
        $region45: #{tpu_custom_call.1} parent=39 // pred_check
          %p243 = pneg %p65
        $region46: #{tpu_custom_call.1} parent=39 // pred_check_branch
          %245 = sbr.rel (%p243) target = $region48
        $region47: #{tpu_custom_call.1} parent=39 // pred_region
          %246 = dma.done [#allocation7], 9216
        $region48: #{tpu_custom_call.1} parent=39 // pred_fallthru
          _
        // Predicated region
        $region49: #{tpu_custom_call.1} parent=39 // pred_check
          %p247 = pneg %p107
        $region50: #{tpu_custom_call.1} parent=39 // pred_check_branch
          %249 = sbr.rel (%p247) target = $region52
        $region51: #{tpu_custom_call.1} parent=39 // pred_region
          %250 = dma.done [#allocation7], 9216
        $region52: #{tpu_custom_call.1} parent=39 // pred_fallthru
          _
        %s251 = sand.u32 %s31, 1
        %s252 = scalar_lea.sflag [#allocation4], %s251
        %s253 = sand.u32 %s31, 1
        %s254 = smul.addr %s253, 160
        %s255 = scalar_lea.vmem [#allocation3], %s254
        %p256 = pneg %p44
        %p257 = pneg %p41
        %p258 = pneg %p65
        %p259 = pneg %p62
        %p260 = pneg %p86
        %p261 = pneg %p83
        %p262 = pneg %p107
        %p263 = pneg %p104
        %p264 = pneg %p128
        %p265 = pneg %p125
        %p266 = pneg %p154
        %p267 = pneg %p151
        %s268 = sand.u32 %s141, 1
        %s269 = scalar_lea.sflag [#allocation5], %s268
        %s270 = sand.u32 %s141, 1
        %s271 = smul.addr %s270, 128
        %s272 = scalar_lea.vmem [#allocation9], %s271
        %s273 = smul.u32 2, %s23
        %s274 = smul.u32 2, %s23
        %v276 = vld [vmem:[%s2] sm:$0x1]
        %v277 = vld [vmem:[%s4] sm:$0x1]
        %v278 = vld [vmem:[%s238] sm:$0xf]
        %v279 = vld [vmem:[%s238 + $0x4] sm:$0xf]
        %v280 = vld [vmem:[%s238 + $0x8] sm:$0xf]
        %v281 = vld [vmem:[%s238 + $0xc] sm:$0xf]
        %v282 = vld [vmem:[%s238 + $0x10] sm:$0xf]
        %v283 = vld [vmem:[%s238 + $0x14] sm:$0xf]
        %v284 = vld [vmem:[%s238 + $0x18] sm:$0xf]
        %v285 = vld [vmem:[%s238 + $0x1c] sm:$0xf]
        %v286 = vld [vmem:[%s238 + $0x20] sm:$0xf]
        %v287 = vld [vmem:[%s238 + $0x24] sm:$0xf]
        %v288 = vld [vmem:[%s238 + $0x28] sm:$0xf]
        %v289 = vld [vmem:[%s238 + $0x2c] sm:$0xf]
        %v290 = vld [vmem:[%s238 + $0x30] sm:$0xf]
        %v291 = vld [vmem:[%s238 + $0x34] sm:$0xf]
        %v292 = vld [vmem:[%s238 + $0x38] sm:$0xf]
        %v293 = vld [vmem:[%s238 + $0x3c] sm:$0xf]
        %v294 = vld [vmem:[%s238 + $0x50] sm:$0xf]
        %v295 = vld [vmem:[%s238 + $0x54] sm:$0xf]
        %v296 = vld [vmem:[%s238 + $0x58] sm:$0xf]
        %v297 = vld [vmem:[%s238 + $0x5c] sm:$0xf]
        %v298 = vld [vmem:[%s238 + $0x60] sm:$0xf]
        %v299 = vld [vmem:[%s238 + $0x64] sm:$0xf]
        %v300 = vld [vmem:[%s238 + $0x68] sm:$0xf]
        %v301 = vld [vmem:[%s238 + $0x6c] sm:$0xf]
        %v302 = vld [vmem:[%s238 + $0x70] sm:$0xf]
        %v303 = vld [vmem:[%s238 + $0x74] sm:$0xf]
        %v304 = vld [vmem:[%s238 + $0x78] sm:$0xf]
        %v305 = vld [vmem:[%s238 + $0x7c] sm:$0xf]
        %v306 = vld [vmem:[%s238 + $0x80] sm:$0xf]
        %v307 = vld [vmem:[%s238 + $0x84] sm:$0xf]
        %v308 = vld [vmem:[%s238 + $0x88] sm:$0xf]
        %v309 = vld [vmem:[%s238 + $0x8c] sm:$0xf]
        %v310 = vld [vmem:[#allocation6] sm:$0xff]
        %v311 = vld [vmem:[#allocation6 + $0x8] sm:$0xf]
        %v312 = vld [vmem:[#allocation6 + $0xc] sm:$0xff]
        %v313 = vld [vmem:[#allocation6 + $0x14] sm:$0xf]
        %v314 = vld [vmem:[#allocation6 + $0x18] sm:$0xff]
        %v315 = vld [vmem:[#allocation6 + $0x20] sm:$0xf]
        %v316 = vld [vmem:[#allocation6 + $0x24] sm:$0xff]
        %v317 = vld [vmem:[#allocation6 + $0x2c] sm:$0xf]
        %v318 = vld [vmem:[#allocation6 + $0x30] sm:$0xff]
        %v319 = vld [vmem:[#allocation6 + $0x38] sm:$0xf]
        %v320 = vld [vmem:[#allocation6 + $0x3c] sm:$0xff]
        %v321 = vld [vmem:[#allocation6 + $0x44] sm:$0xf]
        %v322 = vld [vmem:[#allocation6 + $0x48] sm:$0xff]
        %v323 = vld [vmem:[#allocation6 + $0x50] sm:$0xf]
        %v324 = vld [vmem:[#allocation6 + $0x54] sm:$0xff]
        %v325 = vld [vmem:[#allocation6 + $0x5c] sm:$0xf]
        %v326 = vld [vmem:[#allocation6 + $0x60] sm:$0xff]
        %v327 = vld [vmem:[#allocation6 + $0x68] sm:$0xf]
        %v328 = vld [vmem:[#allocation6 + $0x6c] sm:$0xff]
        %v329 = vld [vmem:[#allocation6 + $0x74] sm:$0xf]
        %v330 = vld [vmem:[#allocation6 + $0x78] sm:$0xff]
        %v331 = vld [vmem:[#allocation6 + $0x80] sm:$0xf]
        %v332 = vld [vmem:[#allocation6 + $0x84] sm:$0xff]
        %v333 = vld [vmem:[#allocation6 + $0x8c] sm:$0xf]
        %v334 = vld [vmem:[#allocation6 + $0x90] sm:$0xff]
        %v335 = vld [vmem:[#allocation6 + $0x98] sm:$0xf]
        %v336 = vld [vmem:[#allocation6 + $0x9c] sm:$0xff]
        %v337 = vld [vmem:[#allocation6 + $0xa4] sm:$0xf]
        %v338 = vld [vmem:[#allocation6 + $0xa8] sm:$0xff]
        %v339 = vld [vmem:[#allocation6 + $0xb0] sm:$0xf]
        %v340 = vld [vmem:[#allocation6 + $0xb4] sm:$0xff]
        %v341 = vld [vmem:[#allocation6 + $0xbc] sm:$0xf]
        %s342 = scalar_lea.vmem %s238, 8 [#allocation3]
        %v343 = vld [vmem:[%s342] sm:$0xf]
        %v344 = vld [vmem:[%s342 + $0x4] sm:$0xf]
        %v345 = vld [vmem:[%s342 + $0x8] sm:$0xf]
        %v346 = vld [vmem:[%s342 + $0xc] sm:$0xf]
        %v347 = vld [vmem:[%s342 + $0x10] sm:$0xf]
        %v348 = vld [vmem:[%s342 + $0x14] sm:$0xf]
        %v349 = vld [vmem:[%s342 + $0x18] sm:$0xf]
        %v350 = vld [vmem:[%s342 + $0x1c] sm:$0xf]
        %v351 = vld [vmem:[%s342 + $0x20] sm:$0xf]
        %v352 = vld [vmem:[%s342 + $0x24] sm:$0xf]
        %v353 = vld [vmem:[%s342 + $0x28] sm:$0xf]
        %v354 = vld [vmem:[%s342 + $0x2c] sm:$0xf]
        %v355 = vld [vmem:[%s342 + $0x30] sm:$0xf]
        %v356 = vld [vmem:[%s342 + $0x34] sm:$0xf]
        %v357 = vld [vmem:[%s342 + $0x38] sm:$0xf]
        %v358 = vld [vmem:[%s342 + $0x3c] sm:$0xf]
        %v359 = vld [vmem:[%s342 + $0x50] sm:$0xf]
        %v360 = vld [vmem:[%s342 + $0x54] sm:$0xf]
        %v361 = vld [vmem:[%s342 + $0x58] sm:$0xf]
        %v362 = vld [vmem:[%s342 + $0x5c] sm:$0xf]
        %v363 = vld [vmem:[%s342 + $0x60] sm:$0xf]
        %v364 = vld [vmem:[%s342 + $0x64] sm:$0xf]
        %v365 = vld [vmem:[%s342 + $0x68] sm:$0xf]
        %v366 = vld [vmem:[%s342 + $0x6c] sm:$0xf]
        %v367 = vld [vmem:[%s342 + $0x70] sm:$0xf]
        %v368 = vld [vmem:[%s342 + $0x74] sm:$0xf]
        %v369 = vld [vmem:[%s342 + $0x78] sm:$0xf]
        %v370 = vld [vmem:[%s342 + $0x7c] sm:$0xf]
        %v371 = vld [vmem:[%s342 + $0x80] sm:$0xf]
        %v372 = vld [vmem:[%s342 + $0x84] sm:$0xf]
        %v373 = vld [vmem:[%s342 + $0x88] sm:$0xf]
        %v374 = vld [vmem:[%s342 + $0x8c] sm:$0xf]
        %s375 = scalar_lea.vmem [#allocation6], 192
        %v376 = vld [vmem:[%s375] sm:$0xff]
        %v377 = vld [vmem:[%s375 + $0x8] sm:$0xf]
        %v378 = vld [vmem:[%s375 + $0xc] sm:$0xff]
        %v379 = vld [vmem:[%s375 + $0x14] sm:$0xf]
        %v380 = vld [vmem:[%s375 + $0x18] sm:$0xff]
        %v381 = vld [vmem:[%s375 + $0x20] sm:$0xf]
        %v382 = vld [vmem:[%s375 + $0x24] sm:$0xff]
        %v383 = vld [vmem:[%s375 + $0x2c] sm:$0xf]
        %v384 = vld [vmem:[%s375 + $0x30] sm:$0xff]
        %v385 = vld [vmem:[%s375 + $0x38] sm:$0xf]
        %v386 = vld [vmem:[%s375 + $0x3c] sm:$0xff]
        %v387 = vld [vmem:[%s375 + $0x44] sm:$0xf]
        %v388 = vld [vmem:[%s375 + $0x48] sm:$0xff]
        %v389 = vld [vmem:[%s375 + $0x50] sm:$0xf]
        %v390 = vld [vmem:[%s375 + $0x54] sm:$0xff]
        %v391 = vld [vmem:[%s375 + $0x5c] sm:$0xf]
        %v392 = vld [vmem:[%s375 + $0x60] sm:$0xff]
        %v393 = vld [vmem:[%s375 + $0x68] sm:$0xf]
        %v394 = vld [vmem:[%s375 + $0x6c] sm:$0xff]
        %v395 = vld [vmem:[%s375 + $0x74] sm:$0xf]
        %v396 = vld [vmem:[%s375 + $0x78] sm:$0xff]
        %v397 = vld [vmem:[%s375 + $0x80] sm:$0xf]
        %v398 = vld [vmem:[%s375 + $0x84] sm:$0xff]
        %v399 = vld [vmem:[%s375 + $0x8c] sm:$0xf]
        %v400 = vld [vmem:[%s375 + $0x90] sm:$0xff]
        %v401 = vld [vmem:[%s375 + $0x98] sm:$0xf]
        %v402 = vld [vmem:[%s375 + $0x9c] sm:$0xff]
        %v403 = vld [vmem:[%s375 + $0xa4] sm:$0xf]
        %v404 = vld [vmem:[%s375 + $0xa8] sm:$0xff]
        %v405 = vld [vmem:[%s375 + $0xb0] sm:$0xf]
        %v406 = vld [vmem:[%s375 + $0xb4] sm:$0xff]
        %v407 = vld [vmem:[%s375 + $0xbc] sm:$0xf]
        %v440 = vunpack.c.l.b16 %v343
        %v441 = vunpack.c.l.b16 %v344
        %v442 = vunpack.c.l.b16 %v345
        %v443 = vunpack.c.l.b16 %v346
        %v444 = vunpack.c.l.b16 %v347
        %v445 = vunpack.c.l.b16 %v348
        %v446 = vunpack.c.l.b16 %v349
        %v447 = vunpack.c.l.b16 %v350
        %v448 = vunpack.c.l.b16 %v351
        %v449 = vunpack.c.l.b16 %v352
        %v450 = vunpack.c.l.b16 %v353
        %v451 = vunpack.c.l.b16 %v354
        %v452 = vunpack.c.l.b16 %v355
        %v453 = vunpack.c.l.b16 %v356
        %v454 = vunpack.c.l.b16 %v357
        %v455 = vunpack.c.l.b16 %v358
        %v456 = vunpack.c.l.b16 %v359
        %v457 = vunpack.c.l.b16 %v360
        %v458 = vunpack.c.l.b16 %v361
        %v459 = vunpack.c.l.b16 %v362
        %v460 = vunpack.c.l.b16 %v363
        %v461 = vunpack.c.l.b16 %v364
        %v462 = vunpack.c.l.b16 %v365
        %v463 = vunpack.c.l.b16 %v366
        %v464 = vunpack.c.l.b16 %v367
        %v465 = vunpack.c.l.b16 %v368
        %v466 = vunpack.c.l.b16 %v369
        %v467 = vunpack.c.l.b16 %v370
        %v468 = vunpack.c.l.b16 %v371
        %v469 = vunpack.c.l.b16 %v372
        %v470 = vunpack.c.l.b16 %v373
        %v471 = vunpack.c.l.b16 %v374
        %v472 = vpack.c.b16 %v441, %v440
        %v473 = vpack.c.b16 %v443, %v442
        %v474 = vpack.c.b16 %v445, %v444
        %v475 = vpack.c.b16 %v447, %v446
        %v476 = vpack.c.b16 %v449, %v448
        %v477 = vpack.c.b16 %v451, %v450
        %v478 = vpack.c.b16 %v453, %v452
        %v479 = vpack.c.b16 %v455, %v454
        %v480 = vpack.c.b16 %v457, %v456
        %v481 = vpack.c.b16 %v459, %v458
        %v482 = vpack.c.b16 %v461, %v460
        %v483 = vpack.c.b16 %v463, %v462
        %v484 = vpack.c.b16 %v465, %v464
        %v485 = vpack.c.b16 %v467, %v466
        %v486 = vpack.c.b16 %v469, %v468
        %v487 = vpack.c.b16 %v471, %v470
        %v536 = vunpack.c.l.b16 %v376
        %v537 = vunpack.c.h.b16 %v376
        %v538 = vunpack.c.l.b16 %v377
        %v539 = vunpack.c.l.b16 %v378
        %v540 = vunpack.c.h.b16 %v378
        %v541 = vunpack.c.l.b16 %v379
        %v542 = vunpack.c.l.b16 %v380
        %v543 = vunpack.c.h.b16 %v380
        %v544 = vunpack.c.l.b16 %v381
        %v545 = vunpack.c.l.b16 %v382
        %v546 = vunpack.c.h.b16 %v382
        %v547 = vunpack.c.l.b16 %v383
        %v548 = vunpack.c.l.b16 %v384
        %v549 = vunpack.c.h.b16 %v384
        %v550 = vunpack.c.l.b16 %v385
        %v551 = vunpack.c.l.b16 %v386
        %v552 = vunpack.c.h.b16 %v386
        %v553 = vunpack.c.l.b16 %v387
        %v554 = vunpack.c.l.b16 %v388
        %v555 = vunpack.c.h.b16 %v388
        %v556 = vunpack.c.l.b16 %v389
        %v557 = vunpack.c.l.b16 %v390
        %v558 = vunpack.c.h.b16 %v390
        %v559 = vunpack.c.l.b16 %v391
        %v560 = vunpack.c.l.b16 %v392
        %v561 = vunpack.c.h.b16 %v392
        %v562 = vunpack.c.l.b16 %v393
        %v563 = vunpack.c.l.b16 %v394
        %v564 = vunpack.c.h.b16 %v394
        %v565 = vunpack.c.l.b16 %v395
        %v566 = vunpack.c.l.b16 %v396
        %v567 = vunpack.c.h.b16 %v396
        %v568 = vunpack.c.l.b16 %v397
        %v569 = vunpack.c.l.b16 %v398
        %v570 = vunpack.c.h.b16 %v398
        %v571 = vunpack.c.l.b16 %v399
        %v572 = vunpack.c.l.b16 %v400
        %v573 = vunpack.c.h.b16 %v400
        %v574 = vunpack.c.l.b16 %v401
        %v575 = vunpack.c.l.b16 %v402
        %v576 = vunpack.c.h.b16 %v402
        %v577 = vunpack.c.l.b16 %v403
        %v578 = vunpack.c.l.b16 %v404
        %v579 = vunpack.c.h.b16 %v404
        %v580 = vunpack.c.l.b16 %v405
        %v581 = vunpack.c.l.b16 %v406
        %v582 = vunpack.c.h.b16 %v406
        %v583 = vunpack.c.l.b16 %v407
        %v584 = vpack.c.b16 %v539, %v536
        %v585 = vpack.c.b16 %v540, %v537
        %v586 = vpack.c.b16 %v541, %v538
        %v587 = vpack.c.b16 %v545, %v542
        %v588 = vpack.c.b16 %v546, %v543
        %v589 = vpack.c.b16 %v547, %v544
        %v590 = vpack.c.b16 %v551, %v548
        %v591 = vpack.c.b16 %v552, %v549
        %v592 = vpack.c.b16 %v553, %v550
        %v593 = vpack.c.b16 %v557, %v554
        %v594 = vpack.c.b16 %v558, %v555
        %v595 = vpack.c.b16 %v559, %v556
        %v596 = vpack.c.b16 %v563, %v560
        %v597 = vpack.c.b16 %v564, %v561
        %v598 = vpack.c.b16 %v565, %v562
        %v599 = vpack.c.b16 %v569, %v566
        %v600 = vpack.c.b16 %v570, %v567
        %v601 = vpack.c.b16 %v571, %v568
        %v602 = vpack.c.b16 %v575, %v572
        %v603 = vpack.c.b16 %v576, %v573
        %v604 = vpack.c.b16 %v577, %v574
        %v605 = vpack.c.b16 %v581, %v578
        %v606 = vpack.c.b16 %v582, %v579
        %v607 = vpack.c.b16 %v583, %v580
        %632 = vmatprep.subr.bf16.mxu0 %v585
        %633 = vmatpush1.bf16.msra.mxu0 %v584
        %634 = vmatprep.subr.bf16.mxu0 %v588
        %635 = vmatpush1.bf16.msra.mxu0 %v587
        %636 = vmatprep.subr.bf16.mxu0 %v591
        %637 = vmatpush1.bf16.msra.mxu0 %v590
        %638 = vmatprep.subr.bf16.mxu0 %v594
        %639 = vmatpush1.bf16.msra.mxu0 %v593
        %640 = vmatprep.subr.bf16.mxu0 %v597
        %641 = vmatpush1.bf16.msra.mxu0 %v596
        %642 = vmatprep.subr.bf16.mxu0 %v600
        %643 = vmatpush1.bf16.msra.mxu0 %v599
        %644 = vmatprep.subr.bf16.mxu0 %v603
        %645 = vmatpush1.bf16.msra.mxu0 %v602
        %646 = vmatprep.subr.bf16.mxu0 %v606
        %647 = vmatpush1.bf16.msra.mxu0 %v605
        %648 = vmatprep.subr.bf16.mxu0 0
        %649 = vmatpush1.bf16.msra.mxu0 0
        %650 = vmatprep.subr.bf16.mxu0 0
        %651 = vmatpush1.bf16.msra.mxu0 0
        %652 = vmatprep.subr.bf16.mxu0 0
        %653 = vmatpush1.bf16.msra.mxu0 0
        %654 = vmatprep.subr.bf16.mxu0 0
        %655 = vmatpush1.bf16.msra.mxu0 0
        %656 = vmatprep.subr.bf16.mxu0 0
        %657 = vmatpush1.bf16.msra.mxu0 0
        %658 = vmatprep.subr.bf16.mxu0 0
        %659 = vmatpush1.bf16.msra.mxu0 0
        %660 = vmatprep.subr.bf16.mxu0 0
        %661 = vmatpush1.bf16.msra.mxu0 0
        %662 = vmatprep.subr.bf16.mxu0 0
        %663 = vmatpush1.bf16.msra.mxu0 0
        %664 = vmatprep.mubr.bf16.mxu0 0
        %665 = vmatmul.mubr.bf16.gmra.mrb[0].mxu0 %v472
        %v666 = vpop.f32.mrb[0].mxu0
        %v667 = vadd.f32 0.0, %v666
        %v668 = vpop.f32.mrb[0].mxu0
        %v669 = vadd.f32 0.0, %v668
        %v670 = vpop.f32.mrb[0].mxu0
        %v671 = vpop.f32.mrb[0].mxu0
        %v672 = vadd.f32 0.0, %v671
        %673 = vmatprep.mubr.bf16.mxu0 0
        %674 = vmatmul.mubr.bf16.gmra.mrb[0].mxu0 %v473
        %v675 = vpop.f32.mrb[0].mxu0
        %v676 = vadd.f32 0.0, %v675
        %v677 = vpop.f32.mrb[0].mxu0
        %v678 = vadd.f32 0.0, %v677
        %v679 = vpop.f32.mrb[0].mxu0
        %v680 = vpop.f32.mrb[0].mxu0
        %v681 = vadd.f32 0.0, %v680
        %682 = vmatprep.mubr.bf16.mxu0 0
        %683 = vmatmul.mubr.bf16.gmra.mrb[0].mxu0 %v474
        %v684 = vpop.f32.mrb[0].mxu0
        %v685 = vadd.f32 0.0, %v684
        %v686 = vpop.f32.mrb[0].mxu0
        %v687 = vadd.f32 0.0, %v686
        %v688 = vpop.f32.mrb[0].mxu0
        %v689 = vpop.f32.mrb[0].mxu0
        %v690 = vadd.f32 0.0, %v689
        %691 = vmatprep.mubr.bf16.mxu0 0
        %692 = vmatmul.mubr.bf16.gmra.mrb[0].mxu0 %v475
        %v693 = vpop.f32.mrb[0].mxu0
        %v694 = vadd.f32 0.0, %v693
        %v695 = vpop.f32.mrb[0].mxu0
        %v696 = vadd.f32 0.0, %v695
        %v697 = vpop.f32.mrb[0].mxu0
        %v698 = vpop.f32.mrb[0].mxu0
        %v699 = vadd.f32 0.0, %v698
        %700 = vmatprep.mubr.bf16.mxu0 0
        %701 = vmatmul.mubr.bf16.gmra.mrb[0].mxu0 %v476
        %v702 = vpop.f32.mrb[0].mxu0
        %v703 = vadd.f32 0.0, %v702
        %v704 = vpop.f32.mrb[0].mxu0
        %v705 = vadd.f32 0.0, %v704
        %v706 = vpop.f32.mrb[0].mxu0
        %v707 = vpop.f32.mrb[0].mxu0
        %v708 = vadd.f32 0.0, %v707
        %709 = vmatprep.mubr.bf16.mxu0 0
        %710 = vmatmul.mubr.bf16.gmra.mrb[0].mxu0 %v477
        %v711 = vpop.f32.mrb[0].mxu0
        %v712 = vadd.f32 0.0, %v711
        %v713 = vpop.f32.mrb[0].mxu0
        %v714 = vadd.f32 0.0, %v713
        %v715 = vpop.f32.mrb[0].mxu0
        %v716 = vpop.f32.mrb[0].mxu0
        %v717 = vadd.f32 0.0, %v716
        %718 = vmatprep.mubr.bf16.mxu0 0
        %719 = vmatmul.mubr.bf16.gmra.mrb[0].mxu0 %v478
        %v720 = vpop.f32.mrb[0].mxu0
        %v721 = vadd.f32 0.0, %v720
        %v722 = vpop.f32.mrb[0].mxu0
        %v723 = vadd.f32 0.0, %v722
        %v724 = vpop.f32.mrb[0].mxu0
        %v725 = vpop.f32.mrb[0].mxu0
        %v726 = vadd.f32 0.0, %v725
        %727 = vmatprep.mubr.bf16.mxu0 0
        %728 = vmatmul.mubr.bf16.gmra.mrb[0].mxu0 %v479
        %v729 = vpop.f32.mrb[0].mxu0
        %v730 = vadd.f32 0.0, %v729
        %v731 = vpop.f32.mrb[0].mxu0
        %v732 = vadd.f32 0.0, %v731
        %v733 = vpop.f32.mrb[0].mxu0
        %v734 = vpop.f32.mrb[0].mxu0
        %v735 = vadd.f32 0.0, %v734
        %736 = vmatprep.mubr.bf16.mxu0 0
        %737 = vmatmul.mubr.bf16.gmra.mrb[0].mxu0 %v480
        %v738 = vpop.f32.mrb[0].mxu0
        %v739 = vadd.f32 0.0, %v738
        %v740 = vpop.f32.mrb[0].mxu0
        %v741 = vadd.f32 0.0, %v740
        %v742 = vpop.f32.mrb[0].mxu0
        %v743 = vpop.f32.mrb[0].mxu0
        %v744 = vadd.f32 0.0, %v743
        %745 = vmatprep.mubr.bf16.mxu0 0
        %746 = vmatmul.mubr.bf16.gmra.mrb[0].mxu0 %v481
        %v747 = vpop.f32.mrb[0].mxu0
        %v748 = vadd.f32 0.0, %v747
        %v749 = vpop.f32.mrb[0].mxu0
        %v750 = vadd.f32 0.0, %v749
        %v751 = vpop.f32.mrb[0].mxu0
        %v752 = vpop.f32.mrb[0].mxu0
        %v753 = vadd.f32 0.0, %v752
        %754 = vmatprep.mubr.bf16.mxu0 0
        %755 = vmatmul.mubr.bf16.gmra.mrb[0].mxu0 %v482
        %v756 = vpop.f32.mrb[0].mxu0
        %v757 = vadd.f32 0.0, %v756
        %v758 = vpop.f32.mrb[0].mxu0
        %v759 = vadd.f32 0.0, %v758
        %v760 = vpop.f32.mrb[0].mxu0
        %v761 = vpop.f32.mrb[0].mxu0
        %v762 = vadd.f32 0.0, %v761
        %763 = vmatprep.mubr.bf16.mxu0 0
        %764 = vmatmul.mubr.bf16.gmra.mrb[0].mxu0 %v483
        %v765 = vpop.f32.mrb[0].mxu0
        %v766 = vadd.f32 0.0, %v765
        %v767 = vpop.f32.mrb[0].mxu0
        %v768 = vadd.f32 0.0, %v767
        %v769 = vpop.f32.mrb[0].mxu0
        %v770 = vpop.f32.mrb[0].mxu0
        %v771 = vadd.f32 0.0, %v770
        %772 = vmatprep.mubr.bf16.mxu0 0
        %773 = vmatmul.mubr.bf16.gmra.mrb[0].mxu0 %v484
        %v774 = vpop.f32.mrb[0].mxu0
        %v775 = vadd.f32 0.0, %v774
        %v776 = vpop.f32.mrb[0].mxu0
        %v777 = vadd.f32 0.0, %v776
        %v778 = vpop.f32.mrb[0].mxu0
        %v779 = vpop.f32.mrb[0].mxu0
        %v780 = vadd.f32 0.0, %v779
        %781 = vmatprep.mubr.bf16.mxu0 0
        %782 = vmatmul.mubr.bf16.gmra.mrb[0].mxu0 %v485
        %v783 = vpop.f32.mrb[0].mxu0
        %v784 = vadd.f32 0.0, %v783
        %v785 = vpop.f32.mrb[0].mxu0
        %v786 = vadd.f32 0.0, %v785
        %v787 = vpop.f32.mrb[0].mxu0
        %v788 = vpop.f32.mrb[0].mxu0
        %v789 = vadd.f32 0.0, %v788
        %790 = vmatprep.mubr.bf16.mxu0 0
        %791 = vmatmul.mubr.bf16.gmra.mrb[0].mxu0 %v486
        %v792 = vpop.f32.mrb[0].mxu0
        %v793 = vadd.f32 0.0, %v792
        %v794 = vpop.f32.mrb[0].mxu0
        %v795 = vadd.f32 0.0, %v794
        %v796 = vpop.f32.mrb[0].mxu0
        %v797 = vpop.f32.mrb[0].mxu0
        %v798 = vadd.f32 0.0, %v797
        %799 = vmatprep.mubr.bf16.mxu0 0
        %800 = vmatmul.mubr.bf16.gmra.mrb[0].mxu0 %v487
        %v801 = vpop.f32.mrb[0].mxu0
        %v802 = vadd.f32 0.0, %v801
        %v803 = vpop.f32.mrb[0].mxu0
        %v804 = vadd.f32 0.0, %v803
        %v805 = vpop.f32.mrb[0].mxu0
        %v806 = vpop.f32.mrb[0].mxu0
        %v807 = vadd.f32 0.0, %v806
        %808 = vdwg.mxu0
        %809 = vmatprep.subr.bf16.mxu0 0
        %810 = vmatpush1.bf16.msra.mxu0 %v586
        %811 = vmatprep.subr.bf16.mxu0 0
        %812 = vmatpush1.bf16.msra.mxu0 %v589
        %813 = vmatprep.subr.bf16.mxu0 0
        %814 = vmatpush1.bf16.msra.mxu0 %v592
        %815 = vmatprep.subr.bf16.mxu0 0
        %816 = vmatpush1.bf16.msra.mxu0 %v595
        %817 = vmatprep.subr.bf16.mxu0 0
        %818 = vmatpush1.bf16.msra.mxu0 %v598
        %819 = vmatprep.subr.bf16.mxu0 0
        %820 = vmatpush1.bf16.msra.mxu0 %v601
        %821 = vmatprep.subr.bf16.mxu0 0
        %822 = vmatpush1.bf16.msra.mxu0 %v604
        %823 = vmatprep.subr.bf16.mxu0 0
        %824 = vmatpush1.bf16.msra.mxu0 %v607
        %825 = vmatprep.subr.bf16.mxu0 0
        %826 = vmatpush1.bf16.msra.mxu0 0
        %827 = vmatprep.subr.bf16.mxu0 0
        %828 = vmatpush1.bf16.msra.mxu0 0
        %829 = vmatprep.subr.bf16.mxu0 0
        %830 = vmatpush1.bf16.msra.mxu0 0
        %831 = vmatprep.subr.bf16.mxu0 0
        %832 = vmatpush1.bf16.msra.mxu0 0
        %833 = vmatprep.subr.bf16.mxu0 0
        %834 = vmatpush1.bf16.msra.mxu0 0
        %835 = vmatprep.subr.bf16.mxu0 0
        %836 = vmatpush1.bf16.msra.mxu0 0
        %837 = vmatprep.subr.bf16.mxu0 0
        %838 = vmatpush1.bf16.msra.mxu0 0
        %839 = vmatprep.subr.bf16.mxu0 0
        %840 = vmatpush1.bf16.msra.mxu0 0
        %841 = vmatprep.mubr.bf16.mxu0 0
        %842 = vmatmul.mubr.bf16.gmra.mrb[0].mxu0 %v472
        %v843 = vpop.f32.mrb[0].mxu0
        %v844 = vadd.f32 0.0, %v843
        %v845 = vpop.f32.mrb[0].mxu0
        %v846 = vpop.f32.mrb[0].mxu0
        %v847 = vadd.f32 0.0, %v846
        %v848 = vpop.f32.mrb[0].mxu0
        %849 = vmatprep.mubr.bf16.mxu0 0
        %850 = vmatmul.mubr.bf16.gmra.mrb[0].mxu0 %v473
        %v851 = vpop.f32.mrb[0].mxu0
        %v852 = vadd.f32 0.0, %v851
        %v853 = vpop.f32.mrb[0].mxu0
        %v854 = vpop.f32.mrb[0].mxu0
        %v855 = vadd.f32 0.0, %v854
        %v856 = vpop.f32.mrb[0].mxu0
        %857 = vmatprep.mubr.bf16.mxu0 0
        %858 = vmatmul.mubr.bf16.gmra.mrb[0].mxu0 %v474
        %v859 = vpop.f32.mrb[0].mxu0
        %v860 = vadd.f32 0.0, %v859
        %v861 = vpop.f32.mrb[0].mxu0
        %v862 = vpop.f32.mrb[0].mxu0
        %v863 = vadd.f32 0.0, %v862
        %v864 = vpop.f32.mrb[0].mxu0
        %865 = vmatprep.mubr.bf16.mxu0 0
        %866 = vmatmul.mubr.bf16.gmra.mrb[0].mxu0 %v475
        %v867 = vpop.f32.mrb[0].mxu0
        %v868 = vadd.f32 0.0, %v867
        %v869 = vpop.f32.mrb[0].mxu0
        %v870 = vpop.f32.mrb[0].mxu0
        %v871 = vadd.f32 0.0, %v870
        %v872 = vpop.f32.mrb[0].mxu0
        %873 = vmatprep.mubr.bf16.mxu0 0
        %874 = vmatmul.mubr.bf16.gmra.mrb[0].mxu0 %v476
        %v875 = vpop.f32.mrb[0].mxu0
        %v876 = vadd.f32 0.0, %v875
        %v877 = vpop.f32.mrb[0].mxu0
        %v878 = vpop.f32.mrb[0].mxu0
        %v879 = vadd.f32 0.0, %v878
        %v880 = vpop.f32.mrb[0].mxu0
        %881 = vmatprep.mubr.bf16.mxu0 0
        %882 = vmatmul.mubr.bf16.gmra.mrb[0].mxu0 %v477
        %v883 = vpop.f32.mrb[0].mxu0
        %v884 = vadd.f32 0.0, %v883
        %v885 = vpop.f32.mrb[0].mxu0
        %v886 = vpop.f32.mrb[0].mxu0
        %v887 = vadd.f32 0.0, %v886
        %v888 = vpop.f32.mrb[0].mxu0
        %889 = vmatprep.mubr.bf16.mxu0 0
        %890 = vmatmul.mubr.bf16.gmra.mrb[0].mxu0 %v478
        %v891 = vpop.f32.mrb[0].mxu0
        %v892 = vadd.f32 0.0, %v891
        %v893 = vpop.f32.mrb[0].mxu0
        %v894 = vpop.f32.mrb[0].mxu0
        %v895 = vadd.f32 0.0, %v894
        %v896 = vpop.f32.mrb[0].mxu0
        %897 = vmatprep.mubr.bf16.mxu0 0
        %898 = vmatmul.mubr.bf16.gmra.mrb[0].mxu0 %v479
        %v899 = vpop.f32.mrb[0].mxu0
        %v900 = vadd.f32 0.0, %v899
        %v901 = vpop.f32.mrb[0].mxu0
        %v902 = vpop.f32.mrb[0].mxu0
        %v903 = vadd.f32 0.0, %v902
        %v904 = vpop.f32.mrb[0].mxu0
        %905 = vmatprep.mubr.bf16.mxu0 0
        %906 = vmatmul.mubr.bf16.gmra.mrb[0].mxu0 %v480
        %v907 = vpop.f32.mrb[0].mxu0
        %v908 = vadd.f32 0.0, %v907
        %v909 = vpop.f32.mrb[0].mxu0
        %v910 = vpop.f32.mrb[0].mxu0
        %v911 = vadd.f32 0.0, %v910
        %v912 = vpop.f32.mrb[0].mxu0
        %913 = vmatprep.mubr.bf16.mxu0 0
        %914 = vmatmul.mubr.bf16.gmra.mrb[0].mxu0 %v481
        %v915 = vpop.f32.mrb[0].mxu0
        %v916 = vadd.f32 0.0, %v915
        %v917 = vpop.f32.mrb[0].mxu0
        %v918 = vpop.f32.mrb[0].mxu0
        %v919 = vadd.f32 0.0, %v918
        %v920 = vpop.f32.mrb[0].mxu0
        %921 = vmatprep.mubr.bf16.mxu0 0
        %922 = vmatmul.mubr.bf16.gmra.mrb[0].mxu0 %v482
        %v923 = vpop.f32.mrb[0].mxu0
        %v924 = vadd.f32 0.0, %v923
        %v925 = vpop.f32.mrb[0].mxu0
        %v926 = vpop.f32.mrb[0].mxu0
        %v927 = vadd.f32 0.0, %v926
        %v928 = vpop.f32.mrb[0].mxu0
        %929 = vmatprep.mubr.bf16.mxu0 0
        %930 = vmatmul.mubr.bf16.gmra.mrb[0].mxu0 %v483
        %v931 = vpop.f32.mrb[0].mxu0
        %v932 = vadd.f32 0.0, %v931
        %v933 = vpop.f32.mrb[0].mxu0
        %v934 = vpop.f32.mrb[0].mxu0
        %v935 = vadd.f32 0.0, %v934
        %v936 = vpop.f32.mrb[0].mxu0
        %937 = vmatprep.mubr.bf16.mxu0 0
        %938 = vmatmul.mubr.bf16.gmra.mrb[0].mxu0 %v484
        %v939 = vpop.f32.mrb[0].mxu0
        %v940 = vadd.f32 0.0, %v939
        %v941 = vpop.f32.mrb[0].mxu0
        %v942 = vpop.f32.mrb[0].mxu0
        %v943 = vadd.f32 0.0, %v942
        %v944 = vpop.f32.mrb[0].mxu0
        %945 = vmatprep.mubr.bf16.mxu0 0
        %946 = vmatmul.mubr.bf16.gmra.mrb[0].mxu0 %v485
        %v947 = vpop.f32.mrb[0].mxu0
        %v948 = vadd.f32 0.0, %v947
        %v949 = vpop.f32.mrb[0].mxu0
        %v950 = vpop.f32.mrb[0].mxu0
        %v951 = vadd.f32 0.0, %v950
        %v952 = vpop.f32.mrb[0].mxu0
        %953 = vmatprep.mubr.bf16.mxu0 0
        %954 = vmatmul.mubr.bf16.gmra.mrb[0].mxu0 %v486
        %v955 = vpop.f32.mrb[0].mxu0
        %v956 = vadd.f32 0.0, %v955
        %v957 = vpop.f32.mrb[0].mxu0
        %v958 = vpop.f32.mrb[0].mxu0
        %v959 = vadd.f32 0.0, %v958
        %v960 = vpop.f32.mrb[0].mxu0
        %961 = vmatprep.mubr.bf16.mxu0 0
        %962 = vmatmul.mubr.bf16.gmra.mrb[0].mxu0 %v487
        %v963 = vpop.f32.mrb[0].mxu0
        %v964 = vadd.f32 0.0, %v963
        %v965 = vpop.f32.mrb[0].mxu0
        %v966 = vpop.f32.mrb[0].mxu0
        %v967 = vadd.f32 0.0, %v966
        %v968 = vpop.f32.mrb[0].mxu0
        %969 = vdwg.mxu0
        %v1002 = vunpack.c.l.b16 %v278
        %v1003 = vunpack.c.l.b16 %v279
        %v1004 = vunpack.c.l.b16 %v280
        %v1005 = vunpack.c.l.b16 %v281
        %v1006 = vunpack.c.l.b16 %v282
        %v1007 = vunpack.c.l.b16 %v283
        %v1008 = vunpack.c.l.b16 %v284
        %v1009 = vunpack.c.l.b16 %v285
        %v1010 = vunpack.c.l.b16 %v286
        %v1011 = vunpack.c.l.b16 %v287
        %v1012 = vunpack.c.l.b16 %v288
        %v1013 = vunpack.c.l.b16 %v289
        %v1014 = vunpack.c.l.b16 %v290
        %v1015 = vunpack.c.l.b16 %v291
        %v1016 = vunpack.c.l.b16 %v292
        %v1017 = vunpack.c.l.b16 %v293
        %v1018 = vunpack.c.l.b16 %v294
        %v1019 = vunpack.c.l.b16 %v295
        %v1020 = vunpack.c.l.b16 %v296
        %v1021 = vunpack.c.l.b16 %v297
        %v1022 = vunpack.c.l.b16 %v298
        %v1023 = vunpack.c.l.b16 %v299
        %v1024 = vunpack.c.l.b16 %v300
        %v1025 = vunpack.c.l.b16 %v301
        %v1026 = vunpack.c.l.b16 %v302
        %v1027 = vunpack.c.l.b16 %v303
        %v1028 = vunpack.c.l.b16 %v304
        %v1029 = vunpack.c.l.b16 %v305
        %v1030 = vunpack.c.l.b16 %v306
        %v1031 = vunpack.c.l.b16 %v307
        %v1032 = vunpack.c.l.b16 %v308
        %v1033 = vunpack.c.l.b16 %v309
        %v1034 = vpack.c.b16 %v1003, %v1002
        %v1035 = vpack.c.b16 %v1005, %v1004
        %v1036 = vpack.c.b16 %v1007, %v1006
        %v1037 = vpack.c.b16 %v1009, %v1008
        %v1038 = vpack.c.b16 %v1011, %v1010
        %v1039 = vpack.c.b16 %v1013, %v1012
        %v1040 = vpack.c.b16 %v1015, %v1014
        %v1041 = vpack.c.b16 %v1017, %v1016
        %v1042 = vpack.c.b16 %v1019, %v1018
        %v1043 = vpack.c.b16 %v1021, %v1020
        %v1044 = vpack.c.b16 %v1023, %v1022
        %v1045 = vpack.c.b16 %v1025, %v1024
        %v1046 = vpack.c.b16 %v1027, %v1026
        %v1047 = vpack.c.b16 %v1029, %v1028
        %v1048 = vpack.c.b16 %v1031, %v1030
        %v1049 = vpack.c.b16 %v1033, %v1032
        %v1098 = vunpack.c.l.b16 %v310
        %v1099 = vunpack.c.h.b16 %v310
        %v1100 = vunpack.c.l.b16 %v311
        %v1101 = vunpack.c.l.b16 %v312
        %v1102 = vunpack.c.h.b16 %v312
        %v1103 = vunpack.c.l.b16 %v313
        %v1104 = vunpack.c.l.b16 %v314
        %v1105 = vunpack.c.h.b16 %v314
        %v1106 = vunpack.c.l.b16 %v315
        %v1107 = vunpack.c.l.b16 %v316
        %v1108 = vunpack.c.h.b16 %v316
        %v1109 = vunpack.c.l.b16 %v317
        %v1110 = vunpack.c.l.b16 %v318
        %v1111 = vunpack.c.h.b16 %v318
        %v1112 = vunpack.c.l.b16 %v319
        %v1113 = vunpack.c.l.b16 %v320
        %v1114 = vunpack.c.h.b16 %v320
        %v1115 = vunpack.c.l.b16 %v321
        %v1116 = vunpack.c.l.b16 %v322
        %v1117 = vunpack.c.h.b16 %v322
        %v1118 = vunpack.c.l.b16 %v323
        %v1119 = vunpack.c.l.b16 %v324
        %v1120 = vunpack.c.h.b16 %v324
        %v1121 = vunpack.c.l.b16 %v325
        %v1122 = vunpack.c.l.b16 %v326
        %v1123 = vunpack.c.h.b16 %v326
        %v1124 = vunpack.c.l.b16 %v327
        %v1125 = vunpack.c.l.b16 %v328
        %v1126 = vunpack.c.h.b16 %v328
        %v1127 = vunpack.c.l.b16 %v329
        %v1128 = vunpack.c.l.b16 %v330
        %v1129 = vunpack.c.h.b16 %v330
        %v1130 = vunpack.c.l.b16 %v331
        %v1131 = vunpack.c.l.b16 %v332
        %v1132 = vunpack.c.h.b16 %v332
        %v1133 = vunpack.c.l.b16 %v333
        %v1134 = vunpack.c.l.b16 %v334
        %v1135 = vunpack.c.h.b16 %v334
        %v1136 = vunpack.c.l.b16 %v335
        %v1137 = vunpack.c.l.b16 %v336
        %v1138 = vunpack.c.h.b16 %v336
        %v1139 = vunpack.c.l.b16 %v337
        %v1140 = vunpack.c.l.b16 %v338
        %v1141 = vunpack.c.h.b16 %v338
        %v1142 = vunpack.c.l.b16 %v339
        %v1143 = vunpack.c.l.b16 %v340
        %v1144 = vunpack.c.h.b16 %v340
        %v1145 = vunpack.c.l.b16 %v341
        %v1146 = vpack.c.b16 %v1101, %v1098
        %v1147 = vpack.c.b16 %v1102, %v1099
        %v1148 = vpack.c.b16 %v1103, %v1100
        %v1149 = vpack.c.b16 %v1107, %v1104
        %v1150 = vpack.c.b16 %v1108, %v1105
        %v1151 = vpack.c.b16 %v1109, %v1106
        %v1152 = vpack.c.b16 %v1113, %v1110
        %v1153 = vpack.c.b16 %v1114, %v1111
        %v1154 = vpack.c.b16 %v1115, %v1112
        %v1155 = vpack.c.b16 %v1119, %v1116
        %v1156 = vpack.c.b16 %v1120, %v1117
        %v1157 = vpack.c.b16 %v1121, %v1118
        %v1158 = vpack.c.b16 %v1125, %v1122
        %v1159 = vpack.c.b16 %v1126, %v1123
        %v1160 = vpack.c.b16 %v1127, %v1124
        %v1161 = vpack.c.b16 %v1131, %v1128
        %v1162 = vpack.c.b16 %v1132, %v1129
        %v1163 = vpack.c.b16 %v1133, %v1130
        %v1164 = vpack.c.b16 %v1137, %v1134
        %v1165 = vpack.c.b16 %v1138, %v1135
        %v1166 = vpack.c.b16 %v1139, %v1136
        %v1167 = vpack.c.b16 %v1143, %v1140
        %v1168 = vpack.c.b16 %v1144, %v1141
        %v1169 = vpack.c.b16 %v1145, %v1142
        %1194 = vmatprep.subr.bf16.mxu0 %v1147
        %1195 = vmatpush1.bf16.msra.mxu0 %v1146
        %1196 = vmatprep.subr.bf16.mxu0 %v1150
        %1197 = vmatpush1.bf16.msra.mxu0 %v1149
        %1198 = vmatprep.subr.bf16.mxu0 %v1153
        %1199 = vmatpush1.bf16.msra.mxu0 %v1152
        %1200 = vmatprep.subr.bf16.mxu0 %v1156
        %1201 = vmatpush1.bf16.msra.mxu0 %v1155
        %1202 = vmatprep.subr.bf16.mxu0 %v1159
        %1203 = vmatpush1.bf16.msra.mxu0 %v1158
        %1204 = vmatprep.subr.bf16.mxu0 %v1162
        %1205 = vmatpush1.bf16.msra.mxu0 %v1161
        %1206 = vmatprep.subr.bf16.mxu0 %v1165
        %1207 = vmatpush1.bf16.msra.mxu0 %v1164
        %1208 = vmatprep.subr.bf16.mxu0 %v1168
        %1209 = vmatpush1.bf16.msra.mxu0 %v1167
        %1210 = vmatprep.subr.bf16.mxu0 0
        %1211 = vmatpush1.bf16.msra.mxu0 0
        %1212 = vmatprep.subr.bf16.mxu0 0
        %1213 = vmatpush1.bf16.msra.mxu0 0
        %1214 = vmatprep.subr.bf16.mxu0 0
        %1215 = vmatpush1.bf16.msra.mxu0 0
        %1216 = vmatprep.subr.bf16.mxu0 0
        %1217 = vmatpush1.bf16.msra.mxu0 0
        %1218 = vmatprep.subr.bf16.mxu0 0
        %1219 = vmatpush1.bf16.msra.mxu0 0
        %1220 = vmatprep.subr.bf16.mxu0 0
        %1221 = vmatpush1.bf16.msra.mxu0 0
        %1222 = vmatprep.subr.bf16.mxu0 0
        %1223 = vmatpush1.bf16.msra.mxu0 0
        %1224 = vmatprep.subr.bf16.mxu0 0
        %1225 = vmatpush1.bf16.msra.mxu0 0
        %1226 = vmatprep.mubr.bf16.mxu0 0
        %1227 = vmatmul.mubr.bf16.gmra.mrb[0].mxu0 %v1034
        %v1228 = vpop.f32.mrb[0].mxu0
        %v1229 = vadd.f32 %v667, %v1228
        %v1230 = vpop.f32.mrb[0].mxu0
        %v1231 = vadd.f32 %v669, %v1230
        %v1232 = vpop.f32.mrb[0].mxu0
        %v1233 = vpop.f32.mrb[0].mxu0
        %v1234 = vadd.f32 %v672, %v1233
        %1235 = vmatprep.mubr.bf16.mxu0 0
        %1236 = vmatmul.mubr.bf16.gmra.mrb[0].mxu0 %v1035
        %v1237 = vpop.f32.mrb[0].mxu0
        %v1238 = vadd.f32 %v676, %v1237
        %v1239 = vpop.f32.mrb[0].mxu0
        %v1240 = vadd.f32 %v678, %v1239
        %v1241 = vpop.f32.mrb[0].mxu0
        %v1242 = vpop.f32.mrb[0].mxu0
        %v1243 = vadd.f32 %v681, %v1242
        %1244 = vmatprep.mubr.bf16.mxu0 0
        %1245 = vmatmul.mubr.bf16.gmra.mrb[0].mxu0 %v1036
        %v1246 = vpop.f32.mrb[0].mxu0
        %v1247 = vadd.f32 %v685, %v1246
        %v1248 = vpop.f32.mrb[0].mxu0
        %v1249 = vadd.f32 %v687, %v1248
        %v1250 = vpop.f32.mrb[0].mxu0
        %v1251 = vpop.f32.mrb[0].mxu0
        %v1252 = vadd.f32 %v690, %v1251
        %1253 = vmatprep.mubr.bf16.mxu0 0
        %1254 = vmatmul.mubr.bf16.gmra.mrb[0].mxu0 %v1037
        %v1255 = vpop.f32.mrb[0].mxu0
        %v1256 = vadd.f32 %v694, %v1255
        %v1257 = vpop.f32.mrb[0].mxu0
        %v1258 = vadd.f32 %v696, %v1257
        %v1259 = vpop.f32.mrb[0].mxu0
        %v1260 = vpop.f32.mrb[0].mxu0
        %v1261 = vadd.f32 %v699, %v1260
        %1262 = vmatprep.mubr.bf16.mxu0 0
        %1263 = vmatmul.mubr.bf16.gmra.mrb[0].mxu0 %v1038
        %v1264 = vpop.f32.mrb[0].mxu0
        %v1265 = vadd.f32 %v703, %v1264
        %v1266 = vpop.f32.mrb[0].mxu0
        %v1267 = vadd.f32 %v705, %v1266
        %v1268 = vpop.f32.mrb[0].mxu0
        %v1269 = vpop.f32.mrb[0].mxu0
        %v1270 = vadd.f32 %v708, %v1269
        %1271 = vmatprep.mubr.bf16.mxu0 0
        %1272 = vmatmul.mubr.bf16.gmra.mrb[0].mxu0 %v1039
        %v1273 = vpop.f32.mrb[0].mxu0
        %v1274 = vadd.f32 %v712, %v1273
        %v1275 = vpop.f32.mrb[0].mxu0
        %v1276 = vadd.f32 %v714, %v1275
        %v1277 = vpop.f32.mrb[0].mxu0
        %v1278 = vpop.f32.mrb[0].mxu0
        %v1279 = vadd.f32 %v717, %v1278
        %1280 = vmatprep.mubr.bf16.mxu0 0
        %1281 = vmatmul.mubr.bf16.gmra.mrb[0].mxu0 %v1040
        %v1282 = vpop.f32.mrb[0].mxu0
        %v1283 = vadd.f32 %v721, %v1282
        %v1284 = vpop.f32.mrb[0].mxu0
        %v1285 = vadd.f32 %v723, %v1284
        %v1286 = vpop.f32.mrb[0].mxu0
        %v1287 = vpop.f32.mrb[0].mxu0
        %v1288 = vadd.f32 %v726, %v1287
        %1289 = vmatprep.mubr.bf16.mxu0 0
        %1290 = vmatmul.mubr.bf16.gmra.mrb[0].mxu0 %v1041
        %v1291 = vpop.f32.mrb[0].mxu0
        %v1292 = vadd.f32 %v730, %v1291
        %v1293 = vpop.f32.mrb[0].mxu0
        %v1294 = vadd.f32 %v732, %v1293
        %v1295 = vpop.f32.mrb[0].mxu0
        %v1296 = vpop.f32.mrb[0].mxu0
        %v1297 = vadd.f32 %v735, %v1296
        %1298 = vmatprep.mubr.bf16.mxu0 0
        %1299 = vmatmul.mubr.bf16.gmra.mrb[0].mxu0 %v1042
        %v1300 = vpop.f32.mrb[0].mxu0
        %v1301 = vadd.f32 %v739, %v1300
        %v1302 = vpop.f32.mrb[0].mxu0
        %v1303 = vadd.f32 %v741, %v1302
        %v1304 = vpop.f32.mrb[0].mxu0
        %v1305 = vpop.f32.mrb[0].mxu0
        %v1306 = vadd.f32 %v744, %v1305
        %1307 = vmatprep.mubr.bf16.mxu0 0
        %1308 = vmatmul.mubr.bf16.gmra.mrb[0].mxu0 %v1043
        %v1309 = vpop.f32.mrb[0].mxu0
        %v1310 = vadd.f32 %v748, %v1309
        %v1311 = vpop.f32.mrb[0].mxu0
        %v1312 = vadd.f32 %v750, %v1311
        %v1313 = vpop.f32.mrb[0].mxu0
        %v1314 = vpop.f32.mrb[0].mxu0
        %v1315 = vadd.f32 %v753, %v1314
        %1316 = vmatprep.mubr.bf16.mxu0 0
        %1317 = vmatmul.mubr.bf16.gmra.mrb[0].mxu0 %v1044
        %v1318 = vpop.f32.mrb[0].mxu0
        %v1319 = vadd.f32 %v757, %v1318
        %v1320 = vpop.f32.mrb[0].mxu0
        %v1321 = vadd.f32 %v759, %v1320
        %v1322 = vpop.f32.mrb[0].mxu0
        %v1323 = vpop.f32.mrb[0].mxu0
        %v1324 = vadd.f32 %v762, %v1323
        %1325 = vmatprep.mubr.bf16.mxu0 0
        %1326 = vmatmul.mubr.bf16.gmra.mrb[0].mxu0 %v1045
        %v1327 = vpop.f32.mrb[0].mxu0
        %v1328 = vadd.f32 %v766, %v1327
        %v1329 = vpop.f32.mrb[0].mxu0
        %v1330 = vadd.f32 %v768, %v1329
        %v1331 = vpop.f32.mrb[0].mxu0
        %v1332 = vpop.f32.mrb[0].mxu0
        %v1333 = vadd.f32 %v771, %v1332
        %1334 = vmatprep.mubr.bf16.mxu0 0
        %1335 = vmatmul.mubr.bf16.gmra.mrb[0].mxu0 %v1046
        %v1336 = vpop.f32.mrb[0].mxu0
        %v1337 = vadd.f32 %v775, %v1336
        %v1338 = vpop.f32.mrb[0].mxu0
        %v1339 = vadd.f32 %v777, %v1338
        %v1340 = vpop.f32.mrb[0].mxu0
        %v1341 = vpop.f32.mrb[0].mxu0
        %v1342 = vadd.f32 %v780, %v1341
        %1343 = vmatprep.mubr.bf16.mxu0 0
        %1344 = vmatmul.mubr.bf16.gmra.mrb[0].mxu0 %v1047
        %v1345 = vpop.f32.mrb[0].mxu0
        %v1346 = vadd.f32 %v784, %v1345
        %v1347 = vpop.f32.mrb[0].mxu0
        %v1348 = vadd.f32 %v786, %v1347
        %v1349 = vpop.f32.mrb[0].mxu0
        %v1350 = vpop.f32.mrb[0].mxu0
        %v1351 = vadd.f32 %v789, %v1350
        %1352 = vmatprep.mubr.bf16.mxu0 0
        %1353 = vmatmul.mubr.bf16.gmra.mrb[0].mxu0 %v1048
        %v1354 = vpop.f32.mrb[0].mxu0
        %v1355 = vadd.f32 %v793, %v1354
        %v1356 = vpop.f32.mrb[0].mxu0
        %v1357 = vadd.f32 %v795, %v1356
        %v1358 = vpop.f32.mrb[0].mxu0
        %v1359 = vpop.f32.mrb[0].mxu0
        %v1360 = vadd.f32 %v798, %v1359
        %1361 = vmatprep.mubr.bf16.mxu0 0
        %1362 = vmatmul.mubr.bf16.gmra.mrb[0].mxu0 %v1049
        %v1363 = vpop.f32.mrb[0].mxu0
        %v1364 = vadd.f32 %v802, %v1363
        %v1365 = vpop.f32.mrb[0].mxu0
        %v1366 = vadd.f32 %v804, %v1365
        %v1367 = vpop.f32.mrb[0].mxu0
        %v1368 = vpop.f32.mrb[0].mxu0
        %v1369 = vadd.f32 %v807, %v1368
        %1370 = vdwg.mxu0
        %1371 = vmatprep.subr.bf16.mxu0 0
        %1372 = vmatpush1.bf16.msra.mxu0 %v1148
        %1373 = vmatprep.subr.bf16.mxu0 0
        %1374 = vmatpush1.bf16.msra.mxu0 %v1151
        %1375 = vmatprep.subr.bf16.mxu0 0
        %1376 = vmatpush1.bf16.msra.mxu0 %v1154
        %1377 = vmatprep.subr.bf16.mxu0 0
        %1378 = vmatpush1.bf16.msra.mxu0 %v1157
        %1379 = vmatprep.subr.bf16.mxu0 0
        %1380 = vmatpush1.bf16.msra.mxu0 %v1160
        %1381 = vmatprep.subr.bf16.mxu0 0
        %1382 = vmatpush1.bf16.msra.mxu0 %v1163
        %1383 = vmatprep.subr.bf16.mxu0 0
        %1384 = vmatpush1.bf16.msra.mxu0 %v1166
        %1385 = vmatprep.subr.bf16.mxu0 0
        %1386 = vmatpush1.bf16.msra.mxu0 %v1169
        %1387 = vmatprep.subr.bf16.mxu0 0
        %1388 = vmatpush1.bf16.msra.mxu0 0
        %1389 = vmatprep.subr.bf16.mxu0 0
        %1390 = vmatpush1.bf16.msra.mxu0 0
        %1391 = vmatprep.subr.bf16.mxu0 0
        %1392 = vmatpush1.bf16.msra.mxu0 0
        %1393 = vmatprep.subr.bf16.mxu0 0
        %1394 = vmatpush1.bf16.msra.mxu0 0
        %1395 = vmatprep.subr.bf16.mxu0 0
        %1396 = vmatpush1.bf16.msra.mxu0 0
        %1397 = vmatprep.subr.bf16.mxu0 0
        %1398 = vmatpush1.bf16.msra.mxu0 0
        %1399 = vmatprep.subr.bf16.mxu0 0
        %1400 = vmatpush1.bf16.msra.mxu0 0
        %1401 = vmatprep.subr.bf16.mxu0 0
        %1402 = vmatpush1.bf16.msra.mxu0 0
        %1403 = vmatprep.mubr.bf16.mxu0 0
        %1404 = vmatmul.mubr.bf16.gmra.mrb[0].mxu0 %v1034
        %v1405 = vpop.f32.mrb[0].mxu0
        %v1406 = vadd.f32 %v844, %v1405
        %v1407 = vpop.f32.mrb[0].mxu0
        %v1408 = vpop.f32.mrb[0].mxu0
        %v1409 = vadd.f32 %v847, %v1408
        %v1410 = vpop.f32.mrb[0].mxu0
        %1411 = vmatprep.mubr.bf16.mxu0 0
        %1412 = vmatmul.mubr.bf16.gmra.mrb[0].mxu0 %v1035
        %v1413 = vpop.f32.mrb[0].mxu0
        %v1414 = vadd.f32 %v852, %v1413
        %v1415 = vpop.f32.mrb[0].mxu0
        %v1416 = vpop.f32.mrb[0].mxu0
        %v1417 = vadd.f32 %v855, %v1416
        %v1418 = vpop.f32.mrb[0].mxu0
        %1419 = vmatprep.mubr.bf16.mxu0 0
        %1420 = vmatmul.mubr.bf16.gmra.mrb[0].mxu0 %v1036
        %v1421 = vpop.f32.mrb[0].mxu0
        %v1422 = vadd.f32 %v860, %v1421
        %v1423 = vpop.f32.mrb[0].mxu0
        %v1424 = vpop.f32.mrb[0].mxu0
        %v1425 = vadd.f32 %v863, %v1424
        %v1426 = vpop.f32.mrb[0].mxu0
        %1427 = vmatprep.mubr.bf16.mxu0 0
        %1428 = vmatmul.mubr.bf16.gmra.mrb[0].mxu0 %v1037
        %v1429 = vpop.f32.mrb[0].mxu0
        %v1430 = vadd.f32 %v868, %v1429
        %v1431 = vpop.f32.mrb[0].mxu0
        %v1432 = vpop.f32.mrb[0].mxu0
        %v1433 = vadd.f32 %v871, %v1432
        %v1434 = vpop.f32.mrb[0].mxu0
        %1435 = vmatprep.mubr.bf16.mxu0 0
        %1436 = vmatmul.mubr.bf16.gmra.mrb[0].mxu0 %v1038
        %v1437 = vpop.f32.mrb[0].mxu0
        %v1438 = vadd.f32 %v876, %v1437
        %v1439 = vpop.f32.mrb[0].mxu0
        %v1440 = vpop.f32.mrb[0].mxu0
        %v1441 = vadd.f32 %v879, %v1440
        %v1442 = vpop.f32.mrb[0].mxu0
        %1443 = vmatprep.mubr.bf16.mxu0 0
        %1444 = vmatmul.mubr.bf16.gmra.mrb[0].mxu0 %v1039
        %v1445 = vpop.f32.mrb[0].mxu0
        %v1446 = vadd.f32 %v884, %v1445
        %v1447 = vpop.f32.mrb[0].mxu0
        %v1448 = vpop.f32.mrb[0].mxu0
        %v1449 = vadd.f32 %v887, %v1448
        %v1450 = vpop.f32.mrb[0].mxu0
        %1451 = vmatprep.mubr.bf16.mxu0 0
        %1452 = vmatmul.mubr.bf16.gmra.mrb[0].mxu0 %v1040
        %v1453 = vpop.f32.mrb[0].mxu0
        %v1454 = vadd.f32 %v892, %v1453
        %v1455 = vpop.f32.mrb[0].mxu0
        %v1456 = vpop.f32.mrb[0].mxu0
        %v1457 = vadd.f32 %v895, %v1456
        %v1458 = vpop.f32.mrb[0].mxu0
        %1459 = vmatprep.mubr.bf16.mxu0 0
        %1460 = vmatmul.mubr.bf16.gmra.mrb[0].mxu0 %v1041
        %v1461 = vpop.f32.mrb[0].mxu0
        %v1462 = vadd.f32 %v900, %v1461
        %v1463 = vpop.f32.mrb[0].mxu0
        %v1464 = vpop.f32.mrb[0].mxu0
        %v1465 = vadd.f32 %v903, %v1464
        %v1466 = vpop.f32.mrb[0].mxu0
        %1467 = vmatprep.mubr.bf16.mxu0 0
        %1468 = vmatmul.mubr.bf16.gmra.mrb[0].mxu0 %v1042
        %v1469 = vpop.f32.mrb[0].mxu0
        %v1470 = vadd.f32 %v908, %v1469
        %v1471 = vpop.f32.mrb[0].mxu0
        %v1472 = vpop.f32.mrb[0].mxu0
        %v1473 = vadd.f32 %v911, %v1472
        %v1474 = vpop.f32.mrb[0].mxu0
        %1475 = vmatprep.mubr.bf16.mxu0 0
        %1476 = vmatmul.mubr.bf16.gmra.mrb[0].mxu0 %v1043
        %v1477 = vpop.f32.mrb[0].mxu0
        %v1478 = vadd.f32 %v916, %v1477
        %v1479 = vpop.f32.mrb[0].mxu0
        %v1480 = vpop.f32.mrb[0].mxu0
        %v1481 = vadd.f32 %v919, %v1480
        %v1482 = vpop.f32.mrb[0].mxu0
        %1483 = vmatprep.mubr.bf16.mxu0 0
        %1484 = vmatmul.mubr.bf16.gmra.mrb[0].mxu0 %v1044
        %v1485 = vpop.f32.mrb[0].mxu0
        %v1486 = vadd.f32 %v924, %v1485
        %v1487 = vpop.f32.mrb[0].mxu0
        %v1488 = vpop.f32.mrb[0].mxu0
        %v1489 = vadd.f32 %v927, %v1488
        %v1490 = vpop.f32.mrb[0].mxu0
        %1491 = vmatprep.mubr.bf16.mxu0 0
        %1492 = vmatmul.mubr.bf16.gmra.mrb[0].mxu0 %v1045
        %v1493 = vpop.f32.mrb[0].mxu0
        %v1494 = vadd.f32 %v932, %v1493
        %v1495 = vpop.f32.mrb[0].mxu0
        %v1496 = vpop.f32.mrb[0].mxu0
        %v1497 = vadd.f32 %v935, %v1496
        %v1498 = vpop.f32.mrb[0].mxu0
        %1499 = vmatprep.mubr.bf16.mxu0 0
        %1500 = vmatmul.mubr.bf16.gmra.mrb[0].mxu0 %v1046
        %v1501 = vpop.f32.mrb[0].mxu0
        %v1502 = vadd.f32 %v940, %v1501
        %v1503 = vpop.f32.mrb[0].mxu0
        %v1504 = vpop.f32.mrb[0].mxu0
        %v1505 = vadd.f32 %v943, %v1504
        %v1506 = vpop.f32.mrb[0].mxu0
        %1507 = vmatprep.mubr.bf16.mxu0 0
        %1508 = vmatmul.mubr.bf16.gmra.mrb[0].mxu0 %v1047
        %v1509 = vpop.f32.mrb[0].mxu0
        %v1510 = vadd.f32 %v948, %v1509
        %v1511 = vpop.f32.mrb[0].mxu0
        %v1512 = vpop.f32.mrb[0].mxu0
        %v1513 = vadd.f32 %v951, %v1512
        %v1514 = vpop.f32.mrb[0].mxu0
        %1515 = vmatprep.mubr.bf16.mxu0 0
        %1516 = vmatmul.mubr.bf16.gmra.mrb[0].mxu0 %v1048
        %v1517 = vpop.f32.mrb[0].mxu0
        %v1518 = vadd.f32 %v956, %v1517
        %v1519 = vpop.f32.mrb[0].mxu0
        %v1520 = vpop.f32.mrb[0].mxu0
        %v1521 = vadd.f32 %v959, %v1520
        %v1522 = vpop.f32.mrb[0].mxu0
        %1523 = vmatprep.mubr.bf16.mxu0 0
        %1524 = vmatmul.mubr.bf16.gmra.mrb[0].mxu0 %v1049
        %v1525 = vpop.f32.mrb[0].mxu0
        %v1526 = vadd.f32 %v964, %v1525
        %v1527 = vpop.f32.mrb[0].mxu0
        %v1528 = vpop.f32.mrb[0].mxu0
        %v1529 = vadd.f32 %v967, %v1528
        %v1530 = vpop.f32.mrb[0].mxu0
        %1531 = vdwg.mxu0
        %s1532 = scalar_lea.vmem %s238, 16 [#allocation3]
        %v1533 = vld [vmem:[%s1532] sm:$0xf]
        %v1534 = vld [vmem:[%s1532 + $0x4] sm:$0xf]
        %v1535 = vld [vmem:[%s1532 + $0x8] sm:$0xf]
        %v1536 = vld [vmem:[%s1532 + $0xc] sm:$0xf]
        %v1537 = vld [vmem:[%s1532 + $0x10] sm:$0xf]
        %v1538 = vld [vmem:[%s1532 + $0x14] sm:$0xf]
        %v1539 = vld [vmem:[%s1532 + $0x18] sm:$0xf]
        %v1540 = vld [vmem:[%s1532 + $0x1c] sm:$0xf]
        %v1541 = vld [vmem:[%s1532 + $0x20] sm:$0xf]
        %v1542 = vld [vmem:[%s1532 + $0x24] sm:$0xf]
        %v1543 = vld [vmem:[%s1532 + $0x28] sm:$0xf]
        %v1544 = vld [vmem:[%s1532 + $0x2c] sm:$0xf]
        %v1545 = vld [vmem:[%s1532 + $0x30] sm:$0xf]
        %v1546 = vld [vmem:[%s1532 + $0x34] sm:$0xf]
        %v1547 = vld [vmem:[%s1532 + $0x38] sm:$0xf]
        %v1548 = vld [vmem:[%s1532 + $0x3c] sm:$0xf]
        %v1549 = vld [vmem:[%s1532 + $0x50] sm:$0xf]
        %v1550 = vld [vmem:[%s1532 + $0x54] sm:$0xf]
        %v1551 = vld [vmem:[%s1532 + $0x58] sm:$0xf]
        %v1552 = vld [vmem:[%s1532 + $0x5c] sm:$0xf]
        %v1553 = vld [vmem:[%s1532 + $0x60] sm:$0xf]
        %v1554 = vld [vmem:[%s1532 + $0x64] sm:$0xf]
        %v1555 = vld [vmem:[%s1532 + $0x68] sm:$0xf]
        %v1556 = vld [vmem:[%s1532 + $0x6c] sm:$0xf]
        %v1557 = vld [vmem:[%s1532 + $0x70] sm:$0xf]
        %v1558 = vld [vmem:[%s1532 + $0x74] sm:$0xf]
        %v1559 = vld [vmem:[%s1532 + $0x78] sm:$0xf]
        %v1560 = vld [vmem:[%s1532 + $0x7c] sm:$0xf]
        %v1561 = vld [vmem:[%s1532 + $0x80] sm:$0xf]
        %v1562 = vld [vmem:[%s1532 + $0x84] sm:$0xf]
        %v1563 = vld [vmem:[%s1532 + $0x88] sm:$0xf]
        %v1564 = vld [vmem:[%s1532 + $0x8c] sm:$0xf]
        %s1565 = scalar_lea.vmem [#allocation6], 384
        %v1566 = vld [vmem:[%s1565] sm:$0xff]
        %v1567 = vld [vmem:[%s1565 + $0x8] sm:$0xf]
        %v1568 = vld [vmem:[%s1565 + $0xc] sm:$0xff]
        %v1569 = vld [vmem:[%s1565 + $0x14] sm:$0xf]
        %v1570 = vld [vmem:[%s1565 + $0x18] sm:$0xff]
        %v1571 = vld [vmem:[%s1565 + $0x20] sm:$0xf]
        %v1572 = vld [vmem:[%s1565 + $0x24] sm:$0xff]
        %v1573 = vld [vmem:[%s1565 + $0x2c] sm:$0xf]
        %v1574 = vld [vmem:[%s1565 + $0x30] sm:$0xff]
        %v1575 = vld [vmem:[%s1565 + $0x38] sm:$0xf]
        %v1576 = vld [vmem:[%s1565 + $0x3c] sm:$0xff]
        %v1577 = vld [vmem:[%s1565 + $0x44] sm:$0xf]
        %v1578 = vld [vmem:[%s1565 + $0x48] sm:$0xff]
        %v1579 = vld [vmem:[%s1565 + $0x50] sm:$0xf]
        %v1580 = vld [vmem:[%s1565 + $0x54] sm:$0xff]
        %v1581 = vld [vmem:[%s1565 + $0x5c] sm:$0xf]
        %v1582 = vld [vmem:[%s1565 + $0x60] sm:$0xff]
        %v1583 = vld [vmem:[%s1565 + $0x68] sm:$0xf]
        %v1584 = vld [vmem:[%s1565 + $0x6c] sm:$0xff]
        %v1585 = vld [vmem:[%s1565 + $0x74] sm:$0xf]
        %v1586 = vld [vmem:[%s1565 + $0x78] sm:$0xff]
        %v1587 = vld [vmem:[%s1565 + $0x80] sm:$0xf]
        %v1588 = vld [vmem:[%s1565 + $0x84] sm:$0xff]
        %v1589 = vld [vmem:[%s1565 + $0x8c] sm:$0xf]
        %v1590 = vld [vmem:[%s1565 + $0x90] sm:$0xff]
        %v1591 = vld [vmem:[%s1565 + $0x98] sm:$0xf]
        %v1592 = vld [vmem:[%s1565 + $0x9c] sm:$0xff]
        %v1593 = vld [vmem:[%s1565 + $0xa4] sm:$0xf]
        %v1594 = vld [vmem:[%s1565 + $0xa8] sm:$0xff]
        %v1595 = vld [vmem:[%s1565 + $0xb0] sm:$0xf]
        %v1596 = vld [vmem:[%s1565 + $0xb4] sm:$0xff]
        %v1597 = vld [vmem:[%s1565 + $0xbc] sm:$0xf]
        %v1630 = vunpack.c.l.b16 %v1533
        %v1631 = vunpack.c.l.b16 %v1534
        %v1632 = vunpack.c.l.b16 %v1535
        %v1633 = vunpack.c.l.b16 %v1536
        %v1634 = vunpack.c.l.b16 %v1537
        %v1635 = vunpack.c.l.b16 %v1538
        %v1636 = vunpack.c.l.b16 %v1539
        %v1637 = vunpack.c.l.b16 %v1540
        %v1638 = vunpack.c.l.b16 %v1541
        %v1639 = vunpack.c.l.b16 %v1542
        %v1640 = vunpack.c.l.b16 %v1543
        %v1641 = vunpack.c.l.b16 %v1544
        %v1642 = vunpack.c.l.b16 %v1545
        %v1643 = vunpack.c.l.b16 %v1546
        %v1644 = vunpack.c.l.b16 %v1547
        %v1645 = vunpack.c.l.b16 %v1548
        %v1646 = vunpack.c.l.b16 %v1549
        %v1647 = vunpack.c.l.b16 %v1550
        %v1648 = vunpack.c.l.b16 %v1551
        %v1649 = vunpack.c.l.b16 %v1552
        %v1650 = vunpack.c.l.b16 %v1553
        %v1651 = vunpack.c.l.b16 %v1554
        %v1652 = vunpack.c.l.b16 %v1555
        %v1653 = vunpack.c.l.b16 %v1556
        %v1654 = vunpack.c.l.b16 %v1557
        %v1655 = vunpack.c.l.b16 %v1558
        %v1656 = vunpack.c.l.b16 %v1559
        %v1657 = vunpack.c.l.b16 %v1560
        %v1658 = vunpack.c.l.b16 %v1561
        %v1659 = vunpack.c.l.b16 %v1562
        %v1660 = vunpack.c.l.b16 %v1563
        %v1661 = vunpack.c.l.b16 %v1564
        %v1662 = vpack.c.b16 %v1631, %v1630
        %v1663 = vpack.c.b16 %v1633, %v1632
        %v1664 = vpack.c.b16 %v1635, %v1634
        %v1665 = vpack.c.b16 %v1637, %v1636
        %v1666 = vpack.c.b16 %v1639, %v1638
        %v1667 = vpack.c.b16 %v1641, %v1640
        %v1668 = vpack.c.b16 %v1643, %v1642
        %v1669 = vpack.c.b16 %v1645, %v1644
        %v1670 = vpack.c.b16 %v1647, %v1646
        %v1671 = vpack.c.b16 %v1649, %v1648
        %v1672 = vpack.c.b16 %v1651, %v1650
        %v1673 = vpack.c.b16 %v1653, %v1652
        %v1674 = vpack.c.b16 %v1655, %v1654
        %v1675 = vpack.c.b16 %v1657, %v1656
        %v1676 = vpack.c.b16 %v1659, %v1658
        %v1677 = vpack.c.b16 %v1661, %v1660
        %v1726 = vunpack.c.l.b16 %v1566
        %v1727 = vunpack.c.h.b16 %v1566
        %v1728 = vunpack.c.l.b16 %v1567
        %v1729 = vunpack.c.l.b16 %v1568
        %v1730 = vunpack.c.h.b16 %v1568
        %v1731 = vunpack.c.l.b16 %v1569
        %v1732 = vunpack.c.l.b16 %v1570
        %v1733 = vunpack.c.h.b16 %v1570
        %v1734 = vunpack.c.l.b16 %v1571
        %v1735 = vunpack.c.l.b16 %v1572
        %v1736 = vunpack.c.h.b16 %v1572
        %v1737 = vunpack.c.l.b16 %v1573
        %v1738 = vunpack.c.l.b16 %v1574
        %v1739 = vunpack.c.h.b16 %v1574
        %v1740 = vunpack.c.l.b16 %v1575
        %v1741 = vunpack.c.l.b16 %v1576
        %v1742 = vunpack.c.h.b16 %v1576
        %v1743 = vunpack.c.l.b16 %v1577
        %v1744 = vunpack.c.l.b16 %v1578
        %v1745 = vunpack.c.h.b16 %v1578
        %v1746 = vunpack.c.l.b16 %v1579
        %v1747 = vunpack.c.l.b16 %v1580
        %v1748 = vunpack.c.h.b16 %v1580
        %v1749 = vunpack.c.l.b16 %v1581
        %v1750 = vunpack.c.l.b16 %v1582
        %v1751 = vunpack.c.h.b16 %v1582
        %v1752 = vunpack.c.l.b16 %v1583
        %v1753 = vunpack.c.l.b16 %v1584
        %v1754 = vunpack.c.h.b16 %v1584
        %v1755 = vunpack.c.l.b16 %v1585
        %v1756 = vunpack.c.l.b16 %v1586
        %v1757 = vunpack.c.h.b16 %v1586
        %v1758 = vunpack.c.l.b16 %v1587
        %v1759 = vunpack.c.l.b16 %v1588
        %v1760 = vunpack.c.h.b16 %v1588
        %v1761 = vunpack.c.l.b16 %v1589
        %v1762 = vunpack.c.l.b16 %v1590
        %v1763 = vunpack.c.h.b16 %v1590
        %v1764 = vunpack.c.l.b16 %v1591
        %v1765 = vunpack.c.l.b16 %v1592
        %v1766 = vunpack.c.h.b16 %v1592
        %v1767 = vunpack.c.l.b16 %v1593
        %v1768 = vunpack.c.l.b16 %v1594
        %v1769 = vunpack.c.h.b16 %v1594
        %v1770 = vunpack.c.l.b16 %v1595
        %v1771 = vunpack.c.l.b16 %v1596
        %v1772 = vunpack.c.h.b16 %v1596
        %v1773 = vunpack.c.l.b16 %v1597
        %v1774 = vpack.c.b16 %v1729, %v1726
        %v1775 = vpack.c.b16 %v1730, %v1727
        %v1776 = vpack.c.b16 %v1731, %v1728
        %v1777 = vpack.c.b16 %v1735, %v1732
        %v1778 = vpack.c.b16 %v1736, %v1733
        %v1779 = vpack.c.b16 %v1737, %v1734
        %v1780 = vpack.c.b16 %v1741, %v1738
        %v1781 = vpack.c.b16 %v1742, %v1739
        %v1782 = vpack.c.b16 %v1743, %v1740
        %v1783 = vpack.c.b16 %v1747, %v1744
        %v1784 = vpack.c.b16 %v1748, %v1745
        %v1785 = vpack.c.b16 %v1749, %v1746
        %v1786 = vpack.c.b16 %v1753, %v1750
        %v1787 = vpack.c.b16 %v1754, %v1751
        %v1788 = vpack.c.b16 %v1755, %v1752
        %v1789 = vpack.c.b16 %v1759, %v1756
        %v1790 = vpack.c.b16 %v1760, %v1757
        %v1791 = vpack.c.b16 %v1761, %v1758
        %v1792 = vpack.c.b16 %v1765, %v1762
        %v1793 = vpack.c.b16 %v1766, %v1763
        %v1794 = vpack.c.b16 %v1767, %v1764
        %v1795 = vpack.c.b16 %v1771, %v1768
        %v1796 = vpack.c.b16 %v1772, %v1769
        %v1797 = vpack.c.b16 %v1773, %v1770
        %1822 = vmatprep.subr.bf16.mxu0 %v1775
        %1823 = vmatpush1.bf16.msra.mxu0 %v1774
        %1824 = vmatprep.subr.bf16.mxu0 %v1778
        %1825 = vmatpush1.bf16.msra.mxu0 %v1777
        %1826 = vmatprep.subr.bf16.mxu0 %v1781
        %1827 = vmatpush1.bf16.msra.mxu0 %v1780
        %1828 = vmatprep.subr.bf16.mxu0 %v1784
        %1829 = vmatpush1.bf16.msra.mxu0 %v1783
        %1830 = vmatprep.subr.bf16.mxu0 %v1787
        %1831 = vmatpush1.bf16.msra.mxu0 %v1786
        %1832 = vmatprep.subr.bf16.mxu0 %v1790
        %1833 = vmatpush1.bf16.msra.mxu0 %v1789
        %1834 = vmatprep.subr.bf16.mxu0 %v1793
        %1835 = vmatpush1.bf16.msra.mxu0 %v1792
        %1836 = vmatprep.subr.bf16.mxu0 %v1796
        %1837 = vmatpush1.bf16.msra.mxu0 %v1795
        %1838 = vmatprep.subr.bf16.mxu0 0
        %1839 = vmatpush1.bf16.msra.mxu0 0
        %1840 = vmatprep.subr.bf16.mxu0 0
        %1841 = vmatpush1.bf16.msra.mxu0 0
        %1842 = vmatprep.subr.bf16.mxu0 0
        %1843 = vmatpush1.bf16.msra.mxu0 0
        %1844 = vmatprep.subr.bf16.mxu0 0
        %1845 = vmatpush1.bf16.msra.mxu0 0
        %1846 = vmatprep.subr.bf16.mxu0 0
        %1847 = vmatpush1.bf16.msra.mxu0 0
        %1848 = vmatprep.subr.bf16.mxu0 0
        %1849 = vmatpush1.bf16.msra.mxu0 0
        %1850 = vmatprep.subr.bf16.mxu0 0
        %1851 = vmatpush1.bf16.msra.mxu0 0
        %1852 = vmatprep.subr.bf16.mxu0 0
        %1853 = vmatpush1.bf16.msra.mxu0 0
        %1854 = vmatprep.mubr.bf16.mxu0 0
        %1855 = vmatmul.mubr.bf16.gmra.mrb[0].mxu0 %v1662
        %v1856 = vpop.f32.mrb[0].mxu0
        %v1857 = vadd.f32 0.0, %v1856
        %v1858 = vpop.f32.mrb[0].mxu0
        %v1859 = vadd.f32 0.0, %v1858
        %v1860 = vpop.f32.mrb[0].mxu0
        %v1861 = vpop.f32.mrb[0].mxu0
        %v1862 = vadd.f32 0.0, %v1861
        %1863 = vmatprep.mubr.bf16.mxu0 0
        %1864 = vmatmul.mubr.bf16.gmra.mrb[0].mxu0 %v1663
        %v1865 = vpop.f32.mrb[0].mxu0
        %v1866 = vadd.f32 0.0, %v1865
        %v1867 = vpop.f32.mrb[0].mxu0
        %v1868 = vadd.f32 0.0, %v1867
        %v1869 = vpop.f32.mrb[0].mxu0
        %v1870 = vpop.f32.mrb[0].mxu0
        %v1871 = vadd.f32 0.0, %v1870
        %1872 = vmatprep.mubr.bf16.mxu0 0
        %1873 = vmatmul.mubr.bf16.gmra.mrb[0].mxu0 %v1664
        %v1874 = vpop.f32.mrb[0].mxu0
        %v1875 = vadd.f32 0.0, %v1874
        %v1876 = vpop.f32.mrb[0].mxu0
        %v1877 = vadd.f32 0.0, %v1876
        %v1878 = vpop.f32.mrb[0].mxu0
        %v1879 = vpop.f32.mrb[0].mxu0
        %v1880 = vadd.f32 0.0, %v1879
        %1881 = vmatprep.mubr.bf16.mxu0 0
        %1882 = vmatmul.mubr.bf16.gmra.mrb[0].mxu0 %v1665
        %v1883 = vpop.f32.mrb[0].mxu0
        %v1884 = vadd.f32 0.0, %v1883
        %v1885 = vpop.f32.mrb[0].mxu0
        %v1886 = vadd.f32 0.0, %v1885
        %v1887 = vpop.f32.mrb[0].mxu0
        %v1888 = vpop.f32.mrb[0].mxu0
        %v1889 = vadd.f32 0.0, %v1888
        %1890 = vmatprep.mubr.bf16.mxu0 0
        %1891 = vmatmul.mubr.bf16.gmra.mrb[0].mxu0 %v1666
        %v1892 = vpop.f32.mrb[0].mxu0
        %v1893 = vadd.f32 0.0, %v1892
        %v1894 = vpop.f32.mrb[0].mxu0
        %v1895 = vadd.f32 0.0, %v1894
        %v1896 = vpop.f32.mrb[0].mxu0
        %v1897 = vpop.f32.mrb[0].mxu0
        %v1898 = vadd.f32 0.0, %v1897
        %1899 = vmatprep.mubr.bf16.mxu0 0
        %1900 = vmatmul.mubr.bf16.gmra.mrb[0].mxu0 %v1667
        %v1901 = vpop.f32.mrb[0].mxu0
        %v1902 = vadd.f32 0.0, %v1901
        %v1903 = vpop.f32.mrb[0].mxu0
        %v1904 = vadd.f32 0.0, %v1903
        %v1905 = vpop.f32.mrb[0].mxu0
        %v1906 = vpop.f32.mrb[0].mxu0
        %v1907 = vadd.f32 0.0, %v1906
        %1908 = vmatprep.mubr.bf16.mxu0 0
        %1909 = vmatmul.mubr.bf16.gmra.mrb[0].mxu0 %v1668
        %v1910 = vpop.f32.mrb[0].mxu0
        %v1911 = vadd.f32 0.0, %v1910
        %v1912 = vpop.f32.mrb[0].mxu0
        %v1913 = vadd.f32 0.0, %v1912
        %v1914 = vpop.f32.mrb[0].mxu0
        %v1915 = vpop.f32.mrb[0].mxu0
        %v1916 = vadd.f32 0.0, %v1915
        %1917 = vmatprep.mubr.bf16.mxu0 0
        %1918 = vmatmul.mubr.bf16.gmra.mrb[0].mxu0 %v1669
        %v1919 = vpop.f32.mrb[0].mxu0
        %v1920 = vadd.f32 0.0, %v1919
        %v1921 = vpop.f32.mrb[0].mxu0
        %v1922 = vadd.f32 0.0, %v1921
        %v1923 = vpop.f32.mrb[0].mxu0
        %v1924 = vpop.f32.mrb[0].mxu0
        %v1925 = vadd.f32 0.0, %v1924
        %1926 = vmatprep.mubr.bf16.mxu0 0
        %1927 = vmatmul.mubr.bf16.gmra.mrb[0].mxu0 %v1670
        %v1928 = vpop.f32.mrb[0].mxu0
        %v1929 = vadd.f32 0.0, %v1928
        %v1930 = vpop.f32.mrb[0].mxu0
        %v1931 = vadd.f32 0.0, %v1930
        %v1932 = vpop.f32.mrb[0].mxu0
        %v1933 = vpop.f32.mrb[0].mxu0
        %v1934 = vadd.f32 0.0, %v1933
        %1935 = vmatprep.mubr.bf16.mxu0 0
        %1936 = vmatmul.mubr.bf16.gmra.mrb[0].mxu0 %v1671
        %v1937 = vpop.f32.mrb[0].mxu0
        %v1938 = vadd.f32 0.0, %v1937
        %v1939 = vpop.f32.mrb[0].mxu0
        %v1940 = vadd.f32 0.0, %v1939
        %v1941 = vpop.f32.mrb[0].mxu0
        %v1942 = vpop.f32.mrb[0].mxu0
        %v1943 = vadd.f32 0.0, %v1942
        %1944 = vmatprep.mubr.bf16.mxu0 0
        %1945 = vmatmul.mubr.bf16.gmra.mrb[0].mxu0 %v1672
        %v1946 = vpop.f32.mrb[0].mxu0
        %v1947 = vadd.f32 0.0, %v1946
        %v1948 = vpop.f32.mrb[0].mxu0
        %v1949 = vadd.f32 0.0, %v1948
        %v1950 = vpop.f32.mrb[0].mxu0
        %v1951 = vpop.f32.mrb[0].mxu0
        %v1952 = vadd.f32 0.0, %v1951
        %1953 = vmatprep.mubr.bf16.mxu0 0
        %1954 = vmatmul.mubr.bf16.gmra.mrb[0].mxu0 %v1673
        %v1955 = vpop.f32.mrb[0].mxu0
        %v1956 = vadd.f32 0.0, %v1955
        %v1957 = vpop.f32.mrb[0].mxu0
        %v1958 = vadd.f32 0.0, %v1957
        %v1959 = vpop.f32.mrb[0].mxu0
        %v1960 = vpop.f32.mrb[0].mxu0
        %v1961 = vadd.f32 0.0, %v1960
        %1962 = vmatprep.mubr.bf16.mxu0 0
        %1963 = vmatmul.mubr.bf16.gmra.mrb[0].mxu0 %v1674
        %v1964 = vpop.f32.mrb[0].mxu0
        %v1965 = vadd.f32 0.0, %v1964
        %v1966 = vpop.f32.mrb[0].mxu0
        %v1967 = vadd.f32 0.0, %v1966
        %v1968 = vpop.f32.mrb[0].mxu0
        %v1969 = vpop.f32.mrb[0].mxu0
        %v1970 = vadd.f32 0.0, %v1969
        %1971 = vmatprep.mubr.bf16.mxu0 0
        %1972 = vmatmul.mubr.bf16.gmra.mrb[0].mxu0 %v1675
        %v1973 = vpop.f32.mrb[0].mxu0
        %v1974 = vadd.f32 0.0, %v1973
        %v1975 = vpop.f32.mrb[0].mxu0
        %v1976 = vadd.f32 0.0, %v1975
        %v1977 = vpop.f32.mrb[0].mxu0
        %v1978 = vpop.f32.mrb[0].mxu0
        %v1979 = vadd.f32 0.0, %v1978
        %1980 = vmatprep.mubr.bf16.mxu0 0
        %1981 = vmatmul.mubr.bf16.gmra.mrb[0].mxu0 %v1676
        %v1982 = vpop.f32.mrb[0].mxu0
        %v1983 = vadd.f32 0.0, %v1982
        %v1984 = vpop.f32.mrb[0].mxu0
        %v1985 = vadd.f32 0.0, %v1984
        %v1986 = vpop.f32.mrb[0].mxu0
        %v1987 = vpop.f32.mrb[0].mxu0
        %v1988 = vadd.f32 0.0, %v1987
        %1989 = vmatprep.mubr.bf16.mxu0 0
        %1990 = vmatmul.mubr.bf16.gmra.mrb[0].mxu0 %v1677
        %v1991 = vpop.f32.mrb[0].mxu0
        %v1992 = vadd.f32 0.0, %v1991
        %v1993 = vpop.f32.mrb[0].mxu0
        %v1994 = vadd.f32 0.0, %v1993
        %v1995 = vpop.f32.mrb[0].mxu0
        %v1996 = vpop.f32.mrb[0].mxu0
        %v1997 = vadd.f32 0.0, %v1996
        %1998 = vdwg.mxu0
        %1999 = vmatprep.subr.bf16.mxu0 0
        %2000 = vmatpush1.bf16.msra.mxu0 %v1776
        %2001 = vmatprep.subr.bf16.mxu0 0
        %2002 = vmatpush1.bf16.msra.mxu0 %v1779
        %2003 = vmatprep.subr.bf16.mxu0 0
        %2004 = vmatpush1.bf16.msra.mxu0 %v1782
        %2005 = vmatprep.subr.bf16.mxu0 0
        %2006 = vmatpush1.bf16.msra.mxu0 %v1785
        %2007 = vmatprep.subr.bf16.mxu0 0
        %2008 = vmatpush1.bf16.msra.mxu0 %v1788
        %2009 = vmatprep.subr.bf16.mxu0 0
        %2010 = vmatpush1.bf16.msra.mxu0 %v1791
        %2011 = vmatprep.subr.bf16.mxu0 0
        %2012 = vmatpush1.bf16.msra.mxu0 %v1794
        %2013 = vmatprep.subr.bf16.mxu0 0
        %2014 = vmatpush1.bf16.msra.mxu0 %v1797
        %2015 = vmatprep.subr.bf16.mxu0 0
        %2016 = vmatpush1.bf16.msra.mxu0 0
        %2017 = vmatprep.subr.bf16.mxu0 0
        %2018 = vmatpush1.bf16.msra.mxu0 0
        %2019 = vmatprep.subr.bf16.mxu0 0
        %2020 = vmatpush1.bf16.msra.mxu0 0
        %2021 = vmatprep.subr.bf16.mxu0 0
        %2022 = vmatpush1.bf16.msra.mxu0 0
        %2023 = vmatprep.subr.bf16.mxu0 0
        %2024 = vmatpush1.bf16.msra.mxu0 0
        %2025 = vmatprep.subr.bf16.mxu0 0
        %2026 = vmatpush1.bf16.msra.mxu0 0
        %2027 = vmatprep.subr.bf16.mxu0 0
        %2028 = vmatpush1.bf16.msra.mxu0 0
        %2029 = vmatprep.subr.bf16.mxu0 0
        %2030 = vmatpush1.bf16.msra.mxu0 0
        %2031 = vmatprep.mubr.bf16.mxu0 0
        %2032 = vmatmul.mubr.bf16.gmra.mrb[0].mxu0 %v1662
        %v2033 = vpop.f32.mrb[0].mxu0
        %v2034 = vadd.f32 0.0, %v2033
        %v2035 = vpop.f32.mrb[0].mxu0
        %v2036 = vpop.f32.mrb[0].mxu0
        %v2037 = vadd.f32 0.0, %v2036
        %v2038 = vpop.f32.mrb[0].mxu0
        %2039 = vmatprep.mubr.bf16.mxu0 0
        %2040 = vmatmul.mubr.bf16.gmra.mrb[0].mxu0 %v1663
        %v2041 = vpop.f32.mrb[0].mxu0
        %v2042 = vadd.f32 0.0, %v2041
        %v2043 = vpop.f32.mrb[0].mxu0
        %v2044 = vpop.f32.mrb[0].mxu0
        %v2045 = vadd.f32 0.0, %v2044
        %v2046 = vpop.f32.mrb[0].mxu0
        %2047 = vmatprep.mubr.bf16.mxu0 0
        %2048 = vmatmul.mubr.bf16.gmra.mrb[0].mxu0 %v1664
        %v2049 = vpop.f32.mrb[0].mxu0
        %v2050 = vadd.f32 0.0, %v2049
        %v2051 = vpop.f32.mrb[0].mxu0
        %v2052 = vpop.f32.mrb[0].mxu0
        %v2053 = vadd.f32 0.0, %v2052
        %v2054 = vpop.f32.mrb[0].mxu0
        %2055 = vmatprep.mubr.bf16.mxu0 0
        %2056 = vmatmul.mubr.bf16.gmra.mrb[0].mxu0 %v1665
        %v2057 = vpop.f32.mrb[0].mxu0
        %v2058 = vadd.f32 0.0, %v2057
        %v2059 = vpop.f32.mrb[0].mxu0
        %v2060 = vpop.f32.mrb[0].mxu0
        %v2061 = vadd.f32 0.0, %v2060
        %v2062 = vpop.f32.mrb[0].mxu0
        %2063 = vmatprep.mubr.bf16.mxu0 0
        %2064 = vmatmul.mubr.bf16.gmra.mrb[0].mxu0 %v1666
        %v2065 = vpop.f32.mrb[0].mxu0
        %v2066 = vadd.f32 0.0, %v2065
        %v2067 = vpop.f32.mrb[0].mxu0
        %v2068 = vpop.f32.mrb[0].mxu0
        %v2069 = vadd.f32 0.0, %v2068
        %v2070 = vpop.f32.mrb[0].mxu0
        %2071 = vmatprep.mubr.bf16.mxu0 0
        %2072 = vmatmul.mubr.bf16.gmra.mrb[0].mxu0 %v1667
        %v2073 = vpop.f32.mrb[0].mxu0
        %v2074 = vadd.f32 0.0, %v2073
        %v2075 = vpop.f32.mrb[0].mxu0
        %v2076 = vpop.f32.mrb[0].mxu0
        %v2077 = vadd.f32 0.0, %v2076
        %v2078 = vpop.f32.mrb[0].mxu0
        %2079 = vmatprep.mubr.bf16.mxu0 0
        %2080 = vmatmul.mubr.bf16.gmra.mrb[0].mxu0 %v1668
        %v2081 = vpop.f32.mrb[0].mxu0
        %v2082 = vadd.f32 0.0, %v2081
        %v2083 = vpop.f32.mrb[0].mxu0
        %v2084 = vpop.f32.mrb[0].mxu0
        %v2085 = vadd.f32 0.0, %v2084
        %v2086 = vpop.f32.mrb[0].mxu0
        %2087 = vmatprep.mubr.bf16.mxu0 0
        %2088 = vmatmul.mubr.bf16.gmra.mrb[0].mxu0 %v1669
        %v2089 = vpop.f32.mrb[0].mxu0
        %v2090 = vadd.f32 0.0, %v2089
        %v2091 = vpop.f32.mrb[0].mxu0
        %v2092 = vpop.f32.mrb[0].mxu0
        %v2093 = vadd.f32 0.0, %v2092
        %v2094 = vpop.f32.mrb[0].mxu0
        %2095 = vmatprep.mubr.bf16.mxu0 0
        %2096 = vmatmul.mubr.bf16.gmra.mrb[0].mxu0 %v1670
        %v2097 = vpop.f32.mrb[0].mxu0
        %v2098 = vadd.f32 0.0, %v2097
        %v2099 = vpop.f32.mrb[0].mxu0
        %v2100 = vpop.f32.mrb[0].mxu0
        %v2101 = vadd.f32 0.0, %v2100
        %v2102 = vpop.f32.mrb[0].mxu0
        %2103 = vmatprep.mubr.bf16.mxu0 0
        %2104 = vmatmul.mubr.bf16.gmra.mrb[0].mxu0 %v1671
        %v2105 = vpop.f32.mrb[0].mxu0
        %v2106 = vadd.f32 0.0, %v2105
        %v2107 = vpop.f32.mrb[0].mxu0
        %v2108 = vpop.f32.mrb[0].mxu0
        %v2109 = vadd.f32 0.0, %v2108
        %v2110 = vpop.f32.mrb[0].mxu0
        %2111 = vmatprep.mubr.bf16.mxu0 0
        %2112 = vmatmul.mubr.bf16.gmra.mrb[0].mxu0 %v1672
        %v2113 = vpop.f32.mrb[0].mxu0
        %v2114 = vadd.f32 0.0, %v2113
        %v2115 = vpop.f32.mrb[0].mxu0
        %v2116 = vpop.f32.mrb[0].mxu0
        %v2117 = vadd.f32 0.0, %v2116
        %v2118 = vpop.f32.mrb[0].mxu0
        %2119 = vmatprep.mubr.bf16.mxu0 0
        %2120 = vmatmul.mubr.bf16.gmra.mrb[0].mxu0 %v1673
        %v2121 = vpop.f32.mrb[0].mxu0
        %v2122 = vadd.f32 0.0, %v2121
        %v2123 = vpop.f32.mrb[0].mxu0
        %v2124 = vpop.f32.mrb[0].mxu0
        %v2125 = vadd.f32 0.0, %v2124
        %v2126 = vpop.f32.mrb[0].mxu0
        %2127 = vmatprep.mubr.bf16.mxu0 0
        %2128 = vmatmul.mubr.bf16.gmra.mrb[0].mxu0 %v1674
        %v2129 = vpop.f32.mrb[0].mxu0
        %v2130 = vadd.f32 0.0, %v2129
        %v2131 = vpop.f32.mrb[0].mxu0
        %v2132 = vpop.f32.mrb[0].mxu0
        %v2133 = vadd.f32 0.0, %v2132
        %v2134 = vpop.f32.mrb[0].mxu0
        %2135 = vmatprep.mubr.bf16.mxu0 0
        %2136 = vmatmul.mubr.bf16.gmra.mrb[0].mxu0 %v1675
        %v2137 = vpop.f32.mrb[0].mxu0
        %v2138 = vadd.f32 0.0, %v2137
        %v2139 = vpop.f32.mrb[0].mxu0
        %v2140 = vpop.f32.mrb[0].mxu0
        %v2141 = vadd.f32 0.0, %v2140
        %v2142 = vpop.f32.mrb[0].mxu0
        %2143 = vmatprep.mubr.bf16.mxu0 0
        %2144 = vmatmul.mubr.bf16.gmra.mrb[0].mxu0 %v1676
        %v2145 = vpop.f32.mrb[0].mxu0
        %v2146 = vadd.f32 0.0, %v2145
        %v2147 = vpop.f32.mrb[0].mxu0
        %v2148 = vpop.f32.mrb[0].mxu0
        %v2149 = vadd.f32 0.0, %v2148
        %v2150 = vpop.f32.mrb[0].mxu0
        %2151 = vmatprep.mubr.bf16.mxu0 0
        %2152 = vmatmul.mubr.bf16.gmra.mrb[0].mxu0 %v1677
        %v2153 = vpop.f32.mrb[0].mxu0
        %v2154 = vadd.f32 0.0, %v2153
        %v2155 = vpop.f32.mrb[0].mxu0
        %v2156 = vpop.f32.mrb[0].mxu0
        %v2157 = vadd.f32 0.0, %v2156
        %v2158 = vpop.f32.mrb[0].mxu0
        %2159 = vdwg.mxu0
        %v2160 = vadd.f32 %v1229, %v1857
        %v2161 = vadd.f32 %v1231, %v1859
        %v2162 = vadd.f32 %v1406, %v2034
        %v2163 = vadd.f32 %v1234, %v1862
        %v2164 = vadd.f32 %v1409, %v2037
        %v2165 = vadd.f32 %v1238, %v1866
        %v2166 = vadd.f32 %v1240, %v1868
        %v2167 = vadd.f32 %v1414, %v2042
        %v2168 = vadd.f32 %v1243, %v1871
        %v2169 = vadd.f32 %v1417, %v2045
        %v2170 = vadd.f32 %v1247, %v1875
        %v2171 = vadd.f32 %v1249, %v1877
        %v2172 = vadd.f32 %v1422, %v2050
        %v2173 = vadd.f32 %v1252, %v1880
        %v2174 = vadd.f32 %v1425, %v2053
        %v2175 = vadd.f32 %v1256, %v1884
        %v2176 = vadd.f32 %v1258, %v1886
        %v2177 = vadd.f32 %v1430, %v2058
        %v2178 = vadd.f32 %v1261, %v1889
        %v2179 = vadd.f32 %v1433, %v2061
        %v2180 = vadd.f32 %v1265, %v1893
        %v2181 = vadd.f32 %v1267, %v1895
        %v2182 = vadd.f32 %v1438, %v2066
        %v2183 = vadd.f32 %v1270, %v1898
        %v2184 = vadd.f32 %v1441, %v2069
        %v2185 = vadd.f32 %v1274, %v1902
        %v2186 = vadd.f32 %v1276, %v1904
        %v2187 = vadd.f32 %v1446, %v2074
        %v2188 = vadd.f32 %v1279, %v1907
        %v2189 = vadd.f32 %v1449, %v2077
        %v2190 = vadd.f32 %v1283, %v1911
        %v2191 = vadd.f32 %v1285, %v1913
        %v2192 = vadd.f32 %v1454, %v2082
        %v2193 = vadd.f32 %v1288, %v1916
        %v2194 = vadd.f32 %v1457, %v2085
        %v2195 = vadd.f32 %v1292, %v1920
        %v2196 = vadd.f32 %v1294, %v1922
        %v2197 = vadd.f32 %v1462, %v2090
        %v2198 = vadd.f32 %v1297, %v1925
        %v2199 = vadd.f32 %v1465, %v2093
        %v2200 = vadd.f32 %v1301, %v1929
        %v2201 = vadd.f32 %v1303, %v1931
        %v2202 = vadd.f32 %v1470, %v2098
        %v2203 = vadd.f32 %v1306, %v1934
        %v2204 = vadd.f32 %v1473, %v2101
        %v2205 = vadd.f32 %v1310, %v1938
        %v2206 = vadd.f32 %v1312, %v1940
        %v2207 = vadd.f32 %v1478, %v2106
        %v2208 = vadd.f32 %v1315, %v1943
        %v2209 = vadd.f32 %v1481, %v2109
        %v2210 = vadd.f32 %v1319, %v1947
        %v2211 = vadd.f32 %v1321, %v1949
        %v2212 = vadd.f32 %v1486, %v2114
        %v2213 = vadd.f32 %v1324, %v1952
        %v2214 = vadd.f32 %v1489, %v2117
        %v2215 = vadd.f32 %v1328, %v1956
        %v2216 = vadd.f32 %v1330, %v1958
        %v2217 = vadd.f32 %v1494, %v2122
        %v2218 = vadd.f32 %v1333, %v1961
        %v2219 = vadd.f32 %v1497, %v2125
        %v2220 = vadd.f32 %v1337, %v1965
        %v2221 = vadd.f32 %v1339, %v1967
        %v2222 = vadd.f32 %v1502, %v2130
        %v2223 = vadd.f32 %v1342, %v1970
        %v2224 = vadd.f32 %v1505, %v2133
        %v2225 = vadd.f32 %v1346, %v1974
        %v2226 = vadd.f32 %v1348, %v1976
        %v2227 = vadd.f32 %v1510, %v2138
        %v2228 = vadd.f32 %v1351, %v1979
        %v2229 = vadd.f32 %v1513, %v2141
        %v2230 = vadd.f32 %v1355, %v1983
        %v2231 = vadd.f32 %v1357, %v1985
        %v2232 = vadd.f32 %v1518, %v2146
        %v2233 = vadd.f32 %v1360, %v1988
        %v2234 = vadd.f32 %v1521, %v2149
        %v2235 = vadd.f32 %v1364, %v1992
        %v2236 = vadd.f32 %v1366, %v1994
        %v2237 = vadd.f32 %v1526, %v2154
        %v2238 = vadd.f32 %v1369, %v1997
        %v2239 = vadd.f32 %v1529, %v2157
        %vm2272 = vcmask 1046528
        %v2273 = vrot.slane %v2161, 1
        %v2274 = vrot.slane %v2163, 1
        %v2275 = vsel %vm2272, %v2273, %v2274
        %v2276 = vrot.slane %v2166, 1
        %v2277 = vrot.slane %v2168, 1
        %v2278 = vsel %vm2272, %v2276, %v2277
        %v2279 = vrot.slane %v2171, 1
        %v2280 = vrot.slane %v2173, 1
        %v2281 = vsel %vm2272, %v2279, %v2280
        %v2282 = vrot.slane %v2176, 1
        %v2283 = vrot.slane %v2178, 1
        %v2284 = vsel %vm2272, %v2282, %v2283
        %v2285 = vrot.slane %v2181, 1
        %v2286 = vrot.slane %v2183, 1
        %v2287 = vsel %vm2272, %v2285, %v2286
        %v2288 = vrot.slane %v2186, 1
        %v2289 = vrot.slane %v2188, 1
        %v2290 = vsel %vm2272, %v2288, %v2289
        %v2291 = vrot.slane %v2191, 1
        %v2292 = vrot.slane %v2193, 1
        %v2293 = vsel %vm2272, %v2291, %v2292
        %v2294 = vrot.slane %v2196, 1
        %v2295 = vrot.slane %v2198, 1
        %v2296 = vsel %vm2272, %v2294, %v2295
        %v2297 = vrot.slane %v2201, 1
        %v2298 = vrot.slane %v2203, 1
        %v2299 = vsel %vm2272, %v2297, %v2298
        %v2300 = vrot.slane %v2206, 1
        %v2301 = vrot.slane %v2208, 1
        %v2302 = vsel %vm2272, %v2300, %v2301
        %v2303 = vrot.slane %v2211, 1
        %v2304 = vrot.slane %v2213, 1
        %v2305 = vsel %vm2272, %v2303, %v2304
        %v2306 = vrot.slane %v2216, 1
        %v2307 = vrot.slane %v2218, 1
        %v2308 = vsel %vm2272, %v2306, %v2307
        %v2309 = vrot.slane %v2221, 1
        %v2310 = vrot.slane %v2223, 1
        %v2311 = vsel %vm2272, %v2309, %v2310
        %v2312 = vrot.slane %v2226, 1
        %v2313 = vrot.slane %v2228, 1
        %v2314 = vsel %vm2272, %v2312, %v2313
        %v2315 = vrot.slane %v2231, 1
        %v2316 = vrot.slane %v2233, 1
        %v2317 = vsel %vm2272, %v2315, %v2316
        %v2318 = vrot.slane %v2236, 1
        %v2319 = vrot.slane %v2238, 1
        %v2320 = vsel %vm2272, %v2318, %v2319
        %v2337 = vadd.f32 %v2160, %v2275
        %v2338 = vadd.f32 %v2165, %v2278
        %v2339 = vadd.f32 %v2170, %v2281
        %v2340 = vadd.f32 %v2175, %v2284
        %v2341 = vadd.f32 %v2180, %v2287
        %v2342 = vadd.f32 %v2185, %v2290
        %v2343 = vadd.f32 %v2190, %v2293
        %v2344 = vadd.f32 %v2195, %v2296
        %v2345 = vadd.f32 %v2200, %v2299
        %v2346 = vadd.f32 %v2205, %v2302
        %v2347 = vadd.f32 %v2210, %v2305
        %v2348 = vadd.f32 %v2215, %v2308
        %v2349 = vadd.f32 %v2220, %v2311
        %v2350 = vadd.f32 %v2225, %v2314
        %v2351 = vadd.f32 %v2230, %v2317
        %v2352 = vadd.f32 %v2235, %v2320
        %vm2385 = vcmask 1045504
        %v2386 = vrot.slane %v2162, 2
        %v2387 = vrot.slane %v2164, 2
        %v2388 = vsel %vm2385, %v2386, %v2387
        %v2389 = vrot.slane %v2167, 2
        %v2390 = vrot.slane %v2169, 2
        %v2391 = vsel %vm2385, %v2389, %v2390
        %v2392 = vrot.slane %v2172, 2
        %v2393 = vrot.slane %v2174, 2
        %v2394 = vsel %vm2385, %v2392, %v2393
        %v2395 = vrot.slane %v2177, 2
        %v2396 = vrot.slane %v2179, 2
        %v2397 = vsel %vm2385, %v2395, %v2396
        %v2398 = vrot.slane %v2182, 2
        %v2399 = vrot.slane %v2184, 2
        %v2400 = vsel %vm2385, %v2398, %v2399
        %v2401 = vrot.slane %v2187, 2
        %v2402 = vrot.slane %v2189, 2
        %v2403 = vsel %vm2385, %v2401, %v2402
        %v2404 = vrot.slane %v2192, 2
        %v2405 = vrot.slane %v2194, 2
        %v2406 = vsel %vm2385, %v2404, %v2405
        %v2407 = vrot.slane %v2197, 2
        %v2408 = vrot.slane %v2199, 2
        %v2409 = vsel %vm2385, %v2407, %v2408
        %v2410 = vrot.slane %v2202, 2
        %v2411 = vrot.slane %v2204, 2
        %v2412 = vsel %vm2385, %v2410, %v2411
        %v2413 = vrot.slane %v2207, 2
        %v2414 = vrot.slane %v2209, 2
        %v2415 = vsel %vm2385, %v2413, %v2414
        %v2416 = vrot.slane %v2212, 2
        %v2417 = vrot.slane %v2214, 2
        %v2418 = vsel %vm2385, %v2416, %v2417
        %v2419 = vrot.slane %v2217, 2
        %v2420 = vrot.slane %v2219, 2
        %v2421 = vsel %vm2385, %v2419, %v2420
        %v2422 = vrot.slane %v2222, 2
        %v2423 = vrot.slane %v2224, 2
        %v2424 = vsel %vm2385, %v2422, %v2423
        %v2425 = vrot.slane %v2227, 2
        %v2426 = vrot.slane %v2229, 2
        %v2427 = vsel %vm2385, %v2425, %v2426
        %v2428 = vrot.slane %v2232, 2
        %v2429 = vrot.slane %v2234, 2
        %v2430 = vsel %vm2385, %v2428, %v2429
        %v2431 = vrot.slane %v2237, 2
        %v2432 = vrot.slane %v2239, 2
        %v2433 = vsel %vm2385, %v2431, %v2432
        %v2450 = vadd.f32 %v2337, %v2388
        %v2451 = vadd.f32 %v2338, %v2391
        %v2452 = vadd.f32 %v2339, %v2394
        %v2453 = vadd.f32 %v2340, %v2397
        %v2454 = vadd.f32 %v2341, %v2400
        %v2455 = vadd.f32 %v2342, %v2403
        %v2456 = vadd.f32 %v2343, %v2406
        %v2457 = vadd.f32 %v2344, %v2409
        %v2458 = vadd.f32 %v2345, %v2412
        %v2459 = vadd.f32 %v2346, %v2415
        %v2460 = vadd.f32 %v2347, %v2418
        %v2461 = vadd.f32 %v2348, %v2421
        %v2462 = vadd.f32 %v2349, %v2424
        %v2463 = vadd.f32 %v2350, %v2427
        %v2464 = vadd.f32 %v2351, %v2430
        %v2465 = vadd.f32 %v2352, %v2433
        %v2467 = vlaneseq
        %v2468 = vshrl.u32 %v2467, 7
        %v2469 = vsub.s32 0, %v2468
        %v2470 = vrot.slane %v276, %v2469
        %v2472 = vadd.f32 %v2450, %v2470
        %v2473 = vadd.f32 %v2451, %v2470
        %v2474 = vadd.f32 %v2452, %v2470
        %v2475 = vadd.f32 %v2453, %v2470
        %v2476 = vadd.f32 %v2454, %v2470
        %v2477 = vadd.f32 %v2455, %v2470
        %v2478 = vadd.f32 %v2456, %v2470
        %v2479 = vadd.f32 %v2457, %v2470
        %v2480 = vadd.f32 %v2458, %v2470
        %v2481 = vadd.f32 %v2459, %v2470
        %v2482 = vadd.f32 %v2460, %v2470
        %v2483 = vadd.f32 %v2461, %v2470
        %v2484 = vadd.f32 %v2462, %v2470
        %v2485 = vadd.f32 %v2463, %v2470
        %v2486 = vadd.f32 %v2464, %v2470
        %v2487 = vadd.f32 %v2465, %v2470
        %v2488 = vmax.f32 %v2472, 0.0
        %v2489 = vmax.f32 %v2473, 0.0
        %v2490 = vmax.f32 %v2474, 0.0
        %v2491 = vmax.f32 %v2475, 0.0
        %v2492 = vmax.f32 %v2476, 0.0
        %v2493 = vmax.f32 %v2477, 0.0
        %v2494 = vmax.f32 %v2478, 0.0
        %v2495 = vmax.f32 %v2479, 0.0
        %v2496 = vmax.f32 %v2480, 0.0
        %v2497 = vmax.f32 %v2481, 0.0
        %v2498 = vmax.f32 %v2482, 0.0
        %v2499 = vmax.f32 %v2483, 0.0
        %v2500 = vmax.f32 %v2484, 0.0
        %v2501 = vmax.f32 %v2485, 0.0
        %v2502 = vmax.f32 %v2486, 0.0
        %v2503 = vmax.f32 %v2487, 0.0
        %2504 = vst [vmem:[#allocation2] sm:$0xff] 0
        %2505 = vst [vmem:[#allocation2 + $0x50] sm:$0xff] 0
        %s2506 = scalar_lea.vmem [#allocation2], 72
        %2507 = vst [vmem:[%s2506] sm:$0xff] 0
        %2508 = vst [vmem:[%s2506 + $0x50] sm:$0xff] 0
        %s2509 = scalar_lea.vmem [#allocation2], 8
        %vm2510 = vcmask 1040384
        %vm2511 = vsmask.f32 256
        %vm2512 = vmand %vm2510, %vm2511
        %v2513 = vld [vmem:[%s2509] sm:$0x1]
        %v2514 = vsel %vm2512, 0, %v2513
        %2515 = vst [vmem:[%s2509] sm:$0x1] %v2514
        %v2516 = vld [vmem:[%s2509 + $0x8] sm:$0x1]
        %v2517 = vsel %vm2512, 0, %v2516
        %2518 = vst [vmem:[%s2509 + $0x8] sm:$0x1] %v2517
        %v2519 = vld [vmem:[%s2509 + $0x10] sm:$0x1]
        %v2520 = vsel %vm2512, 0, %v2519
        %2521 = vst [vmem:[%s2509 + $0x10] sm:$0x1] %v2520
        %v2522 = vld [vmem:[%s2509 + $0x18] sm:$0x1]
        %v2523 = vsel %vm2512, 0, %v2522
        %2524 = vst [vmem:[%s2509 + $0x18] sm:$0x1] %v2523
        %v2525 = vld [vmem:[%s2509 + $0x20] sm:$0x1]
        %v2526 = vsel %vm2512, 0, %v2525
        %2527 = vst [vmem:[%s2509 + $0x20] sm:$0x1] %v2526
        %v2528 = vld [vmem:[%s2509 + $0x28] sm:$0x1]
        %v2529 = vsel %vm2512, 0, %v2528
        %2530 = vst [vmem:[%s2509 + $0x28] sm:$0x1] %v2529
        %v2531 = vld [vmem:[%s2509 + $0x30] sm:$0x1]
        %v2532 = vsel %vm2512, 0, %v2531
        %2533 = vst [vmem:[%s2509 + $0x30] sm:$0x1] %v2532
        %v2534 = vld [vmem:[%s2509 + $0x38] sm:$0x1]
        %v2535 = vsel %vm2512, 0, %v2534
        %2536 = vst [vmem:[%s2509 + $0x38] sm:$0x1] %v2535
        %v2537 = vld [vmem:[%s2509 + $0x50] sm:$0x1]
        %v2538 = vsel %vm2512, 0, %v2537
        %2539 = vst [vmem:[%s2509 + $0x50] sm:$0x1] %v2538
        %v2540 = vld [vmem:[%s2509 + $0x58] sm:$0x1]
        %v2541 = vsel %vm2512, 0, %v2540
        %2542 = vst [vmem:[%s2509 + $0x58] sm:$0x1] %v2541
        %v2543 = vld [vmem:[%s2509 + $0x60] sm:$0x1]
        %v2544 = vsel %vm2512, 0, %v2543
        %2545 = vst [vmem:[%s2509 + $0x60] sm:$0x1] %v2544
        %v2546 = vld [vmem:[%s2509 + $0x68] sm:$0x1]
        %v2547 = vsel %vm2512, 0, %v2546
        %2548 = vst [vmem:[%s2509 + $0x68] sm:$0x1] %v2547
        %v2549 = vld [vmem:[%s2509 + $0x70] sm:$0x1]
        %v2550 = vsel %vm2512, 0, %v2549
        %2551 = vst [vmem:[%s2509 + $0x70] sm:$0x1] %v2550
        %v2552 = vld [vmem:[%s2509 + $0x78] sm:$0x1]
        %v2553 = vsel %vm2512, 0, %v2552
        %2554 = vst [vmem:[%s2509 + $0x78] sm:$0x1] %v2553
        %v2555 = vld [vmem:[%s2509 + $0x80] sm:$0x1]
        %v2556 = vsel %vm2512, 0, %v2555
        %2557 = vst [vmem:[%s2509 + $0x80] sm:$0x1] %v2556
        %v2558 = vld [vmem:[%s2509 + $0x88] sm:$0x1]
        %v2559 = vsel %vm2512, 0, %v2558
        %2560 = vst [vmem:[%s2509 + $0x88] sm:$0x1] %v2559
        %vm2561 = vcmask 1047556
        %vm2562 = vsmask.f32 7954
        %vm2563 = vmand %vm2561, %vm2562
        %v2564 = vld [vmem:[%s2509] sm:$0xf0]
        %v2565 = vsel %vm2563, 0, %v2564
        %2566 = vst [vmem:[%s2509] sm:$0xf0] %v2565
        %v2567 = vld [vmem:[%s2509 + $0x8] sm:$0xf0]
        %v2568 = vsel %vm2563, 0, %v2567
        %2569 = vst [vmem:[%s2509 + $0x8] sm:$0xf0] %v2568
        %v2570 = vld [vmem:[%s2509 + $0x10] sm:$0xf0]
        %v2571 = vsel %vm2563, 0, %v2570
        %2572 = vst [vmem:[%s2509 + $0x10] sm:$0xf0] %v2571
        %v2573 = vld [vmem:[%s2509 + $0x18] sm:$0xf0]
        %v2574 = vsel %vm2563, 0, %v2573
        %2575 = vst [vmem:[%s2509 + $0x18] sm:$0xf0] %v2574
        %v2576 = vld [vmem:[%s2509 + $0x20] sm:$0xf0]
        %v2577 = vsel %vm2563, 0, %v2576
        %2578 = vst [vmem:[%s2509 + $0x20] sm:$0xf0] %v2577
        %v2579 = vld [vmem:[%s2509 + $0x28] sm:$0xf0]
        %v2580 = vsel %vm2563, 0, %v2579
        %2581 = vst [vmem:[%s2509 + $0x28] sm:$0xf0] %v2580
        %v2582 = vld [vmem:[%s2509 + $0x30] sm:$0xf0]
        %v2583 = vsel %vm2563, 0, %v2582
        %2584 = vst [vmem:[%s2509 + $0x30] sm:$0xf0] %v2583
        %v2585 = vld [vmem:[%s2509 + $0x38] sm:$0xf0]
        %v2586 = vsel %vm2563, 0, %v2585
        %2587 = vst [vmem:[%s2509 + $0x38] sm:$0xf0] %v2586
        %v2588 = vld [vmem:[%s2509 + $0x50] sm:$0xf0]
        %v2589 = vsel %vm2563, 0, %v2588
        %2590 = vst [vmem:[%s2509 + $0x50] sm:$0xf0] %v2589
        %v2591 = vld [vmem:[%s2509 + $0x58] sm:$0xf0]
        %v2592 = vsel %vm2563, 0, %v2591
        %2593 = vst [vmem:[%s2509 + $0x58] sm:$0xf0] %v2592
        %v2594 = vld [vmem:[%s2509 + $0x60] sm:$0xf0]
        %v2595 = vsel %vm2563, 0, %v2594
        %2596 = vst [vmem:[%s2509 + $0x60] sm:$0xf0] %v2595
        %v2597 = vld [vmem:[%s2509 + $0x68] sm:$0xf0]
        %v2598 = vsel %vm2563, 0, %v2597
        %2599 = vst [vmem:[%s2509 + $0x68] sm:$0xf0] %v2598
        %v2600 = vld [vmem:[%s2509 + $0x70] sm:$0xf0]
        %v2601 = vsel %vm2563, 0, %v2600
        %2602 = vst [vmem:[%s2509 + $0x70] sm:$0xf0] %v2601
        %v2603 = vld [vmem:[%s2509 + $0x78] sm:$0xf0]
        %v2604 = vsel %vm2563, 0, %v2603
        %2605 = vst [vmem:[%s2509 + $0x78] sm:$0xf0] %v2604
        %v2606 = vld [vmem:[%s2509 + $0x80] sm:$0xf0]
        %v2607 = vsel %vm2563, 0, %v2606
        %2608 = vst [vmem:[%s2509 + $0x80] sm:$0xf0] %v2607
        %v2609 = vld [vmem:[%s2509 + $0x88] sm:$0xf0]
        %v2610 = vsel %vm2563, 0, %v2609
        %2611 = vst [vmem:[%s2509 + $0x88] sm:$0xf0] %v2610
        %v2612 = vpack.c.bf16 %v2488, %v2488
        %v2613 = vpack.c.bf16 %v2489, %v2489
        %v2614 = vpack.c.bf16 %v2490, %v2490
        %v2615 = vpack.c.bf16 %v2491, %v2491
        %v2616 = vpack.c.bf16 %v2492, %v2492
        %v2617 = vpack.c.bf16 %v2493, %v2493
        %v2618 = vpack.c.bf16 %v2494, %v2494
        %v2619 = vpack.c.bf16 %v2495, %v2495
        %v2620 = vpack.c.bf16 %v2496, %v2496
        %v2621 = vpack.c.bf16 %v2497, %v2497
        %v2622 = vpack.c.bf16 %v2498, %v2498
        %v2623 = vpack.c.bf16 %v2499, %v2499
        %v2624 = vpack.c.bf16 %v2500, %v2500
        %v2625 = vpack.c.bf16 %v2501, %v2501
        %v2626 = vpack.c.bf16 %v2502, %v2502
        %v2627 = vpack.c.bf16 %v2503, %v2503
        %v2629 = vshrl.u32 %v2612, 16
        %v2631 = vrot.slane %v2629, 7
        %v2632 = vshll.u32 %v2612, 16
        %v2634 = vor.u32 %v2631, %v2632
        %v2636 = vshrl.u32 %v2613, 16
        %v2638 = vrot.slane %v2636, 7
        %v2639 = vshll.u32 %v2613, 16
        %v2641 = vor.u32 %v2638, %v2639
        %v2643 = vshrl.u32 %v2614, 16
        %v2645 = vrot.slane %v2643, 7
        %v2646 = vshll.u32 %v2614, 16
        %v2648 = vor.u32 %v2645, %v2646
        %v2650 = vshrl.u32 %v2615, 16
        %v2652 = vrot.slane %v2650, 7
        %v2653 = vshll.u32 %v2615, 16
        %v2655 = vor.u32 %v2652, %v2653
        %v2657 = vshrl.u32 %v2616, 16
        %v2659 = vrot.slane %v2657, 7
        %v2660 = vshll.u32 %v2616, 16
        %v2662 = vor.u32 %v2659, %v2660
        %v2664 = vshrl.u32 %v2617, 16
        %v2666 = vrot.slane %v2664, 7
        %v2667 = vshll.u32 %v2617, 16
        %v2669 = vor.u32 %v2666, %v2667
        %v2671 = vshrl.u32 %v2618, 16
        %v2673 = vrot.slane %v2671, 7
        %v2674 = vshll.u32 %v2618, 16
        %v2676 = vor.u32 %v2673, %v2674
        %v2678 = vshrl.u32 %v2619, 16
        %v2680 = vrot.slane %v2678, 7
        %v2681 = vshll.u32 %v2619, 16
        %v2683 = vor.u32 %v2680, %v2681
        %v2685 = vshrl.u32 %v2620, 16
        %v2687 = vrot.slane %v2685, 7
        %v2688 = vshll.u32 %v2620, 16
        %v2690 = vor.u32 %v2687, %v2688
        %v2692 = vshrl.u32 %v2621, 16
        %v2694 = vrot.slane %v2692, 7
        %v2695 = vshll.u32 %v2621, 16
        %v2697 = vor.u32 %v2694, %v2695
        %v2699 = vshrl.u32 %v2622, 16
        %v2701 = vrot.slane %v2699, 7
        %v2702 = vshll.u32 %v2622, 16
        %v2704 = vor.u32 %v2701, %v2702
        %v2706 = vshrl.u32 %v2623, 16
        %v2708 = vrot.slane %v2706, 7
        %v2709 = vshll.u32 %v2623, 16
        %v2711 = vor.u32 %v2708, %v2709
        %v2713 = vshrl.u32 %v2624, 16
        %v2715 = vrot.slane %v2713, 7
        %v2716 = vshll.u32 %v2624, 16
        %v2718 = vor.u32 %v2715, %v2716
        %v2720 = vshrl.u32 %v2625, 16
        %v2722 = vrot.slane %v2720, 7
        %v2723 = vshll.u32 %v2625, 16
        %v2725 = vor.u32 %v2722, %v2723
        %v2727 = vshrl.u32 %v2626, 16
        %v2729 = vrot.slane %v2727, 7
        %v2730 = vshll.u32 %v2626, 16
        %v2732 = vor.u32 %v2729, %v2730
        %v2734 = vshrl.u32 %v2627, 16
        %v2736 = vrot.slane %v2734, 7
        %v2737 = vshll.u32 %v2627, 16
        %v2739 = vor.u32 %v2736, %v2737
        %vm2756 = vcmask 1044480
        %vm2757 = vsmask.f32 4354
        %vm2758 = vmand %vm2756, %vm2757
        %v2759 = vld [vmem:[%s2509] sm:$0x1f]
        %v2760 = vsel %vm2758, %v2634, %v2759
        %2761 = vst [vmem:[%s2509] sm:$0x1f] %v2760
        %v2762 = vld [vmem:[%s2509 + $0x8] sm:$0x1f]
        %v2763 = vsel %vm2758, %v2641, %v2762
        %2764 = vst [vmem:[%s2509 + $0x8] sm:$0x1f] %v2763
        %v2765 = vld [vmem:[%s2509 + $0x10] sm:$0x1f]
        %v2766 = vsel %vm2758, %v2648, %v2765
        %2767 = vst [vmem:[%s2509 + $0x10] sm:$0x1f] %v2766
        %v2768 = vld [vmem:[%s2509 + $0x18] sm:$0x1f]
        %v2769 = vsel %vm2758, %v2655, %v2768
        %2770 = vst [vmem:[%s2509 + $0x18] sm:$0x1f] %v2769
        %v2771 = vld [vmem:[%s2509 + $0x20] sm:$0x1f]
        %v2772 = vsel %vm2758, %v2662, %v2771
        %2773 = vst [vmem:[%s2509 + $0x20] sm:$0x1f] %v2772
        %v2774 = vld [vmem:[%s2509 + $0x28] sm:$0x1f]
        %v2775 = vsel %vm2758, %v2669, %v2774
        %2776 = vst [vmem:[%s2509 + $0x28] sm:$0x1f] %v2775
        %v2777 = vld [vmem:[%s2509 + $0x30] sm:$0x1f]
        %v2778 = vsel %vm2758, %v2676, %v2777
        %2779 = vst [vmem:[%s2509 + $0x30] sm:$0x1f] %v2778
        %v2780 = vld [vmem:[%s2509 + $0x38] sm:$0x1f]
        %v2781 = vsel %vm2758, %v2683, %v2780
        %2782 = vst [vmem:[%s2509 + $0x38] sm:$0x1f] %v2781
        %v2783 = vld [vmem:[%s2509 + $0x50] sm:$0x1f]
        %v2784 = vsel %vm2758, %v2690, %v2783
        %2785 = vst [vmem:[%s2509 + $0x50] sm:$0x1f] %v2784
        %v2786 = vld [vmem:[%s2509 + $0x58] sm:$0x1f]
        %v2787 = vsel %vm2758, %v2697, %v2786
        %2788 = vst [vmem:[%s2509 + $0x58] sm:$0x1f] %v2787
        %v2789 = vld [vmem:[%s2509 + $0x60] sm:$0x1f]
        %v2790 = vsel %vm2758, %v2704, %v2789
        %2791 = vst [vmem:[%s2509 + $0x60] sm:$0x1f] %v2790
        %v2792 = vld [vmem:[%s2509 + $0x68] sm:$0x1f]
        %v2793 = vsel %vm2758, %v2711, %v2792
        %2794 = vst [vmem:[%s2509 + $0x68] sm:$0x1f] %v2793
        %v2795 = vld [vmem:[%s2509 + $0x70] sm:$0x1f]
        %v2796 = vsel %vm2758, %v2718, %v2795
        %2797 = vst [vmem:[%s2509 + $0x70] sm:$0x1f] %v2796
        %v2798 = vld [vmem:[%s2509 + $0x78] sm:$0x1f]
        %v2799 = vsel %vm2758, %v2725, %v2798
        %2800 = vst [vmem:[%s2509 + $0x78] sm:$0x1f] %v2799
        %v2801 = vld [vmem:[%s2509 + $0x80] sm:$0x1f]
        %v2802 = vsel %vm2758, %v2732, %v2801
        %2803 = vst [vmem:[%s2509 + $0x80] sm:$0x1f] %v2802
        %v2804 = vld [vmem:[%s2509 + $0x88] sm:$0x1f]
        %v2805 = vsel %vm2758, %v2739, %v2804
        %2806 = vst [vmem:[%s2509 + $0x88] sm:$0x1f] %v2805
        %v2807 = vld [vmem:[#allocation2] sm:$0xff]
        %v2808 = vld [vmem:[#allocation2 + $0x8] sm:$0xff]
        %v2809 = vld [vmem:[#allocation2 + $0x10] sm:$0xff]
        %v2810 = vld [vmem:[#allocation2 + $0x18] sm:$0xff]
        %v2811 = vld [vmem:[#allocation2 + $0x20] sm:$0xff]
        %v2812 = vld [vmem:[#allocation2 + $0x28] sm:$0xff]
        %v2813 = vld [vmem:[#allocation2 + $0x30] sm:$0xff]
        %v2814 = vld [vmem:[#allocation2 + $0x38] sm:$0xff]
        %v2815 = vld [vmem:[#allocation2 + $0x50] sm:$0xff]
        %v2816 = vld [vmem:[#allocation2 + $0x58] sm:$0xff]
        %v2817 = vld [vmem:[#allocation2 + $0x60] sm:$0xff]
        %v2818 = vld [vmem:[#allocation2 + $0x68] sm:$0xff]
        %v2819 = vld [vmem:[#allocation2 + $0x70] sm:$0xff]
        %v2820 = vld [vmem:[#allocation2 + $0x78] sm:$0xff]
        %v2821 = vld [vmem:[#allocation2 + $0x80] sm:$0xff]
        %v2822 = vld [vmem:[#allocation2 + $0x88] sm:$0xff]
        %v2823 = vld [vmem:[#allocation8] sm:$0xff]
        %v2824 = vld [vmem:[#allocation8 + $0x8] sm:$0xf]
        %v2825 = vld [vmem:[#allocation8 + $0xc] sm:$0xff]
        %v2826 = vld [vmem:[#allocation8 + $0x14] sm:$0xf]
        %v2827 = vld [vmem:[#allocation8 + $0x18] sm:$0xff]
        %v2828 = vld [vmem:[#allocation8 + $0x20] sm:$0xf]
        %v2829 = vld [vmem:[#allocation8 + $0x24] sm:$0xff]
        %v2830 = vld [vmem:[#allocation8 + $0x2c] sm:$0xf]
        %v2831 = vld [vmem:[#allocation8 + $0x30] sm:$0xff]
        %v2832 = vld [vmem:[#allocation8 + $0x38] sm:$0xf]
        %v2833 = vld [vmem:[#allocation8 + $0x3c] sm:$0xff]
        %v2834 = vld [vmem:[#allocation8 + $0x44] sm:$0xf]
        %v2835 = vld [vmem:[#allocation8 + $0x48] sm:$0xff]
        %v2836 = vld [vmem:[#allocation8 + $0x50] sm:$0xf]
        %v2837 = vld [vmem:[#allocation8 + $0x54] sm:$0xff]
        %v2838 = vld [vmem:[#allocation8 + $0x5c] sm:$0xf]
        %v2839 = vld [vmem:[#allocation8 + $0x60] sm:$0xff]
        %v2840 = vld [vmem:[#allocation8 + $0x68] sm:$0xf]
        %v2841 = vld [vmem:[#allocation8 + $0x6c] sm:$0xff]
        %v2842 = vld [vmem:[#allocation8 + $0x74] sm:$0xf]
        %v2843 = vld [vmem:[#allocation8 + $0x78] sm:$0xff]
        %v2844 = vld [vmem:[#allocation8 + $0x80] sm:$0xf]
        %v2845 = vld [vmem:[#allocation8 + $0x84] sm:$0xff]
        %v2846 = vld [vmem:[#allocation8 + $0x8c] sm:$0xf]
        %v2847 = vld [vmem:[#allocation8 + $0x90] sm:$0xff]
        %v2848 = vld [vmem:[#allocation8 + $0x98] sm:$0xf]
        %v2849 = vld [vmem:[#allocation8 + $0x9c] sm:$0xff]
        %v2850 = vld [vmem:[#allocation8 + $0xa4] sm:$0xf]
        %v2851 = vld [vmem:[#allocation8 + $0xa8] sm:$0xff]
        %v2852 = vld [vmem:[#allocation8 + $0xb0] sm:$0xf]
        %v2853 = vld [vmem:[#allocation8 + $0xb4] sm:$0xff]
        %v2854 = vld [vmem:[#allocation8 + $0xbc] sm:$0xf]
        %v2855 = vld [vmem:[%s2509] sm:$0xff]
        %v2856 = vld [vmem:[%s2509 + $0x8] sm:$0xff]
        %v2857 = vld [vmem:[%s2509 + $0x10] sm:$0xff]
        %v2858 = vld [vmem:[%s2509 + $0x18] sm:$0xff]
        %v2859 = vld [vmem:[%s2509 + $0x20] sm:$0xff]
        %v2860 = vld [vmem:[%s2509 + $0x28] sm:$0xff]
        %v2861 = vld [vmem:[%s2509 + $0x30] sm:$0xff]
        %v2862 = vld [vmem:[%s2509 + $0x38] sm:$0xff]
        %v2863 = vld [vmem:[%s2509 + $0x50] sm:$0xff]
        %v2864 = vld [vmem:[%s2509 + $0x58] sm:$0xff]
        %v2865 = vld [vmem:[%s2509 + $0x60] sm:$0xff]
        %v2866 = vld [vmem:[%s2509 + $0x68] sm:$0xff]
        %v2867 = vld [vmem:[%s2509 + $0x70] sm:$0xff]
        %v2868 = vld [vmem:[%s2509 + $0x78] sm:$0xff]
        %v2869 = vld [vmem:[%s2509 + $0x80] sm:$0xff]
        %v2870 = vld [vmem:[%s2509 + $0x88] sm:$0xff]
        %s2871 = scalar_lea.vmem [#allocation8], 192
        %v2872 = vld [vmem:[%s2871] sm:$0xff]
        %v2873 = vld [vmem:[%s2871 + $0x8] sm:$0xf]
        %v2874 = vld [vmem:[%s2871 + $0xc] sm:$0xff]
        %v2875 = vld [vmem:[%s2871 + $0x14] sm:$0xf]
        %v2876 = vld [vmem:[%s2871 + $0x18] sm:$0xff]
        %v2877 = vld [vmem:[%s2871 + $0x20] sm:$0xf]
        %v2878 = vld [vmem:[%s2871 + $0x24] sm:$0xff]
        %v2879 = vld [vmem:[%s2871 + $0x2c] sm:$0xf]
        %v2880 = vld [vmem:[%s2871 + $0x30] sm:$0xff]
        %v2881 = vld [vmem:[%s2871 + $0x38] sm:$0xf]
        %v2882 = vld [vmem:[%s2871 + $0x3c] sm:$0xff]
        %v2883 = vld [vmem:[%s2871 + $0x44] sm:$0xf]
        %v2884 = vld [vmem:[%s2871 + $0x48] sm:$0xff]
        %v2885 = vld [vmem:[%s2871 + $0x50] sm:$0xf]
        %v2886 = vld [vmem:[%s2871 + $0x54] sm:$0xff]
        %v2887 = vld [vmem:[%s2871 + $0x5c] sm:$0xf]
        %v2888 = vld [vmem:[%s2871 + $0x60] sm:$0xff]
        %v2889 = vld [vmem:[%s2871 + $0x68] sm:$0xf]
        %v2890 = vld [vmem:[%s2871 + $0x6c] sm:$0xff]
        %v2891 = vld [vmem:[%s2871 + $0x74] sm:$0xf]
        %v2892 = vld [vmem:[%s2871 + $0x78] sm:$0xff]
        %v2893 = vld [vmem:[%s2871 + $0x80] sm:$0xf]
        %v2894 = vld [vmem:[%s2871 + $0x84] sm:$0xff]
        %v2895 = vld [vmem:[%s2871 + $0x8c] sm:$0xf]
        %v2896 = vld [vmem:[%s2871 + $0x90] sm:$0xff]
        %v2897 = vld [vmem:[%s2871 + $0x98] sm:$0xf]
        %v2898 = vld [vmem:[%s2871 + $0x9c] sm:$0xff]
        %v2899 = vld [vmem:[%s2871 + $0xa4] sm:$0xf]
        %v2900 = vld [vmem:[%s2871 + $0xa8] sm:$0xff]
        %v2901 = vld [vmem:[%s2871 + $0xb0] sm:$0xf]
        %v2902 = vld [vmem:[%s2871 + $0xb4] sm:$0xff]
        %v2903 = vld [vmem:[%s2871 + $0xbc] sm:$0xf]
        %v2936 = vunpack.c.l.b16 %v2872
        %v2937 = vunpack.c.h.b16 %v2872
        %v2938 = vunpack.c.l.b16 %v2873
        %v2939 = vunpack.c.l.b16 %v2874
        %v2940 = vunpack.c.h.b16 %v2874
        %v2941 = vunpack.c.l.b16 %v2875
        %v2942 = vunpack.c.l.b16 %v2876
        %v2943 = vunpack.c.h.b16 %v2876
        %v2944 = vunpack.c.l.b16 %v2877
        %v2945 = vunpack.c.l.b16 %v2878
        %v2946 = vunpack.c.h.b16 %v2878
        %v2947 = vunpack.c.l.b16 %v2879
        %v2948 = vunpack.c.l.b16 %v2880
        %v2949 = vunpack.c.h.b16 %v2880
        %v2950 = vunpack.c.l.b16 %v2881
        %v2951 = vunpack.c.l.b16 %v2882
        %v2952 = vunpack.c.h.b16 %v2882
        %v2953 = vunpack.c.l.b16 %v2883
        %v2954 = vunpack.c.l.b16 %v2884
        %v2955 = vunpack.c.h.b16 %v2884
        %v2956 = vunpack.c.l.b16 %v2885
        %v2957 = vunpack.c.l.b16 %v2886
        %v2958 = vunpack.c.h.b16 %v2886
        %v2959 = vunpack.c.l.b16 %v2887
        %v2960 = vunpack.c.l.b16 %v2888
        %v2961 = vunpack.c.h.b16 %v2888
        %v2962 = vunpack.c.l.b16 %v2889
        %v2963 = vunpack.c.l.b16 %v2890
        %v2964 = vunpack.c.h.b16 %v2890
        %v2965 = vunpack.c.l.b16 %v2891
        %v2966 = vunpack.c.l.b16 %v2892
        %v2967 = vunpack.c.h.b16 %v2892
        %v2968 = vunpack.c.l.b16 %v2893
        %v2969 = vunpack.c.l.b16 %v2894
        %v2970 = vunpack.c.h.b16 %v2894
        %v2971 = vunpack.c.l.b16 %v2895
        %v2972 = vunpack.c.l.b16 %v2896
        %v2973 = vunpack.c.h.b16 %v2896
        %v2974 = vunpack.c.l.b16 %v2897
        %v2975 = vunpack.c.l.b16 %v2898
        %v2976 = vunpack.c.h.b16 %v2898
        %v2977 = vunpack.c.l.b16 %v2899
        %v2978 = vunpack.c.l.b16 %v2900
        %v2979 = vunpack.c.h.b16 %v2900
        %v2980 = vunpack.c.l.b16 %v2901
        %v2981 = vunpack.c.l.b16 %v2902
        %v2982 = vunpack.c.h.b16 %v2902
        %v2983 = vunpack.c.l.b16 %v2903
        %v2984 = vpack.c.b16 %v2939, %v2936
        %v2985 = vpack.c.b16 %v2940, %v2937
        %v2986 = vpack.c.b16 %v2941, %v2938
        %v2987 = vpack.c.b16 %v2945, %v2942
        %v2988 = vpack.c.b16 %v2946, %v2943
        %v2989 = vpack.c.b16 %v2947, %v2944
        %v2990 = vpack.c.b16 %v2951, %v2948
        %v2991 = vpack.c.b16 %v2952, %v2949
        %v2992 = vpack.c.b16 %v2953, %v2950
        %v2993 = vpack.c.b16 %v2957, %v2954
        %v2994 = vpack.c.b16 %v2958, %v2955
        %v2995 = vpack.c.b16 %v2959, %v2956
        %v2996 = vpack.c.b16 %v2963, %v2960
        %v2997 = vpack.c.b16 %v2964, %v2961
        %v2998 = vpack.c.b16 %v2965, %v2962
        %v2999 = vpack.c.b16 %v2969, %v2966
        %v3000 = vpack.c.b16 %v2970, %v2967
        %v3001 = vpack.c.b16 %v2971, %v2968
        %v3002 = vpack.c.b16 %v2975, %v2972
        %v3003 = vpack.c.b16 %v2976, %v2973
        %v3004 = vpack.c.b16 %v2977, %v2974
        %v3005 = vpack.c.b16 %v2981, %v2978
        %v3006 = vpack.c.b16 %v2982, %v2979
        %v3007 = vpack.c.b16 %v2983, %v2980
        %3032 = vmatprep.subr.bf16.mxu0 %v2985
        %3033 = vmatpush1.bf16.msra.mxu0 %v2984
        %3034 = vmatprep.subr.bf16.mxu0 %v2988
        %3035 = vmatpush1.bf16.msra.mxu0 %v2987
        %3036 = vmatprep.subr.bf16.mxu0 %v2991
        %3037 = vmatpush1.bf16.msra.mxu0 %v2990
        %3038 = vmatprep.subr.bf16.mxu0 %v2994
        %3039 = vmatpush1.bf16.msra.mxu0 %v2993
        %3040 = vmatprep.subr.bf16.mxu0 %v2997
        %3041 = vmatpush1.bf16.msra.mxu0 %v2996
        %3042 = vmatprep.subr.bf16.mxu0 %v3000
        %3043 = vmatpush1.bf16.msra.mxu0 %v2999
        %3044 = vmatprep.subr.bf16.mxu0 %v3003
        %3045 = vmatpush1.bf16.msra.mxu0 %v3002
        %3046 = vmatprep.subr.bf16.mxu0 %v3006
        %3047 = vmatpush1.bf16.msra.mxu0 %v3005
        %3048 = vmatprep.subr.bf16.mxu0 0
        %3049 = vmatpush1.bf16.msra.mxu0 0
        %3050 = vmatprep.subr.bf16.mxu0 0
        %3051 = vmatpush1.bf16.msra.mxu0 0
        %3052 = vmatprep.subr.bf16.mxu0 0
        %3053 = vmatpush1.bf16.msra.mxu0 0
        %3054 = vmatprep.subr.bf16.mxu0 0
        %3055 = vmatpush1.bf16.msra.mxu0 0
        %3056 = vmatprep.subr.bf16.mxu0 0
        %3057 = vmatpush1.bf16.msra.mxu0 0
        %3058 = vmatprep.subr.bf16.mxu0 0
        %3059 = vmatpush1.bf16.msra.mxu0 0
        %3060 = vmatprep.subr.bf16.mxu0 0
        %3061 = vmatpush1.bf16.msra.mxu0 0
        %3062 = vmatprep.subr.bf16.mxu0 0
        %3063 = vmatpush1.bf16.msra.mxu0 0
        %3064 = vmatprep.mubr.bf16.mxu0 0
        %3065 = vmatmul.mubr.bf16.gmra.mrb[0].mxu0 %v2855
        %v3066 = vpop.f32.mrb[0].mxu0
        %v3067 = vadd.f32 0.0, %v3066
        %v3068 = vpop.f32.mrb[0].mxu0
        %v3069 = vadd.f32 0.0, %v3068
        %v3070 = vpop.f32.mrb[0].mxu0
        %v3071 = vpop.f32.mrb[0].mxu0
        %v3072 = vadd.f32 0.0, %v3071
        %3073 = vmatprep.mubr.bf16.mxu0 0
        %3074 = vmatmul.mubr.bf16.gmra.mrb[0].mxu0 %v2856
        %v3075 = vpop.f32.mrb[0].mxu0
        %v3076 = vadd.f32 0.0, %v3075
        %v3077 = vpop.f32.mrb[0].mxu0
        %v3078 = vadd.f32 0.0, %v3077
        %v3079 = vpop.f32.mrb[0].mxu0
        %v3080 = vpop.f32.mrb[0].mxu0
        %v3081 = vadd.f32 0.0, %v3080
        %3082 = vmatprep.mubr.bf16.mxu0 0
        %3083 = vmatmul.mubr.bf16.gmra.mrb[0].mxu0 %v2857
        %v3084 = vpop.f32.mrb[0].mxu0
        %v3085 = vadd.f32 0.0, %v3084
        %v3086 = vpop.f32.mrb[0].mxu0
        %v3087 = vadd.f32 0.0, %v3086
        %v3088 = vpop.f32.mrb[0].mxu0
        %v3089 = vpop.f32.mrb[0].mxu0
        %v3090 = vadd.f32 0.0, %v3089
        %3091 = vmatprep.mubr.bf16.mxu0 0
        %3092 = vmatmul.mubr.bf16.gmra.mrb[0].mxu0 %v2858
        %v3093 = vpop.f32.mrb[0].mxu0
        %v3094 = vadd.f32 0.0, %v3093
        %v3095 = vpop.f32.mrb[0].mxu0
        %v3096 = vadd.f32 0.0, %v3095
        %v3097 = vpop.f32.mrb[0].mxu0
        %v3098 = vpop.f32.mrb[0].mxu0
        %v3099 = vadd.f32 0.0, %v3098
        %3100 = vmatprep.mubr.bf16.mxu0 0
        %3101 = vmatmul.mubr.bf16.gmra.mrb[0].mxu0 %v2859
        %v3102 = vpop.f32.mrb[0].mxu0
        %v3103 = vadd.f32 0.0, %v3102
        %v3104 = vpop.f32.mrb[0].mxu0
        %v3105 = vadd.f32 0.0, %v3104
        %v3106 = vpop.f32.mrb[0].mxu0
        %v3107 = vpop.f32.mrb[0].mxu0
        %v3108 = vadd.f32 0.0, %v3107
        %3109 = vmatprep.mubr.bf16.mxu0 0
        %3110 = vmatmul.mubr.bf16.gmra.mrb[0].mxu0 %v2860
        %v3111 = vpop.f32.mrb[0].mxu0
        %v3112 = vadd.f32 0.0, %v3111
        %v3113 = vpop.f32.mrb[0].mxu0
        %v3114 = vadd.f32 0.0, %v3113
        %v3115 = vpop.f32.mrb[0].mxu0
        %v3116 = vpop.f32.mrb[0].mxu0
        %v3117 = vadd.f32 0.0, %v3116
        %3118 = vmatprep.mubr.bf16.mxu0 0
        %3119 = vmatmul.mubr.bf16.gmra.mrb[0].mxu0 %v2861
        %v3120 = vpop.f32.mrb[0].mxu0
        %v3121 = vadd.f32 0.0, %v3120
        %v3122 = vpop.f32.mrb[0].mxu0
        %v3123 = vadd.f32 0.0, %v3122
        %v3124 = vpop.f32.mrb[0].mxu0
        %v3125 = vpop.f32.mrb[0].mxu0
        %v3126 = vadd.f32 0.0, %v3125
        %3127 = vmatprep.mubr.bf16.mxu0 0
        %3128 = vmatmul.mubr.bf16.gmra.mrb[0].mxu0 %v2862
        %v3129 = vpop.f32.mrb[0].mxu0
        %v3130 = vadd.f32 0.0, %v3129
        %v3131 = vpop.f32.mrb[0].mxu0
        %v3132 = vadd.f32 0.0, %v3131
        %v3133 = vpop.f32.mrb[0].mxu0
        %v3134 = vpop.f32.mrb[0].mxu0
        %v3135 = vadd.f32 0.0, %v3134
        %3136 = vmatprep.mubr.bf16.mxu0 0
        %3137 = vmatmul.mubr.bf16.gmra.mrb[0].mxu0 %v2863
        %v3138 = vpop.f32.mrb[0].mxu0
        %v3139 = vadd.f32 0.0, %v3138
        %v3140 = vpop.f32.mrb[0].mxu0
        %v3141 = vadd.f32 0.0, %v3140
        %v3142 = vpop.f32.mrb[0].mxu0
        %v3143 = vpop.f32.mrb[0].mxu0
        %v3144 = vadd.f32 0.0, %v3143
        %3145 = vmatprep.mubr.bf16.mxu0 0
        %3146 = vmatmul.mubr.bf16.gmra.mrb[0].mxu0 %v2864
        %v3147 = vpop.f32.mrb[0].mxu0
        %v3148 = vadd.f32 0.0, %v3147
        %v3149 = vpop.f32.mrb[0].mxu0
        %v3150 = vadd.f32 0.0, %v3149
        %v3151 = vpop.f32.mrb[0].mxu0
        %v3152 = vpop.f32.mrb[0].mxu0
        %v3153 = vadd.f32 0.0, %v3152
        %3154 = vmatprep.mubr.bf16.mxu0 0
        %3155 = vmatmul.mubr.bf16.gmra.mrb[0].mxu0 %v2865
        %v3156 = vpop.f32.mrb[0].mxu0
        %v3157 = vadd.f32 0.0, %v3156
        %v3158 = vpop.f32.mrb[0].mxu0
        %v3159 = vadd.f32 0.0, %v3158
        %v3160 = vpop.f32.mrb[0].mxu0
        %v3161 = vpop.f32.mrb[0].mxu0
        %v3162 = vadd.f32 0.0, %v3161
        %3163 = vmatprep.mubr.bf16.mxu0 0
        %3164 = vmatmul.mubr.bf16.gmra.mrb[0].mxu0 %v2866
        %v3165 = vpop.f32.mrb[0].mxu0
        %v3166 = vadd.f32 0.0, %v3165
        %v3167 = vpop.f32.mrb[0].mxu0
        %v3168 = vadd.f32 0.0, %v3167
        %v3169 = vpop.f32.mrb[0].mxu0
        %v3170 = vpop.f32.mrb[0].mxu0
        %v3171 = vadd.f32 0.0, %v3170
        %3172 = vmatprep.mubr.bf16.mxu0 0
        %3173 = vmatmul.mubr.bf16.gmra.mrb[0].mxu0 %v2867
        %v3174 = vpop.f32.mrb[0].mxu0
        %v3175 = vadd.f32 0.0, %v3174
        %v3176 = vpop.f32.mrb[0].mxu0
        %v3177 = vadd.f32 0.0, %v3176
        %v3178 = vpop.f32.mrb[0].mxu0
        %v3179 = vpop.f32.mrb[0].mxu0
        %v3180 = vadd.f32 0.0, %v3179
        %3181 = vmatprep.mubr.bf16.mxu0 0
        %3182 = vmatmul.mubr.bf16.gmra.mrb[0].mxu0 %v2868
        %v3183 = vpop.f32.mrb[0].mxu0
        %v3184 = vadd.f32 0.0, %v3183
        %v3185 = vpop.f32.mrb[0].mxu0
        %v3186 = vadd.f32 0.0, %v3185
        %v3187 = vpop.f32.mrb[0].mxu0
        %v3188 = vpop.f32.mrb[0].mxu0
        %v3189 = vadd.f32 0.0, %v3188
        %3190 = vmatprep.mubr.bf16.mxu0 0
        %3191 = vmatmul.mubr.bf16.gmra.mrb[0].mxu0 %v2869
        %v3192 = vpop.f32.mrb[0].mxu0
        %v3193 = vadd.f32 0.0, %v3192
        %v3194 = vpop.f32.mrb[0].mxu0
        %v3195 = vadd.f32 0.0, %v3194
        %v3196 = vpop.f32.mrb[0].mxu0
        %v3197 = vpop.f32.mrb[0].mxu0
        %v3198 = vadd.f32 0.0, %v3197
        %3199 = vmatprep.mubr.bf16.mxu0 0
        %3200 = vmatmul.mubr.bf16.gmra.mrb[0].mxu0 %v2870
        %v3201 = vpop.f32.mrb[0].mxu0
        %v3202 = vadd.f32 0.0, %v3201
        %v3203 = vpop.f32.mrb[0].mxu0
        %v3204 = vadd.f32 0.0, %v3203
        %v3205 = vpop.f32.mrb[0].mxu0
        %v3206 = vpop.f32.mrb[0].mxu0
        %v3207 = vadd.f32 0.0, %v3206
        %3208 = vdwg.mxu0
        %3209 = vmatprep.subr.bf16.mxu0 0
        %3210 = vmatpush1.bf16.msra.mxu0 %v2986
        %3211 = vmatprep.subr.bf16.mxu0 0
        %3212 = vmatpush1.bf16.msra.mxu0 %v2989
        %3213 = vmatprep.subr.bf16.mxu0 0
        %3214 = vmatpush1.bf16.msra.mxu0 %v2992
        %3215 = vmatprep.subr.bf16.mxu0 0
        %3216 = vmatpush1.bf16.msra.mxu0 %v2995
        %3217 = vmatprep.subr.bf16.mxu0 0
        %3218 = vmatpush1.bf16.msra.mxu0 %v2998
        %3219 = vmatprep.subr.bf16.mxu0 0
        %3220 = vmatpush1.bf16.msra.mxu0 %v3001
        %3221 = vmatprep.subr.bf16.mxu0 0
        %3222 = vmatpush1.bf16.msra.mxu0 %v3004
        %3223 = vmatprep.subr.bf16.mxu0 0
        %3224 = vmatpush1.bf16.msra.mxu0 %v3007
        %3225 = vmatprep.subr.bf16.mxu0 0
        %3226 = vmatpush1.bf16.msra.mxu0 0
        %3227 = vmatprep.subr.bf16.mxu0 0
        %3228 = vmatpush1.bf16.msra.mxu0 0
        %3229 = vmatprep.subr.bf16.mxu0 0
        %3230 = vmatpush1.bf16.msra.mxu0 0
        %3231 = vmatprep.subr.bf16.mxu0 0
        %3232 = vmatpush1.bf16.msra.mxu0 0
        %3233 = vmatprep.subr.bf16.mxu0 0
        %3234 = vmatpush1.bf16.msra.mxu0 0
        %3235 = vmatprep.subr.bf16.mxu0 0
        %3236 = vmatpush1.bf16.msra.mxu0 0
        %3237 = vmatprep.subr.bf16.mxu0 0
        %3238 = vmatpush1.bf16.msra.mxu0 0
        %3239 = vmatprep.subr.bf16.mxu0 0
        %3240 = vmatpush1.bf16.msra.mxu0 0
        %3241 = vmatprep.mubr.bf16.mxu0 0
        %3242 = vmatmul.mubr.bf16.gmra.mrb[0].mxu0 %v2855
        %v3243 = vpop.f32.mrb[0].mxu0
        %v3244 = vadd.f32 0.0, %v3243
        %v3245 = vpop.f32.mrb[0].mxu0
        %v3246 = vpop.f32.mrb[0].mxu0
        %v3247 = vadd.f32 0.0, %v3246
        %v3248 = vpop.f32.mrb[0].mxu0
        %3249 = vmatprep.mubr.bf16.mxu0 0
        %3250 = vmatmul.mubr.bf16.gmra.mrb[0].mxu0 %v2856
        %v3251 = vpop.f32.mrb[0].mxu0
        %v3252 = vadd.f32 0.0, %v3251
        %v3253 = vpop.f32.mrb[0].mxu0
        %v3254 = vpop.f32.mrb[0].mxu0
        %v3255 = vadd.f32 0.0, %v3254
        %v3256 = vpop.f32.mrb[0].mxu0
        %3257 = vmatprep.mubr.bf16.mxu0 0
        %3258 = vmatmul.mubr.bf16.gmra.mrb[0].mxu0 %v2857
        %v3259 = vpop.f32.mrb[0].mxu0
        %v3260 = vadd.f32 0.0, %v3259
        %v3261 = vpop.f32.mrb[0].mxu0
        %v3262 = vpop.f32.mrb[0].mxu0
        %v3263 = vadd.f32 0.0, %v3262
        %v3264 = vpop.f32.mrb[0].mxu0
        %3265 = vmatprep.mubr.bf16.mxu0 0
        %3266 = vmatmul.mubr.bf16.gmra.mrb[0].mxu0 %v2858
        %v3267 = vpop.f32.mrb[0].mxu0
        %v3268 = vadd.f32 0.0, %v3267
        %v3269 = vpop.f32.mrb[0].mxu0
        %v3270 = vpop.f32.mrb[0].mxu0
        %v3271 = vadd.f32 0.0, %v3270
        %v3272 = vpop.f32.mrb[0].mxu0
        %3273 = vmatprep.mubr.bf16.mxu0 0
        %3274 = vmatmul.mubr.bf16.gmra.mrb[0].mxu0 %v2859
        %v3275 = vpop.f32.mrb[0].mxu0
        %v3276 = vadd.f32 0.0, %v3275
        %v3277 = vpop.f32.mrb[0].mxu0
        %v3278 = vpop.f32.mrb[0].mxu0
        %v3279 = vadd.f32 0.0, %v3278
        %v3280 = vpop.f32.mrb[0].mxu0
        %3281 = vmatprep.mubr.bf16.mxu0 0
        %3282 = vmatmul.mubr.bf16.gmra.mrb[0].mxu0 %v2860
        %v3283 = vpop.f32.mrb[0].mxu0
        %v3284 = vadd.f32 0.0, %v3283
        %v3285 = vpop.f32.mrb[0].mxu0
        %v3286 = vpop.f32.mrb[0].mxu0
        %v3287 = vadd.f32 0.0, %v3286
        %v3288 = vpop.f32.mrb[0].mxu0
        %3289 = vmatprep.mubr.bf16.mxu0 0
        %3290 = vmatmul.mubr.bf16.gmra.mrb[0].mxu0 %v2861
        %v3291 = vpop.f32.mrb[0].mxu0
        %v3292 = vadd.f32 0.0, %v3291
        %v3293 = vpop.f32.mrb[0].mxu0
        %v3294 = vpop.f32.mrb[0].mxu0
        %v3295 = vadd.f32 0.0, %v3294
        %v3296 = vpop.f32.mrb[0].mxu0
        %3297 = vmatprep.mubr.bf16.mxu0 0
        %3298 = vmatmul.mubr.bf16.gmra.mrb[0].mxu0 %v2862
        %v3299 = vpop.f32.mrb[0].mxu0
        %v3300 = vadd.f32 0.0, %v3299
        %v3301 = vpop.f32.mrb[0].mxu0
        %v3302 = vpop.f32.mrb[0].mxu0
        %v3303 = vadd.f32 0.0, %v3302
        %v3304 = vpop.f32.mrb[0].mxu0
        %3305 = vmatprep.mubr.bf16.mxu0 0
        %3306 = vmatmul.mubr.bf16.gmra.mrb[0].mxu0 %v2863
        %v3307 = vpop.f32.mrb[0].mxu0
        %v3308 = vadd.f32 0.0, %v3307
        %v3309 = vpop.f32.mrb[0].mxu0
        %v3310 = vpop.f32.mrb[0].mxu0
        %v3311 = vadd.f32 0.0, %v3310
        %v3312 = vpop.f32.mrb[0].mxu0
        %3313 = vmatprep.mubr.bf16.mxu0 0
        %3314 = vmatmul.mubr.bf16.gmra.mrb[0].mxu0 %v2864
        %v3315 = vpop.f32.mrb[0].mxu0
        %v3316 = vadd.f32 0.0, %v3315
        %v3317 = vpop.f32.mrb[0].mxu0
        %v3318 = vpop.f32.mrb[0].mxu0
        %v3319 = vadd.f32 0.0, %v3318
        %v3320 = vpop.f32.mrb[0].mxu0
        %3321 = vmatprep.mubr.bf16.mxu0 0
        %3322 = vmatmul.mubr.bf16.gmra.mrb[0].mxu0 %v2865
        %v3323 = vpop.f32.mrb[0].mxu0
        %v3324 = vadd.f32 0.0, %v3323
        %v3325 = vpop.f32.mrb[0].mxu0
        %v3326 = vpop.f32.mrb[0].mxu0
        %v3327 = vadd.f32 0.0, %v3326
        %v3328 = vpop.f32.mrb[0].mxu0
        %3329 = vmatprep.mubr.bf16.mxu0 0
        %3330 = vmatmul.mubr.bf16.gmra.mrb[0].mxu0 %v2866
        %v3331 = vpop.f32.mrb[0].mxu0
        %v3332 = vadd.f32 0.0, %v3331
        %v3333 = vpop.f32.mrb[0].mxu0
        %v3334 = vpop.f32.mrb[0].mxu0
        %v3335 = vadd.f32 0.0, %v3334
        %v3336 = vpop.f32.mrb[0].mxu0
        %3337 = vmatprep.mubr.bf16.mxu0 0
        %3338 = vmatmul.mubr.bf16.gmra.mrb[0].mxu0 %v2867
        %v3339 = vpop.f32.mrb[0].mxu0
        %v3340 = vadd.f32 0.0, %v3339
        %v3341 = vpop.f32.mrb[0].mxu0
        %v3342 = vpop.f32.mrb[0].mxu0
        %v3343 = vadd.f32 0.0, %v3342
        %v3344 = vpop.f32.mrb[0].mxu0
        %3345 = vmatprep.mubr.bf16.mxu0 0
        %3346 = vmatmul.mubr.bf16.gmra.mrb[0].mxu0 %v2868
        %v3347 = vpop.f32.mrb[0].mxu0
        %v3348 = vadd.f32 0.0, %v3347
        %v3349 = vpop.f32.mrb[0].mxu0
        %v3350 = vpop.f32.mrb[0].mxu0
        %v3351 = vadd.f32 0.0, %v3350
        %v3352 = vpop.f32.mrb[0].mxu0
        %3353 = vmatprep.mubr.bf16.mxu0 0
        %3354 = vmatmul.mubr.bf16.gmra.mrb[0].mxu0 %v2869
        %v3355 = vpop.f32.mrb[0].mxu0
        %v3356 = vadd.f32 0.0, %v3355
        %v3357 = vpop.f32.mrb[0].mxu0
        %v3358 = vpop.f32.mrb[0].mxu0
        %v3359 = vadd.f32 0.0, %v3358
        %v3360 = vpop.f32.mrb[0].mxu0
        %3361 = vmatprep.mubr.bf16.mxu0 0
        %3362 = vmatmul.mubr.bf16.gmra.mrb[0].mxu0 %v2870
        %v3363 = vpop.f32.mrb[0].mxu0
        %v3364 = vadd.f32 0.0, %v3363
        %v3365 = vpop.f32.mrb[0].mxu0
        %v3366 = vpop.f32.mrb[0].mxu0
        %v3367 = vadd.f32 0.0, %v3366
        %v3368 = vpop.f32.mrb[0].mxu0
        %3369 = vdwg.mxu0
        %v3402 = vunpack.c.l.b16 %v2823
        %v3403 = vunpack.c.h.b16 %v2823
        %v3404 = vunpack.c.l.b16 %v2824
        %v3405 = vunpack.c.l.b16 %v2825
        %v3406 = vunpack.c.h.b16 %v2825
        %v3407 = vunpack.c.l.b16 %v2826
        %v3408 = vunpack.c.l.b16 %v2827
        %v3409 = vunpack.c.h.b16 %v2827
        %v3410 = vunpack.c.l.b16 %v2828
        %v3411 = vunpack.c.l.b16 %v2829
        %v3412 = vunpack.c.h.b16 %v2829
        %v3413 = vunpack.c.l.b16 %v2830
        %v3414 = vunpack.c.l.b16 %v2831
        %v3415 = vunpack.c.h.b16 %v2831
        %v3416 = vunpack.c.l.b16 %v2832
        %v3417 = vunpack.c.l.b16 %v2833
        %v3418 = vunpack.c.h.b16 %v2833
        %v3419 = vunpack.c.l.b16 %v2834
        %v3420 = vunpack.c.l.b16 %v2835
        %v3421 = vunpack.c.h.b16 %v2835
        %v3422 = vunpack.c.l.b16 %v2836
        %v3423 = vunpack.c.l.b16 %v2837
        %v3424 = vunpack.c.h.b16 %v2837
        %v3425 = vunpack.c.l.b16 %v2838
        %v3426 = vunpack.c.l.b16 %v2839
        %v3427 = vunpack.c.h.b16 %v2839
        %v3428 = vunpack.c.l.b16 %v2840
        %v3429 = vunpack.c.l.b16 %v2841
        %v3430 = vunpack.c.h.b16 %v2841
        %v3431 = vunpack.c.l.b16 %v2842
        %v3432 = vunpack.c.l.b16 %v2843
        %v3433 = vunpack.c.h.b16 %v2843
        %v3434 = vunpack.c.l.b16 %v2844
        %v3435 = vunpack.c.l.b16 %v2845
        %v3436 = vunpack.c.h.b16 %v2845
        %v3437 = vunpack.c.l.b16 %v2846
        %v3438 = vunpack.c.l.b16 %v2847
        %v3439 = vunpack.c.h.b16 %v2847
        %v3440 = vunpack.c.l.b16 %v2848
        %v3441 = vunpack.c.l.b16 %v2849
        %v3442 = vunpack.c.h.b16 %v2849
        %v3443 = vunpack.c.l.b16 %v2850
        %v3444 = vunpack.c.l.b16 %v2851
        %v3445 = vunpack.c.h.b16 %v2851
        %v3446 = vunpack.c.l.b16 %v2852
        %v3447 = vunpack.c.l.b16 %v2853
        %v3448 = vunpack.c.h.b16 %v2853
        %v3449 = vunpack.c.l.b16 %v2854
        %v3450 = vpack.c.b16 %v3405, %v3402
        %v3451 = vpack.c.b16 %v3406, %v3403
        %v3452 = vpack.c.b16 %v3407, %v3404
        %v3453 = vpack.c.b16 %v3411, %v3408
        %v3454 = vpack.c.b16 %v3412, %v3409
        %v3455 = vpack.c.b16 %v3413, %v3410
        %v3456 = vpack.c.b16 %v3417, %v3414
        %v3457 = vpack.c.b16 %v3418, %v3415
        %v3458 = vpack.c.b16 %v3419, %v3416
        %v3459 = vpack.c.b16 %v3423, %v3420
        %v3460 = vpack.c.b16 %v3424, %v3421
        %v3461 = vpack.c.b16 %v3425, %v3422
        %v3462 = vpack.c.b16 %v3429, %v3426
        %v3463 = vpack.c.b16 %v3430, %v3427
        %v3464 = vpack.c.b16 %v3431, %v3428
        %v3465 = vpack.c.b16 %v3435, %v3432
        %v3466 = vpack.c.b16 %v3436, %v3433
        %v3467 = vpack.c.b16 %v3437, %v3434
        %v3468 = vpack.c.b16 %v3441, %v3438
        %v3469 = vpack.c.b16 %v3442, %v3439
        %v3470 = vpack.c.b16 %v3443, %v3440
        %v3471 = vpack.c.b16 %v3447, %v3444
        %v3472 = vpack.c.b16 %v3448, %v3445
        %v3473 = vpack.c.b16 %v3449, %v3446
        %3498 = vmatprep.subr.bf16.mxu0 %v3451
        %3499 = vmatpush1.bf16.msra.mxu0 %v3450
        %3500 = vmatprep.subr.bf16.mxu0 %v3454
        %3501 = vmatpush1.bf16.msra.mxu0 %v3453
        %3502 = vmatprep.subr.bf16.mxu0 %v3457
        %3503 = vmatpush1.bf16.msra.mxu0 %v3456
        %3504 = vmatprep.subr.bf16.mxu0 %v3460
        %3505 = vmatpush1.bf16.msra.mxu0 %v3459
        %3506 = vmatprep.subr.bf16.mxu0 %v3463
        %3507 = vmatpush1.bf16.msra.mxu0 %v3462
        %3508 = vmatprep.subr.bf16.mxu0 %v3466
        %3509 = vmatpush1.bf16.msra.mxu0 %v3465
        %3510 = vmatprep.subr.bf16.mxu0 %v3469
        %3511 = vmatpush1.bf16.msra.mxu0 %v3468
        %3512 = vmatprep.subr.bf16.mxu0 %v3472
        %3513 = vmatpush1.bf16.msra.mxu0 %v3471
        %3514 = vmatprep.subr.bf16.mxu0 0
        %3515 = vmatpush1.bf16.msra.mxu0 0
        %3516 = vmatprep.subr.bf16.mxu0 0
        %3517 = vmatpush1.bf16.msra.mxu0 0
        %3518 = vmatprep.subr.bf16.mxu0 0
        %3519 = vmatpush1.bf16.msra.mxu0 0
        %3520 = vmatprep.subr.bf16.mxu0 0
        %3521 = vmatpush1.bf16.msra.mxu0 0
        %3522 = vmatprep.subr.bf16.mxu0 0
        %3523 = vmatpush1.bf16.msra.mxu0 0
        %3524 = vmatprep.subr.bf16.mxu0 0
        %3525 = vmatpush1.bf16.msra.mxu0 0
        %3526 = vmatprep.subr.bf16.mxu0 0
        %3527 = vmatpush1.bf16.msra.mxu0 0
        %3528 = vmatprep.subr.bf16.mxu0 0
        %3529 = vmatpush1.bf16.msra.mxu0 0
        %3530 = vmatprep.mubr.bf16.mxu0 0
        %3531 = vmatmul.mubr.bf16.gmra.mrb[0].mxu0 %v2807
        %v3532 = vpop.f32.mrb[0].mxu0
        %v3533 = vadd.f32 %v3067, %v3532
        %v3534 = vpop.f32.mrb[0].mxu0
        %v3535 = vadd.f32 %v3069, %v3534
        %v3536 = vpop.f32.mrb[0].mxu0
        %v3537 = vpop.f32.mrb[0].mxu0
        %v3538 = vadd.f32 %v3072, %v3537
        %3539 = vmatprep.mubr.bf16.mxu0 0
        %3540 = vmatmul.mubr.bf16.gmra.mrb[0].mxu0 %v2808
        %v3541 = vpop.f32.mrb[0].mxu0
        %v3542 = vadd.f32 %v3076, %v3541
        %v3543 = vpop.f32.mrb[0].mxu0
        %v3544 = vadd.f32 %v3078, %v3543
        %v3545 = vpop.f32.mrb[0].mxu0
        %v3546 = vpop.f32.mrb[0].mxu0
        %v3547 = vadd.f32 %v3081, %v3546
        %3548 = vmatprep.mubr.bf16.mxu0 0
        %3549 = vmatmul.mubr.bf16.gmra.mrb[0].mxu0 %v2809
        %v3550 = vpop.f32.mrb[0].mxu0
        %v3551 = vadd.f32 %v3085, %v3550
        %v3552 = vpop.f32.mrb[0].mxu0
        %v3553 = vadd.f32 %v3087, %v3552
        %v3554 = vpop.f32.mrb[0].mxu0
        %v3555 = vpop.f32.mrb[0].mxu0
        %v3556 = vadd.f32 %v3090, %v3555
        %3557 = vmatprep.mubr.bf16.mxu0 0
        %3558 = vmatmul.mubr.bf16.gmra.mrb[0].mxu0 %v2810
        %v3559 = vpop.f32.mrb[0].mxu0
        %v3560 = vadd.f32 %v3094, %v3559
        %v3561 = vpop.f32.mrb[0].mxu0
        %v3562 = vadd.f32 %v3096, %v3561
        %v3563 = vpop.f32.mrb[0].mxu0
        %v3564 = vpop.f32.mrb[0].mxu0
        %v3565 = vadd.f32 %v3099, %v3564
        %3566 = vmatprep.mubr.bf16.mxu0 0
        %3567 = vmatmul.mubr.bf16.gmra.mrb[0].mxu0 %v2811
        %v3568 = vpop.f32.mrb[0].mxu0
        %v3569 = vadd.f32 %v3103, %v3568
        %v3570 = vpop.f32.mrb[0].mxu0
        %v3571 = vadd.f32 %v3105, %v3570
        %v3572 = vpop.f32.mrb[0].mxu0
        %v3573 = vpop.f32.mrb[0].mxu0
        %v3574 = vadd.f32 %v3108, %v3573
        %3575 = vmatprep.mubr.bf16.mxu0 0
        %3576 = vmatmul.mubr.bf16.gmra.mrb[0].mxu0 %v2812
        %v3577 = vpop.f32.mrb[0].mxu0
        %v3578 = vadd.f32 %v3112, %v3577
        %v3579 = vpop.f32.mrb[0].mxu0
        %v3580 = vadd.f32 %v3114, %v3579
        %v3581 = vpop.f32.mrb[0].mxu0
        %v3582 = vpop.f32.mrb[0].mxu0
        %v3583 = vadd.f32 %v3117, %v3582
        %3584 = vmatprep.mubr.bf16.mxu0 0
        %3585 = vmatmul.mubr.bf16.gmra.mrb[0].mxu0 %v2813
        %v3586 = vpop.f32.mrb[0].mxu0
        %v3587 = vadd.f32 %v3121, %v3586
        %v3588 = vpop.f32.mrb[0].mxu0
        %v3589 = vadd.f32 %v3123, %v3588
        %v3590 = vpop.f32.mrb[0].mxu0
        %v3591 = vpop.f32.mrb[0].mxu0
        %v3592 = vadd.f32 %v3126, %v3591
        %3593 = vmatprep.mubr.bf16.mxu0 0
        %3594 = vmatmul.mubr.bf16.gmra.mrb[0].mxu0 %v2814
        %v3595 = vpop.f32.mrb[0].mxu0
        %v3596 = vadd.f32 %v3130, %v3595
        %v3597 = vpop.f32.mrb[0].mxu0
        %v3598 = vadd.f32 %v3132, %v3597
        %v3599 = vpop.f32.mrb[0].mxu0
        %v3600 = vpop.f32.mrb[0].mxu0
        %v3601 = vadd.f32 %v3135, %v3600
        %3602 = vmatprep.mubr.bf16.mxu0 0
        %3603 = vmatmul.mubr.bf16.gmra.mrb[0].mxu0 %v2815
        %v3604 = vpop.f32.mrb[0].mxu0
        %v3605 = vadd.f32 %v3139, %v3604
        %v3606 = vpop.f32.mrb[0].mxu0
        %v3607 = vadd.f32 %v3141, %v3606
        %v3608 = vpop.f32.mrb[0].mxu0
        %v3609 = vpop.f32.mrb[0].mxu0
        %v3610 = vadd.f32 %v3144, %v3609
        %3611 = vmatprep.mubr.bf16.mxu0 0
        %3612 = vmatmul.mubr.bf16.gmra.mrb[0].mxu0 %v2816
        %v3613 = vpop.f32.mrb[0].mxu0
        %v3614 = vadd.f32 %v3148, %v3613
        %v3615 = vpop.f32.mrb[0].mxu0
        %v3616 = vadd.f32 %v3150, %v3615
        %v3617 = vpop.f32.mrb[0].mxu0
        %v3618 = vpop.f32.mrb[0].mxu0
        %v3619 = vadd.f32 %v3153, %v3618
        %3620 = vmatprep.mubr.bf16.mxu0 0
        %3621 = vmatmul.mubr.bf16.gmra.mrb[0].mxu0 %v2817
        %v3622 = vpop.f32.mrb[0].mxu0
        %v3623 = vadd.f32 %v3157, %v3622
        %v3624 = vpop.f32.mrb[0].mxu0
        %v3625 = vadd.f32 %v3159, %v3624
        %v3626 = vpop.f32.mrb[0].mxu0
        %v3627 = vpop.f32.mrb[0].mxu0
        %v3628 = vadd.f32 %v3162, %v3627
        %3629 = vmatprep.mubr.bf16.mxu0 0
        %3630 = vmatmul.mubr.bf16.gmra.mrb[0].mxu0 %v2818
        %v3631 = vpop.f32.mrb[0].mxu0
        %v3632 = vadd.f32 %v3166, %v3631
        %v3633 = vpop.f32.mrb[0].mxu0
        %v3634 = vadd.f32 %v3168, %v3633
        %v3635 = vpop.f32.mrb[0].mxu0
        %v3636 = vpop.f32.mrb[0].mxu0
        %v3637 = vadd.f32 %v3171, %v3636
        %3638 = vmatprep.mubr.bf16.mxu0 0
        %3639 = vmatmul.mubr.bf16.gmra.mrb[0].mxu0 %v2819
        %v3640 = vpop.f32.mrb[0].mxu0
        %v3641 = vadd.f32 %v3175, %v3640
        %v3642 = vpop.f32.mrb[0].mxu0
        %v3643 = vadd.f32 %v3177, %v3642
        %v3644 = vpop.f32.mrb[0].mxu0
        %v3645 = vpop.f32.mrb[0].mxu0
        %v3646 = vadd.f32 %v3180, %v3645
        %3647 = vmatprep.mubr.bf16.mxu0 0
        %3648 = vmatmul.mubr.bf16.gmra.mrb[0].mxu0 %v2820
        %v3649 = vpop.f32.mrb[0].mxu0
        %v3650 = vadd.f32 %v3184, %v3649
        %v3651 = vpop.f32.mrb[0].mxu0
        %v3652 = vadd.f32 %v3186, %v3651
        %v3653 = vpop.f32.mrb[0].mxu0
        %v3654 = vpop.f32.mrb[0].mxu0
        %v3655 = vadd.f32 %v3189, %v3654
        %3656 = vmatprep.mubr.bf16.mxu0 0
        %3657 = vmatmul.mubr.bf16.gmra.mrb[0].mxu0 %v2821
        %v3658 = vpop.f32.mrb[0].mxu0
        %v3659 = vadd.f32 %v3193, %v3658
        %v3660 = vpop.f32.mrb[0].mxu0
        %v3661 = vadd.f32 %v3195, %v3660
        %v3662 = vpop.f32.mrb[0].mxu0
        %v3663 = vpop.f32.mrb[0].mxu0
        %v3664 = vadd.f32 %v3198, %v3663
        %3665 = vmatprep.mubr.bf16.mxu0 0
        %3666 = vmatmul.mubr.bf16.gmra.mrb[0].mxu0 %v2822
        %v3667 = vpop.f32.mrb[0].mxu0
        %v3668 = vadd.f32 %v3202, %v3667
        %v3669 = vpop.f32.mrb[0].mxu0
        %v3670 = vadd.f32 %v3204, %v3669
        %v3671 = vpop.f32.mrb[0].mxu0
        %v3672 = vpop.f32.mrb[0].mxu0
        %v3673 = vadd.f32 %v3207, %v3672
        %3674 = vdwg.mxu0
        %3675 = vmatprep.subr.bf16.mxu0 0
        %3676 = vmatpush1.bf16.msra.mxu0 %v3452
        %3677 = vmatprep.subr.bf16.mxu0 0
        %3678 = vmatpush1.bf16.msra.mxu0 %v3455
        %3679 = vmatprep.subr.bf16.mxu0 0
        %3680 = vmatpush1.bf16.msra.mxu0 %v3458
        %3681 = vmatprep.subr.bf16.mxu0 0
        %3682 = vmatpush1.bf16.msra.mxu0 %v3461
        %3683 = vmatprep.subr.bf16.mxu0 0
        %3684 = vmatpush1.bf16.msra.mxu0 %v3464
        %3685 = vmatprep.subr.bf16.mxu0 0
        %3686 = vmatpush1.bf16.msra.mxu0 %v3467
        %3687 = vmatprep.subr.bf16.mxu0 0
        %3688 = vmatpush1.bf16.msra.mxu0 %v3470
        %3689 = vmatprep.subr.bf16.mxu0 0
        %3690 = vmatpush1.bf16.msra.mxu0 %v3473
        %3691 = vmatprep.subr.bf16.mxu0 0
        %3692 = vmatpush1.bf16.msra.mxu0 0
        %3693 = vmatprep.subr.bf16.mxu0 0
        %3694 = vmatpush1.bf16.msra.mxu0 0
        %3695 = vmatprep.subr.bf16.mxu0 0
        %3696 = vmatpush1.bf16.msra.mxu0 0
        %3697 = vmatprep.subr.bf16.mxu0 0
        %3698 = vmatpush1.bf16.msra.mxu0 0
        %3699 = vmatprep.subr.bf16.mxu0 0
        %3700 = vmatpush1.bf16.msra.mxu0 0
        %3701 = vmatprep.subr.bf16.mxu0 0
        %3702 = vmatpush1.bf16.msra.mxu0 0
        %3703 = vmatprep.subr.bf16.mxu0 0
        %3704 = vmatpush1.bf16.msra.mxu0 0
        %3705 = vmatprep.subr.bf16.mxu0 0
        %3706 = vmatpush1.bf16.msra.mxu0 0
        %3707 = vmatprep.mubr.bf16.mxu0 0
        %3708 = vmatmul.mubr.bf16.gmra.mrb[0].mxu0 %v2807
        %v3709 = vpop.f32.mrb[0].mxu0
        %v3710 = vadd.f32 %v3244, %v3709
        %v3711 = vpop.f32.mrb[0].mxu0
        %v3712 = vpop.f32.mrb[0].mxu0
        %v3713 = vadd.f32 %v3247, %v3712
        %v3714 = vpop.f32.mrb[0].mxu0
        %3715 = vmatprep.mubr.bf16.mxu0 0
        %3716 = vmatmul.mubr.bf16.gmra.mrb[0].mxu0 %v2808
        %v3717 = vpop.f32.mrb[0].mxu0
        %v3718 = vadd.f32 %v3252, %v3717
        %v3719 = vpop.f32.mrb[0].mxu0
        %v3720 = vpop.f32.mrb[0].mxu0
        %v3721 = vadd.f32 %v3255, %v3720
        %v3722 = vpop.f32.mrb[0].mxu0
        %3723 = vmatprep.mubr.bf16.mxu0 0
        %3724 = vmatmul.mubr.bf16.gmra.mrb[0].mxu0 %v2809
        %v3725 = vpop.f32.mrb[0].mxu0
        %v3726 = vadd.f32 %v3260, %v3725
        %v3727 = vpop.f32.mrb[0].mxu0
        %v3728 = vpop.f32.mrb[0].mxu0
        %v3729 = vadd.f32 %v3263, %v3728
        %v3730 = vpop.f32.mrb[0].mxu0
        %3731 = vmatprep.mubr.bf16.mxu0 0
        %3732 = vmatmul.mubr.bf16.gmra.mrb[0].mxu0 %v2810
        %v3733 = vpop.f32.mrb[0].mxu0
        %v3734 = vadd.f32 %v3268, %v3733
        %v3735 = vpop.f32.mrb[0].mxu0
        %v3736 = vpop.f32.mrb[0].mxu0
        %v3737 = vadd.f32 %v3271, %v3736
        %v3738 = vpop.f32.mrb[0].mxu0
        %3739 = vmatprep.mubr.bf16.mxu0 0
        %3740 = vmatmul.mubr.bf16.gmra.mrb[0].mxu0 %v2811
        %v3741 = vpop.f32.mrb[0].mxu0
        %v3742 = vadd.f32 %v3276, %v3741
        %v3743 = vpop.f32.mrb[0].mxu0
        %v3744 = vpop.f32.mrb[0].mxu0
        %v3745 = vadd.f32 %v3279, %v3744
        %v3746 = vpop.f32.mrb[0].mxu0
        %3747 = vmatprep.mubr.bf16.mxu0 0
        %3748 = vmatmul.mubr.bf16.gmra.mrb[0].mxu0 %v2812
        %v3749 = vpop.f32.mrb[0].mxu0
        %v3750 = vadd.f32 %v3284, %v3749
        %v3751 = vpop.f32.mrb[0].mxu0
        %v3752 = vpop.f32.mrb[0].mxu0
        %v3753 = vadd.f32 %v3287, %v3752
        %v3754 = vpop.f32.mrb[0].mxu0
        %3755 = vmatprep.mubr.bf16.mxu0 0
        %3756 = vmatmul.mubr.bf16.gmra.mrb[0].mxu0 %v2813
        %v3757 = vpop.f32.mrb[0].mxu0
        %v3758 = vadd.f32 %v3292, %v3757
        %v3759 = vpop.f32.mrb[0].mxu0
        %v3760 = vpop.f32.mrb[0].mxu0
        %v3761 = vadd.f32 %v3295, %v3760
        %v3762 = vpop.f32.mrb[0].mxu0
        %3763 = vmatprep.mubr.bf16.mxu0 0
        %3764 = vmatmul.mubr.bf16.gmra.mrb[0].mxu0 %v2814
        %v3765 = vpop.f32.mrb[0].mxu0
        %v3766 = vadd.f32 %v3300, %v3765
        %v3767 = vpop.f32.mrb[0].mxu0
        %v3768 = vpop.f32.mrb[0].mxu0
        %v3769 = vadd.f32 %v3303, %v3768
        %v3770 = vpop.f32.mrb[0].mxu0
        %3771 = vmatprep.mubr.bf16.mxu0 0
        %3772 = vmatmul.mubr.bf16.gmra.mrb[0].mxu0 %v2815
        %v3773 = vpop.f32.mrb[0].mxu0
        %v3774 = vadd.f32 %v3308, %v3773
        %v3775 = vpop.f32.mrb[0].mxu0
        %v3776 = vpop.f32.mrb[0].mxu0
        %v3777 = vadd.f32 %v3311, %v3776
        %v3778 = vpop.f32.mrb[0].mxu0
        %3779 = vmatprep.mubr.bf16.mxu0 0
        %3780 = vmatmul.mubr.bf16.gmra.mrb[0].mxu0 %v2816
        %v3781 = vpop.f32.mrb[0].mxu0
        %v3782 = vadd.f32 %v3316, %v3781
        %v3783 = vpop.f32.mrb[0].mxu0
        %v3784 = vpop.f32.mrb[0].mxu0
        %v3785 = vadd.f32 %v3319, %v3784
        %v3786 = vpop.f32.mrb[0].mxu0
        %3787 = vmatprep.mubr.bf16.mxu0 0
        %3788 = vmatmul.mubr.bf16.gmra.mrb[0].mxu0 %v2817
        %v3789 = vpop.f32.mrb[0].mxu0
        %v3790 = vadd.f32 %v3324, %v3789
        %v3791 = vpop.f32.mrb[0].mxu0
        %v3792 = vpop.f32.mrb[0].mxu0
        %v3793 = vadd.f32 %v3327, %v3792
        %v3794 = vpop.f32.mrb[0].mxu0
        %3795 = vmatprep.mubr.bf16.mxu0 0
        %3796 = vmatmul.mubr.bf16.gmra.mrb[0].mxu0 %v2818
        %v3797 = vpop.f32.mrb[0].mxu0
        %v3798 = vadd.f32 %v3332, %v3797
        %v3799 = vpop.f32.mrb[0].mxu0
        %v3800 = vpop.f32.mrb[0].mxu0
        %v3801 = vadd.f32 %v3335, %v3800
        %v3802 = vpop.f32.mrb[0].mxu0
        %3803 = vmatprep.mubr.bf16.mxu0 0
        %3804 = vmatmul.mubr.bf16.gmra.mrb[0].mxu0 %v2819
        %v3805 = vpop.f32.mrb[0].mxu0
        %v3806 = vadd.f32 %v3340, %v3805
        %v3807 = vpop.f32.mrb[0].mxu0
        %v3808 = vpop.f32.mrb[0].mxu0
        %v3809 = vadd.f32 %v3343, %v3808
        %v3810 = vpop.f32.mrb[0].mxu0
        %3811 = vmatprep.mubr.bf16.mxu0 0
        %3812 = vmatmul.mubr.bf16.gmra.mrb[0].mxu0 %v2820
        %v3813 = vpop.f32.mrb[0].mxu0
        %v3814 = vadd.f32 %v3348, %v3813
        %v3815 = vpop.f32.mrb[0].mxu0
        %v3816 = vpop.f32.mrb[0].mxu0
        %v3817 = vadd.f32 %v3351, %v3816
        %v3818 = vpop.f32.mrb[0].mxu0
        %3819 = vmatprep.mubr.bf16.mxu0 0
        %3820 = vmatmul.mubr.bf16.gmra.mrb[0].mxu0 %v2821
        %v3821 = vpop.f32.mrb[0].mxu0
        %v3822 = vadd.f32 %v3356, %v3821
        %v3823 = vpop.f32.mrb[0].mxu0
        %v3824 = vpop.f32.mrb[0].mxu0
        %v3825 = vadd.f32 %v3359, %v3824
        %v3826 = vpop.f32.mrb[0].mxu0
        %3827 = vmatprep.mubr.bf16.mxu0 0
        %3828 = vmatmul.mubr.bf16.gmra.mrb[0].mxu0 %v2822
        %v3829 = vpop.f32.mrb[0].mxu0
        %v3830 = vadd.f32 %v3364, %v3829
        %v3831 = vpop.f32.mrb[0].mxu0
        %v3832 = vpop.f32.mrb[0].mxu0
        %v3833 = vadd.f32 %v3367, %v3832
        %v3834 = vpop.f32.mrb[0].mxu0
        %3835 = vdwg.mxu0
        %s3836 = scalar_lea.vmem [#allocation2], 16
        %v3837 = vld [vmem:[%s3836] sm:$0xff]
        %v3838 = vld [vmem:[%s3836 + $0x8] sm:$0xff]
        %v3839 = vld [vmem:[%s3836 + $0x10] sm:$0xff]
        %v3840 = vld [vmem:[%s3836 + $0x18] sm:$0xff]
        %v3841 = vld [vmem:[%s3836 + $0x20] sm:$0xff]
        %v3842 = vld [vmem:[%s3836 + $0x28] sm:$0xff]
        %v3843 = vld [vmem:[%s3836 + $0x30] sm:$0xff]
        %v3844 = vld [vmem:[%s3836 + $0x38] sm:$0xff]
        %v3845 = vld [vmem:[%s3836 + $0x50] sm:$0xff]
        %v3846 = vld [vmem:[%s3836 + $0x58] sm:$0xff]
        %v3847 = vld [vmem:[%s3836 + $0x60] sm:$0xff]
        %v3848 = vld [vmem:[%s3836 + $0x68] sm:$0xff]
        %v3849 = vld [vmem:[%s3836 + $0x70] sm:$0xff]
        %v3850 = vld [vmem:[%s3836 + $0x78] sm:$0xff]
        %v3851 = vld [vmem:[%s3836 + $0x80] sm:$0xff]
        %v3852 = vld [vmem:[%s3836 + $0x88] sm:$0xff]
        %s3853 = scalar_lea.vmem [#allocation8], 384
        %v3854 = vld [vmem:[%s3853] sm:$0xff]
        %v3855 = vld [vmem:[%s3853 + $0x8] sm:$0xf]
        %v3856 = vld [vmem:[%s3853 + $0xc] sm:$0xff]
        %v3857 = vld [vmem:[%s3853 + $0x14] sm:$0xf]
        %v3858 = vld [vmem:[%s3853 + $0x18] sm:$0xff]
        %v3859 = vld [vmem:[%s3853 + $0x20] sm:$0xf]
        %v3860 = vld [vmem:[%s3853 + $0x24] sm:$0xff]
        %v3861 = vld [vmem:[%s3853 + $0x2c] sm:$0xf]
        %v3862 = vld [vmem:[%s3853 + $0x30] sm:$0xff]
        %v3863 = vld [vmem:[%s3853 + $0x38] sm:$0xf]
        %v3864 = vld [vmem:[%s3853 + $0x3c] sm:$0xff]
        %v3865 = vld [vmem:[%s3853 + $0x44] sm:$0xf]
        %v3866 = vld [vmem:[%s3853 + $0x48] sm:$0xff]
        %v3867 = vld [vmem:[%s3853 + $0x50] sm:$0xf]
        %v3868 = vld [vmem:[%s3853 + $0x54] sm:$0xff]
        %v3869 = vld [vmem:[%s3853 + $0x5c] sm:$0xf]
        %v3870 = vld [vmem:[%s3853 + $0x60] sm:$0xff]
        %v3871 = vld [vmem:[%s3853 + $0x68] sm:$0xf]
        %v3872 = vld [vmem:[%s3853 + $0x6c] sm:$0xff]
        %v3873 = vld [vmem:[%s3853 + $0x74] sm:$0xf]
        %v3874 = vld [vmem:[%s3853 + $0x78] sm:$0xff]
        %v3875 = vld [vmem:[%s3853 + $0x80] sm:$0xf]
        %v3876 = vld [vmem:[%s3853 + $0x84] sm:$0xff]
        %v3877 = vld [vmem:[%s3853 + $0x8c] sm:$0xf]
        %v3878 = vld [vmem:[%s3853 + $0x90] sm:$0xff]
        %v3879 = vld [vmem:[%s3853 + $0x98] sm:$0xf]
        %v3880 = vld [vmem:[%s3853 + $0x9c] sm:$0xff]
        %v3881 = vld [vmem:[%s3853 + $0xa4] sm:$0xf]
        %v3882 = vld [vmem:[%s3853 + $0xa8] sm:$0xff]
        %v3883 = vld [vmem:[%s3853 + $0xb0] sm:$0xf]
        %v3884 = vld [vmem:[%s3853 + $0xb4] sm:$0xff]
        %v3885 = vld [vmem:[%s3853 + $0xbc] sm:$0xf]
        %v3918 = vunpack.c.l.b16 %v3854
        %v3919 = vunpack.c.h.b16 %v3854
        %v3920 = vunpack.c.l.b16 %v3855
        %v3921 = vunpack.c.l.b16 %v3856
        %v3922 = vunpack.c.h.b16 %v3856
        %v3923 = vunpack.c.l.b16 %v3857
        %v3924 = vunpack.c.l.b16 %v3858
        %v3925 = vunpack.c.h.b16 %v3858
        %v3926 = vunpack.c.l.b16 %v3859
        %v3927 = vunpack.c.l.b16 %v3860
        %v3928 = vunpack.c.h.b16 %v3860
        %v3929 = vunpack.c.l.b16 %v3861
        %v3930 = vunpack.c.l.b16 %v3862
        %v3931 = vunpack.c.h.b16 %v3862
        %v3932 = vunpack.c.l.b16 %v3863
        %v3933 = vunpack.c.l.b16 %v3864
        %v3934 = vunpack.c.h.b16 %v3864
        %v3935 = vunpack.c.l.b16 %v3865
        %v3936 = vunpack.c.l.b16 %v3866
        %v3937 = vunpack.c.h.b16 %v3866
        %v3938 = vunpack.c.l.b16 %v3867
        %v3939 = vunpack.c.l.b16 %v3868
        %v3940 = vunpack.c.h.b16 %v3868
        %v3941 = vunpack.c.l.b16 %v3869
        %v3942 = vunpack.c.l.b16 %v3870
        %v3943 = vunpack.c.h.b16 %v3870
        %v3944 = vunpack.c.l.b16 %v3871
        %v3945 = vunpack.c.l.b16 %v3872
        %v3946 = vunpack.c.h.b16 %v3872
        %v3947 = vunpack.c.l.b16 %v3873
        %v3948 = vunpack.c.l.b16 %v3874
        %v3949 = vunpack.c.h.b16 %v3874
        %v3950 = vunpack.c.l.b16 %v3875
        %v3951 = vunpack.c.l.b16 %v3876
        %v3952 = vunpack.c.h.b16 %v3876
        %v3953 = vunpack.c.l.b16 %v3877
        %v3954 = vunpack.c.l.b16 %v3878
        %v3955 = vunpack.c.h.b16 %v3878
        %v3956 = vunpack.c.l.b16 %v3879
        %v3957 = vunpack.c.l.b16 %v3880
        %v3958 = vunpack.c.h.b16 %v3880
        %v3959 = vunpack.c.l.b16 %v3881
        %v3960 = vunpack.c.l.b16 %v3882
        %v3961 = vunpack.c.h.b16 %v3882
        %v3962 = vunpack.c.l.b16 %v3883
        %v3963 = vunpack.c.l.b16 %v3884
        %v3964 = vunpack.c.h.b16 %v3884
        %v3965 = vunpack.c.l.b16 %v3885
        %v3966 = vpack.c.b16 %v3921, %v3918
        %v3967 = vpack.c.b16 %v3922, %v3919
        %v3968 = vpack.c.b16 %v3923, %v3920
        %v3969 = vpack.c.b16 %v3927, %v3924
        %v3970 = vpack.c.b16 %v3928, %v3925
        %v3971 = vpack.c.b16 %v3929, %v3926
        %v3972 = vpack.c.b16 %v3933, %v3930
        %v3973 = vpack.c.b16 %v3934, %v3931
        %v3974 = vpack.c.b16 %v3935, %v3932
        %v3975 = vpack.c.b16 %v3939, %v3936
        %v3976 = vpack.c.b16 %v3940, %v3937
        %v3977 = vpack.c.b16 %v3941, %v3938
        %v3978 = vpack.c.b16 %v3945, %v3942
        %v3979 = vpack.c.b16 %v3946, %v3943
        %v3980 = vpack.c.b16 %v3947, %v3944
        %v3981 = vpack.c.b16 %v3951, %v3948
        %v3982 = vpack.c.b16 %v3952, %v3949
        %v3983 = vpack.c.b16 %v3953, %v3950
        %v3984 = vpack.c.b16 %v3957, %v3954
        %v3985 = vpack.c.b16 %v3958, %v3955
        %v3986 = vpack.c.b16 %v3959, %v3956
        %v3987 = vpack.c.b16 %v3963, %v3960
        %v3988 = vpack.c.b16 %v3964, %v3961
        %v3989 = vpack.c.b16 %v3965, %v3962
        %4014 = vmatprep.subr.bf16.mxu0 %v3967
        %4015 = vmatpush1.bf16.msra.mxu0 %v3966
        %4016 = vmatprep.subr.bf16.mxu0 %v3970
        %4017 = vmatpush1.bf16.msra.mxu0 %v3969
        %4018 = vmatprep.subr.bf16.mxu0 %v3973
        %4019 = vmatpush1.bf16.msra.mxu0 %v3972
        %4020 = vmatprep.subr.bf16.mxu0 %v3976
        %4021 = vmatpush1.bf16.msra.mxu0 %v3975
        %4022 = vmatprep.subr.bf16.mxu0 %v3979
        %4023 = vmatpush1.bf16.msra.mxu0 %v3978
        %4024 = vmatprep.subr.bf16.mxu0 %v3982
        %4025 = vmatpush1.bf16.msra.mxu0 %v3981
        %4026 = vmatprep.subr.bf16.mxu0 %v3985
        %4027 = vmatpush1.bf16.msra.mxu0 %v3984
        %4028 = vmatprep.subr.bf16.mxu0 %v3988
        %4029 = vmatpush1.bf16.msra.mxu0 %v3987
        %4030 = vmatprep.subr.bf16.mxu0 0
        %4031 = vmatpush1.bf16.msra.mxu0 0
        %4032 = vmatprep.subr.bf16.mxu0 0
        %4033 = vmatpush1.bf16.msra.mxu0 0
        %4034 = vmatprep.subr.bf16.mxu0 0
        %4035 = vmatpush1.bf16.msra.mxu0 0
        %4036 = vmatprep.subr.bf16.mxu0 0
        %4037 = vmatpush1.bf16.msra.mxu0 0
        %4038 = vmatprep.subr.bf16.mxu0 0
        %4039 = vmatpush1.bf16.msra.mxu0 0
        %4040 = vmatprep.subr.bf16.mxu0 0
        %4041 = vmatpush1.bf16.msra.mxu0 0
        %4042 = vmatprep.subr.bf16.mxu0 0
        %4043 = vmatpush1.bf16.msra.mxu0 0
        %4044 = vmatprep.subr.bf16.mxu0 0
        %4045 = vmatpush1.bf16.msra.mxu0 0
        %4046 = vmatprep.mubr.bf16.mxu0 0
        %4047 = vmatmul.mubr.bf16.gmra.mrb[0].mxu0 %v3837
        %v4048 = vpop.f32.mrb[0].mxu0
        %v4049 = vadd.f32 0.0, %v4048
        %v4050 = vpop.f32.mrb[0].mxu0
        %v4051 = vadd.f32 0.0, %v4050
        %v4052 = vpop.f32.mrb[0].mxu0
        %v4053 = vpop.f32.mrb[0].mxu0
        %v4054 = vadd.f32 0.0, %v4053
        %4055 = vmatprep.mubr.bf16.mxu0 0
        %4056 = vmatmul.mubr.bf16.gmra.mrb[0].mxu0 %v3838
        %v4057 = vpop.f32.mrb[0].mxu0
        %v4058 = vadd.f32 0.0, %v4057
        %v4059 = vpop.f32.mrb[0].mxu0
        %v4060 = vadd.f32 0.0, %v4059
        %v4061 = vpop.f32.mrb[0].mxu0
        %v4062 = vpop.f32.mrb[0].mxu0
        %v4063 = vadd.f32 0.0, %v4062
        %4064 = vmatprep.mubr.bf16.mxu0 0
        %4065 = vmatmul.mubr.bf16.gmra.mrb[0].mxu0 %v3839
        %v4066 = vpop.f32.mrb[0].mxu0
        %v4067 = vadd.f32 0.0, %v4066
        %v4068 = vpop.f32.mrb[0].mxu0
        %v4069 = vadd.f32 0.0, %v4068
        %v4070 = vpop.f32.mrb[0].mxu0
        %v4071 = vpop.f32.mrb[0].mxu0
        %v4072 = vadd.f32 0.0, %v4071
        %4073 = vmatprep.mubr.bf16.mxu0 0
        %4074 = vmatmul.mubr.bf16.gmra.mrb[0].mxu0 %v3840
        %v4075 = vpop.f32.mrb[0].mxu0
        %v4076 = vadd.f32 0.0, %v4075
        %v4077 = vpop.f32.mrb[0].mxu0
        %v4078 = vadd.f32 0.0, %v4077
        %v4079 = vpop.f32.mrb[0].mxu0
        %v4080 = vpop.f32.mrb[0].mxu0
        %v4081 = vadd.f32 0.0, %v4080
        %4082 = vmatprep.mubr.bf16.mxu0 0
        %4083 = vmatmul.mubr.bf16.gmra.mrb[0].mxu0 %v3841
        %v4084 = vpop.f32.mrb[0].mxu0
        %v4085 = vadd.f32 0.0, %v4084
        %v4086 = vpop.f32.mrb[0].mxu0
        %v4087 = vadd.f32 0.0, %v4086
        %v4088 = vpop.f32.mrb[0].mxu0
        %v4089 = vpop.f32.mrb[0].mxu0
        %v4090 = vadd.f32 0.0, %v4089
        %4091 = vmatprep.mubr.bf16.mxu0 0
        %4092 = vmatmul.mubr.bf16.gmra.mrb[0].mxu0 %v3842
        %v4093 = vpop.f32.mrb[0].mxu0
        %v4094 = vadd.f32 0.0, %v4093
        %v4095 = vpop.f32.mrb[0].mxu0
        %v4096 = vadd.f32 0.0, %v4095
        %v4097 = vpop.f32.mrb[0].mxu0
        %v4098 = vpop.f32.mrb[0].mxu0
        %v4099 = vadd.f32 0.0, %v4098
        %4100 = vmatprep.mubr.bf16.mxu0 0
        %4101 = vmatmul.mubr.bf16.gmra.mrb[0].mxu0 %v3843
        %v4102 = vpop.f32.mrb[0].mxu0
        %v4103 = vadd.f32 0.0, %v4102
        %v4104 = vpop.f32.mrb[0].mxu0
        %v4105 = vadd.f32 0.0, %v4104
        %v4106 = vpop.f32.mrb[0].mxu0
        %v4107 = vpop.f32.mrb[0].mxu0
        %v4108 = vadd.f32 0.0, %v4107
        %4109 = vmatprep.mubr.bf16.mxu0 0
        %4110 = vmatmul.mubr.bf16.gmra.mrb[0].mxu0 %v3844
        %v4111 = vpop.f32.mrb[0].mxu0
        %v4112 = vadd.f32 0.0, %v4111
        %v4113 = vpop.f32.mrb[0].mxu0
        %v4114 = vadd.f32 0.0, %v4113
        %v4115 = vpop.f32.mrb[0].mxu0
        %v4116 = vpop.f32.mrb[0].mxu0
        %v4117 = vadd.f32 0.0, %v4116
        %4118 = vmatprep.mubr.bf16.mxu0 0
        %4119 = vmatmul.mubr.bf16.gmra.mrb[0].mxu0 %v3845
        %v4120 = vpop.f32.mrb[0].mxu0
        %v4121 = vadd.f32 0.0, %v4120
        %v4122 = vpop.f32.mrb[0].mxu0
        %v4123 = vadd.f32 0.0, %v4122
        %v4124 = vpop.f32.mrb[0].mxu0
        %v4125 = vpop.f32.mrb[0].mxu0
        %v4126 = vadd.f32 0.0, %v4125
        %4127 = vmatprep.mubr.bf16.mxu0 0
        %4128 = vmatmul.mubr.bf16.gmra.mrb[0].mxu0 %v3846
        %v4129 = vpop.f32.mrb[0].mxu0
        %v4130 = vadd.f32 0.0, %v4129
        %v4131 = vpop.f32.mrb[0].mxu0
        %v4132 = vadd.f32 0.0, %v4131
        %v4133 = vpop.f32.mrb[0].mxu0
        %v4134 = vpop.f32.mrb[0].mxu0
        %v4135 = vadd.f32 0.0, %v4134
        %4136 = vmatprep.mubr.bf16.mxu0 0
        %4137 = vmatmul.mubr.bf16.gmra.mrb[0].mxu0 %v3847
        %v4138 = vpop.f32.mrb[0].mxu0
        %v4139 = vadd.f32 0.0, %v4138
        %v4140 = vpop.f32.mrb[0].mxu0
        %v4141 = vadd.f32 0.0, %v4140
        %v4142 = vpop.f32.mrb[0].mxu0
        %v4143 = vpop.f32.mrb[0].mxu0
        %v4144 = vadd.f32 0.0, %v4143
        %4145 = vmatprep.mubr.bf16.mxu0 0
        %4146 = vmatmul.mubr.bf16.gmra.mrb[0].mxu0 %v3848
        %v4147 = vpop.f32.mrb[0].mxu0
        %v4148 = vadd.f32 0.0, %v4147
        %v4149 = vpop.f32.mrb[0].mxu0
        %v4150 = vadd.f32 0.0, %v4149
        %v4151 = vpop.f32.mrb[0].mxu0
        %v4152 = vpop.f32.mrb[0].mxu0
        %v4153 = vadd.f32 0.0, %v4152
        %4154 = vmatprep.mubr.bf16.mxu0 0
        %4155 = vmatmul.mubr.bf16.gmra.mrb[0].mxu0 %v3849
        %v4156 = vpop.f32.mrb[0].mxu0
        %v4157 = vadd.f32 0.0, %v4156
        %v4158 = vpop.f32.mrb[0].mxu0
        %v4159 = vadd.f32 0.0, %v4158
        %v4160 = vpop.f32.mrb[0].mxu0
        %v4161 = vpop.f32.mrb[0].mxu0
        %v4162 = vadd.f32 0.0, %v4161
        %4163 = vmatprep.mubr.bf16.mxu0 0
        %4164 = vmatmul.mubr.bf16.gmra.mrb[0].mxu0 %v3850
        %v4165 = vpop.f32.mrb[0].mxu0
        %v4166 = vadd.f32 0.0, %v4165
        %v4167 = vpop.f32.mrb[0].mxu0
        %v4168 = vadd.f32 0.0, %v4167
        %v4169 = vpop.f32.mrb[0].mxu0
        %v4170 = vpop.f32.mrb[0].mxu0
        %v4171 = vadd.f32 0.0, %v4170
        %4172 = vmatprep.mubr.bf16.mxu0 0
        %4173 = vmatmul.mubr.bf16.gmra.mrb[0].mxu0 %v3851
        %v4174 = vpop.f32.mrb[0].mxu0
        %v4175 = vadd.f32 0.0, %v4174
        %v4176 = vpop.f32.mrb[0].mxu0
        %v4177 = vadd.f32 0.0, %v4176
        %v4178 = vpop.f32.mrb[0].mxu0
        %v4179 = vpop.f32.mrb[0].mxu0
        %v4180 = vadd.f32 0.0, %v4179
        %4181 = vmatprep.mubr.bf16.mxu0 0
        %4182 = vmatmul.mubr.bf16.gmra.mrb[0].mxu0 %v3852
        %v4183 = vpop.f32.mrb[0].mxu0
        %v4184 = vadd.f32 0.0, %v4183
        %v4185 = vpop.f32.mrb[0].mxu0
        %v4186 = vadd.f32 0.0, %v4185
        %v4187 = vpop.f32.mrb[0].mxu0
        %v4188 = vpop.f32.mrb[0].mxu0
        %v4189 = vadd.f32 0.0, %v4188
        %4190 = vdwg.mxu0
        %4191 = vmatprep.subr.bf16.mxu0 0
        %4192 = vmatpush1.bf16.msra.mxu0 %v3968
        %4193 = vmatprep.subr.bf16.mxu0 0
        %4194 = vmatpush1.bf16.msra.mxu0 %v3971
        %4195 = vmatprep.subr.bf16.mxu0 0
        %4196 = vmatpush1.bf16.msra.mxu0 %v3974
        %4197 = vmatprep.subr.bf16.mxu0 0
        %4198 = vmatpush1.bf16.msra.mxu0 %v3977
        %4199 = vmatprep.subr.bf16.mxu0 0
        %4200 = vmatpush1.bf16.msra.mxu0 %v3980
        %4201 = vmatprep.subr.bf16.mxu0 0
        %4202 = vmatpush1.bf16.msra.mxu0 %v3983
        %4203 = vmatprep.subr.bf16.mxu0 0
        %4204 = vmatpush1.bf16.msra.mxu0 %v3986
        %4205 = vmatprep.subr.bf16.mxu0 0
        %4206 = vmatpush1.bf16.msra.mxu0 %v3989
        %4207 = vmatprep.subr.bf16.mxu0 0
        %4208 = vmatpush1.bf16.msra.mxu0 0
        %4209 = vmatprep.subr.bf16.mxu0 0
        %4210 = vmatpush1.bf16.msra.mxu0 0
        %4211 = vmatprep.subr.bf16.mxu0 0
        %4212 = vmatpush1.bf16.msra.mxu0 0
        %4213 = vmatprep.subr.bf16.mxu0 0
        %4214 = vmatpush1.bf16.msra.mxu0 0
        %4215 = vmatprep.subr.bf16.mxu0 0
        %4216 = vmatpush1.bf16.msra.mxu0 0
        %4217 = vmatprep.subr.bf16.mxu0 0
        %4218 = vmatpush1.bf16.msra.mxu0 0
        %4219 = vmatprep.subr.bf16.mxu0 0
        %4220 = vmatpush1.bf16.msra.mxu0 0
        %4221 = vmatprep.subr.bf16.mxu0 0
        %4222 = vmatpush1.bf16.msra.mxu0 0
        %4223 = vmatprep.mubr.bf16.mxu0 0
        %4224 = vmatmul.mubr.bf16.gmra.mrb[0].mxu0 %v3837
        %v4225 = vpop.f32.mrb[0].mxu0
        %v4226 = vadd.f32 0.0, %v4225
        %v4227 = vpop.f32.mrb[0].mxu0
        %v4228 = vpop.f32.mrb[0].mxu0
        %v4229 = vadd.f32 0.0, %v4228
        %v4230 = vpop.f32.mrb[0].mxu0
        %4231 = vmatprep.mubr.bf16.mxu0 0
        %4232 = vmatmul.mubr.bf16.gmra.mrb[0].mxu0 %v3838
        %v4233 = vpop.f32.mrb[0].mxu0
        %v4234 = vadd.f32 0.0, %v4233
        %v4235 = vpop.f32.mrb[0].mxu0
        %v4236 = vpop.f32.mrb[0].mxu0
        %v4237 = vadd.f32 0.0, %v4236
        %v4238 = vpop.f32.mrb[0].mxu0
        %4239 = vmatprep.mubr.bf16.mxu0 0
        %4240 = vmatmul.mubr.bf16.gmra.mrb[0].mxu0 %v3839
        %v4241 = vpop.f32.mrb[0].mxu0
        %v4242 = vadd.f32 0.0, %v4241
        %v4243 = vpop.f32.mrb[0].mxu0
        %v4244 = vpop.f32.mrb[0].mxu0
        %v4245 = vadd.f32 0.0, %v4244
        %v4246 = vpop.f32.mrb[0].mxu0
        %4247 = vmatprep.mubr.bf16.mxu0 0
        %4248 = vmatmul.mubr.bf16.gmra.mrb[0].mxu0 %v3840
        %v4249 = vpop.f32.mrb[0].mxu0
        %v4250 = vadd.f32 0.0, %v4249
        %v4251 = vpop.f32.mrb[0].mxu0
        %v4252 = vpop.f32.mrb[0].mxu0
        %v4253 = vadd.f32 0.0, %v4252
        %v4254 = vpop.f32.mrb[0].mxu0
        %4255 = vmatprep.mubr.bf16.mxu0 0
        %4256 = vmatmul.mubr.bf16.gmra.mrb[0].mxu0 %v3841
        %v4257 = vpop.f32.mrb[0].mxu0
        %v4258 = vadd.f32 0.0, %v4257
        %v4259 = vpop.f32.mrb[0].mxu0
        %v4260 = vpop.f32.mrb[0].mxu0
        %v4261 = vadd.f32 0.0, %v4260
        %v4262 = vpop.f32.mrb[0].mxu0
        %4263 = vmatprep.mubr.bf16.mxu0 0
        %4264 = vmatmul.mubr.bf16.gmra.mrb[0].mxu0 %v3842
        %v4265 = vpop.f32.mrb[0].mxu0
        %v4266 = vadd.f32 0.0, %v4265
        %v4267 = vpop.f32.mrb[0].mxu0
        %v4268 = vpop.f32.mrb[0].mxu0
        %v4269 = vadd.f32 0.0, %v4268
        %v4270 = vpop.f32.mrb[0].mxu0
        %4271 = vmatprep.mubr.bf16.mxu0 0
        %4272 = vmatmul.mubr.bf16.gmra.mrb[0].mxu0 %v3843
        %v4273 = vpop.f32.mrb[0].mxu0
        %v4274 = vadd.f32 0.0, %v4273
        %v4275 = vpop.f32.mrb[0].mxu0
        %v4276 = vpop.f32.mrb[0].mxu0
        %v4277 = vadd.f32 0.0, %v4276
        %v4278 = vpop.f32.mrb[0].mxu0
        %4279 = vmatprep.mubr.bf16.mxu0 0
        %4280 = vmatmul.mubr.bf16.gmra.mrb[0].mxu0 %v3844
        %v4281 = vpop.f32.mrb[0].mxu0
        %v4282 = vadd.f32 0.0, %v4281
        %v4283 = vpop.f32.mrb[0].mxu0
        %v4284 = vpop.f32.mrb[0].mxu0
        %v4285 = vadd.f32 0.0, %v4284
        %v4286 = vpop.f32.mrb[0].mxu0
        %4287 = vmatprep.mubr.bf16.mxu0 0
        %4288 = vmatmul.mubr.bf16.gmra.mrb[0].mxu0 %v3845
        %v4289 = vpop.f32.mrb[0].mxu0
        %v4290 = vadd.f32 0.0, %v4289
        %v4291 = vpop.f32.mrb[0].mxu0
        %v4292 = vpop.f32.mrb[0].mxu0
        %v4293 = vadd.f32 0.0, %v4292
        %v4294 = vpop.f32.mrb[0].mxu0
        %4295 = vmatprep.mubr.bf16.mxu0 0
        %4296 = vmatmul.mubr.bf16.gmra.mrb[0].mxu0 %v3846
        %v4297 = vpop.f32.mrb[0].mxu0
        %v4298 = vadd.f32 0.0, %v4297
        %v4299 = vpop.f32.mrb[0].mxu0
        %v4300 = vpop.f32.mrb[0].mxu0
        %v4301 = vadd.f32 0.0, %v4300
        %v4302 = vpop.f32.mrb[0].mxu0
        %4303 = vmatprep.mubr.bf16.mxu0 0
        %4304 = vmatmul.mubr.bf16.gmra.mrb[0].mxu0 %v3847
        %v4305 = vpop.f32.mrb[0].mxu0
        %v4306 = vadd.f32 0.0, %v4305
        %v4307 = vpop.f32.mrb[0].mxu0
        %v4308 = vpop.f32.mrb[0].mxu0
        %v4309 = vadd.f32 0.0, %v4308
        %v4310 = vpop.f32.mrb[0].mxu0
        %4311 = vmatprep.mubr.bf16.mxu0 0
        %4312 = vmatmul.mubr.bf16.gmra.mrb[0].mxu0 %v3848
        %v4313 = vpop.f32.mrb[0].mxu0
        %v4314 = vadd.f32 0.0, %v4313
        %v4315 = vpop.f32.mrb[0].mxu0
        %v4316 = vpop.f32.mrb[0].mxu0
        %v4317 = vadd.f32 0.0, %v4316
        %v4318 = vpop.f32.mrb[0].mxu0
        %4319 = vmatprep.mubr.bf16.mxu0 0
        %4320 = vmatmul.mubr.bf16.gmra.mrb[0].mxu0 %v3849
        %v4321 = vpop.f32.mrb[0].mxu0
        %v4322 = vadd.f32 0.0, %v4321
        %v4323 = vpop.f32.mrb[0].mxu0
        %v4324 = vpop.f32.mrb[0].mxu0
        %v4325 = vadd.f32 0.0, %v4324
        %v4326 = vpop.f32.mrb[0].mxu0
        %4327 = vmatprep.mubr.bf16.mxu0 0
        %4328 = vmatmul.mubr.bf16.gmra.mrb[0].mxu0 %v3850
        %v4329 = vpop.f32.mrb[0].mxu0
        %v4330 = vadd.f32 0.0, %v4329
        %v4331 = vpop.f32.mrb[0].mxu0
        %v4332 = vpop.f32.mrb[0].mxu0
        %v4333 = vadd.f32 0.0, %v4332
        %v4334 = vpop.f32.mrb[0].mxu0
        %4335 = vmatprep.mubr.bf16.mxu0 0
        %4336 = vmatmul.mubr.bf16.gmra.mrb[0].mxu0 %v3851
        %v4337 = vpop.f32.mrb[0].mxu0
        %v4338 = vadd.f32 0.0, %v4337
        %v4339 = vpop.f32.mrb[0].mxu0
        %v4340 = vpop.f32.mrb[0].mxu0
        %v4341 = vadd.f32 0.0, %v4340
        %v4342 = vpop.f32.mrb[0].mxu0
        %4343 = vmatprep.mubr.bf16.mxu0 0
        %4344 = vmatmul.mubr.bf16.gmra.mrb[0].mxu0 %v3852
        %v4345 = vpop.f32.mrb[0].mxu0
        %v4346 = vadd.f32 0.0, %v4345
        %v4347 = vpop.f32.mrb[0].mxu0
        %v4348 = vpop.f32.mrb[0].mxu0
        %v4349 = vadd.f32 0.0, %v4348
        %v4350 = vpop.f32.mrb[0].mxu0
        %4351 = vdwg.mxu0
        %v4352 = vadd.f32 %v3533, %v4049
        %v4353 = vadd.f32 %v3535, %v4051
        %v4354 = vadd.f32 %v3710, %v4226
        %v4355 = vadd.f32 %v3538, %v4054
        %v4356 = vadd.f32 %v3713, %v4229
        %v4357 = vadd.f32 %v3542, %v4058
        %v4358 = vadd.f32 %v3544, %v4060
        %v4359 = vadd.f32 %v3718, %v4234
        %v4360 = vadd.f32 %v3547, %v4063
        %v4361 = vadd.f32 %v3721, %v4237
        %v4362 = vadd.f32 %v3551, %v4067
        %v4363 = vadd.f32 %v3553, %v4069
        %v4364 = vadd.f32 %v3726, %v4242
        %v4365 = vadd.f32 %v3556, %v4072
        %v4366 = vadd.f32 %v3729, %v4245
        %v4367 = vadd.f32 %v3560, %v4076
        %v4368 = vadd.f32 %v3562, %v4078
        %v4369 = vadd.f32 %v3734, %v4250
        %v4370 = vadd.f32 %v3565, %v4081
        %v4371 = vadd.f32 %v3737, %v4253
        %v4372 = vadd.f32 %v3569, %v4085
        %v4373 = vadd.f32 %v3571, %v4087
        %v4374 = vadd.f32 %v3742, %v4258
        %v4375 = vadd.f32 %v3574, %v4090
        %v4376 = vadd.f32 %v3745, %v4261
        %v4377 = vadd.f32 %v3578, %v4094
        %v4378 = vadd.f32 %v3580, %v4096
        %v4379 = vadd.f32 %v3750, %v4266
        %v4380 = vadd.f32 %v3583, %v4099
        %v4381 = vadd.f32 %v3753, %v4269
        %v4382 = vadd.f32 %v3587, %v4103
        %v4383 = vadd.f32 %v3589, %v4105
        %v4384 = vadd.f32 %v3758, %v4274
        %v4385 = vadd.f32 %v3592, %v4108
        %v4386 = vadd.f32 %v3761, %v4277
        %v4387 = vadd.f32 %v3596, %v4112
        %v4388 = vadd.f32 %v3598, %v4114
        %v4389 = vadd.f32 %v3766, %v4282
        %v4390 = vadd.f32 %v3601, %v4117
        %v4391 = vadd.f32 %v3769, %v4285
        %v4392 = vadd.f32 %v3605, %v4121
        %v4393 = vadd.f32 %v3607, %v4123
        %v4394 = vadd.f32 %v3774, %v4290
        %v4395 = vadd.f32 %v3610, %v4126
        %v4396 = vadd.f32 %v3777, %v4293
        %v4397 = vadd.f32 %v3614, %v4130
        %v4398 = vadd.f32 %v3616, %v4132
        %v4399 = vadd.f32 %v3782, %v4298
        %v4400 = vadd.f32 %v3619, %v4135
        %v4401 = vadd.f32 %v3785, %v4301
        %v4402 = vadd.f32 %v3623, %v4139
        %v4403 = vadd.f32 %v3625, %v4141
        %v4404 = vadd.f32 %v3790, %v4306
        %v4405 = vadd.f32 %v3628, %v4144
        %v4406 = vadd.f32 %v3793, %v4309
        %v4407 = vadd.f32 %v3632, %v4148
        %v4408 = vadd.f32 %v3634, %v4150
        %v4409 = vadd.f32 %v3798, %v4314
        %v4410 = vadd.f32 %v3637, %v4153
        %v4411 = vadd.f32 %v3801, %v4317
        %v4412 = vadd.f32 %v3641, %v4157
        %v4413 = vadd.f32 %v3643, %v4159
        %v4414 = vadd.f32 %v3806, %v4322
        %v4415 = vadd.f32 %v3646, %v4162
        %v4416 = vadd.f32 %v3809, %v4325
        %v4417 = vadd.f32 %v3650, %v4166
        %v4418 = vadd.f32 %v3652, %v4168
        %v4419 = vadd.f32 %v3814, %v4330
        %v4420 = vadd.f32 %v3655, %v4171
        %v4421 = vadd.f32 %v3817, %v4333
        %v4422 = vadd.f32 %v3659, %v4175
        %v4423 = vadd.f32 %v3661, %v4177
        %v4424 = vadd.f32 %v3822, %v4338
        %v4425 = vadd.f32 %v3664, %v4180
        %v4426 = vadd.f32 %v3825, %v4341
        %v4427 = vadd.f32 %v3668, %v4184
        %v4428 = vadd.f32 %v3670, %v4186
        %v4429 = vadd.f32 %v3830, %v4346
        %v4430 = vadd.f32 %v3673, %v4189
        %v4431 = vadd.f32 %v3833, %v4349
        %v4464 = vrot.slane %v4353, 1
        %v4465 = vrot.slane %v4355, 1
        %v4466 = vsel %vm2272, %v4464, %v4465
        %v4467 = vrot.slane %v4358, 1
        %v4468 = vrot.slane %v4360, 1
        %v4469 = vsel %vm2272, %v4467, %v4468
        %v4470 = vrot.slane %v4363, 1
        %v4471 = vrot.slane %v4365, 1
        %v4472 = vsel %vm2272, %v4470, %v4471
        %v4473 = vrot.slane %v4368, 1
        %v4474 = vrot.slane %v4370, 1
        %v4475 = vsel %vm2272, %v4473, %v4474
        %v4476 = vrot.slane %v4373, 1
        %v4477 = vrot.slane %v4375, 1
        %v4478 = vsel %vm2272, %v4476, %v4477
        %v4479 = vrot.slane %v4378, 1
        %v4480 = vrot.slane %v4380, 1
        %v4481 = vsel %vm2272, %v4479, %v4480
        %v4482 = vrot.slane %v4383, 1
        %v4483 = vrot.slane %v4385, 1
        %v4484 = vsel %vm2272, %v4482, %v4483
        %v4485 = vrot.slane %v4388, 1
        %v4486 = vrot.slane %v4390, 1
        %v4487 = vsel %vm2272, %v4485, %v4486
        %v4488 = vrot.slane %v4393, 1
        %v4489 = vrot.slane %v4395, 1
        %v4490 = vsel %vm2272, %v4488, %v4489
        %v4491 = vrot.slane %v4398, 1
        %v4492 = vrot.slane %v4400, 1
        %v4493 = vsel %vm2272, %v4491, %v4492
        %v4494 = vrot.slane %v4403, 1
        %v4495 = vrot.slane %v4405, 1
        %v4496 = vsel %vm2272, %v4494, %v4495
        %v4497 = vrot.slane %v4408, 1
        %v4498 = vrot.slane %v4410, 1
        %v4499 = vsel %vm2272, %v4497, %v4498
        %v4500 = vrot.slane %v4413, 1
        %v4501 = vrot.slane %v4415, 1
        %v4502 = vsel %vm2272, %v4500, %v4501
        %v4503 = vrot.slane %v4418, 1
        %v4504 = vrot.slane %v4420, 1
        %v4505 = vsel %vm2272, %v4503, %v4504
        %v4506 = vrot.slane %v4423, 1
        %v4507 = vrot.slane %v4425, 1
        %v4508 = vsel %vm2272, %v4506, %v4507
        %v4509 = vrot.slane %v4428, 1
        %v4510 = vrot.slane %v4430, 1
        %v4511 = vsel %vm2272, %v4509, %v4510
        %v4528 = vadd.f32 %v4352, %v4466
        %v4529 = vadd.f32 %v4357, %v4469
        %v4530 = vadd.f32 %v4362, %v4472
        %v4531 = vadd.f32 %v4367, %v4475
        %v4532 = vadd.f32 %v4372, %v4478
        %v4533 = vadd.f32 %v4377, %v4481
        %v4534 = vadd.f32 %v4382, %v4484
        %v4535 = vadd.f32 %v4387, %v4487
        %v4536 = vadd.f32 %v4392, %v4490
        %v4537 = vadd.f32 %v4397, %v4493
        %v4538 = vadd.f32 %v4402, %v4496
        %v4539 = vadd.f32 %v4407, %v4499
        %v4540 = vadd.f32 %v4412, %v4502
        %v4541 = vadd.f32 %v4417, %v4505
        %v4542 = vadd.f32 %v4422, %v4508
        %v4543 = vadd.f32 %v4427, %v4511
        %v4576 = vrot.slane %v4354, 2
        %v4577 = vrot.slane %v4356, 2
        %v4578 = vsel %vm2385, %v4576, %v4577
        %v4579 = vrot.slane %v4359, 2
        %v4580 = vrot.slane %v4361, 2
        %v4581 = vsel %vm2385, %v4579, %v4580
        %v4582 = vrot.slane %v4364, 2
        %v4583 = vrot.slane %v4366, 2
        %v4584 = vsel %vm2385, %v4582, %v4583
        %v4585 = vrot.slane %v4369, 2
        %v4586 = vrot.slane %v4371, 2
        %v4587 = vsel %vm2385, %v4585, %v4586
        %v4588 = vrot.slane %v4374, 2
        %v4589 = vrot.slane %v4376, 2
        %v4590 = vsel %vm2385, %v4588, %v4589
        %v4591 = vrot.slane %v4379, 2
        %v4592 = vrot.slane %v4381, 2
        %v4593 = vsel %vm2385, %v4591, %v4592
        %v4594 = vrot.slane %v4384, 2
        %v4595 = vrot.slane %v4386, 2
        %v4596 = vsel %vm2385, %v4594, %v4595
        %v4597 = vrot.slane %v4389, 2
        %v4598 = vrot.slane %v4391, 2
        %v4599 = vsel %vm2385, %v4597, %v4598
        %v4600 = vrot.slane %v4394, 2
        %v4601 = vrot.slane %v4396, 2
        %v4602 = vsel %vm2385, %v4600, %v4601
        %v4603 = vrot.slane %v4399, 2
        %v4604 = vrot.slane %v4401, 2
        %v4605 = vsel %vm2385, %v4603, %v4604
        %v4606 = vrot.slane %v4404, 2
        %v4607 = vrot.slane %v4406, 2
        %v4608 = vsel %vm2385, %v4606, %v4607
        %v4609 = vrot.slane %v4409, 2
        %v4610 = vrot.slane %v4411, 2
        %v4611 = vsel %vm2385, %v4609, %v4610
        %v4612 = vrot.slane %v4414, 2
        %v4613 = vrot.slane %v4416, 2
        %v4614 = vsel %vm2385, %v4612, %v4613
        %v4615 = vrot.slane %v4419, 2
        %v4616 = vrot.slane %v4421, 2
        %v4617 = vsel %vm2385, %v4615, %v4616
        %v4618 = vrot.slane %v4424, 2
        %v4619 = vrot.slane %v4426, 2
        %v4620 = vsel %vm2385, %v4618, %v4619
        %v4621 = vrot.slane %v4429, 2
        %v4622 = vrot.slane %v4431, 2
        %v4623 = vsel %vm2385, %v4621, %v4622
        %v4640 = vadd.f32 %v4528, %v4578
        %v4641 = vadd.f32 %v4529, %v4581
        %v4642 = vadd.f32 %v4530, %v4584
        %v4643 = vadd.f32 %v4531, %v4587
        %v4644 = vadd.f32 %v4532, %v4590
        %v4645 = vadd.f32 %v4533, %v4593
        %v4646 = vadd.f32 %v4534, %v4596
        %v4647 = vadd.f32 %v4535, %v4599
        %v4648 = vadd.f32 %v4536, %v4602
        %v4649 = vadd.f32 %v4537, %v4605
        %v4650 = vadd.f32 %v4538, %v4608
        %v4651 = vadd.f32 %v4539, %v4611
        %v4652 = vadd.f32 %v4540, %v4614
        %v4653 = vadd.f32 %v4541, %v4617
        %v4654 = vadd.f32 %v4542, %v4620
        %v4655 = vadd.f32 %v4543, %v4623
        %v4657 = vlaneseq
        %v4658 = vshrl.u32 %v4657, 7
        %v4659 = vsub.s32 0, %v4658
        %v4660 = vrot.slane %v277, %v4659
        %v4662 = vadd.f32 %v4640, %v4660
        %v4663 = vadd.f32 %v4641, %v4660
        %v4664 = vadd.f32 %v4642, %v4660
        %v4665 = vadd.f32 %v4643, %v4660
        %v4666 = vadd.f32 %v4644, %v4660
        %v4667 = vadd.f32 %v4645, %v4660
        %v4668 = vadd.f32 %v4646, %v4660
        %v4669 = vadd.f32 %v4647, %v4660
        %v4670 = vadd.f32 %v4648, %v4660
        %v4671 = vadd.f32 %v4649, %v4660
        %v4672 = vadd.f32 %v4650, %v4660
        %v4673 = vadd.f32 %v4651, %v4660
        %v4674 = vadd.f32 %v4652, %v4660
        %v4675 = vadd.f32 %v4653, %v4660
        %v4676 = vadd.f32 %v4654, %v4660
        %v4677 = vadd.f32 %v4655, %v4660
        %v4678 = vld [vmem:[%s342] sm:$0xf]
        %v4679 = vld [vmem:[%s342 + $0x4] sm:$0x1]
        %v4680 = vld [vmem:[%s342 + $0x8] sm:$0xf]
        %v4681 = vld [vmem:[%s342 + $0xc] sm:$0x1]
        %v4682 = vld [vmem:[%s342 + $0x10] sm:$0xf]
        %v4683 = vld [vmem:[%s342 + $0x14] sm:$0x1]
        %v4684 = vld [vmem:[%s342 + $0x18] sm:$0xf]
        %v4685 = vld [vmem:[%s342 + $0x1c] sm:$0x1]
        %v4686 = vld [vmem:[%s342 + $0x20] sm:$0xf]
        %v4687 = vld [vmem:[%s342 + $0x24] sm:$0x1]
        %v4688 = vld [vmem:[%s342 + $0x28] sm:$0xf]
        %v4689 = vld [vmem:[%s342 + $0x2c] sm:$0x1]
        %v4690 = vld [vmem:[%s342 + $0x30] sm:$0xf]
        %v4691 = vld [vmem:[%s342 + $0x34] sm:$0x1]
        %v4692 = vld [vmem:[%s342 + $0x38] sm:$0xf]
        %v4693 = vld [vmem:[%s342 + $0x3c] sm:$0x1]
        %v4694 = vld [vmem:[%s342 + $0x50] sm:$0xf]
        %v4695 = vld [vmem:[%s342 + $0x54] sm:$0x1]
        %v4696 = vld [vmem:[%s342 + $0x58] sm:$0xf]
        %v4697 = vld [vmem:[%s342 + $0x5c] sm:$0x1]
        %v4698 = vld [vmem:[%s342 + $0x60] sm:$0xf]
        %v4699 = vld [vmem:[%s342 + $0x64] sm:$0x1]
        %v4700 = vld [vmem:[%s342 + $0x68] sm:$0xf]
        %v4701 = vld [vmem:[%s342 + $0x6c] sm:$0x1]
        %v4702 = vld [vmem:[%s342 + $0x70] sm:$0xf]
        %v4703 = vld [vmem:[%s342 + $0x74] sm:$0x1]
        %v4704 = vld [vmem:[%s342 + $0x78] sm:$0xf]
        %v4705 = vld [vmem:[%s342 + $0x7c] sm:$0x1]
        %v4706 = vld [vmem:[%s342 + $0x80] sm:$0xf]
        %v4707 = vld [vmem:[%s342 + $0x84] sm:$0x1]
        %v4708 = vld [vmem:[%s342 + $0x88] sm:$0xf]
        %v4709 = vld [vmem:[%s342 + $0x8c] sm:$0x1]
        %v4710 = vunpack.c.l.bf16 %v4678
        %v4711 = vunpack.c.l.bf16 %v4679
        %v4712 = vunpack.c.l.bf16 %v4680
        %v4713 = vunpack.c.l.bf16 %v4681
        %v4714 = vunpack.c.l.bf16 %v4682
        %v4715 = vunpack.c.l.bf16 %v4683
        %v4716 = vunpack.c.l.bf16 %v4684
        %v4717 = vunpack.c.l.bf16 %v4685
        %v4718 = vunpack.c.l.bf16 %v4686
        %v4719 = vunpack.c.l.bf16 %v4687
        %v4720 = vunpack.c.l.bf16 %v4688
        %v4721 = vunpack.c.l.bf16 %v4689
        %v4722 = vunpack.c.l.bf16 %v4690
        %v4723 = vunpack.c.l.bf16 %v4691
        %v4724 = vunpack.c.l.bf16 %v4692
        %v4725 = vunpack.c.l.bf16 %v4693
        %v4726 = vunpack.c.l.bf16 %v4694
        %v4727 = vunpack.c.l.bf16 %v4695
        %v4728 = vunpack.c.l.bf16 %v4696
        %v4729 = vunpack.c.l.bf16 %v4697
        %v4730 = vunpack.c.l.bf16 %v4698
        %v4731 = vunpack.c.l.bf16 %v4699
        %v4732 = vunpack.c.l.bf16 %v4700
        %v4733 = vunpack.c.l.bf16 %v4701
        %v4734 = vunpack.c.l.bf16 %v4702
        %v4735 = vunpack.c.l.bf16 %v4703
        %v4736 = vunpack.c.l.bf16 %v4704
        %v4737 = vunpack.c.l.bf16 %v4705
        %v4738 = vunpack.c.l.bf16 %v4706
        %v4739 = vunpack.c.l.bf16 %v4707
        %v4740 = vunpack.c.l.bf16 %v4708
        %v4741 = vunpack.c.l.bf16 %v4709
        %v4774 = vrot.slane %v4710, 1
        %v4775 = vrot.slane %v4711, 1
        %v4776 = vsel %vm2272, %v4774, %v4775
        %v4777 = vrot.slane %v4712, 1
        %v4778 = vrot.slane %v4713, 1
        %v4779 = vsel %vm2272, %v4777, %v4778
        %v4780 = vrot.slane %v4714, 1
        %v4781 = vrot.slane %v4715, 1
        %v4782 = vsel %vm2272, %v4780, %v4781
        %v4783 = vrot.slane %v4716, 1
        %v4784 = vrot.slane %v4717, 1
        %v4785 = vsel %vm2272, %v4783, %v4784
        %v4786 = vrot.slane %v4718, 1
        %v4787 = vrot.slane %v4719, 1
        %v4788 = vsel %vm2272, %v4786, %v4787
        %v4789 = vrot.slane %v4720, 1
        %v4790 = vrot.slane %v4721, 1
        %v4791 = vsel %vm2272, %v4789, %v4790
        %v4792 = vrot.slane %v4722, 1
        %v4793 = vrot.slane %v4723, 1
        %v4794 = vsel %vm2272, %v4792, %v4793
        %v4795 = vrot.slane %v4724, 1
        %v4796 = vrot.slane %v4725, 1
        %v4797 = vsel %vm2272, %v4795, %v4796
        %v4798 = vrot.slane %v4726, 1
        %v4799 = vrot.slane %v4727, 1
        %v4800 = vsel %vm2272, %v4798, %v4799
        %v4801 = vrot.slane %v4728, 1
        %v4802 = vrot.slane %v4729, 1
        %v4803 = vsel %vm2272, %v4801, %v4802
        %v4804 = vrot.slane %v4730, 1
        %v4805 = vrot.slane %v4731, 1
        %v4806 = vsel %vm2272, %v4804, %v4805
        %v4807 = vrot.slane %v4732, 1
        %v4808 = vrot.slane %v4733, 1
        %v4809 = vsel %vm2272, %v4807, %v4808
        %v4810 = vrot.slane %v4734, 1
        %v4811 = vrot.slane %v4735, 1
        %v4812 = vsel %vm2272, %v4810, %v4811
        %v4813 = vrot.slane %v4736, 1
        %v4814 = vrot.slane %v4737, 1
        %v4815 = vsel %vm2272, %v4813, %v4814
        %v4816 = vrot.slane %v4738, 1
        %v4817 = vrot.slane %v4739, 1
        %v4818 = vsel %vm2272, %v4816, %v4817
        %v4819 = vrot.slane %v4740, 1
        %v4820 = vrot.slane %v4741, 1
        %v4821 = vsel %vm2272, %v4819, %v4820
        %v4838 = vadd.f32 %v4662, %v4776
        %v4839 = vadd.f32 %v4663, %v4779
        %v4840 = vadd.f32 %v4664, %v4782
        %v4841 = vadd.f32 %v4665, %v4785
        %v4842 = vadd.f32 %v4666, %v4788
        %v4843 = vadd.f32 %v4667, %v4791
        %v4844 = vadd.f32 %v4668, %v4794
        %v4845 = vadd.f32 %v4669, %v4797
        %v4846 = vadd.f32 %v4670, %v4800
        %v4847 = vadd.f32 %v4671, %v4803
        %v4848 = vadd.f32 %v4672, %v4806
        %v4849 = vadd.f32 %v4673, %v4809
        %v4850 = vadd.f32 %v4674, %v4812
        %v4851 = vadd.f32 %v4675, %v4815
        %v4852 = vadd.f32 %v4676, %v4818
        %v4853 = vadd.f32 %v4677, %v4821
        %v4854 = vmax.f32 %v4838, 0.0
        %v4855 = vmax.f32 %v4839, 0.0
        %v4856 = vmax.f32 %v4840, 0.0
        %v4857 = vmax.f32 %v4841, 0.0
        %v4858 = vmax.f32 %v4842, 0.0
        %v4859 = vmax.f32 %v4843, 0.0
        %v4860 = vmax.f32 %v4844, 0.0
        %v4861 = vmax.f32 %v4845, 0.0
        %v4862 = vmax.f32 %v4846, 0.0
        %v4863 = vmax.f32 %v4847, 0.0
        %v4864 = vmax.f32 %v4848, 0.0
        %v4865 = vmax.f32 %v4849, 0.0
        %v4866 = vmax.f32 %v4850, 0.0
        %v4867 = vmax.f32 %v4851, 0.0
        %v4868 = vmax.f32 %v4852, 0.0
        %v4869 = vmax.f32 %v4853, 0.0
        %4870 = vst [vmem:[%s272] sm:$0xff] %v4854
        %4871 = vst [vmem:[%s272 + $0x8] sm:$0xff] %v4855
        %4872 = vst [vmem:[%s272 + $0x10] sm:$0xff] %v4856
        %4873 = vst [vmem:[%s272 + $0x18] sm:$0xff] %v4857
        %4874 = vst [vmem:[%s272 + $0x20] sm:$0xff] %v4858
        %4875 = vst [vmem:[%s272 + $0x28] sm:$0xff] %v4859
        %4876 = vst [vmem:[%s272 + $0x30] sm:$0xff] %v4860
        %4877 = vst [vmem:[%s272 + $0x38] sm:$0xff] %v4861
        %4878 = vst [vmem:[%s272 + $0x40] sm:$0xff] %v4862
        %4879 = vst [vmem:[%s272 + $0x48] sm:$0xff] %v4863
        %4880 = vst [vmem:[%s272 + $0x50] sm:$0xff] %v4864
        %4881 = vst [vmem:[%s272 + $0x58] sm:$0xff] %v4865
        %4882 = vst [vmem:[%s272 + $0x60] sm:$0xff] %v4866
        %4883 = vst [vmem:[%s272 + $0x68] sm:$0xff] %v4867
        %4884 = vst [vmem:[%s272 + $0x70] sm:$0xff] %v4868
        %4885 = vst [vmem:[%s272 + $0x78] sm:$0xff] %v4869
        %s4886 = sand.u32 %s141, 1
        %s4887 = scalar_lea.sflag [#allocation5], %s4886
        %s4888 = sand.u32 %s141, 1
        %s4889 = smul.addr %s4888, 128
        %s4890 = scalar_lea.vmem [#allocation9], %s4889
        // Predicated region
        $region53: #{tpu_custom_call.1} parent=39 // pred_check
          %p4891 = pneg %p151
        $region54: #{tpu_custom_call.1} parent=39 // pred_check_branch
          %4893 = sbr.rel (%p4891) target = $region56
        $region55: #{tpu_custom_call.1} parent=39 // pred_region
          %s4894 = smul.u32 2, %s23
          %s4896 = ssub.s32 2048, 2048
          %4897 = vsyncadd %s4887, %s4896
          %s4898 = smul.addr %s4894, 8
          %s4899 = smul.addr %s4898, 128
          %s4900 = scalar_lea.hbm %s5, %s4899
          %s4901 = sshll.u32 %s4890, 4
          %s4902 = int_to_ptr.vmem [resolvable:$true] %s4901
          %4907 = dma.vmem_to_hbm [thread:$0]  %s4902, 2048, %s4900, %s4887, 128, 128, 8
        $region56: #{tpu_custom_call.1} parent=39 // pred_fallthru
          _
      $region40: #{tpu_custom_call.1} parent=5 // pred_fallthru
        _
      %p4908 = scmp.le.s32.totalorder 2, %s18
      // Predicated region
      $region57: #{tpu_custom_call.1} parent=5 // pred_check
        %p4909 = pneg %p4908
      $region58: #{tpu_custom_call.1} parent=5 // pred_check_branch
        %4911 = sbr.rel (%p4909) target = $region60
      $region59: #{tpu_custom_call.1} parent=5 // pred_region
        %s4912 = ssub.s32 %s18, 2
        // Predicated region
        $region61: #{tpu_custom_call.1} parent=59 // pred_check
          %p4913 = pneg %p157
        $region62: #{tpu_custom_call.1} parent=59 // pred_check_branch
          %4915 = sbr.rel (%p4913) target = $region64
        $region63: #{tpu_custom_call.1} parent=59 // pred_region
          %s4916 = sand.u32 %s142, 1
          %s4917 = scalar_lea.sflag [#allocation5], %s4916
          %s4918 = sand.u32 %s142, 1
          %s4919 = smul.addr %s4918, 128
          %s4920 = scalar_lea.vmem [#allocation9], %s4919
          %4921 = dma.done %s4917, 2048
        $region64: #{tpu_custom_call.1} parent=59 // pred_fallthru
          _
      $region60: #{tpu_custom_call.1} parent=5 // pred_fallthru
        _
    $region6: #{tpu_custom_call.1} parent=1 // loop_footer
      %s22 = sadd.s32 1, %s18
    $region7: #{tpu_custom_call.1} parent=1 // loop_footer_branch
      %17 = sbr.rel target = $region3
    $region8: #{tpu_custom_call.1} parent=1 // loop_exit
      _
    %4922 = vsyncpa [#allocation4], 1
    %s4923 = scalar_lea.sflag [#allocation4], 1
    %4924 = vsyncpa %s4923, 1
    %4925 = vsyncpa [#allocation7], 1
    %4926 = vsyncpa [#allocation5], 1
    %s4927 = scalar_lea.sflag [#allocation5], 1
    %4928 = vsyncpa %s4927, 1

</llo_original>
